<compile_context>
chip_gen: v7x
topology: tpu7x:2x2x1
jax: 0.10.0
libtpu: 0.0.40
codegen_flags: <defaults>
</compile_context>

<pallas_src>
import jax
import jax.numpy as jnp
from jax import lax
from jax.experimental import pallas as pl
from jax.experimental.pallas import tpu as pltpu

# --- model config (matches LIIF.__init__: imnet_in_dim = 64*9 + 2 + 2 = 580) ---
FEAT_C = 64
IN_DIM = FEAT_C * 9 + 2 + 2          # 580
HID1 = 64                            # imnet hidden sizes
HID2 = 64
OUT_DIM = 3
OUT_PAD = 8                          # pad output channels per ensemble
N_ENS = 4                            # local-ensemble size
PACK = N_ENS * HID1                  # 256: 4 ensembles packed along lanes
OUT_PACK = N_ENS * OUT_PAD           # 32
TQ = 1024                            # query tile (sublane) size


# ----------------------------- Pallas kernel ---------------------------------
def mlp_ensemble_kernel(qz1_ref, wq_ref, w2_ref, b2_ref, w3_ref, b3_ref, out_ref):
    """Fused imnet MLP (layers 2-3) + weighted local-ensemble reduction.

    grid = (num_query_tiles,).  All 4 ensemble shifts are packed along lanes.

    qz1_ref : (TQ, 256) bf16 -- pre-ReLU layer-1 activations, 4 ensembles packed
    wq_ref  : (TQ, 4)   f32  -- per-query ensemble weights (already swapped)
    w2_ref  : (256, 256) bf16 -- block-diagonal layer-2 weights
    b2_ref  : (1, 256)   f32
    w3_ref  : (256, 32)  bf16 -- block-diagonal layer-3 weights (out padded to 8)
    b3_ref  : (1, 32)    f32
    out_ref : (TQ, OUT_PAD) f32
    """
    # layer 1 finish: ReLU (feature / rel / cell / bias terms folded in glue)
    h = jnp.maximum(qz1_ref[...], 0.0).astype(jnp.bfloat16)          # (TQ, 256)

    # layer 2: one lane-dense 256-wide MXU dot for all 4 ensembles
    h2 = jnp.dot(h, w2_ref[...], preferred_element_type=jnp.float32) + b2_ref[...]
    h2 = jnp.maximum(h2, 0.0).astype(jnp.bfloat16)                   # (TQ, 256)

    # layer 3: one dot, 4 ensembles x OUT_PAD output lanes
    p = jnp.dot(h2, w3_ref[...], preferred_element_type=jnp.float32) + b3_ref[...]

    # area-weighted 4-way ensemble reduction (static lane slices, f32)
    wq = wq_ref[...]                                                 # (TQ, 4)
    acc = p[:, 0:OUT_PAD] * wq[:, 0:1]
    for e in range(1, N_ENS):
        acc = acc + p[:, e * OUT_PAD:(e + 1) * OUT_PAD] * wq[:, e:e + 1]

    out_ref[...] = acc


def run_imnet_ensemble(qz1, wq, kparams):
    """qz1: (NQp, 256) bf16, wq: (NQp, 4) f32; NQp a multiple of TQ."""
    nq_pad = qz1.shape[0]
    w2b, b2r, w3b, b3r = kparams
    return pl.pallas_call(
        mlp_ensemble_kernel,
        out_shape=jax.ShapeDtypeStruct((nq_pad, OUT_PAD), jnp.float32),
        grid_spec=pltpu.PrefetchScalarGridSpec(
            num_scalar_prefetch=0,
            grid=(nq_pad // TQ,),
            in_specs=[
                pl.BlockSpec((TQ, PACK), lambda i: (i, 0)),
                pl.BlockSpec((TQ, N_ENS), lambda i: (i, 0)),
                pl.BlockSpec((PACK, PACK), lambda i: (0, 0)),      # fetched once
                pl.BlockSpec((1, PACK), lambda i: (0, 0)),
                pl.BlockSpec((PACK, OUT_PACK), lambda i: (0, 0)),
                pl.BlockSpec((1, OUT_PACK), lambda i: (0, 0)),
            ],
            out_specs=pl.BlockSpec((TQ, OUT_PAD), lambda i: (i, 0)),
        ),
        compiler_params=pltpu.CompilerParams(
            dimension_semantics=("parallel",)),
    )(qz1, wq, w2b, b2r, w3b, b3r)


# ------------------------------- JAX glue -------------------------------------
def make_coord(shape):
    """liif.make_coord: pixel-center coords in [-1, 1], shape (H, W, 2)."""
    seqs = []
    for n in shape:
        r = 1.0 / n
        seqs.append(-1.0 + r + 2.0 * r * jnp.arange(n, dtype=jnp.float32))
    yy, xx = jnp.meshgrid(seqs[0], seqs[1], indexing="ij")
    return jnp.stack([yy, xx], axis=-1)


def gen_feature(x, conv_w, conv_b):
    # TODO(synk): `gen_feature`/encoder is abstract in LIIF; a single 3x3 conv
    # (Cin -> 64 channels) stands in for the encoder here (plain JAX glue).
    y = lax.conv_general_dilated(
        x, conv_w, window_strides=(1, 1), padding="SAME",
        dimension_numbers=("NCHW", "OIHW", "NCHW"))
    return y + conv_b[None, :, None, None]


def feat_unfold_3x3(feat):
    """F.unfold(feat, 3, padding=1) reshaped back to (B, C*9, H, W);
    channel ordering matches PyTorch: c*9 + ki*3 + kj.  (Reference path only.)"""
    B, C, H, W = feat.shape
    padded = jnp.pad(feat, ((0, 0), (0, 0), (1, 1), (1, 1)))
    patches = []
    for ki in range(3):
        for kj in range(3):
            patches.append(padded[:, :, ki:ki + H, kj:kj + W])
    return jnp.stack(patches, axis=2).reshape(B, C * 9, H, W)


def first_layer_feature_projection(feat, w1_feat):
    """unfold(3x3, pad=1) followed by @ w1[:C*9]  ==  a 3x3 conv whose OIHW
    kernel is w1[:C*9].reshape(C, 3, 3, H1).transpose(3, 0, 1, 2).
    Returns (B, H*W, H1) f32 — 9x smaller than the unfolded feature."""
    B, C, H, W = feat.shape
    h1c = w1_feat.shape[-1]
    kern = w1_feat.reshape(C, 3, 3, h1c).transpose(3, 0, 1, 2)     # OIHW
    h1 = lax.conv_general_dilated(
        feat, kern, window_strides=(1, 1), padding="SAME",
        dimension_numbers=("NCHW", "OIHW", "NCHW"))
    return jnp.transpose(h1, (0, 2, 3, 1)).reshape(B, H * W, h1c)


def _ensemble_geometry(coord, H, W):
    """Per local-ensemble shift: nearest-neighbor indices (grid_sample nearest,
    align_corners=False), relative coords and areas.  The eps shift keeps the
    unnormalized coords off half-integer boundaries so rounding mode never
    matters (jnp.round half-even vs PyTorch nearest)."""
    rx = 2.0 / H / 2.0
    ry = 2.0 / W / 2.0
    eps_shift = 1e-6
    ch_tab = -1.0 + (2.0 * jnp.arange(H, dtype=jnp.float32) + 1.0) / H
    cw_tab = -1.0 + (2.0 * jnp.arange(W, dtype=jnp.float32) + 1.0) / W
    scale_hw = jnp.array([H, W], jnp.float32)
    out = []
    for vx in (-1, 1):
        for vy in (-1, 1):
            shift = jnp.array([vx * rx + eps_shift, vy * ry + eps_shift],
                              jnp.float32)
            cs = jnp.clip(coord + shift, -1.0 + 1e-6, 1.0 - 1e-6)
            iy = jnp.clip(jnp.round(((cs[..., 0] + 1.0) * H - 1.0) / 2.0),
                          0, H - 1).astype(jnp.int32)
            ix = jnp.clip(jnp.round(((cs[..., 1] + 1.0) * W - 1.0) / 2.0),
                          0, W - 1).astype(jnp.int32)
            qcoord = jnp.stack([ch_tab[iy], cw_tab[ix]], axis=-1)   # (B, Q, 2)
            rel = (coord - qcoord) * scale_hw
            area = jnp.abs(rel[..., 0] * rel[..., 1]) + 1e-9
            out.append((iy, ix, rel, area))
    return out


def _mlp_ref(x, params):
    w1, b1, w2, b2, w3, b3 = params
    h = jnp.maximum(x @ w1 + b1, 0.0)
    h = jnp.maximum(h @ w2 + b2, 0.0)
    return h @ w3 + b3


def _query_rgb_ref(feat, coord, cell, mlp_params):
    """Pure-JAX f32 reference: original LIIF formulation (unfold -> gather 576
    -> full MLP -> weighted ensemble)."""
    B, C, H, W = feat.shape
    feat_u = feat_unfold_3x3(feat)
    feat_flat = jnp.transpose(feat_u.reshape(B, C * 9, H * W), (0, 2, 1))
    rel_cell = cell * jnp.array([H, W], jnp.float32)
    preds, areas = [], []
    for iy, ix, rel, area in _ensemble_geometry(coord, H, W):
        flat_idx = iy * W + ix
        qfeat = jnp.take_along_axis(feat_flat, flat_idx[..., None], axis=1)
        mid = jnp.concatenate([qfeat, rel, rel_cell], axis=-1)      # (B, Q, 580)
        preds.append(_mlp_ref(mid, mlp_params))
        areas.append(area)
    total = areas[0] + areas[1] + areas[2] + areas[3]
    weights = [a / total for a in areas[::-1]]          # local-ensemble swap
    res = 0.0
    for p, w in zip(preds, weights):
        res = res + p * w[..., None]
    return res


def _query_rgb_pallas(feat, coord, cell, mlp_params):
    """LIIF.query_rgb (feat_unfold=True, local_ensemble=True, cell_decode=True)
    with the layer-1 feature projection hoisted before the gather and the
    rel/cell + bias terms folded into the glue (f32), kernel handles layers 2-3
    for all 4 ensembles lane-packed."""
    B, C, H, W = feat.shape
    Q = coord.shape[1]
    w1, b1, w2, b2, w3, b3 = mlp_params

    # (B, H*W, HID1) — equivalent to unfold + @ w1[:576], 9x less data.
    # bf16 before the gather halves the gathered intermediate's HBM traffic.
    h1_flat = first_layer_feature_projection(feat, w1[:C * 9]).astype(jnp.bfloat16)
    w1_rc = w1[C * 9:].astype(jnp.float32)                          # (4, HID1)
    rel_cell = cell * jnp.array([H, W], jnp.float32)                # (B, Q, 2)

    nq = B * Q
    nq_pad = -(-nq // TQ) * TQ
    pad = nq_pad - nq

    z1_cols, areas = [], []
    for iy, ix, rel, area in _ensemble_geometry(coord, H, W):
        flat_idx = iy * W + ix                                      # (B, Q)
        qh1 = jnp.take_along_axis(h1_flat, flat_idx[..., None], axis=1)  # bf16
        rc = jnp.concatenate([rel, rel_cell], axis=-1)              # (B, Q, 4) f32
        # fold rel/cell rows of w1 and b1 in f32 (single bf16 rounding at the end)
        z1 = qh1.astype(jnp.float32) + rc @ w1_rc + b1.astype(jnp.float32)
        z1_cols.append(z1.reshape(nq, HID1))
        areas.append(area.reshape(nq))
    total = areas[0] + areas[1] + areas[2] + areas[3]
    # local-ensemble swap: pred e is weighted by area[3-e] / total
    wq = jnp.stack([a / total for a in areas[::-1]], axis=-1)       # (nq, 4) f32

    # pack the 4 ensembles along lanes: (nq_pad, 256) bf16
    qz1 = jnp.concatenate(z1_cols, axis=-1).astype(jnp.bfloat16)    # (nq, 256)
    qz1 = jnp.pad(qz1, ((0, pad), (0, 0)))
    wq = jnp.pad(wq.astype(jnp.float32), ((0, pad), (0, 0)))        # zero weight -> 0

    # block-diagonal packed weights (layers 2-3 for all 4 ensembles in one dot)
    eye = jnp.eye(N_ENS, dtype=jnp.float32)
    w2b = jnp.kron(eye, w2).astype(jnp.bfloat16)                            # (256, 256)
    b2r = jnp.tile(b2.astype(jnp.float32), (1, N_ENS))                      # (1, 256)
    w3p = jnp.pad(w3, ((0, 0), (0, OUT_PAD - OUT_DIM)))                     # (64, 8)
    w3b = jnp.kron(eye, w3p).astype(jnp.bfloat16)                           # (256, 32)
    b3r = jnp.tile(jnp.pad(b3, ((0, 0), (0, OUT_PAD - OUT_DIM))).astype(jnp.float32),
                   (1, N_ENS))                                              # (1, 32)

    out = run_imnet_ensemble(qz1, wq, (w2b, b2r, w3b, b3r))
    return out[:nq, :OUT_DIM].reshape(B, Q, OUT_DIM)


def liif_forward(x, coord, cell, conv_w, conv_b, mlp_params, use_pallas=True):
    feat = gen_feature(x, conv_w, conv_b)
    if use_pallas:
        return _query_rgb_pallas(feat, coord, cell, mlp_params)
    return _query_rgb_ref(feat, coord, cell, mlp_params)


# --------------------------------- main ---------------------------------------
if __name__ == "__main__":
    key = jax.random.PRNGKey(0)
    k = jax.random.split(key, 9)

    B, Cin, H, W = 2, 3, 16, 16
    tgt_h, tgt_w = 24, 24                 # super-resolve 16x16 -> 24x24
    Q = tgt_h * tgt_w

    x = jax.random.normal(k[0], (B, Cin, H, W), jnp.float32)
    coord = make_coord((tgt_h, tgt_w)).reshape(-1, 2)
    coord = jnp.broadcast_to(coord[None], (B, Q, 2)).astype(jnp.float32)
    cell = jnp.zeros((B, Q, 2), jnp.float32)
    cell = cell.at[..., 0].set(2.0 / tgt_h).at[..., 1].set(2.0 / tgt_w)

    # deterministic parameter init (encoder conv + imnet MLP)
    conv_w = jax.random.normal(k[1], (FEAT_C, Cin, 3, 3), jnp.float32) * 0.05
    conv_b = jax.random.normal(k[2], (FEAT_C,), jnp.float32) * 0.05
    w1 = jax.random.normal(k[3], (IN_DIM, HID1), jnp.float32) * 0.02
    b1 = jax.random.normal(k[4], (1, HID1), jnp.float32) * 0.02
    w2 = jax.random.normal(k[5], (HID1, HID2), jnp.float32) * 0.05
    b2 = jax.random.normal(k[6], (1, HID2), jnp.float32) * 0.05
    w3 = jax.random.normal(k[7], (HID2, OUT_DIM), jnp.float32) * 0.05
    b3 = jax.random.normal(k[8], (1, OUT_DIM), jnp.float32) * 0.05
    mlp_params = (w1, b1, w2, b2, w3, b3)

    fwd_pallas = jax.jit(lambda a, c, cl, cw, cb, mp:
                         liif_forward(a, c, cl, cw, cb, mp, use_pallas=True))
    fwd_ref = jax.jit(lambda a, c, cl, cw, cb, mp:
                      liif_forward(a, c, cl, cw, cb, mp, use_pallas=False))

    pred = jax.block_until_ready(fwd_pallas(x, coord, cell, conv_w, conv_b, mlp_params))
    ref = jax.block_until_ready(fwd_ref(x, coord, cell, conv_w, conv_b, mlp_params))

    assert pred.shape == (B, Q, OUT_DIM)
    assert bool(jnp.all(jnp.isfinite(pred)))
    max_err = float(jnp.max(jnp.abs(pred - ref)))
    # kernel path streams bf16 activations; compare against f32 reference loosely
    assert bool(jnp.allclose(pred, ref, atol=2e-2, rtol=2e-2)), f"max_err={max_err}"
    print("KERNEL_OK")
</pallas_src>

<mosaic_0001>
module attributes {stable_mosaic.version = 11 : i64} {
  func.func @mlp_ensemble_kernel(%arg0: i32, %arg1: memref<1024x256xbf16, #tpu.memory_space<vmem>>, %arg2: memref<1024x4xf32, #tpu.memory_space<vmem>>, %arg3: memref<256x256xbf16, #tpu.memory_space<vmem>>, %arg4: memref<1x256xf32, #tpu.memory_space<vmem>>, %arg5: memref<256x32xbf16, #tpu.memory_space<vmem>>, %arg6: memref<1x32xf32, #tpu.memory_space<vmem>>, %arg7: memref<1024x8xf32, #tpu.memory_space<vmem>>) attributes {dimension_semantics = [#tpu.dimension_semantics<parallel>], iteration_bounds = array<i64: 2>, scalar_prefetch = 0 : i64, scratch_operands = 0 : i64, tpu.core_type = #tpu.core_type<tc>, window_params = [{transform_indices = @transform_0, window_bounds = array<i64: 1024, 256>}, {transform_indices = @transform_1, window_bounds = array<i64: 1024, 4>}, {pipeline_mode = #tpu.pipeline_mode<synchronous>, transform_indices = @transform_2, window_bounds = array<i64: 256, 256>}, {pipeline_mode = #tpu.pipeline_mode<synchronous>, transform_indices = @transform_3, window_bounds = array<i64: 1, 256>}, {pipeline_mode = #tpu.pipeline_mode<synchronous>, transform_indices = @transform_4, window_bounds = array<i64: 256, 32>}, {pipeline_mode = #tpu.pipeline_mode<synchronous>, transform_indices = @transform_5, window_bounds = array<i64: 1, 32>}, {transform_indices = @transform_6, window_bounds = array<i64: 1024, 8>}]} {
    %c0 = arith.constant 0 : index
    %c0_0 = arith.constant 0 : index
    %0 = vector.load %arg1[%c0, %c0_0] : memref<1024x256xbf16, #tpu.memory_space<vmem>>, vector<1024x256xbf16>
    %cst = arith.constant 0.000000e+00 : bf16
    %1 = vector.broadcast %cst : bf16 to vector<1024x256xbf16>
    %2 = arith.maximumf %0, %1 : vector<1024x256xbf16>
    %c0_1 = arith.constant 0 : index
    %c0_2 = arith.constant 0 : index
    %3 = vector.load %arg3[%c0_1, %c0_2] : memref<256x256xbf16, #tpu.memory_space<vmem>>, vector<256x256xbf16>
    %cst_3 = arith.constant dense<0.000000e+00> : vector<1024x256xf32>
    %4 = tpu.matmul %2, %3, %cst_3 {dimension_numbers = #tpu.dot_dimension_numbers<[1], [0], [0], [1], [0, 0, 1, 1], [], []>} : vector<1024x256xbf16>, vector<256x256xbf16>, vector<1024x256xf32> -> vector<1024x256xf32>
    %c0_4 = arith.constant 0 : index
    %c0_5 = arith.constant 0 : index
    %5 = vector.load %arg4[%c0_4, %c0_5] : memref<1x256xf32, #tpu.memory_space<vmem>>, vector<1x256xf32>
    %6 = vector.broadcast %5 : vector<1x256xf32> to vector<1024x256xf32>
    %7 = arith.addf %4, %6 : vector<1024x256xf32>
    %cst_6 = arith.constant 0.000000e+00 : f32
    %8 = vector.broadcast %cst_6 : f32 to vector<1024x256xf32>
    %9 = arith.maximumf %7, %8 : vector<1024x256xf32>
    %10 = arith.truncf %9 : vector<1024x256xf32> to vector<1024x256xbf16>
    %c0_7 = arith.constant 0 : index
    %c0_8 = arith.constant 0 : index
    %11 = vector.load %arg5[%c0_7, %c0_8] : memref<256x32xbf16, #tpu.memory_space<vmem>>, vector<256x32xbf16>
    %cst_9 = arith.constant dense<0.000000e+00> : vector<1024x32xf32>
    %12 = tpu.matmul %10, %11, %cst_9 {dimension_numbers = #tpu.dot_dimension_numbers<[1], [0], [0], [1], [0, 0, 1, 1], [], []>} : vector<1024x256xbf16>, vector<256x32xbf16>, vector<1024x32xf32> -> vector<1024x32xf32>
    %c0_10 = arith.constant 0 : index
    %c0_11 = arith.constant 0 : index
    %13 = vector.load %arg6[%c0_10, %c0_11] : memref<1x32xf32, #tpu.memory_space<vmem>>, vector<1x32xf32>
    %14 = vector.broadcast %13 : vector<1x32xf32> to vector<1024x32xf32>
    %15 = arith.addf %12, %14 : vector<1024x32xf32>
    %c0_12 = arith.constant 0 : index
    %c0_13 = arith.constant 0 : index
    %16 = vector.load %arg2[%c0_12, %c0_13] : memref<1024x4xf32, #tpu.memory_space<vmem>>, vector<1024x4xf32>
    %17 = vector.extract_strided_slice %15 {offsets = [0, 0], sizes = [1024, 8], strides = [1, 1]} : vector<1024x32xf32> to vector<1024x8xf32>
    %18 = vector.extract_strided_slice %16 {offsets = [0, 0], sizes = [1024, 1], strides = [1, 1]} : vector<1024x4xf32> to vector<1024x1xf32>
    %19 = vector.broadcast %18 : vector<1024x1xf32> to vector<1024x8xf32>
    %20 = arith.mulf %17, %19 : vector<1024x8xf32>
    %21 = vector.extract_strided_slice %15 {offsets = [0, 8], sizes = [1024, 8], strides = [1, 1]} : vector<1024x32xf32> to vector<1024x8xf32>
    %22 = vector.extract_strided_slice %16 {offsets = [0, 1], sizes = [1024, 1], strides = [1, 1]} : vector<1024x4xf32> to vector<1024x1xf32>
    %23 = vector.broadcast %22 : vector<1024x1xf32> to vector<1024x8xf32>
    %24 = arith.mulf %21, %23 : vector<1024x8xf32>
    %25 = arith.addf %20, %24 : vector<1024x8xf32>
    %26 = vector.extract_strided_slice %15 {offsets = [0, 16], sizes = [1024, 8], strides = [1, 1]} : vector<1024x32xf32> to vector<1024x8xf32>
    %27 = vector.extract_strided_slice %16 {offsets = [0, 2], sizes = [1024, 1], strides = [1, 1]} : vector<1024x4xf32> to vector<1024x1xf32>
    %28 = vector.broadcast %27 : vector<1024x1xf32> to vector<1024x8xf32>
    %29 = arith.mulf %26, %28 : vector<1024x8xf32>
    %30 = arith.addf %25, %29 : vector<1024x8xf32>
    %31 = vector.extract_strided_slice %15 {offsets = [0, 24], sizes = [1024, 8], strides = [1, 1]} : vector<1024x32xf32> to vector<1024x8xf32>
    %32 = vector.extract_strided_slice %16 {offsets = [0, 3], sizes = [1024, 1], strides = [1, 1]} : vector<1024x4xf32> to vector<1024x1xf32>
    %33 = vector.broadcast %32 : vector<1024x1xf32> to vector<1024x8xf32>
    %34 = arith.mulf %31, %33 : vector<1024x8xf32>
    %35 = arith.addf %30, %34 : vector<1024x8xf32>
    %c0_14 = arith.constant 0 : index
    %c0_15 = arith.constant 0 : index
    %36 = vector.load %arg7[%c0_14, %c0_15] : memref<1024x8xf32, #tpu.memory_space<vmem>>, vector<1024x8xf32>
    tpu.vector_store %arg7[%c0_14, %c0_15], %35 {strides = array<i32>} : memref<1024x8xf32, #tpu.memory_space<vmem>>, vector<1024x8xf32>,
    return
  }
  func.func @transform_0(%arg0: i32) -> (i32, i32) {
    %c0_i32 = arith.constant 0 : i32
    %c0_i32_0 = arith.constant 0 : i32
    return %arg0, %c0_i32 : i32, i32
  }
  func.func @transform_1(%arg0: i32) -> (i32, i32) {
    %c0_i32 = arith.constant 0 : i32
    %c0_i32_0 = arith.constant 0 : i32
    return %arg0, %c0_i32 : i32, i32
  }
  func.func @transform_2(%arg0: i32) -> (i32, i32) {
    %c0_i32 = arith.constant 0 : i32
    %c0_i32_0 = arith.constant 0 : i32
    %c0_i32_1 = arith.constant 0 : i32
    return %c0_i32, %c0_i32_0 : i32, i32
  }
  func.func @transform_3(%arg0: i32) -> (i32, i32) {
    %c0_i32 = arith.constant 0 : i32
    %c0_i32_0 = arith.constant 0 : i32
    %c0_i32_1 = arith.constant 0 : i32
    return %c0_i32, %c0_i32_0 : i32, i32
  }
  func.func @transform_4(%arg0: i32) -> (i32, i32) {
    %c0_i32 = arith.constant 0 : i32
    %c0_i32_0 = arith.constant 0 : i32
    %c0_i32_1 = arith.constant 0 : i32
    return %c0_i32, %c0_i32_0 : i32, i32
  }
  func.func @transform_5(%arg0: i32) -> (i32, i32) {
    %c0_i32 = arith.constant 0 : i32
    %c0_i32_0 = arith.constant 0 : i32
    %c0_i32_1 = arith.constant 0 : i32
    return %c0_i32, %c0_i32_0 : i32, i32
  }
  func.func @transform_6(%arg0: i32) -> (i32, i32) {
    %c0_i32 = arith.constant 0 : i32
    %c0_i32_0 = arith.constant 0 : i32
    return %arg0, %c0_i32 : i32, i32
  }
}

</mosaic_0001>

<llo_original>
// kernel: _lambda_.1
$region0: #{_lambda_.1}
  #allocation0 [shape = 'u32[]', space=smem, size = 0x4, offset = 0x4, fixed_abs, tag = 'smem constant byte address 0x4 - core index']
  #allocation1 [shape = 'u32[144,128]{1,0:T(1,128)}', space=vmem, size = 0x12000, scoped, tag = 'internal scratch']
  %s0 = inlined_call_operand.vmem [shape: bf16[2048,256], index: 0, kind: input, shape index: {}]
  %s1 = inlined_call_operand.vmem [shape: f32[2048,4], index: 1, kind: input, shape index: {}]
  %s2 = inlined_call_operand.vmem [shape: bf16[256,256], index: 2, kind: input, shape index: {}]
  %s3 = inlined_call_operand.vmem [shape: f32[1,256], index: 3, kind: input, shape index: {}]
  %s4 = inlined_call_operand.vmem [shape: bf16[256,32], index: 4, kind: input, shape index: {}]
  %s5 = inlined_call_operand.vmem [shape: f32[1,32], index: 5, kind: input, shape index: {}]
  %s6 = inlined_call_operand.vmem [shape: f32[2048,8], index: 6, kind: output, shape index: {}]
  %s7 = sld [smem:[#allocation0]]
  $region57: #{_lambda_.1} parent=0
    _
  %s9 = ssub.s32 1, %s7
  %s10 = scalar_select 0, %s9, %s7
  loop: start=0, step=1, limit=4
  $region2: #{_lambda_.1} parent=0 // loop_pre_header
    _
  $region3: #{_lambda_.1} parent=0 // loop_header
    %s12 = sphi 0, %s16
    %p13 = scmp.ge.s32.totalorder %s12, 4
    %s22 = sphi 0, %s24
    %s25 = sphi 0, %s22
    %s26 = sphi 0, %s25
    %s42 = sphi 0, %s26
    %s48 = sphi 0, %s50
    %s51 = sphi 0, %s48
    %s52 = sphi 0, %s51
    %s68 = sphi 0, %s52
    %s72 = sphi 0, %s72
    %s74 = sphi 0, %s72
    %s75 = sphi 0, %s74
    %s89 = sphi 0, %s75
    %s93 = sphi 0, %s93
    %s95 = sphi 0, %s93
    %s96 = sphi 0, %s95
    %s110 = sphi 0, %s96
    %s114 = sphi 0, %s114
    %s116 = sphi 0, %s114
    %s117 = sphi 0, %s116
    %s131 = sphi 0, %s117
    %s135 = sphi 0, %s135
    %s137 = sphi 0, %s135
    %s138 = sphi 0, %s137
    %s152 = sphi 0, %s138
    %s158 = sphi 0, %s160
    %s161 = sphi 0, %s158
    %s162 = sphi 0, %s161
    %s178 = sphi 0, %s162
  $region4: #{_lambda_.1} parent=0 // loop_header_branch
    %15 = sbr.rel (%p13) target = $region8
  $region5: #{_lambda_.1} parent=0 // loop_body
    %s17 = ssub.s32 %s12, 1
    %s18 = ssub.s32 %s12, 2
    %s19 = sadd.s32 %s12, 1
    %s20 = ssub.s32 %s12, %s19
    %p21 = scmp.eq.s32.totalorder %s20, 0
    %s23 = sadd.s32 %s22, 1
    %s24 = scalar_select %p21, %s22, %s23
    %p27 = pneg %p21
    %p28 = scmp.eq.s32.totalorder %s12, 1
    %p29 = por %p27, %p28
    %p30 = scmp.ne.s32.totalorder %s22, %s25
    %p31 = scmp.eq.s32.totalorder %s12, 0
    %p32 = por %p30, %p31
    %p33 = scmp.ne.s32.totalorder %s22, %s25
    %p34 = scmp.eq.s32.totalorder %s17, 1
    %p35 = por %p33, %p34
    %p36 = scmp.ne.s32.totalorder %s25, %s26
    %p37 = scmp.eq.s32.totalorder %s17, 0
    %p38 = por %p36, %p37
    %p39 = scmp.ne.s32.totalorder %s25, %s26
    %p40 = scmp.eq.s32.totalorder %s18, 1
    %p41 = por %p39, %p40
    %p43 = scmp.ne.s32.totalorder %s26, %s42
    %p44 = scmp.eq.s32.totalorder %s18, 0
    %p45 = por %p43, %p44
    %s46 = ssub.s32 %s12, %s19
    %p47 = scmp.eq.s32.totalorder %s46, 0
    %s49 = sadd.s32 %s48, 1
    %s50 = scalar_select %p47, %s48, %s49
    %p53 = pneg %p47
    %p54 = scmp.eq.s32.totalorder %s12, 1
    %p55 = por %p53, %p54
    %p56 = scmp.ne.s32.totalorder %s48, %s51
    %p57 = scmp.eq.s32.totalorder %s12, 0
    %p58 = por %p56, %p57
    %p59 = scmp.ne.s32.totalorder %s48, %s51
    %p60 = scmp.eq.s32.totalorder %s17, 1
    %p61 = por %p59, %p60
    %p62 = scmp.ne.s32.totalorder %s51, %s52
    %p63 = scmp.eq.s32.totalorder %s17, 0
    %p64 = por %p62, %p63
    %p65 = scmp.ne.s32.totalorder %s51, %s52
    %p66 = scmp.eq.s32.totalorder %s18, 1
    %p67 = por %p65, %p66
    %p69 = scmp.ne.s32.totalorder %s52, %s68
    %p70 = scmp.eq.s32.totalorder %s18, 0
    %p71 = por %p69, %p70
    %s73 = sadd.s32 %s72, 1
    %p76 = scmp.eq.s32.totalorder %s12, 1
    %p77 = scmp.ne.s32.totalorder %s72, %s74
    %p78 = scmp.eq.s32.totalorder %s12, 0
    %p79 = por %p77, %p78
    %p80 = scmp.ne.s32.totalorder %s72, %s74
    %p81 = scmp.eq.s32.totalorder %s17, 1
    %p82 = por %p80, %p81
    %p83 = scmp.ne.s32.totalorder %s74, %s75
    %p84 = scmp.eq.s32.totalorder %s17, 0
    %p85 = por %p83, %p84
    %p86 = scmp.ne.s32.totalorder %s74, %s75
    %p87 = scmp.eq.s32.totalorder %s18, 1
    %p88 = por %p86, %p87
    %p90 = scmp.ne.s32.totalorder %s75, %s89
    %p91 = scmp.eq.s32.totalorder %s18, 0
    %p92 = por %p90, %p91
    %s94 = sadd.s32 %s93, 1
    %p97 = scmp.eq.s32.totalorder %s12, 1
    %p98 = scmp.ne.s32.totalorder %s93, %s95
    %p99 = scmp.eq.s32.totalorder %s12, 0
    %p100 = por %p98, %p99
    %p101 = scmp.ne.s32.totalorder %s93, %s95
    %p102 = scmp.eq.s32.totalorder %s17, 1
    %p103 = por %p101, %p102
    %p104 = scmp.ne.s32.totalorder %s95, %s96
    %p105 = scmp.eq.s32.totalorder %s17, 0
    %p106 = por %p104, %p105
    %p107 = scmp.ne.s32.totalorder %s95, %s96
    %p108 = scmp.eq.s32.totalorder %s18, 1
    %p109 = por %p107, %p108
    %p111 = scmp.ne.s32.totalorder %s96, %s110
    %p112 = scmp.eq.s32.totalorder %s18, 0
    %p113 = por %p111, %p112
    %s115 = sadd.s32 %s114, 1
    %p118 = scmp.eq.s32.totalorder %s12, 1
    %p119 = scmp.ne.s32.totalorder %s114, %s116
    %p120 = scmp.eq.s32.totalorder %s12, 0
    %p121 = por %p119, %p120
    %p122 = scmp.ne.s32.totalorder %s114, %s116
    %p123 = scmp.eq.s32.totalorder %s17, 1
    %p124 = por %p122, %p123
    %p125 = scmp.ne.s32.totalorder %s116, %s117
    %p126 = scmp.eq.s32.totalorder %s17, 0
    %p127 = por %p125, %p126
    %p128 = scmp.ne.s32.totalorder %s116, %s117
    %p129 = scmp.eq.s32.totalorder %s18, 1
    %p130 = por %p128, %p129
    %p132 = scmp.ne.s32.totalorder %s117, %s131
    %p133 = scmp.eq.s32.totalorder %s18, 0
    %p134 = por %p132, %p133
    %s136 = sadd.s32 %s135, 1
    %p139 = scmp.eq.s32.totalorder %s12, 1
    %p140 = scmp.ne.s32.totalorder %s135, %s137
    %p141 = scmp.eq.s32.totalorder %s12, 0
    %p142 = por %p140, %p141
    %p143 = scmp.ne.s32.totalorder %s135, %s137
    %p144 = scmp.eq.s32.totalorder %s17, 1
    %p145 = por %p143, %p144
    %p146 = scmp.ne.s32.totalorder %s137, %s138
    %p147 = scmp.eq.s32.totalorder %s17, 0
    %p148 = por %p146, %p147
    %p149 = scmp.ne.s32.totalorder %s137, %s138
    %p150 = scmp.eq.s32.totalorder %s18, 1
    %p151 = por %p149, %p150
    %p153 = scmp.ne.s32.totalorder %s138, %s152
    %p154 = scmp.eq.s32.totalorder %s18, 0
    %p155 = por %p153, %p154
    %s156 = ssub.s32 %s12, %s19
    %p157 = scmp.eq.s32.totalorder %s156, 0
    %s159 = sadd.s32 %s158, 1
    %s160 = scalar_select %p157, %s158, %s159
    %p163 = pneg %p157
    %p164 = scmp.eq.s32.totalorder %s12, 1
    %p165 = por %p163, %p164
    %p166 = scmp.ne.s32.totalorder %s158, %s161
    %p167 = scmp.eq.s32.totalorder %s12, 0
    %p168 = por %p166, %p167
    %p169 = scmp.ne.s32.totalorder %s158, %s161
    %p170 = scmp.eq.s32.totalorder %s17, 1
    %p171 = por %p169, %p170
    %p172 = scmp.ne.s32.totalorder %s161, %s162
    %p173 = scmp.eq.s32.totalorder %s17, 0
    %p174 = por %p172, %p173
    %p175 = scmp.ne.s32.totalorder %s161, %s162
    %p176 = scmp.eq.s32.totalorder %s18, 1
    %p177 = por %p175, %p176
    %p179 = scmp.ne.s32.totalorder %s162, %s178
    %p180 = scmp.eq.s32.totalorder %s18, 0
    %p181 = por %p179, %p180
    %p182 = scmp.le.s32.totalorder 1, %s12
    %p183 = scmp.lt.s32.totalorder %s12, 3
    %p184 = pnand %p182, %p183
    %p185 = pneg %p184
    // Predicated region
    $region9: #{_lambda_.1} parent=5 // pred_check
      _
    $region10: #{_lambda_.1} parent=5 // pred_check_branch
      %187 = sbr.rel (%p184) target = $region12
    $region11: #{_lambda_.1} parent=5 // pred_region
      %s188 = ssub.s32 %s12, 1
      // Predicated region
      $region13: #{_lambda_.1} parent=11 // pred_check
        %p189 = pneg %p85
      $region14: #{_lambda_.1} parent=11 // pred_check_branch
        %191 = sbr.rel (%p189) target = $region16
      $region15: #{_lambda_.1} parent=11 // pred_region
        _
      $region16: #{_lambda_.1} parent=11 // pred_fallthru
        _
      // Predicated region
      $region17: #{_lambda_.1} parent=11 // pred_check
        %p192 = pneg %p106
      $region18: #{_lambda_.1} parent=11 // pred_check_branch
        %194 = sbr.rel (%p192) target = $region20
      $region19: #{_lambda_.1} parent=11 // pred_region
        _
      $region20: #{_lambda_.1} parent=11 // pred_fallthru
        _
      // Predicated region
      $region21: #{_lambda_.1} parent=11 // pred_check
        %p195 = pneg %p127
      $region22: #{_lambda_.1} parent=11 // pred_check_branch
        %197 = sbr.rel (%p195) target = $region24
      $region23: #{_lambda_.1} parent=11 // pred_region
        _
      $region24: #{_lambda_.1} parent=11 // pred_fallthru
        _
      // Predicated region
      $region25: #{_lambda_.1} parent=11 // pred_check
        %p198 = pneg %p148
      $region26: #{_lambda_.1} parent=11 // pred_check_branch
        %200 = sbr.rel (%p198) target = $region28
      $region27: #{_lambda_.1} parent=11 // pred_region
        _
      $region28: #{_lambda_.1} parent=11 // pred_fallthru
        _
    $region12: #{_lambda_.1} parent=5 // pred_fallthru
      _
    %p201 = scmp.lt.s32.totalorder %s12, 2
    // Predicated region
    $region29: #{_lambda_.1} parent=5 // pred_check
      %p202 = pneg %p201
    $region30: #{_lambda_.1} parent=5 // pred_check_branch
      %204 = sbr.rel (%p202) target = $region32
    $region31: #{_lambda_.1} parent=5 // pred_region
      // Predicated region
      $region33: #{_lambda_.1} parent=31 // pred_check
        %p205 = pneg %p32
      $region34: #{_lambda_.1} parent=31 // pred_check_branch
        %207 = sbr.rel (%p205) target = $region36
      $region35: #{_lambda_.1} parent=31 // pred_region
        %s208 = smul.u32 128, %s12
        %p209 = scmp.lt.s32.totalorder %s208, 255
        %s210 = scalar_select %p209, %s208, 255
        %s211 = smul.addr %s210, 2
        %s212 = smul.addr %s211, 4
        %s213 = scalar_lea.vmem %s0, %s212
        %s214 = smul.u32 128, %s12
      $region36: #{_lambda_.1} parent=31 // pred_fallthru
        _
      // Predicated region
      $region37: #{_lambda_.1} parent=31 // pred_check
        %p215 = pneg %p58
      $region38: #{_lambda_.1} parent=31 // pred_check_branch
        %217 = sbr.rel (%p215) target = $region40
      $region39: #{_lambda_.1} parent=31 // pred_region
        %s218 = smul.u32 128, %s12
        %p219 = scmp.lt.s32.totalorder %s218, 255
        %s220 = scalar_select %p219, %s218, 255
        %s221 = smul.addr %s220, 8
        %s222 = scalar_lea.vmem %s1, %s221
        %s223 = smul.u32 128, %s12
      $region40: #{_lambda_.1} parent=31 // pred_fallthru
        _
    $region32: #{_lambda_.1} parent=5 // pred_fallthru
      _
    %p224 = scmp.le.s32.totalorder 1, %s12
    %p225 = scmp.lt.s32.totalorder %s12, 3
    %p226 = pnand %p224, %p225
    %p227 = pneg %p226
    // Predicated region
    $region41: #{_lambda_.1} parent=5 // pred_check
      _
    $region42: #{_lambda_.1} parent=5 // pred_check_branch
      %229 = sbr.rel (%p226) target = $region44
    $region43: #{_lambda_.1} parent=5 // pred_region
      %s230 = ssub.s32 %s12, 1
      %s231 = smul.u32 128, %s17
      %p232 = scmp.lt.s32.totalorder %s231, 255
      %s233 = scalar_select %p232, %s231, 255
      %s234 = smul.addr %s233, 2
      %s235 = smul.addr %s234, 4
      %s236 = scalar_lea.vmem %s0, %s235
      %p237 = pneg %p38
      %p238 = pneg %p35
      %s239 = smul.u32 128, %s17
      %p240 = scmp.lt.s32.totalorder %s239, 255
      %s241 = scalar_select %p240, %s239, 255
      %s242 = smul.addr %s241, 8
      %s243 = scalar_lea.vmem %s1, %s242
      %p244 = pneg %p64
      %p245 = pneg %p61
      %p246 = pneg %p85
      %p247 = pneg %p82
      %p248 = pneg %p106
      %p249 = pneg %p103
      %p250 = pneg %p127
      %p251 = pneg %p124
      %p252 = pneg %p148
      %p253 = pneg %p145
      %p254 = pneg %p174
      %p255 = pneg %p171
      %s256 = smul.u32 128, %s17
      %p257 = scmp.lt.s32.totalorder %s256, 255
      %s258 = scalar_select %p257, %s256, 255
      %s259 = smul.addr %s258, 8
      %s260 = scalar_lea.vmem %s6, %s259
      %s261 = smul.u32 128, %s17
      %p262 = scmp.lt.s32.totalorder %s261, 255
      %s263 = scalar_select %p262, %s261, 255
      %s264 = smul.addr %s263, 2
      %s265 = smul.addr %s264, 4
      %s266 = scalar_lea.vmem %s0, %s265
      %s267 = smul.u32 128, %s17
      %s268 = smul.u32 128, %s17
      %p269 = scmp.lt.s32.totalorder %s268, 255
      %s270 = scalar_select %p269, %s268, 255
      %s271 = smul.addr %s270, 8
      %s272 = scalar_lea.vmem %s1, %s271
      %s273 = smul.u32 128, %s17
      %s274 = smul.u32 128, %s17
      %p275 = scmp.lt.s32.totalorder %s274, 255
      %s276 = scalar_select %p275, %s274, 255
      %s277 = smul.addr %s276, 8
      %s278 = scalar_lea.vmem %s6, %s277
      %s279 = smul.u32 128, %s17
      %v281 = vld [vmem:[%s266] sm:$0xff]
      %v282 = vld [vmem:[%s266 + $0x8] sm:$0xff]
      %v283 = vld [vmem:[%s266 + $0x10] sm:$0xff]
      %v284 = vld [vmem:[%s266 + $0x18] sm:$0xff]
      %v285 = vld [vmem:[%s266 + $0x20] sm:$0xff]
      %v286 = vld [vmem:[%s266 + $0x28] sm:$0xff]
      %v287 = vld [vmem:[%s266 + $0x30] sm:$0xff]
      %v288 = vld [vmem:[%s266 + $0x38] sm:$0xff]
      %v289 = vld [vmem:[%s266 + $0x40] sm:$0xff]
      %v290 = vld [vmem:[%s266 + $0x48] sm:$0xff]
      %v291 = vld [vmem:[%s266 + $0x50] sm:$0xff]
      %v292 = vld [vmem:[%s266 + $0x58] sm:$0xff]
      %v293 = vld [vmem:[%s266 + $0x60] sm:$0xff]
      %v294 = vld [vmem:[%s266 + $0x68] sm:$0xff]
      %v295 = vld [vmem:[%s266 + $0x70] sm:$0xff]
      %v296 = vld [vmem:[%s266 + $0x78] sm:$0xff]
      %v297 = vld [vmem:[%s266 + $0x80] sm:$0xff]
      %v298 = vld [vmem:[%s266 + $0x88] sm:$0xff]
      %v299 = vld [vmem:[%s266 + $0x90] sm:$0xff]
      %v300 = vld [vmem:[%s266 + $0x98] sm:$0xff]
      %v301 = vld [vmem:[%s266 + $0xa0] sm:$0xff]
      %v302 = vld [vmem:[%s266 + $0xa8] sm:$0xff]
      %v303 = vld [vmem:[%s266 + $0xb0] sm:$0xff]
      %v304 = vld [vmem:[%s266 + $0xb8] sm:$0xff]
      %v305 = vld [vmem:[%s266 + $0xc0] sm:$0xff]
      %v306 = vld [vmem:[%s266 + $0xc8] sm:$0xff]
      %v307 = vld [vmem:[%s266 + $0xd0] sm:$0xff]
      %v308 = vld [vmem:[%s266 + $0xd8] sm:$0xff]
      %v309 = vld [vmem:[%s266 + $0xe0] sm:$0xff]
      %v310 = vld [vmem:[%s266 + $0xe8] sm:$0xff]
      %v311 = vld [vmem:[%s266 + $0xf0] sm:$0xff]
      %v312 = vld [vmem:[%s266 + $0xf8] sm:$0xff]
      %v313 = vld [vmem:[%s266 + $0x100] sm:$0xff]
      %v314 = vld [vmem:[%s266 + $0x108] sm:$0xff]
      %v315 = vld [vmem:[%s266 + $0x110] sm:$0xff]
      %v316 = vld [vmem:[%s266 + $0x118] sm:$0xff]
      %v317 = vld [vmem:[%s266 + $0x120] sm:$0xff]
      %v318 = vld [vmem:[%s266 + $0x128] sm:$0xff]
      %v319 = vld [vmem:[%s266 + $0x130] sm:$0xff]
      %v320 = vld [vmem:[%s266 + $0x138] sm:$0xff]
      %v321 = vld [vmem:[%s266 + $0x140] sm:$0xff]
      %v322 = vld [vmem:[%s266 + $0x148] sm:$0xff]
      %v323 = vld [vmem:[%s266 + $0x150] sm:$0xff]
      %v324 = vld [vmem:[%s266 + $0x158] sm:$0xff]
      %v325 = vld [vmem:[%s266 + $0x160] sm:$0xff]
      %v326 = vld [vmem:[%s266 + $0x168] sm:$0xff]
      %v327 = vld [vmem:[%s266 + $0x170] sm:$0xff]
      %v328 = vld [vmem:[%s266 + $0x178] sm:$0xff]
      %v329 = vld [vmem:[%s266 + $0x180] sm:$0xff]
      %v330 = vld [vmem:[%s266 + $0x188] sm:$0xff]
      %v331 = vld [vmem:[%s266 + $0x190] sm:$0xff]
      %v332 = vld [vmem:[%s266 + $0x198] sm:$0xff]
      %v333 = vld [vmem:[%s266 + $0x1a0] sm:$0xff]
      %v334 = vld [vmem:[%s266 + $0x1a8] sm:$0xff]
      %v335 = vld [vmem:[%s266 + $0x1b0] sm:$0xff]
      %v336 = vld [vmem:[%s266 + $0x1b8] sm:$0xff]
      %v337 = vld [vmem:[%s266 + $0x1c0] sm:$0xff]
      %v338 = vld [vmem:[%s266 + $0x1c8] sm:$0xff]
      %v339 = vld [vmem:[%s266 + $0x1d0] sm:$0xff]
      %v340 = vld [vmem:[%s266 + $0x1d8] sm:$0xff]
      %v341 = vld [vmem:[%s266 + $0x1e0] sm:$0xff]
      %v342 = vld [vmem:[%s266 + $0x1e8] sm:$0xff]
      %v343 = vld [vmem:[%s266 + $0x1f0] sm:$0xff]
      %v344 = vld [vmem:[%s266 + $0x1f8] sm:$0xff]
      %v345 = vld [vmem:[%s266 + $0x200] sm:$0xff]
      %v346 = vld [vmem:[%s266 + $0x208] sm:$0xff]
      %v347 = vld [vmem:[%s266 + $0x210] sm:$0xff]
      %v348 = vld [vmem:[%s266 + $0x218] sm:$0xff]
      %v349 = vld [vmem:[%s266 + $0x220] sm:$0xff]
      %v350 = vld [vmem:[%s266 + $0x228] sm:$0xff]
      %v351 = vld [vmem:[%s266 + $0x230] sm:$0xff]
      %v352 = vld [vmem:[%s266 + $0x238] sm:$0xff]
      %v353 = vld [vmem:[%s266 + $0x240] sm:$0xff]
      %v354 = vld [vmem:[%s266 + $0x248] sm:$0xff]
      %v355 = vld [vmem:[%s266 + $0x250] sm:$0xff]
      %v356 = vld [vmem:[%s266 + $0x258] sm:$0xff]
      %v357 = vld [vmem:[%s266 + $0x260] sm:$0xff]
      %v358 = vld [vmem:[%s266 + $0x268] sm:$0xff]
      %v359 = vld [vmem:[%s266 + $0x270] sm:$0xff]
      %v360 = vld [vmem:[%s266 + $0x278] sm:$0xff]
      %v361 = vld [vmem:[%s266 + $0x280] sm:$0xff]
      %v362 = vld [vmem:[%s266 + $0x288] sm:$0xff]
      %v363 = vld [vmem:[%s266 + $0x290] sm:$0xff]
      %v364 = vld [vmem:[%s266 + $0x298] sm:$0xff]
      %v365 = vld [vmem:[%s266 + $0x2a0] sm:$0xff]
      %v366 = vld [vmem:[%s266 + $0x2a8] sm:$0xff]
      %v367 = vld [vmem:[%s266 + $0x2b0] sm:$0xff]
      %v368 = vld [vmem:[%s266 + $0x2b8] sm:$0xff]
      %v369 = vld [vmem:[%s266 + $0x2c0] sm:$0xff]
      %v370 = vld [vmem:[%s266 + $0x2c8] sm:$0xff]
      %v371 = vld [vmem:[%s266 + $0x2d0] sm:$0xff]
      %v372 = vld [vmem:[%s266 + $0x2d8] sm:$0xff]
      %v373 = vld [vmem:[%s266 + $0x2e0] sm:$0xff]
      %v374 = vld [vmem:[%s266 + $0x2e8] sm:$0xff]
      %v375 = vld [vmem:[%s266 + $0x2f0] sm:$0xff]
      %v376 = vld [vmem:[%s266 + $0x2f8] sm:$0xff]
      %v377 = vld [vmem:[%s266 + $0x300] sm:$0xff]
      %v378 = vld [vmem:[%s266 + $0x308] sm:$0xff]
      %v379 = vld [vmem:[%s266 + $0x310] sm:$0xff]
      %v380 = vld [vmem:[%s266 + $0x318] sm:$0xff]
      %v381 = vld [vmem:[%s266 + $0x320] sm:$0xff]
      %v382 = vld [vmem:[%s266 + $0x328] sm:$0xff]
      %v383 = vld [vmem:[%s266 + $0x330] sm:$0xff]
      %v384 = vld [vmem:[%s266 + $0x338] sm:$0xff]
      %v385 = vld [vmem:[%s266 + $0x340] sm:$0xff]
      %v386 = vld [vmem:[%s266 + $0x348] sm:$0xff]
      %v387 = vld [vmem:[%s266 + $0x350] sm:$0xff]
      %v388 = vld [vmem:[%s266 + $0x358] sm:$0xff]
      %v389 = vld [vmem:[%s266 + $0x360] sm:$0xff]
      %v390 = vld [vmem:[%s266 + $0x368] sm:$0xff]
      %v391 = vld [vmem:[%s266 + $0x370] sm:$0xff]
      %v392 = vld [vmem:[%s266 + $0x378] sm:$0xff]
      %v393 = vld [vmem:[%s266 + $0x380] sm:$0xff]
      %v394 = vld [vmem:[%s266 + $0x388] sm:$0xff]
      %v395 = vld [vmem:[%s266 + $0x390] sm:$0xff]
      %v396 = vld [vmem:[%s266 + $0x398] sm:$0xff]
      %v397 = vld [vmem:[%s266 + $0x3a0] sm:$0xff]
      %v398 = vld [vmem:[%s266 + $0x3a8] sm:$0xff]
      %v399 = vld [vmem:[%s266 + $0x3b0] sm:$0xff]
      %v400 = vld [vmem:[%s266 + $0x3b8] sm:$0xff]
      %v401 = vld [vmem:[%s266 + $0x3c0] sm:$0xff]
      %v402 = vld [vmem:[%s266 + $0x3c8] sm:$0xff]
      %v403 = vld [vmem:[%s266 + $0x3d0] sm:$0xff]
      %v404 = vld [vmem:[%s266 + $0x3d8] sm:$0xff]
      %v405 = vld [vmem:[%s266 + $0x3e0] sm:$0xff]
      %v406 = vld [vmem:[%s266 + $0x3e8] sm:$0xff]
      %v407 = vld [vmem:[%s266 + $0x3f0] sm:$0xff]
      %v408 = vld [vmem:[%s266 + $0x3f8] sm:$0xff]
      %v409 = vmax.bf16 %v281, 0
      %v410 = vmax.bf16 %v282, 0
      %v411 = vmax.bf16 %v283, 0
      %v412 = vmax.bf16 %v284, 0
      %v413 = vmax.bf16 %v285, 0
      %v414 = vmax.bf16 %v286, 0
      %v415 = vmax.bf16 %v287, 0
      %v416 = vmax.bf16 %v288, 0
      %v417 = vmax.bf16 %v289, 0
      %v418 = vmax.bf16 %v290, 0
      %v419 = vmax.bf16 %v291, 0
      %v420 = vmax.bf16 %v292, 0
      %v421 = vmax.bf16 %v293, 0
      %v422 = vmax.bf16 %v294, 0
      %v423 = vmax.bf16 %v295, 0
      %v424 = vmax.bf16 %v296, 0
      %v425 = vmax.bf16 %v297, 0
      %v426 = vmax.bf16 %v298, 0
      %v427 = vmax.bf16 %v299, 0
      %v428 = vmax.bf16 %v300, 0
      %v429 = vmax.bf16 %v301, 0
      %v430 = vmax.bf16 %v302, 0
      %v431 = vmax.bf16 %v303, 0
      %v432 = vmax.bf16 %v304, 0
      %v433 = vmax.bf16 %v305, 0
      %v434 = vmax.bf16 %v306, 0
      %v435 = vmax.bf16 %v307, 0
      %v436 = vmax.bf16 %v308, 0
      %v437 = vmax.bf16 %v309, 0
      %v438 = vmax.bf16 %v310, 0
      %v439 = vmax.bf16 %v311, 0
      %v440 = vmax.bf16 %v312, 0
      %v441 = vmax.bf16 %v313, 0
      %v442 = vmax.bf16 %v314, 0
      %v443 = vmax.bf16 %v315, 0
      %v444 = vmax.bf16 %v316, 0
      %v445 = vmax.bf16 %v317, 0
      %v446 = vmax.bf16 %v318, 0
      %v447 = vmax.bf16 %v319, 0
      %v448 = vmax.bf16 %v320, 0
      %v449 = vmax.bf16 %v321, 0
      %v450 = vmax.bf16 %v322, 0
      %v451 = vmax.bf16 %v323, 0
      %v452 = vmax.bf16 %v324, 0
      %v453 = vmax.bf16 %v325, 0
      %v454 = vmax.bf16 %v326, 0
      %v455 = vmax.bf16 %v327, 0
      %v456 = vmax.bf16 %v328, 0
      %v457 = vmax.bf16 %v329, 0
      %v458 = vmax.bf16 %v330, 0
      %v459 = vmax.bf16 %v331, 0
      %v460 = vmax.bf16 %v332, 0
      %v461 = vmax.bf16 %v333, 0
      %v462 = vmax.bf16 %v334, 0
      %v463 = vmax.bf16 %v335, 0
      %v464 = vmax.bf16 %v336, 0
      %v465 = vmax.bf16 %v337, 0
      %v466 = vmax.bf16 %v338, 0
      %v467 = vmax.bf16 %v339, 0
      %v468 = vmax.bf16 %v340, 0
      %v469 = vmax.bf16 %v341, 0
      %v470 = vmax.bf16 %v342, 0
      %v471 = vmax.bf16 %v343, 0
      %v472 = vmax.bf16 %v344, 0
      %v473 = vmax.bf16 %v345, 0
      %v474 = vmax.bf16 %v346, 0
      %v475 = vmax.bf16 %v347, 0
      %v476 = vmax.bf16 %v348, 0
      %v477 = vmax.bf16 %v349, 0
      %v478 = vmax.bf16 %v350, 0
      %v479 = vmax.bf16 %v351, 0
      %v480 = vmax.bf16 %v352, 0
      %v481 = vmax.bf16 %v353, 0
      %v482 = vmax.bf16 %v354, 0
      %v483 = vmax.bf16 %v355, 0
      %v484 = vmax.bf16 %v356, 0
      %v485 = vmax.bf16 %v357, 0
      %v486 = vmax.bf16 %v358, 0
      %v487 = vmax.bf16 %v359, 0
      %v488 = vmax.bf16 %v360, 0
      %v489 = vmax.bf16 %v361, 0
      %v490 = vmax.bf16 %v362, 0
      %v491 = vmax.bf16 %v363, 0
      %v492 = vmax.bf16 %v364, 0
      %v493 = vmax.bf16 %v365, 0
      %v494 = vmax.bf16 %v366, 0
      %v495 = vmax.bf16 %v367, 0
      %v496 = vmax.bf16 %v368, 0
      %v497 = vmax.bf16 %v369, 0
      %v498 = vmax.bf16 %v370, 0
      %v499 = vmax.bf16 %v371, 0
      %v500 = vmax.bf16 %v372, 0
      %v501 = vmax.bf16 %v373, 0
      %v502 = vmax.bf16 %v374, 0
      %v503 = vmax.bf16 %v375, 0
      %v504 = vmax.bf16 %v376, 0
      %v505 = vmax.bf16 %v377, 0
      %v506 = vmax.bf16 %v378, 0
      %v507 = vmax.bf16 %v379, 0
      %v508 = vmax.bf16 %v380, 0
      %v509 = vmax.bf16 %v381, 0
      %v510 = vmax.bf16 %v382, 0
      %v511 = vmax.bf16 %v383, 0
      %v512 = vmax.bf16 %v384, 0
      %v513 = vmax.bf16 %v385, 0
      %v514 = vmax.bf16 %v386, 0
      %v515 = vmax.bf16 %v387, 0
      %v516 = vmax.bf16 %v388, 0
      %v517 = vmax.bf16 %v389, 0
      %v518 = vmax.bf16 %v390, 0
      %v519 = vmax.bf16 %v391, 0
      %v520 = vmax.bf16 %v392, 0
      %v521 = vmax.bf16 %v393, 0
      %v522 = vmax.bf16 %v394, 0
      %v523 = vmax.bf16 %v395, 0
      %v524 = vmax.bf16 %v396, 0
      %v525 = vmax.bf16 %v397, 0
      %v526 = vmax.bf16 %v398, 0
      %v527 = vmax.bf16 %v399, 0
      %v528 = vmax.bf16 %v400, 0
      %v529 = vmax.bf16 %v401, 0
      %v530 = vmax.bf16 %v402, 0
      %v531 = vmax.bf16 %v403, 0
      %v532 = vmax.bf16 %v404, 0
      %v533 = vmax.bf16 %v405, 0
      %v534 = vmax.bf16 %v406, 0
      %v535 = vmax.bf16 %v407, 0
      %v536 = vmax.bf16 %v408, 0
      %v537 = vld [vmem:[%s2] sm:$0xff]
      %v538 = vld [vmem:[%s2 + $0x8] sm:$0xff]
      %v539 = vld [vmem:[%s2 + $0x10] sm:$0xff]
      %v540 = vld [vmem:[%s2 + $0x18] sm:$0xff]
      %v541 = vld [vmem:[%s2 + $0x20] sm:$0xff]
      %v542 = vld [vmem:[%s2 + $0x28] sm:$0xff]
      %v543 = vld [vmem:[%s2 + $0x30] sm:$0xff]
      %v544 = vld [vmem:[%s2 + $0x38] sm:$0xff]
      %v545 = vld [vmem:[%s2 + $0x40] sm:$0xff]
      %v546 = vld [vmem:[%s2 + $0x48] sm:$0xff]
      %v547 = vld [vmem:[%s2 + $0x50] sm:$0xff]
      %v548 = vld [vmem:[%s2 + $0x58] sm:$0xff]
      %v549 = vld [vmem:[%s2 + $0x60] sm:$0xff]
      %v550 = vld [vmem:[%s2 + $0x68] sm:$0xff]
      %v551 = vld [vmem:[%s2 + $0x70] sm:$0xff]
      %v552 = vld [vmem:[%s2 + $0x78] sm:$0xff]
      %v553 = vld [vmem:[%s2 + $0x80] sm:$0xff]
      %v554 = vld [vmem:[%s2 + $0x88] sm:$0xff]
      %v555 = vld [vmem:[%s2 + $0x90] sm:$0xff]
      %v556 = vld [vmem:[%s2 + $0x98] sm:$0xff]
      %v557 = vld [vmem:[%s2 + $0xa0] sm:$0xff]
      %v558 = vld [vmem:[%s2 + $0xa8] sm:$0xff]
      %v559 = vld [vmem:[%s2 + $0xb0] sm:$0xff]
      %v560 = vld [vmem:[%s2 + $0xb8] sm:$0xff]
      %v561 = vld [vmem:[%s2 + $0xc0] sm:$0xff]
      %v562 = vld [vmem:[%s2 + $0xc8] sm:$0xff]
      %v563 = vld [vmem:[%s2 + $0xd0] sm:$0xff]
      %v564 = vld [vmem:[%s2 + $0xd8] sm:$0xff]
      %v565 = vld [vmem:[%s2 + $0xe0] sm:$0xff]
      %v566 = vld [vmem:[%s2 + $0xe8] sm:$0xff]
      %v567 = vld [vmem:[%s2 + $0xf0] sm:$0xff]
      %v568 = vld [vmem:[%s2 + $0xf8] sm:$0xff]
      %v569 = vld [vmem:[%s3] sm:$0x3]
      %v571 = vlaneseq
      %v572 = vshrl.u32 %v571, 7
      %v573 = vsub.s32 0, %v572
      %v574 = vrot.slane %v569, %v573
      %v575 = vlaneseq
      %v576 = vshrl.u32 %v575, 7
      %v577 = vsub.s32 1, %v576
      %v578 = vrot.slane %v569, %v577
      %v709 = vunpack.c.l.b16 %v409
      %v710 = vunpack.c.h.b16 %v409
      %v711 = vunpack.c.l.b16 %v410
      %v712 = vunpack.c.h.b16 %v410
      %v713 = vunpack.c.l.b16 %v411
      %v714 = vunpack.c.h.b16 %v411
      %v715 = vunpack.c.l.b16 %v412
      %v716 = vunpack.c.h.b16 %v412
      %v717 = vunpack.c.l.b16 %v413
      %v718 = vunpack.c.h.b16 %v413
      %v719 = vunpack.c.l.b16 %v414
      %v720 = vunpack.c.h.b16 %v414
      %v721 = vunpack.c.l.b16 %v415
      %v722 = vunpack.c.h.b16 %v415
      %v723 = vunpack.c.l.b16 %v416
      %v724 = vunpack.c.h.b16 %v416
      %v725 = vunpack.c.l.b16 %v417
      %v726 = vunpack.c.h.b16 %v417
      %v727 = vunpack.c.l.b16 %v418
      %v728 = vunpack.c.h.b16 %v418
      %v729 = vunpack.c.l.b16 %v419
      %v730 = vunpack.c.h.b16 %v419
      %v731 = vunpack.c.l.b16 %v420
      %v732 = vunpack.c.h.b16 %v420
      %v733 = vunpack.c.l.b16 %v421
      %v734 = vunpack.c.h.b16 %v421
      %v735 = vunpack.c.l.b16 %v422
      %v736 = vunpack.c.h.b16 %v422
      %v737 = vunpack.c.l.b16 %v423
      %v738 = vunpack.c.h.b16 %v423
      %v739 = vunpack.c.l.b16 %v424
      %v740 = vunpack.c.h.b16 %v424
      %v741 = vunpack.c.l.b16 %v425
      %v742 = vunpack.c.h.b16 %v425
      %v743 = vunpack.c.l.b16 %v426
      %v744 = vunpack.c.h.b16 %v426
      %v745 = vunpack.c.l.b16 %v427
      %v746 = vunpack.c.h.b16 %v427
      %v747 = vunpack.c.l.b16 %v428
      %v748 = vunpack.c.h.b16 %v428
      %v749 = vunpack.c.l.b16 %v429
      %v750 = vunpack.c.h.b16 %v429
      %v751 = vunpack.c.l.b16 %v430
      %v752 = vunpack.c.h.b16 %v430
      %v753 = vunpack.c.l.b16 %v431
      %v754 = vunpack.c.h.b16 %v431
      %v755 = vunpack.c.l.b16 %v432
      %v756 = vunpack.c.h.b16 %v432
      %v757 = vunpack.c.l.b16 %v433
      %v758 = vunpack.c.h.b16 %v433
      %v759 = vunpack.c.l.b16 %v434
      %v760 = vunpack.c.h.b16 %v434
      %v761 = vunpack.c.l.b16 %v435
      %v762 = vunpack.c.h.b16 %v435
      %v763 = vunpack.c.l.b16 %v436
      %v764 = vunpack.c.h.b16 %v436
      %v765 = vunpack.c.l.b16 %v437
      %v766 = vunpack.c.h.b16 %v437
      %v767 = vunpack.c.l.b16 %v438
      %v768 = vunpack.c.h.b16 %v438
      %v769 = vunpack.c.l.b16 %v439
      %v770 = vunpack.c.h.b16 %v439
      %v771 = vunpack.c.l.b16 %v440
      %v772 = vunpack.c.h.b16 %v440
      %v773 = vunpack.c.l.b16 %v441
      %v774 = vunpack.c.h.b16 %v441
      %v775 = vunpack.c.l.b16 %v442
      %v776 = vunpack.c.h.b16 %v442
      %v777 = vunpack.c.l.b16 %v443
      %v778 = vunpack.c.h.b16 %v443
      %v779 = vunpack.c.l.b16 %v444
      %v780 = vunpack.c.h.b16 %v444
      %v781 = vunpack.c.l.b16 %v445
      %v782 = vunpack.c.h.b16 %v445
      %v783 = vunpack.c.l.b16 %v446
      %v784 = vunpack.c.h.b16 %v446
      %v785 = vunpack.c.l.b16 %v447
      %v786 = vunpack.c.h.b16 %v447
      %v787 = vunpack.c.l.b16 %v448
      %v788 = vunpack.c.h.b16 %v448
      %v789 = vunpack.c.l.b16 %v449
      %v790 = vunpack.c.h.b16 %v449
      %v791 = vunpack.c.l.b16 %v450
      %v792 = vunpack.c.h.b16 %v450
      %v793 = vunpack.c.l.b16 %v451
      %v794 = vunpack.c.h.b16 %v451
      %v795 = vunpack.c.l.b16 %v452
      %v796 = vunpack.c.h.b16 %v452
      %v797 = vunpack.c.l.b16 %v453
      %v798 = vunpack.c.h.b16 %v453
      %v799 = vunpack.c.l.b16 %v454
      %v800 = vunpack.c.h.b16 %v454
      %v801 = vunpack.c.l.b16 %v455
      %v802 = vunpack.c.h.b16 %v455
      %v803 = vunpack.c.l.b16 %v456
      %v804 = vunpack.c.h.b16 %v456
      %v805 = vunpack.c.l.b16 %v457
      %v806 = vunpack.c.h.b16 %v457
      %v807 = vunpack.c.l.b16 %v458
      %v808 = vunpack.c.h.b16 %v458
      %v809 = vunpack.c.l.b16 %v459
      %v810 = vunpack.c.h.b16 %v459
      %v811 = vunpack.c.l.b16 %v460
      %v812 = vunpack.c.h.b16 %v460
      %v813 = vunpack.c.l.b16 %v461
      %v814 = vunpack.c.h.b16 %v461
      %v815 = vunpack.c.l.b16 %v462
      %v816 = vunpack.c.h.b16 %v462
      %v817 = vunpack.c.l.b16 %v463
      %v818 = vunpack.c.h.b16 %v463
      %v819 = vunpack.c.l.b16 %v464
      %v820 = vunpack.c.h.b16 %v464
      %v821 = vunpack.c.l.b16 %v465
      %v822 = vunpack.c.h.b16 %v465
      %v823 = vunpack.c.l.b16 %v466
      %v824 = vunpack.c.h.b16 %v466
      %v825 = vunpack.c.l.b16 %v467
      %v826 = vunpack.c.h.b16 %v467
      %v827 = vunpack.c.l.b16 %v468
      %v828 = vunpack.c.h.b16 %v468
      %v829 = vunpack.c.l.b16 %v469
      %v830 = vunpack.c.h.b16 %v469
      %v831 = vunpack.c.l.b16 %v470
      %v832 = vunpack.c.h.b16 %v470
      %v833 = vunpack.c.l.b16 %v471
      %v834 = vunpack.c.h.b16 %v471
      %v835 = vunpack.c.l.b16 %v472
      %v836 = vunpack.c.h.b16 %v472
      %v837 = vunpack.c.l.b16 %v473
      %v838 = vunpack.c.h.b16 %v473
      %v839 = vunpack.c.l.b16 %v474
      %v840 = vunpack.c.h.b16 %v474
      %v841 = vunpack.c.l.b16 %v475
      %v842 = vunpack.c.h.b16 %v475
      %v843 = vunpack.c.l.b16 %v476
      %v844 = vunpack.c.h.b16 %v476
      %v845 = vunpack.c.l.b16 %v477
      %v846 = vunpack.c.h.b16 %v477
      %v847 = vunpack.c.l.b16 %v478
      %v848 = vunpack.c.h.b16 %v478
      %v849 = vunpack.c.l.b16 %v479
      %v850 = vunpack.c.h.b16 %v479
      %v851 = vunpack.c.l.b16 %v480
      %v852 = vunpack.c.h.b16 %v480
      %v853 = vunpack.c.l.b16 %v481
      %v854 = vunpack.c.h.b16 %v481
      %v855 = vunpack.c.l.b16 %v482
      %v856 = vunpack.c.h.b16 %v482
      %v857 = vunpack.c.l.b16 %v483
      %v858 = vunpack.c.h.b16 %v483
      %v859 = vunpack.c.l.b16 %v484
      %v860 = vunpack.c.h.b16 %v484
      %v861 = vunpack.c.l.b16 %v485
      %v862 = vunpack.c.h.b16 %v485
      %v863 = vunpack.c.l.b16 %v486
      %v864 = vunpack.c.h.b16 %v486
      %v865 = vunpack.c.l.b16 %v487
      %v866 = vunpack.c.h.b16 %v487
      %v867 = vunpack.c.l.b16 %v488
      %v868 = vunpack.c.h.b16 %v488
      %v869 = vunpack.c.l.b16 %v489
      %v870 = vunpack.c.h.b16 %v489
      %v871 = vunpack.c.l.b16 %v490
      %v872 = vunpack.c.h.b16 %v490
      %v873 = vunpack.c.l.b16 %v491
      %v874 = vunpack.c.h.b16 %v491
      %v875 = vunpack.c.l.b16 %v492
      %v876 = vunpack.c.h.b16 %v492
      %v877 = vunpack.c.l.b16 %v493
      %v878 = vunpack.c.h.b16 %v493
      %v879 = vunpack.c.l.b16 %v494
      %v880 = vunpack.c.h.b16 %v494
      %v881 = vunpack.c.l.b16 %v495
      %v882 = vunpack.c.h.b16 %v495
      %v883 = vunpack.c.l.b16 %v496
      %v884 = vunpack.c.h.b16 %v496
      %v885 = vunpack.c.l.b16 %v497
      %v886 = vunpack.c.h.b16 %v497
      %v887 = vunpack.c.l.b16 %v498
      %v888 = vunpack.c.h.b16 %v498
      %v889 = vunpack.c.l.b16 %v499
      %v890 = vunpack.c.h.b16 %v499
      %v891 = vunpack.c.l.b16 %v500
      %v892 = vunpack.c.h.b16 %v500
      %v893 = vunpack.c.l.b16 %v501
      %v894 = vunpack.c.h.b16 %v501
      %v895 = vunpack.c.l.b16 %v502
      %v896 = vunpack.c.h.b16 %v502
      %v897 = vunpack.c.l.b16 %v503
      %v898 = vunpack.c.h.b16 %v503
      %v899 = vunpack.c.l.b16 %v504
      %v900 = vunpack.c.h.b16 %v504
      %v901 = vunpack.c.l.b16 %v505
      %v902 = vunpack.c.h.b16 %v505
      %v903 = vunpack.c.l.b16 %v506
      %v904 = vunpack.c.h.b16 %v506
      %v905 = vunpack.c.l.b16 %v507
      %v906 = vunpack.c.h.b16 %v507
      %v907 = vunpack.c.l.b16 %v508
      %v908 = vunpack.c.h.b16 %v508
      %v909 = vunpack.c.l.b16 %v509
      %v910 = vunpack.c.h.b16 %v509
      %v911 = vunpack.c.l.b16 %v510
      %v912 = vunpack.c.h.b16 %v510
      %v913 = vunpack.c.l.b16 %v511
      %v914 = vunpack.c.h.b16 %v511
      %v915 = vunpack.c.l.b16 %v512
      %v916 = vunpack.c.h.b16 %v512
      %v917 = vunpack.c.l.b16 %v513
      %v918 = vunpack.c.h.b16 %v513
      %v919 = vunpack.c.l.b16 %v514
      %v920 = vunpack.c.h.b16 %v514
      %v921 = vunpack.c.l.b16 %v515
      %v922 = vunpack.c.h.b16 %v515
      %v923 = vunpack.c.l.b16 %v516
      %v924 = vunpack.c.h.b16 %v516
      %v925 = vunpack.c.l.b16 %v517
      %v926 = vunpack.c.h.b16 %v517
      %v927 = vunpack.c.l.b16 %v518
      %v928 = vunpack.c.h.b16 %v518
      %v929 = vunpack.c.l.b16 %v519
      %v930 = vunpack.c.h.b16 %v519
      %v931 = vunpack.c.l.b16 %v520
      %v932 = vunpack.c.h.b16 %v520
      %v933 = vunpack.c.l.b16 %v521
      %v934 = vunpack.c.h.b16 %v521
      %v935 = vunpack.c.l.b16 %v522
      %v936 = vunpack.c.h.b16 %v522
      %v937 = vunpack.c.l.b16 %v523
      %v938 = vunpack.c.h.b16 %v523
      %v939 = vunpack.c.l.b16 %v524
      %v940 = vunpack.c.h.b16 %v524
      %v941 = vunpack.c.l.b16 %v525
      %v942 = vunpack.c.h.b16 %v525
      %v943 = vunpack.c.l.b16 %v526
      %v944 = vunpack.c.h.b16 %v526
      %v945 = vunpack.c.l.b16 %v527
      %v946 = vunpack.c.h.b16 %v527
      %v947 = vunpack.c.l.b16 %v528
      %v948 = vunpack.c.h.b16 %v528
      %v949 = vunpack.c.l.b16 %v529
      %v950 = vunpack.c.h.b16 %v529
      %v951 = vunpack.c.l.b16 %v530
      %v952 = vunpack.c.h.b16 %v530
      %v953 = vunpack.c.l.b16 %v531
      %v954 = vunpack.c.h.b16 %v531
      %v955 = vunpack.c.l.b16 %v532
      %v956 = vunpack.c.h.b16 %v532
      %v957 = vunpack.c.l.b16 %v533
      %v958 = vunpack.c.h.b16 %v533
      %v959 = vunpack.c.l.b16 %v534
      %v960 = vunpack.c.h.b16 %v534
      %v961 = vunpack.c.l.b16 %v535
      %v962 = vunpack.c.h.b16 %v535
      %v963 = vunpack.c.l.b16 %v536
      %v964 = vunpack.c.h.b16 %v536
      %v965 = vpack.c.b16 %v711, %v709
      %v966 = vpack.c.b16 %v712, %v710
      %v967 = vpack.c.b16 %v715, %v713
      %v968 = vpack.c.b16 %v716, %v714
      %v969 = vpack.c.b16 %v719, %v717
      %v970 = vpack.c.b16 %v720, %v718
      %v971 = vpack.c.b16 %v723, %v721
      %v972 = vpack.c.b16 %v724, %v722
      %v973 = vpack.c.b16 %v727, %v725
      %v974 = vpack.c.b16 %v728, %v726
      %v975 = vpack.c.b16 %v731, %v729
      %v976 = vpack.c.b16 %v732, %v730
      %v977 = vpack.c.b16 %v735, %v733
      %v978 = vpack.c.b16 %v736, %v734
      %v979 = vpack.c.b16 %v739, %v737
      %v980 = vpack.c.b16 %v740, %v738
      %v981 = vpack.c.b16 %v743, %v741
      %v982 = vpack.c.b16 %v744, %v742
      %v983 = vpack.c.b16 %v747, %v745
      %v984 = vpack.c.b16 %v748, %v746
      %v985 = vpack.c.b16 %v751, %v749
      %v986 = vpack.c.b16 %v752, %v750
      %v987 = vpack.c.b16 %v755, %v753
      %v988 = vpack.c.b16 %v756, %v754
      %v989 = vpack.c.b16 %v759, %v757
      %v990 = vpack.c.b16 %v760, %v758
      %v991 = vpack.c.b16 %v763, %v761
      %v992 = vpack.c.b16 %v764, %v762
      %v993 = vpack.c.b16 %v767, %v765
      %v994 = vpack.c.b16 %v768, %v766
      %v995 = vpack.c.b16 %v771, %v769
      %v996 = vpack.c.b16 %v772, %v770
      %v997 = vpack.c.b16 %v775, %v773
      %v998 = vpack.c.b16 %v776, %v774
      %v999 = vpack.c.b16 %v779, %v777
      %v1000 = vpack.c.b16 %v780, %v778
      %v1001 = vpack.c.b16 %v783, %v781
      %v1002 = vpack.c.b16 %v784, %v782
      %v1003 = vpack.c.b16 %v787, %v785
      %v1004 = vpack.c.b16 %v788, %v786
      %v1005 = vpack.c.b16 %v791, %v789
      %v1006 = vpack.c.b16 %v792, %v790
      %v1007 = vpack.c.b16 %v795, %v793
      %v1008 = vpack.c.b16 %v796, %v794
      %v1009 = vpack.c.b16 %v799, %v797
      %v1010 = vpack.c.b16 %v800, %v798
      %v1011 = vpack.c.b16 %v803, %v801
      %v1012 = vpack.c.b16 %v804, %v802
      %v1013 = vpack.c.b16 %v807, %v805
      %v1014 = vpack.c.b16 %v808, %v806
      %v1015 = vpack.c.b16 %v811, %v809
      %v1016 = vpack.c.b16 %v812, %v810
      %v1017 = vpack.c.b16 %v815, %v813
      %v1018 = vpack.c.b16 %v816, %v814
      %v1019 = vpack.c.b16 %v819, %v817
      %v1020 = vpack.c.b16 %v820, %v818
      %v1021 = vpack.c.b16 %v823, %v821
      %v1022 = vpack.c.b16 %v824, %v822
      %v1023 = vpack.c.b16 %v827, %v825
      %v1024 = vpack.c.b16 %v828, %v826
      %v1025 = vpack.c.b16 %v831, %v829
      %v1026 = vpack.c.b16 %v832, %v830
      %v1027 = vpack.c.b16 %v835, %v833
      %v1028 = vpack.c.b16 %v836, %v834
      %v1029 = vpack.c.b16 %v839, %v837
      %v1030 = vpack.c.b16 %v840, %v838
      %v1031 = vpack.c.b16 %v843, %v841
      %v1032 = vpack.c.b16 %v844, %v842
      %v1033 = vpack.c.b16 %v847, %v845
      %v1034 = vpack.c.b16 %v848, %v846
      %v1035 = vpack.c.b16 %v851, %v849
      %v1036 = vpack.c.b16 %v852, %v850
      %v1037 = vpack.c.b16 %v855, %v853
      %v1038 = vpack.c.b16 %v856, %v854
      %v1039 = vpack.c.b16 %v859, %v857
      %v1040 = vpack.c.b16 %v860, %v858
      %v1041 = vpack.c.b16 %v863, %v861
      %v1042 = vpack.c.b16 %v864, %v862
      %v1043 = vpack.c.b16 %v867, %v865
      %v1044 = vpack.c.b16 %v868, %v866
      %v1045 = vpack.c.b16 %v871, %v869
      %v1046 = vpack.c.b16 %v872, %v870
      %v1047 = vpack.c.b16 %v875, %v873
      %v1048 = vpack.c.b16 %v876, %v874
      %v1049 = vpack.c.b16 %v879, %v877
      %v1050 = vpack.c.b16 %v880, %v878
      %v1051 = vpack.c.b16 %v883, %v881
      %v1052 = vpack.c.b16 %v884, %v882
      %v1053 = vpack.c.b16 %v887, %v885
      %v1054 = vpack.c.b16 %v888, %v886
      %v1055 = vpack.c.b16 %v891, %v889
      %v1056 = vpack.c.b16 %v892, %v890
      %v1057 = vpack.c.b16 %v895, %v893
      %v1058 = vpack.c.b16 %v896, %v894
      %v1059 = vpack.c.b16 %v899, %v897
      %v1060 = vpack.c.b16 %v900, %v898
      %v1061 = vpack.c.b16 %v903, %v901
      %v1062 = vpack.c.b16 %v904, %v902
      %v1063 = vpack.c.b16 %v907, %v905
      %v1064 = vpack.c.b16 %v908, %v906
      %v1065 = vpack.c.b16 %v911, %v909
      %v1066 = vpack.c.b16 %v912, %v910
      %v1067 = vpack.c.b16 %v915, %v913
      %v1068 = vpack.c.b16 %v916, %v914
      %v1069 = vpack.c.b16 %v919, %v917
      %v1070 = vpack.c.b16 %v920, %v918
      %v1071 = vpack.c.b16 %v923, %v921
      %v1072 = vpack.c.b16 %v924, %v922
      %v1073 = vpack.c.b16 %v927, %v925
      %v1074 = vpack.c.b16 %v928, %v926
      %v1075 = vpack.c.b16 %v931, %v929
      %v1076 = vpack.c.b16 %v932, %v930
      %v1077 = vpack.c.b16 %v935, %v933
      %v1078 = vpack.c.b16 %v936, %v934
      %v1079 = vpack.c.b16 %v939, %v937
      %v1080 = vpack.c.b16 %v940, %v938
      %v1081 = vpack.c.b16 %v943, %v941
      %v1082 = vpack.c.b16 %v944, %v942
      %v1083 = vpack.c.b16 %v947, %v945
      %v1084 = vpack.c.b16 %v948, %v946
      %v1085 = vpack.c.b16 %v951, %v949
      %v1086 = vpack.c.b16 %v952, %v950
      %v1087 = vpack.c.b16 %v955, %v953
      %v1088 = vpack.c.b16 %v956, %v954
      %v1089 = vpack.c.b16 %v959, %v957
      %v1090 = vpack.c.b16 %v960, %v958
      %v1091 = vpack.c.b16 %v963, %v961
      %v1092 = vpack.c.b16 %v964, %v962
      %v1253 = vunpack.c.l.b16 %v537
      %v1254 = vunpack.c.h.b16 %v537
      %v1255 = vunpack.c.l.b16 %v538
      %v1256 = vunpack.c.h.b16 %v538
      %v1257 = vunpack.c.l.b16 %v539
      %v1258 = vunpack.c.h.b16 %v539
      %v1259 = vunpack.c.l.b16 %v540
      %v1260 = vunpack.c.h.b16 %v540
      %v1261 = vunpack.c.l.b16 %v541
      %v1262 = vunpack.c.h.b16 %v541
      %v1263 = vunpack.c.l.b16 %v542
      %v1264 = vunpack.c.h.b16 %v542
      %v1265 = vunpack.c.l.b16 %v543
      %v1266 = vunpack.c.h.b16 %v543
      %v1267 = vunpack.c.l.b16 %v544
      %v1268 = vunpack.c.h.b16 %v544
      %v1269 = vunpack.c.l.b16 %v545
      %v1270 = vunpack.c.h.b16 %v545
      %v1271 = vunpack.c.l.b16 %v546
      %v1272 = vunpack.c.h.b16 %v546
      %v1273 = vunpack.c.l.b16 %v547
      %v1274 = vunpack.c.h.b16 %v547
      %v1275 = vunpack.c.l.b16 %v548
      %v1276 = vunpack.c.h.b16 %v548
      %v1277 = vunpack.c.l.b16 %v549
      %v1278 = vunpack.c.h.b16 %v549
      %v1279 = vunpack.c.l.b16 %v550
      %v1280 = vunpack.c.h.b16 %v550
      %v1281 = vunpack.c.l.b16 %v551
      %v1282 = vunpack.c.h.b16 %v551
      %v1283 = vunpack.c.l.b16 %v552
      %v1284 = vunpack.c.h.b16 %v552
      %v1285 = vunpack.c.l.b16 %v553
      %v1286 = vunpack.c.h.b16 %v553
      %v1287 = vunpack.c.l.b16 %v554
      %v1288 = vunpack.c.h.b16 %v554
      %v1289 = vunpack.c.l.b16 %v555
      %v1290 = vunpack.c.h.b16 %v555
      %v1291 = vunpack.c.l.b16 %v556
      %v1292 = vunpack.c.h.b16 %v556
      %v1293 = vunpack.c.l.b16 %v557
      %v1294 = vunpack.c.h.b16 %v557
      %v1295 = vunpack.c.l.b16 %v558
      %v1296 = vunpack.c.h.b16 %v558
      %v1297 = vunpack.c.l.b16 %v559
      %v1298 = vunpack.c.h.b16 %v559
      %v1299 = vunpack.c.l.b16 %v560
      %v1300 = vunpack.c.h.b16 %v560
      %v1301 = vunpack.c.l.b16 %v561
      %v1302 = vunpack.c.h.b16 %v561
      %v1303 = vunpack.c.l.b16 %v562
      %v1304 = vunpack.c.h.b16 %v562
      %v1305 = vunpack.c.l.b16 %v563
      %v1306 = vunpack.c.h.b16 %v563
      %v1307 = vunpack.c.l.b16 %v564
      %v1308 = vunpack.c.h.b16 %v564
      %v1309 = vunpack.c.l.b16 %v565
      %v1310 = vunpack.c.h.b16 %v565
      %v1311 = vunpack.c.l.b16 %v566
      %v1312 = vunpack.c.h.b16 %v566
      %v1313 = vunpack.c.l.b16 %v567
      %v1314 = vunpack.c.h.b16 %v567
      %v1315 = vunpack.c.l.b16 %v568
      %v1316 = vunpack.c.h.b16 %v568
      %v1317 = vpack.c.b16 %v1255, %v1253
      %v1318 = vpack.c.b16 %v1256, %v1254
      %v1319 = vpack.c.b16 %v1259, %v1257
      %v1320 = vpack.c.b16 %v1260, %v1258
      %v1321 = vpack.c.b16 %v1263, %v1261
      %v1322 = vpack.c.b16 %v1264, %v1262
      %v1323 = vpack.c.b16 %v1267, %v1265
      %v1324 = vpack.c.b16 %v1268, %v1266
      %v1325 = vpack.c.b16 %v1271, %v1269
      %v1326 = vpack.c.b16 %v1272, %v1270
      %v1327 = vpack.c.b16 %v1275, %v1273
      %v1328 = vpack.c.b16 %v1276, %v1274
      %v1329 = vpack.c.b16 %v1279, %v1277
      %v1330 = vpack.c.b16 %v1280, %v1278
      %v1331 = vpack.c.b16 %v1283, %v1281
      %v1332 = vpack.c.b16 %v1284, %v1282
      %v1333 = vpack.c.b16 %v1287, %v1285
      %v1334 = vpack.c.b16 %v1288, %v1286
      %v1335 = vpack.c.b16 %v1291, %v1289
      %v1336 = vpack.c.b16 %v1292, %v1290
      %v1337 = vpack.c.b16 %v1295, %v1293
      %v1338 = vpack.c.b16 %v1296, %v1294
      %v1339 = vpack.c.b16 %v1299, %v1297
      %v1340 = vpack.c.b16 %v1300, %v1298
      %v1341 = vpack.c.b16 %v1303, %v1301
      %v1342 = vpack.c.b16 %v1304, %v1302
      %v1343 = vpack.c.b16 %v1307, %v1305
      %v1344 = vpack.c.b16 %v1308, %v1306
      %v1345 = vpack.c.b16 %v1311, %v1309
      %v1346 = vpack.c.b16 %v1312, %v1310
      %v1347 = vpack.c.b16 %v1315, %v1313
      %v1348 = vpack.c.b16 %v1316, %v1314
      %1381 = vmatprep.subr.bf16.mxu0 %v1318
      %1382 = vmatpush1.bf16.msra.mxu0 %v1317
      %1383 = vmatprep.subr.bf16.mxu0 %v1320
      %1384 = vmatpush1.bf16.msra.mxu0 %v1319
      %1385 = vmatprep.subr.bf16.mxu0 %v1322
      %1386 = vmatpush1.bf16.msra.mxu0 %v1321
      %1387 = vmatprep.subr.bf16.mxu0 %v1324
      %1388 = vmatpush1.bf16.msra.mxu0 %v1323
      %1389 = vmatprep.subr.bf16.mxu0 %v1326
      %1390 = vmatpush1.bf16.msra.mxu0 %v1325
      %1391 = vmatprep.subr.bf16.mxu0 %v1328
      %1392 = vmatpush1.bf16.msra.mxu0 %v1327
      %1393 = vmatprep.subr.bf16.mxu0 %v1330
      %1394 = vmatpush1.bf16.msra.mxu0 %v1329
      %1395 = vmatprep.subr.bf16.mxu0 %v1332
      %1396 = vmatpush1.bf16.msra.mxu0 %v1331
      %1397 = vmatprep.subr.bf16.mxu0 %v1334
      %1398 = vmatpush1.bf16.msra.mxu0 %v1333
      %1399 = vmatprep.subr.bf16.mxu0 %v1336
      %1400 = vmatpush1.bf16.msra.mxu0 %v1335
      %1401 = vmatprep.subr.bf16.mxu0 %v1338
      %1402 = vmatpush1.bf16.msra.mxu0 %v1337
      %1403 = vmatprep.subr.bf16.mxu0 %v1340
      %1404 = vmatpush1.bf16.msra.mxu0 %v1339
      %1405 = vmatprep.subr.bf16.mxu0 %v1342
      %1406 = vmatpush1.bf16.msra.mxu0 %v1341
      %1407 = vmatprep.subr.bf16.mxu0 %v1344
      %1408 = vmatpush1.bf16.msra.mxu0 %v1343
      %1409 = vmatprep.subr.bf16.mxu0 %v1346
      %1410 = vmatpush1.bf16.msra.mxu0 %v1345
      %1411 = vmatprep.subr.bf16.mxu0 %v1348
      %1412 = vmatpush1.bf16.msra.mxu0 %v1347
      %1413 = vmatprep.mubr.bf16.mxu0 %v966
      %1414 = vmatmul.mubr.bf16.gmra.mrb[0].mxu0 %v965
      %v1415 = vpop.f32.mrb[0].mxu0
      %v1416 = vadd.f32 %v574, %v1415
      %v1417 = vpop.f32.mrb[0].mxu0
      %v1418 = vadd.f32 %v578, %v1417
      %v1419 = vpop.f32.mrb[0].mxu0
      %v1420 = vadd.f32 %v574, %v1419
      %v1421 = vpop.f32.mrb[0].mxu0
      %v1422 = vadd.f32 %v578, %v1421
      %1423 = vmatprep.mubr.bf16.mxu0 %v968
      %1424 = vmatmul.mubr.bf16.gmra.mrb[0].mxu0 %v967
      %v1425 = vpop.f32.mrb[0].mxu0
      %v1426 = vadd.f32 %v574, %v1425
      %v1427 = vpop.f32.mrb[0].mxu0
      %v1428 = vadd.f32 %v578, %v1427
      %v1429 = vpop.f32.mrb[0].mxu0
      %v1430 = vadd.f32 %v574, %v1429
      %v1431 = vpop.f32.mrb[0].mxu0
      %v1432 = vadd.f32 %v578, %v1431
      %1433 = vmatprep.mubr.bf16.mxu0 %v970
      %1434 = vmatmul.mubr.bf16.gmra.mrb[0].mxu0 %v969
      %v1435 = vpop.f32.mrb[0].mxu0
      %v1436 = vadd.f32 %v574, %v1435
      %v1437 = vpop.f32.mrb[0].mxu0
      %v1438 = vadd.f32 %v578, %v1437
      %v1439 = vpop.f32.mrb[0].mxu0
      %v1440 = vadd.f32 %v574, %v1439
      %v1441 = vpop.f32.mrb[0].mxu0
      %v1442 = vadd.f32 %v578, %v1441
      %1443 = vmatprep.mubr.bf16.mxu0 %v972
      %1444 = vmatmul.mubr.bf16.gmra.mrb[0].mxu0 %v971
      %v1445 = vpop.f32.mrb[0].mxu0
      %v1446 = vadd.f32 %v574, %v1445
      %v1447 = vpop.f32.mrb[0].mxu0
      %v1448 = vadd.f32 %v578, %v1447
      %v1449 = vpop.f32.mrb[0].mxu0
      %v1450 = vadd.f32 %v574, %v1449
      %v1451 = vpop.f32.mrb[0].mxu0
      %v1452 = vadd.f32 %v578, %v1451
      %1453 = vmatprep.mubr.bf16.mxu0 %v974
      %1454 = vmatmul.mubr.bf16.gmra.mrb[0].mxu0 %v973
      %v1455 = vpop.f32.mrb[0].mxu0
      %v1456 = vadd.f32 %v574, %v1455
      %v1457 = vpop.f32.mrb[0].mxu0
      %v1458 = vadd.f32 %v578, %v1457
      %v1459 = vpop.f32.mrb[0].mxu0
      %v1460 = vadd.f32 %v574, %v1459
      %v1461 = vpop.f32.mrb[0].mxu0
      %v1462 = vadd.f32 %v578, %v1461
      %1463 = vmatprep.mubr.bf16.mxu0 %v976
      %1464 = vmatmul.mubr.bf16.gmra.mrb[0].mxu0 %v975
      %v1465 = vpop.f32.mrb[0].mxu0
      %v1466 = vadd.f32 %v574, %v1465
      %v1467 = vpop.f32.mrb[0].mxu0
      %v1468 = vadd.f32 %v578, %v1467
      %v1469 = vpop.f32.mrb[0].mxu0
      %v1470 = vadd.f32 %v574, %v1469
      %v1471 = vpop.f32.mrb[0].mxu0
      %v1472 = vadd.f32 %v578, %v1471
      %1473 = vmatprep.mubr.bf16.mxu0 %v978
      %1474 = vmatmul.mubr.bf16.gmra.mrb[0].mxu0 %v977
      %v1475 = vpop.f32.mrb[0].mxu0
      %v1476 = vadd.f32 %v574, %v1475
      %v1477 = vpop.f32.mrb[0].mxu0
      %v1478 = vadd.f32 %v578, %v1477
      %v1479 = vpop.f32.mrb[0].mxu0
      %v1480 = vadd.f32 %v574, %v1479
      %v1481 = vpop.f32.mrb[0].mxu0
      %v1482 = vadd.f32 %v578, %v1481
      %1483 = vmatprep.mubr.bf16.mxu0 %v980
      %1484 = vmatmul.mubr.bf16.gmra.mrb[0].mxu0 %v979
      %v1485 = vpop.f32.mrb[0].mxu0
      %v1486 = vadd.f32 %v574, %v1485
      %v1487 = vpop.f32.mrb[0].mxu0
      %v1488 = vadd.f32 %v578, %v1487
      %v1489 = vpop.f32.mrb[0].mxu0
      %v1490 = vadd.f32 %v574, %v1489
      %v1491 = vpop.f32.mrb[0].mxu0
      %v1492 = vadd.f32 %v578, %v1491
      %1493 = vmatprep.mubr.bf16.mxu0 %v982
      %1494 = vmatmul.mubr.bf16.gmra.mrb[0].mxu0 %v981
      %v1495 = vpop.f32.mrb[0].mxu0
      %v1496 = vadd.f32 %v574, %v1495
      %v1497 = vpop.f32.mrb[0].mxu0
      %v1498 = vadd.f32 %v578, %v1497
      %v1499 = vpop.f32.mrb[0].mxu0
      %v1500 = vadd.f32 %v574, %v1499
      %v1501 = vpop.f32.mrb[0].mxu0
      %v1502 = vadd.f32 %v578, %v1501
      %1503 = vmatprep.mubr.bf16.mxu0 %v984
      %1504 = vmatmul.mubr.bf16.gmra.mrb[0].mxu0 %v983
      %v1505 = vpop.f32.mrb[0].mxu0
      %v1506 = vadd.f32 %v574, %v1505
      %v1507 = vpop.f32.mrb[0].mxu0
      %v1508 = vadd.f32 %v578, %v1507
      %v1509 = vpop.f32.mrb[0].mxu0
      %v1510 = vadd.f32 %v574, %v1509
      %v1511 = vpop.f32.mrb[0].mxu0
      %v1512 = vadd.f32 %v578, %v1511
      %1513 = vmatprep.mubr.bf16.mxu0 %v986
      %1514 = vmatmul.mubr.bf16.gmra.mrb[0].mxu0 %v985
      %v1515 = vpop.f32.mrb[0].mxu0
      %v1516 = vadd.f32 %v574, %v1515
      %v1517 = vpop.f32.mrb[0].mxu0
      %v1518 = vadd.f32 %v578, %v1517
      %v1519 = vpop.f32.mrb[0].mxu0
      %v1520 = vadd.f32 %v574, %v1519
      %v1521 = vpop.f32.mrb[0].mxu0
      %v1522 = vadd.f32 %v578, %v1521
      %1523 = vmatprep.mubr.bf16.mxu0 %v988
      %1524 = vmatmul.mubr.bf16.gmra.mrb[0].mxu0 %v987
      %v1525 = vpop.f32.mrb[0].mxu0
      %v1526 = vadd.f32 %v574, %v1525
      %v1527 = vpop.f32.mrb[0].mxu0
      %v1528 = vadd.f32 %v578, %v1527
      %v1529 = vpop.f32.mrb[0].mxu0
      %v1530 = vadd.f32 %v574, %v1529
      %v1531 = vpop.f32.mrb[0].mxu0
      %v1532 = vadd.f32 %v578, %v1531
      %1533 = vmatprep.mubr.bf16.mxu0 %v990
      %1534 = vmatmul.mubr.bf16.gmra.mrb[0].mxu0 %v989
      %v1535 = vpop.f32.mrb[0].mxu0
      %v1536 = vadd.f32 %v574, %v1535
      %v1537 = vpop.f32.mrb[0].mxu0
      %v1538 = vadd.f32 %v578, %v1537
      %v1539 = vpop.f32.mrb[0].mxu0
      %v1540 = vadd.f32 %v574, %v1539
      %v1541 = vpop.f32.mrb[0].mxu0
      %v1542 = vadd.f32 %v578, %v1541
      %1543 = vmatprep.mubr.bf16.mxu0 %v992
      %1544 = vmatmul.mubr.bf16.gmra.mrb[0].mxu0 %v991
      %v1545 = vpop.f32.mrb[0].mxu0
      %v1546 = vadd.f32 %v574, %v1545
      %v1547 = vpop.f32.mrb[0].mxu0
      %v1548 = vadd.f32 %v578, %v1547
      %v1549 = vpop.f32.mrb[0].mxu0
      %v1550 = vadd.f32 %v574, %v1549
      %v1551 = vpop.f32.mrb[0].mxu0
      %v1552 = vadd.f32 %v578, %v1551
      %1553 = vmatprep.mubr.bf16.mxu0 %v994
      %1554 = vmatmul.mubr.bf16.gmra.mrb[0].mxu0 %v993
      %v1555 = vpop.f32.mrb[0].mxu0
      %v1556 = vadd.f32 %v574, %v1555
      %v1557 = vpop.f32.mrb[0].mxu0
      %v1558 = vadd.f32 %v578, %v1557
      %v1559 = vpop.f32.mrb[0].mxu0
      %v1560 = vadd.f32 %v574, %v1559
      %v1561 = vpop.f32.mrb[0].mxu0
      %v1562 = vadd.f32 %v578, %v1561
      %1563 = vmatprep.mubr.bf16.mxu0 %v996
      %1564 = vmatmul.mubr.bf16.gmra.mrb[0].mxu0 %v995
      %v1565 = vpop.f32.mrb[0].mxu0
      %v1566 = vadd.f32 %v574, %v1565
      %v1567 = vpop.f32.mrb[0].mxu0
      %v1568 = vadd.f32 %v578, %v1567
      %v1569 = vpop.f32.mrb[0].mxu0
      %v1570 = vadd.f32 %v574, %v1569
      %v1571 = vpop.f32.mrb[0].mxu0
      %v1572 = vadd.f32 %v578, %v1571
      %1573 = vmatprep.mubr.bf16.mxu0 %v998
      %1574 = vmatmul.mubr.bf16.gmra.mrb[0].mxu0 %v997
      %v1575 = vpop.f32.mrb[0].mxu0
      %v1576 = vadd.f32 %v574, %v1575
      %v1577 = vpop.f32.mrb[0].mxu0
      %v1578 = vadd.f32 %v578, %v1577
      %v1579 = vpop.f32.mrb[0].mxu0
      %v1580 = vadd.f32 %v574, %v1579
      %v1581 = vpop.f32.mrb[0].mxu0
      %v1582 = vadd.f32 %v578, %v1581
      %1583 = vmatprep.mubr.bf16.mxu0 %v1000
      %1584 = vmatmul.mubr.bf16.gmra.mrb[0].mxu0 %v999
      %v1585 = vpop.f32.mrb[0].mxu0
      %v1586 = vadd.f32 %v574, %v1585
      %v1587 = vpop.f32.mrb[0].mxu0
      %v1588 = vadd.f32 %v578, %v1587
      %v1589 = vpop.f32.mrb[0].mxu0
      %v1590 = vadd.f32 %v574, %v1589
      %v1591 = vpop.f32.mrb[0].mxu0
      %v1592 = vadd.f32 %v578, %v1591
      %1593 = vmatprep.mubr.bf16.mxu0 %v1002
      %1594 = vmatmul.mubr.bf16.gmra.mrb[0].mxu0 %v1001
      %v1595 = vpop.f32.mrb[0].mxu0
      %v1596 = vadd.f32 %v574, %v1595
      %v1597 = vpop.f32.mrb[0].mxu0
      %v1598 = vadd.f32 %v578, %v1597
      %v1599 = vpop.f32.mrb[0].mxu0
      %v1600 = vadd.f32 %v574, %v1599
      %v1601 = vpop.f32.mrb[0].mxu0
      %v1602 = vadd.f32 %v578, %v1601
      %1603 = vmatprep.mubr.bf16.mxu0 %v1004
      %1604 = vmatmul.mubr.bf16.gmra.mrb[0].mxu0 %v1003
      %v1605 = vpop.f32.mrb[0].mxu0
      %v1606 = vadd.f32 %v574, %v1605
      %v1607 = vpop.f32.mrb[0].mxu0
      %v1608 = vadd.f32 %v578, %v1607
      %v1609 = vpop.f32.mrb[0].mxu0
      %v1610 = vadd.f32 %v574, %v1609
      %v1611 = vpop.f32.mrb[0].mxu0
      %v1612 = vadd.f32 %v578, %v1611
      %1613 = vmatprep.mubr.bf16.mxu0 %v1006
      %1614 = vmatmul.mubr.bf16.gmra.mrb[0].mxu0 %v1005
      %v1615 = vpop.f32.mrb[0].mxu0
      %v1616 = vadd.f32 %v574, %v1615
      %v1617 = vpop.f32.mrb[0].mxu0
      %v1618 = vadd.f32 %v578, %v1617
      %v1619 = vpop.f32.mrb[0].mxu0
      %v1620 = vadd.f32 %v574, %v1619
      %v1621 = vpop.f32.mrb[0].mxu0
      %v1622 = vadd.f32 %v578, %v1621
      %1623 = vmatprep.mubr.bf16.mxu0 %v1008
      %1624 = vmatmul.mubr.bf16.gmra.mrb[0].mxu0 %v1007
      %v1625 = vpop.f32.mrb[0].mxu0
      %v1626 = vadd.f32 %v574, %v1625
      %v1627 = vpop.f32.mrb[0].mxu0
      %v1628 = vadd.f32 %v578, %v1627
      %v1629 = vpop.f32.mrb[0].mxu0
      %v1630 = vadd.f32 %v574, %v1629
      %v1631 = vpop.f32.mrb[0].mxu0
      %v1632 = vadd.f32 %v578, %v1631
      %1633 = vmatprep.mubr.bf16.mxu0 %v1010
      %1634 = vmatmul.mubr.bf16.gmra.mrb[0].mxu0 %v1009
      %v1635 = vpop.f32.mrb[0].mxu0
      %v1636 = vadd.f32 %v574, %v1635
      %v1637 = vpop.f32.mrb[0].mxu0
      %v1638 = vadd.f32 %v578, %v1637
      %v1639 = vpop.f32.mrb[0].mxu0
      %v1640 = vadd.f32 %v574, %v1639
      %v1641 = vpop.f32.mrb[0].mxu0
      %v1642 = vadd.f32 %v578, %v1641
      %1643 = vmatprep.mubr.bf16.mxu0 %v1012
      %1644 = vmatmul.mubr.bf16.gmra.mrb[0].mxu0 %v1011
      %v1645 = vpop.f32.mrb[0].mxu0
      %v1646 = vadd.f32 %v574, %v1645
      %v1647 = vpop.f32.mrb[0].mxu0
      %v1648 = vadd.f32 %v578, %v1647
      %v1649 = vpop.f32.mrb[0].mxu0
      %v1650 = vadd.f32 %v574, %v1649
      %v1651 = vpop.f32.mrb[0].mxu0
      %v1652 = vadd.f32 %v578, %v1651
      %1653 = vmatprep.mubr.bf16.mxu0 %v1014
      %1654 = vmatmul.mubr.bf16.gmra.mrb[0].mxu0 %v1013
      %v1655 = vpop.f32.mrb[0].mxu0
      %v1656 = vadd.f32 %v574, %v1655
      %v1657 = vpop.f32.mrb[0].mxu0
      %v1658 = vadd.f32 %v578, %v1657
      %v1659 = vpop.f32.mrb[0].mxu0
      %v1660 = vadd.f32 %v574, %v1659
      %v1661 = vpop.f32.mrb[0].mxu0
      %v1662 = vadd.f32 %v578, %v1661
      %1663 = vmatprep.mubr.bf16.mxu0 %v1016
      %1664 = vmatmul.mubr.bf16.gmra.mrb[0].mxu0 %v1015
      %v1665 = vpop.f32.mrb[0].mxu0
      %v1666 = vadd.f32 %v574, %v1665
      %v1667 = vpop.f32.mrb[0].mxu0
      %v1668 = vadd.f32 %v578, %v1667
      %v1669 = vpop.f32.mrb[0].mxu0
      %v1670 = vadd.f32 %v574, %v1669
      %v1671 = vpop.f32.mrb[0].mxu0
      %v1672 = vadd.f32 %v578, %v1671
      %1673 = vmatprep.mubr.bf16.mxu0 %v1018
      %1674 = vmatmul.mubr.bf16.gmra.mrb[0].mxu0 %v1017
      %v1675 = vpop.f32.mrb[0].mxu0
      %v1676 = vadd.f32 %v574, %v1675
      %v1677 = vpop.f32.mrb[0].mxu0
      %v1678 = vadd.f32 %v578, %v1677
      %v1679 = vpop.f32.mrb[0].mxu0
      %v1680 = vadd.f32 %v574, %v1679
      %v1681 = vpop.f32.mrb[0].mxu0
      %v1682 = vadd.f32 %v578, %v1681
      %1683 = vmatprep.mubr.bf16.mxu0 %v1020
      %1684 = vmatmul.mubr.bf16.gmra.mrb[0].mxu0 %v1019
      %v1685 = vpop.f32.mrb[0].mxu0
      %v1686 = vadd.f32 %v574, %v1685
      %v1687 = vpop.f32.mrb[0].mxu0
      %v1688 = vadd.f32 %v578, %v1687
      %v1689 = vpop.f32.mrb[0].mxu0
      %v1690 = vadd.f32 %v574, %v1689
      %v1691 = vpop.f32.mrb[0].mxu0
      %v1692 = vadd.f32 %v578, %v1691
      %1693 = vmatprep.mubr.bf16.mxu0 %v1022
      %1694 = vmatmul.mubr.bf16.gmra.mrb[0].mxu0 %v1021
      %v1695 = vpop.f32.mrb[0].mxu0
      %v1696 = vadd.f32 %v574, %v1695
      %v1697 = vpop.f32.mrb[0].mxu0
      %v1698 = vadd.f32 %v578, %v1697
      %v1699 = vpop.f32.mrb[0].mxu0
      %v1700 = vadd.f32 %v574, %v1699
      %v1701 = vpop.f32.mrb[0].mxu0
      %v1702 = vadd.f32 %v578, %v1701
      %1703 = vmatprep.mubr.bf16.mxu0 %v1024
      %1704 = vmatmul.mubr.bf16.gmra.mrb[0].mxu0 %v1023
      %v1705 = vpop.f32.mrb[0].mxu0
      %v1706 = vadd.f32 %v574, %v1705
      %v1707 = vpop.f32.mrb[0].mxu0
      %v1708 = vadd.f32 %v578, %v1707
      %v1709 = vpop.f32.mrb[0].mxu0
      %v1710 = vadd.f32 %v574, %v1709
      %v1711 = vpop.f32.mrb[0].mxu0
      %v1712 = vadd.f32 %v578, %v1711
      %1713 = vmatprep.mubr.bf16.mxu0 %v1026
      %1714 = vmatmul.mubr.bf16.gmra.mrb[0].mxu0 %v1025
      %v1715 = vpop.f32.mrb[0].mxu0
      %v1716 = vadd.f32 %v574, %v1715
      %v1717 = vpop.f32.mrb[0].mxu0
      %v1718 = vadd.f32 %v578, %v1717
      %v1719 = vpop.f32.mrb[0].mxu0
      %v1720 = vadd.f32 %v574, %v1719
      %v1721 = vpop.f32.mrb[0].mxu0
      %v1722 = vadd.f32 %v578, %v1721
      %1723 = vmatprep.mubr.bf16.mxu0 %v1028
      %1724 = vmatmul.mubr.bf16.gmra.mrb[0].mxu0 %v1027
      %v1725 = vpop.f32.mrb[0].mxu0
      %v1726 = vadd.f32 %v574, %v1725
      %v1727 = vpop.f32.mrb[0].mxu0
      %v1728 = vadd.f32 %v578, %v1727
      %v1729 = vpop.f32.mrb[0].mxu0
      %v1730 = vadd.f32 %v574, %v1729
      %v1731 = vpop.f32.mrb[0].mxu0
      %v1732 = vadd.f32 %v578, %v1731
      %1733 = vmatprep.mubr.bf16.mxu0 %v1030
      %1734 = vmatmul.mubr.bf16.gmra.mrb[0].mxu0 %v1029
      %v1735 = vpop.f32.mrb[0].mxu0
      %v1736 = vadd.f32 %v574, %v1735
      %v1737 = vpop.f32.mrb[0].mxu0
      %v1738 = vadd.f32 %v578, %v1737
      %v1739 = vpop.f32.mrb[0].mxu0
      %v1740 = vadd.f32 %v574, %v1739
      %v1741 = vpop.f32.mrb[0].mxu0
      %v1742 = vadd.f32 %v578, %v1741
      %1743 = vmatprep.mubr.bf16.mxu0 %v1032
      %1744 = vmatmul.mubr.bf16.gmra.mrb[0].mxu0 %v1031
      %v1745 = vpop.f32.mrb[0].mxu0
      %v1746 = vadd.f32 %v574, %v1745
      %v1747 = vpop.f32.mrb[0].mxu0
      %v1748 = vadd.f32 %v578, %v1747
      %v1749 = vpop.f32.mrb[0].mxu0
      %v1750 = vadd.f32 %v574, %v1749
      %v1751 = vpop.f32.mrb[0].mxu0
      %v1752 = vadd.f32 %v578, %v1751
      %1753 = vmatprep.mubr.bf16.mxu0 %v1034
      %1754 = vmatmul.mubr.bf16.gmra.mrb[0].mxu0 %v1033
      %v1755 = vpop.f32.mrb[0].mxu0
      %v1756 = vadd.f32 %v574, %v1755
      %v1757 = vpop.f32.mrb[0].mxu0
      %v1758 = vadd.f32 %v578, %v1757
      %v1759 = vpop.f32.mrb[0].mxu0
      %v1760 = vadd.f32 %v574, %v1759
      %v1761 = vpop.f32.mrb[0].mxu0
      %v1762 = vadd.f32 %v578, %v1761
      %1763 = vmatprep.mubr.bf16.mxu0 %v1036
      %1764 = vmatmul.mubr.bf16.gmra.mrb[0].mxu0 %v1035
      %v1765 = vpop.f32.mrb[0].mxu0
      %v1766 = vadd.f32 %v574, %v1765
      %v1767 = vpop.f32.mrb[0].mxu0
      %v1768 = vadd.f32 %v578, %v1767
      %v1769 = vpop.f32.mrb[0].mxu0
      %v1770 = vadd.f32 %v574, %v1769
      %v1771 = vpop.f32.mrb[0].mxu0
      %v1772 = vadd.f32 %v578, %v1771
      %1773 = vmatprep.mubr.bf16.mxu0 %v1038
      %1774 = vmatmul.mubr.bf16.gmra.mrb[0].mxu0 %v1037
      %v1775 = vpop.f32.mrb[0].mxu0
      %v1776 = vadd.f32 %v574, %v1775
      %v1777 = vpop.f32.mrb[0].mxu0
      %v1778 = vadd.f32 %v578, %v1777
      %v1779 = vpop.f32.mrb[0].mxu0
      %v1780 = vadd.f32 %v574, %v1779
      %v1781 = vpop.f32.mrb[0].mxu0
      %v1782 = vadd.f32 %v578, %v1781
      %1783 = vmatprep.mubr.bf16.mxu0 %v1040
      %1784 = vmatmul.mubr.bf16.gmra.mrb[0].mxu0 %v1039
      %v1785 = vpop.f32.mrb[0].mxu0
      %v1786 = vadd.f32 %v574, %v1785
      %v1787 = vpop.f32.mrb[0].mxu0
      %v1788 = vadd.f32 %v578, %v1787
      %v1789 = vpop.f32.mrb[0].mxu0
      %v1790 = vadd.f32 %v574, %v1789
      %v1791 = vpop.f32.mrb[0].mxu0
      %v1792 = vadd.f32 %v578, %v1791
      %1793 = vmatprep.mubr.bf16.mxu0 %v1042
      %1794 = vmatmul.mubr.bf16.gmra.mrb[0].mxu0 %v1041
      %v1795 = vpop.f32.mrb[0].mxu0
      %v1796 = vadd.f32 %v574, %v1795
      %v1797 = vpop.f32.mrb[0].mxu0
      %v1798 = vadd.f32 %v578, %v1797
      %v1799 = vpop.f32.mrb[0].mxu0
      %v1800 = vadd.f32 %v574, %v1799
      %v1801 = vpop.f32.mrb[0].mxu0
      %v1802 = vadd.f32 %v578, %v1801
      %1803 = vmatprep.mubr.bf16.mxu0 %v1044
      %1804 = vmatmul.mubr.bf16.gmra.mrb[0].mxu0 %v1043
      %v1805 = vpop.f32.mrb[0].mxu0
      %v1806 = vadd.f32 %v574, %v1805
      %v1807 = vpop.f32.mrb[0].mxu0
      %v1808 = vadd.f32 %v578, %v1807
      %v1809 = vpop.f32.mrb[0].mxu0
      %v1810 = vadd.f32 %v574, %v1809
      %v1811 = vpop.f32.mrb[0].mxu0
      %v1812 = vadd.f32 %v578, %v1811
      %1813 = vmatprep.mubr.bf16.mxu0 %v1046
      %1814 = vmatmul.mubr.bf16.gmra.mrb[0].mxu0 %v1045
      %v1815 = vpop.f32.mrb[0].mxu0
      %v1816 = vadd.f32 %v574, %v1815
      %v1817 = vpop.f32.mrb[0].mxu0
      %v1818 = vadd.f32 %v578, %v1817
      %v1819 = vpop.f32.mrb[0].mxu0
      %v1820 = vadd.f32 %v574, %v1819
      %v1821 = vpop.f32.mrb[0].mxu0
      %v1822 = vadd.f32 %v578, %v1821
      %1823 = vmatprep.mubr.bf16.mxu0 %v1048
      %1824 = vmatmul.mubr.bf16.gmra.mrb[0].mxu0 %v1047
      %v1825 = vpop.f32.mrb[0].mxu0
      %v1826 = vadd.f32 %v574, %v1825
      %v1827 = vpop.f32.mrb[0].mxu0
      %v1828 = vadd.f32 %v578, %v1827
      %v1829 = vpop.f32.mrb[0].mxu0
      %v1830 = vadd.f32 %v574, %v1829
      %v1831 = vpop.f32.mrb[0].mxu0
      %v1832 = vadd.f32 %v578, %v1831
      %1833 = vmatprep.mubr.bf16.mxu0 %v1050
      %1834 = vmatmul.mubr.bf16.gmra.mrb[0].mxu0 %v1049
      %v1835 = vpop.f32.mrb[0].mxu0
      %v1836 = vadd.f32 %v574, %v1835
      %v1837 = vpop.f32.mrb[0].mxu0
      %v1838 = vadd.f32 %v578, %v1837
      %v1839 = vpop.f32.mrb[0].mxu0
      %v1840 = vadd.f32 %v574, %v1839
      %v1841 = vpop.f32.mrb[0].mxu0
      %v1842 = vadd.f32 %v578, %v1841
      %1843 = vmatprep.mubr.bf16.mxu0 %v1052
      %1844 = vmatmul.mubr.bf16.gmra.mrb[0].mxu0 %v1051
      %v1845 = vpop.f32.mrb[0].mxu0
      %v1846 = vadd.f32 %v574, %v1845
      %v1847 = vpop.f32.mrb[0].mxu0
      %v1848 = vadd.f32 %v578, %v1847
      %v1849 = vpop.f32.mrb[0].mxu0
      %v1850 = vadd.f32 %v574, %v1849
      %v1851 = vpop.f32.mrb[0].mxu0
      %v1852 = vadd.f32 %v578, %v1851
      %1853 = vmatprep.mubr.bf16.mxu0 %v1054
      %1854 = vmatmul.mubr.bf16.gmra.mrb[0].mxu0 %v1053
      %v1855 = vpop.f32.mrb[0].mxu0
      %v1856 = vadd.f32 %v574, %v1855
      %v1857 = vpop.f32.mrb[0].mxu0
      %v1858 = vadd.f32 %v578, %v1857
      %v1859 = vpop.f32.mrb[0].mxu0
      %v1860 = vadd.f32 %v574, %v1859
      %v1861 = vpop.f32.mrb[0].mxu0
      %v1862 = vadd.f32 %v578, %v1861
      %1863 = vmatprep.mubr.bf16.mxu0 %v1056
      %1864 = vmatmul.mubr.bf16.gmra.mrb[0].mxu0 %v1055
      %v1865 = vpop.f32.mrb[0].mxu0
      %v1866 = vadd.f32 %v574, %v1865
      %v1867 = vpop.f32.mrb[0].mxu0
      %v1868 = vadd.f32 %v578, %v1867
      %v1869 = vpop.f32.mrb[0].mxu0
      %v1870 = vadd.f32 %v574, %v1869
      %v1871 = vpop.f32.mrb[0].mxu0
      %v1872 = vadd.f32 %v578, %v1871
      %1873 = vmatprep.mubr.bf16.mxu0 %v1058
      %1874 = vmatmul.mubr.bf16.gmra.mrb[0].mxu0 %v1057
      %v1875 = vpop.f32.mrb[0].mxu0
      %v1876 = vadd.f32 %v574, %v1875
      %v1877 = vpop.f32.mrb[0].mxu0
      %v1878 = vadd.f32 %v578, %v1877
      %v1879 = vpop.f32.mrb[0].mxu0
      %v1880 = vadd.f32 %v574, %v1879
      %v1881 = vpop.f32.mrb[0].mxu0
      %v1882 = vadd.f32 %v578, %v1881
      %1883 = vmatprep.mubr.bf16.mxu0 %v1060
      %1884 = vmatmul.mubr.bf16.gmra.mrb[0].mxu0 %v1059
      %v1885 = vpop.f32.mrb[0].mxu0
      %v1886 = vadd.f32 %v574, %v1885
      %v1887 = vpop.f32.mrb[0].mxu0
      %v1888 = vadd.f32 %v578, %v1887
      %v1889 = vpop.f32.mrb[0].mxu0
      %v1890 = vadd.f32 %v574, %v1889
      %v1891 = vpop.f32.mrb[0].mxu0
      %v1892 = vadd.f32 %v578, %v1891
      %1893 = vmatprep.mubr.bf16.mxu0 %v1062
      %1894 = vmatmul.mubr.bf16.gmra.mrb[0].mxu0 %v1061
      %v1895 = vpop.f32.mrb[0].mxu0
      %v1896 = vadd.f32 %v574, %v1895
      %v1897 = vpop.f32.mrb[0].mxu0
      %v1898 = vadd.f32 %v578, %v1897
      %v1899 = vpop.f32.mrb[0].mxu0
      %v1900 = vadd.f32 %v574, %v1899
      %v1901 = vpop.f32.mrb[0].mxu0
      %v1902 = vadd.f32 %v578, %v1901
      %1903 = vmatprep.mubr.bf16.mxu0 %v1064
      %1904 = vmatmul.mubr.bf16.gmra.mrb[0].mxu0 %v1063
      %v1905 = vpop.f32.mrb[0].mxu0
      %v1906 = vadd.f32 %v574, %v1905
      %v1907 = vpop.f32.mrb[0].mxu0
      %v1908 = vadd.f32 %v578, %v1907
      %v1909 = vpop.f32.mrb[0].mxu0
      %v1910 = vadd.f32 %v574, %v1909
      %v1911 = vpop.f32.mrb[0].mxu0
      %v1912 = vadd.f32 %v578, %v1911
      %1913 = vmatprep.mubr.bf16.mxu0 %v1066
      %1914 = vmatmul.mubr.bf16.gmra.mrb[0].mxu0 %v1065
      %v1915 = vpop.f32.mrb[0].mxu0
      %v1916 = vadd.f32 %v574, %v1915
      %v1917 = vpop.f32.mrb[0].mxu0
      %v1918 = vadd.f32 %v578, %v1917
      %v1919 = vpop.f32.mrb[0].mxu0
      %v1920 = vadd.f32 %v574, %v1919
      %v1921 = vpop.f32.mrb[0].mxu0
      %v1922 = vadd.f32 %v578, %v1921
      %1923 = vmatprep.mubr.bf16.mxu0 %v1068
      %1924 = vmatmul.mubr.bf16.gmra.mrb[0].mxu0 %v1067
      %v1925 = vpop.f32.mrb[0].mxu0
      %v1926 = vadd.f32 %v574, %v1925
      %v1927 = vpop.f32.mrb[0].mxu0
      %v1928 = vadd.f32 %v578, %v1927
      %v1929 = vpop.f32.mrb[0].mxu0
      %v1930 = vadd.f32 %v574, %v1929
      %v1931 = vpop.f32.mrb[0].mxu0
      %v1932 = vadd.f32 %v578, %v1931
      %1933 = vmatprep.mubr.bf16.mxu0 %v1070
      %1934 = vmatmul.mubr.bf16.gmra.mrb[0].mxu0 %v1069
      %v1935 = vpop.f32.mrb[0].mxu0
      %v1936 = vadd.f32 %v574, %v1935
      %v1937 = vpop.f32.mrb[0].mxu0
      %v1938 = vadd.f32 %v578, %v1937
      %v1939 = vpop.f32.mrb[0].mxu0
      %v1940 = vadd.f32 %v574, %v1939
      %v1941 = vpop.f32.mrb[0].mxu0
      %v1942 = vadd.f32 %v578, %v1941
      %1943 = vmatprep.mubr.bf16.mxu0 %v1072
      %1944 = vmatmul.mubr.bf16.gmra.mrb[0].mxu0 %v1071
      %v1945 = vpop.f32.mrb[0].mxu0
      %v1946 = vadd.f32 %v574, %v1945
      %v1947 = vpop.f32.mrb[0].mxu0
      %v1948 = vadd.f32 %v578, %v1947
      %v1949 = vpop.f32.mrb[0].mxu0
      %v1950 = vadd.f32 %v574, %v1949
      %v1951 = vpop.f32.mrb[0].mxu0
      %v1952 = vadd.f32 %v578, %v1951
      %1953 = vmatprep.mubr.bf16.mxu0 %v1074
      %1954 = vmatmul.mubr.bf16.gmra.mrb[0].mxu0 %v1073
      %v1955 = vpop.f32.mrb[0].mxu0
      %v1956 = vadd.f32 %v574, %v1955
      %v1957 = vpop.f32.mrb[0].mxu0
      %v1958 = vadd.f32 %v578, %v1957
      %v1959 = vpop.f32.mrb[0].mxu0
      %v1960 = vadd.f32 %v574, %v1959
      %v1961 = vpop.f32.mrb[0].mxu0
      %v1962 = vadd.f32 %v578, %v1961
      %1963 = vmatprep.mubr.bf16.mxu0 %v1076
      %1964 = vmatmul.mubr.bf16.gmra.mrb[0].mxu0 %v1075
      %v1965 = vpop.f32.mrb[0].mxu0
      %v1966 = vadd.f32 %v574, %v1965
      %v1967 = vpop.f32.mrb[0].mxu0
      %v1968 = vadd.f32 %v578, %v1967
      %v1969 = vpop.f32.mrb[0].mxu0
      %v1970 = vadd.f32 %v574, %v1969
      %v1971 = vpop.f32.mrb[0].mxu0
      %v1972 = vadd.f32 %v578, %v1971
      %1973 = vmatprep.mubr.bf16.mxu0 %v1078
      %1974 = vmatmul.mubr.bf16.gmra.mrb[0].mxu0 %v1077
      %v1975 = vpop.f32.mrb[0].mxu0
      %v1976 = vadd.f32 %v574, %v1975
      %v1977 = vpop.f32.mrb[0].mxu0
      %v1978 = vadd.f32 %v578, %v1977
      %v1979 = vpop.f32.mrb[0].mxu0
      %v1980 = vadd.f32 %v574, %v1979
      %v1981 = vpop.f32.mrb[0].mxu0
      %v1982 = vadd.f32 %v578, %v1981
      %1983 = vmatprep.mubr.bf16.mxu0 %v1080
      %1984 = vmatmul.mubr.bf16.gmra.mrb[0].mxu0 %v1079
      %v1985 = vpop.f32.mrb[0].mxu0
      %v1986 = vadd.f32 %v574, %v1985
      %v1987 = vpop.f32.mrb[0].mxu0
      %v1988 = vadd.f32 %v578, %v1987
      %v1989 = vpop.f32.mrb[0].mxu0
      %v1990 = vadd.f32 %v574, %v1989
      %v1991 = vpop.f32.mrb[0].mxu0
      %v1992 = vadd.f32 %v578, %v1991
      %1993 = vmatprep.mubr.bf16.mxu0 %v1082
      %1994 = vmatmul.mubr.bf16.gmra.mrb[0].mxu0 %v1081
      %v1995 = vpop.f32.mrb[0].mxu0
      %v1996 = vadd.f32 %v574, %v1995
      %v1997 = vpop.f32.mrb[0].mxu0
      %v1998 = vadd.f32 %v578, %v1997
      %v1999 = vpop.f32.mrb[0].mxu0
      %v2000 = vadd.f32 %v574, %v1999
      %v2001 = vpop.f32.mrb[0].mxu0
      %v2002 = vadd.f32 %v578, %v2001
      %2003 = vmatprep.mubr.bf16.mxu0 %v1084
      %2004 = vmatmul.mubr.bf16.gmra.mrb[0].mxu0 %v1083
      %v2005 = vpop.f32.mrb[0].mxu0
      %v2006 = vadd.f32 %v574, %v2005
      %v2007 = vpop.f32.mrb[0].mxu0
      %v2008 = vadd.f32 %v578, %v2007
      %v2009 = vpop.f32.mrb[0].mxu0
      %v2010 = vadd.f32 %v574, %v2009
      %v2011 = vpop.f32.mrb[0].mxu0
      %v2012 = vadd.f32 %v578, %v2011
      %2013 = vmatprep.mubr.bf16.mxu0 %v1086
      %2014 = vmatmul.mubr.bf16.gmra.mrb[0].mxu0 %v1085
      %v2015 = vpop.f32.mrb[0].mxu0
      %v2016 = vadd.f32 %v574, %v2015
      %v2017 = vpop.f32.mrb[0].mxu0
      %v2018 = vadd.f32 %v578, %v2017
      %v2019 = vpop.f32.mrb[0].mxu0
      %v2020 = vadd.f32 %v574, %v2019
      %v2021 = vpop.f32.mrb[0].mxu0
      %v2022 = vadd.f32 %v578, %v2021
      %2023 = vmatprep.mubr.bf16.mxu0 %v1088
      %2024 = vmatmul.mubr.bf16.gmra.mrb[0].mxu0 %v1087
      %v2025 = vpop.f32.mrb[0].mxu0
      %v2026 = vadd.f32 %v574, %v2025
      %v2027 = vpop.f32.mrb[0].mxu0
      %v2028 = vadd.f32 %v578, %v2027
      %v2029 = vpop.f32.mrb[0].mxu0
      %v2030 = vadd.f32 %v574, %v2029
      %v2031 = vpop.f32.mrb[0].mxu0
      %v2032 = vadd.f32 %v578, %v2031
      %2033 = vmatprep.mubr.bf16.mxu0 %v1090
      %2034 = vmatmul.mubr.bf16.gmra.mrb[0].mxu0 %v1089
      %v2035 = vpop.f32.mrb[0].mxu0
      %v2036 = vadd.f32 %v574, %v2035
      %v2037 = vpop.f32.mrb[0].mxu0
      %v2038 = vadd.f32 %v578, %v2037
      %v2039 = vpop.f32.mrb[0].mxu0
      %v2040 = vadd.f32 %v574, %v2039
      %v2041 = vpop.f32.mrb[0].mxu0
      %v2042 = vadd.f32 %v578, %v2041
      %2043 = vmatprep.mubr.bf16.mxu0 %v1092
      %2044 = vmatmul.mubr.bf16.gmra.mrb[0].mxu0 %v1091
      %v2045 = vpop.f32.mrb[0].mxu0
      %v2046 = vadd.f32 %v574, %v2045
      %v2047 = vpop.f32.mrb[0].mxu0
      %v2048 = vadd.f32 %v578, %v2047
      %v2049 = vpop.f32.mrb[0].mxu0
      %v2050 = vadd.f32 %v574, %v2049
      %v2051 = vpop.f32.mrb[0].mxu0
      %v2052 = vadd.f32 %v578, %v2051
      %2053 = vdwg.mxu0
      %v2054 = vmax.f32 %v1416, 0.0
      %v2055 = vmax.f32 %v1418, 0.0
      %v2056 = vmax.f32 %v1420, 0.0
      %v2057 = vmax.f32 %v1422, 0.0
      %v2058 = vmax.f32 %v1426, 0.0
      %v2059 = vmax.f32 %v1428, 0.0
      %v2060 = vmax.f32 %v1430, 0.0
      %v2061 = vmax.f32 %v1432, 0.0
      %v2062 = vmax.f32 %v1436, 0.0
      %v2063 = vmax.f32 %v1438, 0.0
      %v2064 = vmax.f32 %v1440, 0.0
      %v2065 = vmax.f32 %v1442, 0.0
      %v2066 = vmax.f32 %v1446, 0.0
      %v2067 = vmax.f32 %v1448, 0.0
      %v2068 = vmax.f32 %v1450, 0.0
      %v2069 = vmax.f32 %v1452, 0.0
      %v2070 = vmax.f32 %v1456, 0.0
      %v2071 = vmax.f32 %v1458, 0.0
      %v2072 = vmax.f32 %v1460, 0.0
      %v2073 = vmax.f32 %v1462, 0.0
      %v2074 = vmax.f32 %v1466, 0.0
      %v2075 = vmax.f32 %v1468, 0.0
      %v2076 = vmax.f32 %v1470, 0.0
      %v2077 = vmax.f32 %v1472, 0.0
      %v2078 = vmax.f32 %v1476, 0.0
      %v2079 = vmax.f32 %v1478, 0.0
      %v2080 = vmax.f32 %v1480, 0.0
      %v2081 = vmax.f32 %v1482, 0.0
      %v2082 = vmax.f32 %v1486, 0.0
      %v2083 = vmax.f32 %v1488, 0.0
      %v2084 = vmax.f32 %v1490, 0.0
      %v2085 = vmax.f32 %v1492, 0.0
      %v2086 = vmax.f32 %v1496, 0.0
      %v2087 = vmax.f32 %v1498, 0.0
      %v2088 = vmax.f32 %v1500, 0.0
      %v2089 = vmax.f32 %v1502, 0.0
      %v2090 = vmax.f32 %v1506, 0.0
      %v2091 = vmax.f32 %v1508, 0.0
      %v2092 = vmax.f32 %v1510, 0.0
      %v2093 = vmax.f32 %v1512, 0.0
      %v2094 = vmax.f32 %v1516, 0.0
      %v2095 = vmax.f32 %v1518, 0.0
      %v2096 = vmax.f32 %v1520, 0.0
      %v2097 = vmax.f32 %v1522, 0.0
      %v2098 = vmax.f32 %v1526, 0.0
      %v2099 = vmax.f32 %v1528, 0.0
      %v2100 = vmax.f32 %v1530, 0.0
      %v2101 = vmax.f32 %v1532, 0.0
      %v2102 = vmax.f32 %v1536, 0.0
      %v2103 = vmax.f32 %v1538, 0.0
      %v2104 = vmax.f32 %v1540, 0.0
      %v2105 = vmax.f32 %v1542, 0.0
      %v2106 = vmax.f32 %v1546, 0.0
      %v2107 = vmax.f32 %v1548, 0.0
      %v2108 = vmax.f32 %v1550, 0.0
      %v2109 = vmax.f32 %v1552, 0.0
      %v2110 = vmax.f32 %v1556, 0.0
      %v2111 = vmax.f32 %v1558, 0.0
      %v2112 = vmax.f32 %v1560, 0.0
      %v2113 = vmax.f32 %v1562, 0.0
      %v2114 = vmax.f32 %v1566, 0.0
      %v2115 = vmax.f32 %v1568, 0.0
      %v2116 = vmax.f32 %v1570, 0.0
      %v2117 = vmax.f32 %v1572, 0.0
      %v2118 = vmax.f32 %v1576, 0.0
      %v2119 = vmax.f32 %v1578, 0.0
      %v2120 = vmax.f32 %v1580, 0.0
      %v2121 = vmax.f32 %v1582, 0.0
      %v2122 = vmax.f32 %v1586, 0.0
      %v2123 = vmax.f32 %v1588, 0.0
      %v2124 = vmax.f32 %v1590, 0.0
      %v2125 = vmax.f32 %v1592, 0.0
      %v2126 = vmax.f32 %v1596, 0.0
      %v2127 = vmax.f32 %v1598, 0.0
      %v2128 = vmax.f32 %v1600, 0.0
      %v2129 = vmax.f32 %v1602, 0.0
      %v2130 = vmax.f32 %v1606, 0.0
      %v2131 = vmax.f32 %v1608, 0.0
      %v2132 = vmax.f32 %v1610, 0.0
      %v2133 = vmax.f32 %v1612, 0.0
      %v2134 = vmax.f32 %v1616, 0.0
      %v2135 = vmax.f32 %v1618, 0.0
      %v2136 = vmax.f32 %v1620, 0.0
      %v2137 = vmax.f32 %v1622, 0.0
      %v2138 = vmax.f32 %v1626, 0.0
      %v2139 = vmax.f32 %v1628, 0.0
      %v2140 = vmax.f32 %v1630, 0.0
      %v2141 = vmax.f32 %v1632, 0.0
      %v2142 = vmax.f32 %v1636, 0.0
      %v2143 = vmax.f32 %v1638, 0.0
      %v2144 = vmax.f32 %v1640, 0.0
      %v2145 = vmax.f32 %v1642, 0.0
      %v2146 = vmax.f32 %v1646, 0.0
      %v2147 = vmax.f32 %v1648, 0.0
      %v2148 = vmax.f32 %v1650, 0.0
      %v2149 = vmax.f32 %v1652, 0.0
      %v2150 = vmax.f32 %v1656, 0.0
      %v2151 = vmax.f32 %v1658, 0.0
      %v2152 = vmax.f32 %v1660, 0.0
      %v2153 = vmax.f32 %v1662, 0.0
      %v2154 = vmax.f32 %v1666, 0.0
      %v2155 = vmax.f32 %v1668, 0.0
      %v2156 = vmax.f32 %v1670, 0.0
      %v2157 = vmax.f32 %v1672, 0.0
      %v2158 = vmax.f32 %v1676, 0.0
      %v2159 = vmax.f32 %v1678, 0.0
      %v2160 = vmax.f32 %v1680, 0.0
      %v2161 = vmax.f32 %v1682, 0.0
      %v2162 = vmax.f32 %v1686, 0.0
      %v2163 = vmax.f32 %v1688, 0.0
      %v2164 = vmax.f32 %v1690, 0.0
      %v2165 = vmax.f32 %v1692, 0.0
      %v2166 = vmax.f32 %v1696, 0.0
      %v2167 = vmax.f32 %v1698, 0.0
      %v2168 = vmax.f32 %v1700, 0.0
      %v2169 = vmax.f32 %v1702, 0.0
      %v2170 = vmax.f32 %v1706, 0.0
      %v2171 = vmax.f32 %v1708, 0.0
      %v2172 = vmax.f32 %v1710, 0.0
      %v2173 = vmax.f32 %v1712, 0.0
      %v2174 = vmax.f32 %v1716, 0.0
      %v2175 = vmax.f32 %v1718, 0.0
      %v2176 = vmax.f32 %v1720, 0.0
      %v2177 = vmax.f32 %v1722, 0.0
      %v2178 = vmax.f32 %v1726, 0.0
      %v2179 = vmax.f32 %v1728, 0.0
      %v2180 = vmax.f32 %v1730, 0.0
      %v2181 = vmax.f32 %v1732, 0.0
      %v2182 = vmax.f32 %v1736, 0.0
      %v2183 = vmax.f32 %v1738, 0.0
      %v2184 = vmax.f32 %v1740, 0.0
      %v2185 = vmax.f32 %v1742, 0.0
      %v2186 = vmax.f32 %v1746, 0.0
      %v2187 = vmax.f32 %v1748, 0.0
      %v2188 = vmax.f32 %v1750, 0.0
      %v2189 = vmax.f32 %v1752, 0.0
      %v2190 = vmax.f32 %v1756, 0.0
      %v2191 = vmax.f32 %v1758, 0.0
      %v2192 = vmax.f32 %v1760, 0.0
      %v2193 = vmax.f32 %v1762, 0.0
      %v2194 = vmax.f32 %v1766, 0.0
      %v2195 = vmax.f32 %v1768, 0.0
      %v2196 = vmax.f32 %v1770, 0.0
      %v2197 = vmax.f32 %v1772, 0.0
      %v2198 = vmax.f32 %v1776, 0.0
      %v2199 = vmax.f32 %v1778, 0.0
      %v2200 = vmax.f32 %v1780, 0.0
      %v2201 = vmax.f32 %v1782, 0.0
      %v2202 = vmax.f32 %v1786, 0.0
      %v2203 = vmax.f32 %v1788, 0.0
      %v2204 = vmax.f32 %v1790, 0.0
      %v2205 = vmax.f32 %v1792, 0.0
      %v2206 = vmax.f32 %v1796, 0.0
      %v2207 = vmax.f32 %v1798, 0.0
      %v2208 = vmax.f32 %v1800, 0.0
      %v2209 = vmax.f32 %v1802, 0.0
      %v2210 = vmax.f32 %v1806, 0.0
      %v2211 = vmax.f32 %v1808, 0.0
      %v2212 = vmax.f32 %v1810, 0.0
      %v2213 = vmax.f32 %v1812, 0.0
      %v2214 = vmax.f32 %v1816, 0.0
      %v2215 = vmax.f32 %v1818, 0.0
      %v2216 = vmax.f32 %v1820, 0.0
      %v2217 = vmax.f32 %v1822, 0.0
      %v2218 = vmax.f32 %v1826, 0.0
      %v2219 = vmax.f32 %v1828, 0.0
      %v2220 = vmax.f32 %v1830, 0.0
      %v2221 = vmax.f32 %v1832, 0.0
      %v2222 = vmax.f32 %v1836, 0.0
      %v2223 = vmax.f32 %v1838, 0.0
      %v2224 = vmax.f32 %v1840, 0.0
      %v2225 = vmax.f32 %v1842, 0.0
      %v2226 = vmax.f32 %v1846, 0.0
      %v2227 = vmax.f32 %v1848, 0.0
      %v2228 = vmax.f32 %v1850, 0.0
      %v2229 = vmax.f32 %v1852, 0.0
      %v2230 = vmax.f32 %v1856, 0.0
      %v2231 = vmax.f32 %v1858, 0.0
      %v2232 = vmax.f32 %v1860, 0.0
      %v2233 = vmax.f32 %v1862, 0.0
      %v2234 = vmax.f32 %v1866, 0.0
      %v2235 = vmax.f32 %v1868, 0.0
      %v2236 = vmax.f32 %v1870, 0.0
      %v2237 = vmax.f32 %v1872, 0.0
      %v2238 = vmax.f32 %v1876, 0.0
      %v2239 = vmax.f32 %v1878, 0.0
      %v2240 = vmax.f32 %v1880, 0.0
      %v2241 = vmax.f32 %v1882, 0.0
      %v2242 = vmax.f32 %v1886, 0.0
      %v2243 = vmax.f32 %v1888, 0.0
      %v2244 = vmax.f32 %v1890, 0.0
      %v2245 = vmax.f32 %v1892, 0.0
      %v2246 = vmax.f32 %v1896, 0.0
      %v2247 = vmax.f32 %v1898, 0.0
      %v2248 = vmax.f32 %v1900, 0.0
      %v2249 = vmax.f32 %v1902, 0.0
      %v2250 = vmax.f32 %v1906, 0.0
      %v2251 = vmax.f32 %v1908, 0.0
      %v2252 = vmax.f32 %v1910, 0.0
      %v2253 = vmax.f32 %v1912, 0.0
      %v2254 = vmax.f32 %v1916, 0.0
      %v2255 = vmax.f32 %v1918, 0.0
      %v2256 = vmax.f32 %v1920, 0.0
      %v2257 = vmax.f32 %v1922, 0.0
      %v2258 = vmax.f32 %v1926, 0.0
      %v2259 = vmax.f32 %v1928, 0.0
      %v2260 = vmax.f32 %v1930, 0.0
      %v2261 = vmax.f32 %v1932, 0.0
      %v2262 = vmax.f32 %v1936, 0.0
      %v2263 = vmax.f32 %v1938, 0.0
      %v2264 = vmax.f32 %v1940, 0.0
      %v2265 = vmax.f32 %v1942, 0.0
      %v2266 = vmax.f32 %v1946, 0.0
      %v2267 = vmax.f32 %v1948, 0.0
      %v2268 = vmax.f32 %v1950, 0.0
      %v2269 = vmax.f32 %v1952, 0.0
      %v2270 = vmax.f32 %v1956, 0.0
      %v2271 = vmax.f32 %v1958, 0.0
      %v2272 = vmax.f32 %v1960, 0.0
      %v2273 = vmax.f32 %v1962, 0.0
      %v2274 = vmax.f32 %v1966, 0.0
      %v2275 = vmax.f32 %v1968, 0.0
      %v2276 = vmax.f32 %v1970, 0.0
      %v2277 = vmax.f32 %v1972, 0.0
      %v2278 = vmax.f32 %v1976, 0.0
      %v2279 = vmax.f32 %v1978, 0.0
      %v2280 = vmax.f32 %v1980, 0.0
      %v2281 = vmax.f32 %v1982, 0.0
      %v2282 = vmax.f32 %v1986, 0.0
      %v2283 = vmax.f32 %v1988, 0.0
      %v2284 = vmax.f32 %v1990, 0.0
      %v2285 = vmax.f32 %v1992, 0.0
      %v2286 = vmax.f32 %v1996, 0.0
      %v2287 = vmax.f32 %v1998, 0.0
      %v2288 = vmax.f32 %v2000, 0.0
      %v2289 = vmax.f32 %v2002, 0.0
      %v2290 = vmax.f32 %v2006, 0.0
      %v2291 = vmax.f32 %v2008, 0.0
      %v2292 = vmax.f32 %v2010, 0.0
      %v2293 = vmax.f32 %v2012, 0.0
      %v2294 = vmax.f32 %v2016, 0.0
      %v2295 = vmax.f32 %v2018, 0.0
      %v2296 = vmax.f32 %v2020, 0.0
      %v2297 = vmax.f32 %v2022, 0.0
      %v2298 = vmax.f32 %v2026, 0.0
      %v2299 = vmax.f32 %v2028, 0.0
      %v2300 = vmax.f32 %v2030, 0.0
      %v2301 = vmax.f32 %v2032, 0.0
      %v2302 = vmax.f32 %v2036, 0.0
      %v2303 = vmax.f32 %v2038, 0.0
      %v2304 = vmax.f32 %v2040, 0.0
      %v2305 = vmax.f32 %v2042, 0.0
      %v2306 = vmax.f32 %v2046, 0.0
      %v2307 = vmax.f32 %v2048, 0.0
      %v2308 = vmax.f32 %v2050, 0.0
      %v2309 = vmax.f32 %v2052, 0.0
      %v2310 = vpack.c.bf16 %v2056, %v2054
      %v2311 = vpack.c.bf16 %v2057, %v2055
      %v2312 = vpack.c.bf16 %v2060, %v2058
      %v2313 = vpack.c.bf16 %v2061, %v2059
      %v2314 = vpack.c.bf16 %v2064, %v2062
      %v2315 = vpack.c.bf16 %v2065, %v2063
      %v2316 = vpack.c.bf16 %v2068, %v2066
      %v2317 = vpack.c.bf16 %v2069, %v2067
      %v2318 = vpack.c.bf16 %v2072, %v2070
      %v2319 = vpack.c.bf16 %v2073, %v2071
      %v2320 = vpack.c.bf16 %v2076, %v2074
      %v2321 = vpack.c.bf16 %v2077, %v2075
      %v2322 = vpack.c.bf16 %v2080, %v2078
      %v2323 = vpack.c.bf16 %v2081, %v2079
      %v2324 = vpack.c.bf16 %v2084, %v2082
      %v2325 = vpack.c.bf16 %v2085, %v2083
      %v2326 = vpack.c.bf16 %v2088, %v2086
      %v2327 = vpack.c.bf16 %v2089, %v2087
      %v2328 = vpack.c.bf16 %v2092, %v2090
      %v2329 = vpack.c.bf16 %v2093, %v2091
      %v2330 = vpack.c.bf16 %v2096, %v2094
      %v2331 = vpack.c.bf16 %v2097, %v2095
      %v2332 = vpack.c.bf16 %v2100, %v2098
      %v2333 = vpack.c.bf16 %v2101, %v2099
      %v2334 = vpack.c.bf16 %v2104, %v2102
      %v2335 = vpack.c.bf16 %v2105, %v2103
      %v2336 = vpack.c.bf16 %v2108, %v2106
      %v2337 = vpack.c.bf16 %v2109, %v2107
      %v2338 = vpack.c.bf16 %v2112, %v2110
      %v2339 = vpack.c.bf16 %v2113, %v2111
      %v2340 = vpack.c.bf16 %v2116, %v2114
      %v2341 = vpack.c.bf16 %v2117, %v2115
      %v2342 = vpack.c.bf16 %v2120, %v2118
      %v2343 = vpack.c.bf16 %v2121, %v2119
      %v2344 = vpack.c.bf16 %v2124, %v2122
      %v2345 = vpack.c.bf16 %v2125, %v2123
      %v2346 = vpack.c.bf16 %v2128, %v2126
      %v2347 = vpack.c.bf16 %v2129, %v2127
      %v2348 = vpack.c.bf16 %v2132, %v2130
      %v2349 = vpack.c.bf16 %v2133, %v2131
      %v2350 = vpack.c.bf16 %v2136, %v2134
      %v2351 = vpack.c.bf16 %v2137, %v2135
      %v2352 = vpack.c.bf16 %v2140, %v2138
      %v2353 = vpack.c.bf16 %v2141, %v2139
      %v2354 = vpack.c.bf16 %v2144, %v2142
      %v2355 = vpack.c.bf16 %v2145, %v2143
      %v2356 = vpack.c.bf16 %v2148, %v2146
      %v2357 = vpack.c.bf16 %v2149, %v2147
      %v2358 = vpack.c.bf16 %v2152, %v2150
      %v2359 = vpack.c.bf16 %v2153, %v2151
      %v2360 = vpack.c.bf16 %v2156, %v2154
      %v2361 = vpack.c.bf16 %v2157, %v2155
      %v2362 = vpack.c.bf16 %v2160, %v2158
      %v2363 = vpack.c.bf16 %v2161, %v2159
      %v2364 = vpack.c.bf16 %v2164, %v2162
      %v2365 = vpack.c.bf16 %v2165, %v2163
      %v2366 = vpack.c.bf16 %v2168, %v2166
      %v2367 = vpack.c.bf16 %v2169, %v2167
      %v2368 = vpack.c.bf16 %v2172, %v2170
      %v2369 = vpack.c.bf16 %v2173, %v2171
      %v2370 = vpack.c.bf16 %v2176, %v2174
      %v2371 = vpack.c.bf16 %v2177, %v2175
      %v2372 = vpack.c.bf16 %v2180, %v2178
      %v2373 = vpack.c.bf16 %v2181, %v2179
      %v2374 = vpack.c.bf16 %v2184, %v2182
      %v2375 = vpack.c.bf16 %v2185, %v2183
      %v2376 = vpack.c.bf16 %v2188, %v2186
      %v2377 = vpack.c.bf16 %v2189, %v2187
      %v2378 = vpack.c.bf16 %v2192, %v2190
      %v2379 = vpack.c.bf16 %v2193, %v2191
      %v2380 = vpack.c.bf16 %v2196, %v2194
      %v2381 = vpack.c.bf16 %v2197, %v2195
      %v2382 = vpack.c.bf16 %v2200, %v2198
      %v2383 = vpack.c.bf16 %v2201, %v2199
      %v2384 = vpack.c.bf16 %v2204, %v2202
      %v2385 = vpack.c.bf16 %v2205, %v2203
      %v2386 = vpack.c.bf16 %v2208, %v2206
      %v2387 = vpack.c.bf16 %v2209, %v2207
      %v2388 = vpack.c.bf16 %v2212, %v2210
      %v2389 = vpack.c.bf16 %v2213, %v2211
      %v2390 = vpack.c.bf16 %v2216, %v2214
      %v2391 = vpack.c.bf16 %v2217, %v2215
      %v2392 = vpack.c.bf16 %v2220, %v2218
      %v2393 = vpack.c.bf16 %v2221, %v2219
      %v2394 = vpack.c.bf16 %v2224, %v2222
      %v2395 = vpack.c.bf16 %v2225, %v2223
      %v2396 = vpack.c.bf16 %v2228, %v2226
      %v2397 = vpack.c.bf16 %v2229, %v2227
      %v2398 = vpack.c.bf16 %v2232, %v2230
      %v2399 = vpack.c.bf16 %v2233, %v2231
      %v2400 = vpack.c.bf16 %v2236, %v2234
      %v2401 = vpack.c.bf16 %v2237, %v2235
      %v2402 = vpack.c.bf16 %v2240, %v2238
      %v2403 = vpack.c.bf16 %v2241, %v2239
      %v2404 = vpack.c.bf16 %v2244, %v2242
      %v2405 = vpack.c.bf16 %v2245, %v2243
      %v2406 = vpack.c.bf16 %v2248, %v2246
      %v2407 = vpack.c.bf16 %v2249, %v2247
      %v2408 = vpack.c.bf16 %v2252, %v2250
      %v2409 = vpack.c.bf16 %v2253, %v2251
      %v2410 = vpack.c.bf16 %v2256, %v2254
      %v2411 = vpack.c.bf16 %v2257, %v2255
      %v2412 = vpack.c.bf16 %v2260, %v2258
      %v2413 = vpack.c.bf16 %v2261, %v2259
      %v2414 = vpack.c.bf16 %v2264, %v2262
      %v2415 = vpack.c.bf16 %v2265, %v2263
      %v2416 = vpack.c.bf16 %v2268, %v2266
      %v2417 = vpack.c.bf16 %v2269, %v2267
      %v2418 = vpack.c.bf16 %v2272, %v2270
      %v2419 = vpack.c.bf16 %v2273, %v2271
      %v2420 = vpack.c.bf16 %v2276, %v2274
      %v2421 = vpack.c.bf16 %v2277, %v2275
      %v2422 = vpack.c.bf16 %v2280, %v2278
      %v2423 = vpack.c.bf16 %v2281, %v2279
      %v2424 = vpack.c.bf16 %v2284, %v2282
      %v2425 = vpack.c.bf16 %v2285, %v2283
      %v2426 = vpack.c.bf16 %v2288, %v2286
      %v2427 = vpack.c.bf16 %v2289, %v2287
      %v2428 = vpack.c.bf16 %v2292, %v2290
      %v2429 = vpack.c.bf16 %v2293, %v2291
      %v2430 = vpack.c.bf16 %v2296, %v2294
      %v2431 = vpack.c.bf16 %v2297, %v2295
      %v2432 = vpack.c.bf16 %v2300, %v2298
      %v2433 = vpack.c.bf16 %v2301, %v2299
      %v2434 = vpack.c.bf16 %v2304, %v2302
      %v2435 = vpack.c.bf16 %v2305, %v2303
      %v2436 = vpack.c.bf16 %v2308, %v2306
      %v2437 = vpack.c.bf16 %v2309, %v2307
      %v2438 = vld [vmem:[%s4] sm:$0xf]
      %v2439 = vld [vmem:[%s4 + $0x4] sm:$0xf]
      %v2440 = vld [vmem:[%s4 + $0x8] sm:$0xf]
      %v2441 = vld [vmem:[%s4 + $0xc] sm:$0xf]
      %v2442 = vld [vmem:[%s4 + $0x10] sm:$0xf]
      %v2443 = vld [vmem:[%s4 + $0x14] sm:$0xf]
      %v2444 = vld [vmem:[%s4 + $0x18] sm:$0xf]
      %v2445 = vld [vmem:[%s4 + $0x1c] sm:$0xf]
      %v2446 = vld [vmem:[%s4 + $0x20] sm:$0xf]
      %v2447 = vld [vmem:[%s4 + $0x24] sm:$0xf]
      %v2448 = vld [vmem:[%s4 + $0x28] sm:$0xf]
      %v2449 = vld [vmem:[%s4 + $0x2c] sm:$0xf]
      %v2450 = vld [vmem:[%s4 + $0x30] sm:$0xf]
      %v2451 = vld [vmem:[%s4 + $0x34] sm:$0xf]
      %v2452 = vld [vmem:[%s4 + $0x38] sm:$0xf]
      %v2453 = vld [vmem:[%s4 + $0x3c] sm:$0xf]
      %v2454 = vld [vmem:[%s4 + $0x40] sm:$0xf]
      %v2455 = vld [vmem:[%s4 + $0x44] sm:$0xf]
      %v2456 = vld [vmem:[%s4 + $0x48] sm:$0xf]
      %v2457 = vld [vmem:[%s4 + $0x4c] sm:$0xf]
      %v2458 = vld [vmem:[%s4 + $0x50] sm:$0xf]
      %v2459 = vld [vmem:[%s4 + $0x54] sm:$0xf]
      %v2460 = vld [vmem:[%s4 + $0x58] sm:$0xf]
      %v2461 = vld [vmem:[%s4 + $0x5c] sm:$0xf]
      %v2462 = vld [vmem:[%s4 + $0x60] sm:$0xf]
      %v2463 = vld [vmem:[%s4 + $0x64] sm:$0xf]
      %v2464 = vld [vmem:[%s4 + $0x68] sm:$0xf]
      %v2465 = vld [vmem:[%s4 + $0x6c] sm:$0xf]
      %v2466 = vld [vmem:[%s4 + $0x70] sm:$0xf]
      %v2467 = vld [vmem:[%s4 + $0x74] sm:$0xf]
      %v2468 = vld [vmem:[%s4 + $0x78] sm:$0xf]
      %v2469 = vld [vmem:[%s4 + $0x7c] sm:$0xf]
      %v2470 = vld [vmem:[%s5] sm:$0x1]
      %v2472 = vlaneseq
      %v2473 = vshrl.u32 %v2472, 7
      %v2474 = vsub.s32 0, %v2473
      %v2475 = vrot.slane %v2470, %v2474
      %v2509 = vunpack.c.l.b16 %v2438
      %v2510 = vunpack.c.l.b16 %v2439
      %v2511 = vunpack.c.l.b16 %v2440
      %v2512 = vunpack.c.l.b16 %v2441
      %v2513 = vunpack.c.l.b16 %v2442
      %v2514 = vunpack.c.l.b16 %v2443
      %v2515 = vunpack.c.l.b16 %v2444
      %v2516 = vunpack.c.l.b16 %v2445
      %v2517 = vunpack.c.l.b16 %v2446
      %v2518 = vunpack.c.l.b16 %v2447
      %v2519 = vunpack.c.l.b16 %v2448
      %v2520 = vunpack.c.l.b16 %v2449
      %v2521 = vunpack.c.l.b16 %v2450
      %v2522 = vunpack.c.l.b16 %v2451
      %v2523 = vunpack.c.l.b16 %v2452
      %v2524 = vunpack.c.l.b16 %v2453
      %v2525 = vunpack.c.l.b16 %v2454
      %v2526 = vunpack.c.l.b16 %v2455
      %v2527 = vunpack.c.l.b16 %v2456
      %v2528 = vunpack.c.l.b16 %v2457
      %v2529 = vunpack.c.l.b16 %v2458
      %v2530 = vunpack.c.l.b16 %v2459
      %v2531 = vunpack.c.l.b16 %v2460
      %v2532 = vunpack.c.l.b16 %v2461
      %v2533 = vunpack.c.l.b16 %v2462
      %v2534 = vunpack.c.l.b16 %v2463
      %v2535 = vunpack.c.l.b16 %v2464
      %v2536 = vunpack.c.l.b16 %v2465
      %v2537 = vunpack.c.l.b16 %v2466
      %v2538 = vunpack.c.l.b16 %v2467
      %v2539 = vunpack.c.l.b16 %v2468
      %v2540 = vunpack.c.l.b16 %v2469
      %v2541 = vpack.c.b16 %v2510, %v2509
      %v2542 = vpack.c.b16 %v2512, %v2511
      %v2543 = vpack.c.b16 %v2514, %v2513
      %v2544 = vpack.c.b16 %v2516, %v2515
      %v2545 = vpack.c.b16 %v2518, %v2517
      %v2546 = vpack.c.b16 %v2520, %v2519
      %v2547 = vpack.c.b16 %v2522, %v2521
      %v2548 = vpack.c.b16 %v2524, %v2523
      %v2549 = vpack.c.b16 %v2526, %v2525
      %v2550 = vpack.c.b16 %v2528, %v2527
      %v2551 = vpack.c.b16 %v2530, %v2529
      %v2552 = vpack.c.b16 %v2532, %v2531
      %v2553 = vpack.c.b16 %v2534, %v2533
      %v2554 = vpack.c.b16 %v2536, %v2535
      %v2555 = vpack.c.b16 %v2538, %v2537
      %v2556 = vpack.c.b16 %v2540, %v2539
      %2573 = vmatprep.subr.bf16.mxu0 0
      %2574 = vmatpush1.bf16.msra.mxu0 %v2541
      %2575 = vmatprep.subr.bf16.mxu0 0
      %2576 = vmatpush1.bf16.msra.mxu0 %v2542
      %2577 = vmatprep.subr.bf16.mxu0 0
      %2578 = vmatpush1.bf16.msra.mxu0 %v2543
      %2579 = vmatprep.subr.bf16.mxu0 0
      %2580 = vmatpush1.bf16.msra.mxu0 %v2544
      %2581 = vmatprep.subr.bf16.mxu0 0
      %2582 = vmatpush1.bf16.msra.mxu0 %v2545
      %2583 = vmatprep.subr.bf16.mxu0 0
      %2584 = vmatpush1.bf16.msra.mxu0 %v2546
      %2585 = vmatprep.subr.bf16.mxu0 0
      %2586 = vmatpush1.bf16.msra.mxu0 %v2547
      %2587 = vmatprep.subr.bf16.mxu0 0
      %2588 = vmatpush1.bf16.msra.mxu0 %v2548
      %2589 = vmatprep.subr.bf16.mxu0 0
      %2590 = vmatpush1.bf16.msra.mxu0 %v2549
      %2591 = vmatprep.subr.bf16.mxu0 0
      %2592 = vmatpush1.bf16.msra.mxu0 %v2550
      %2593 = vmatprep.subr.bf16.mxu0 0
      %2594 = vmatpush1.bf16.msra.mxu0 %v2551
      %2595 = vmatprep.subr.bf16.mxu0 0
      %2596 = vmatpush1.bf16.msra.mxu0 %v2552
      %2597 = vmatprep.subr.bf16.mxu0 0
      %2598 = vmatpush1.bf16.msra.mxu0 %v2553
      %2599 = vmatprep.subr.bf16.mxu0 0
      %2600 = vmatpush1.bf16.msra.mxu0 %v2554
      %2601 = vmatprep.subr.bf16.mxu0 0
      %2602 = vmatpush1.bf16.msra.mxu0 %v2555
      %2603 = vmatprep.subr.bf16.mxu0 0
      %2604 = vmatpush1.bf16.msra.mxu0 %v2556
      %2605 = vmatprep.mubr.bf16.mxu0 %v2311
      %2606 = vmatmul.mubr.bf16.gmra.mrb[0].mxu0 %v2310
      %v2607 = vpop.f32.mrb[0].mxu0
      %v2608 = vadd.f32 %v2475, %v2607
      %v2609 = vpop.f32.mrb[0].mxu0
      %v2610 = vpop.f32.mrb[0].mxu0
      %v2611 = vadd.f32 %v2475, %v2610
      %v2612 = vpop.f32.mrb[0].mxu0
      %2613 = vmatprep.mubr.bf16.mxu0 %v2313
      %2614 = vmatmul.mubr.bf16.gmra.mrb[0].mxu0 %v2312
      %v2615 = vpop.f32.mrb[0].mxu0
      %v2616 = vadd.f32 %v2475, %v2615
      %v2617 = vpop.f32.mrb[0].mxu0
      %v2618 = vpop.f32.mrb[0].mxu0
      %v2619 = vadd.f32 %v2475, %v2618
      %v2620 = vpop.f32.mrb[0].mxu0
      %2621 = vmatprep.mubr.bf16.mxu0 %v2315
      %2622 = vmatmul.mubr.bf16.gmra.mrb[0].mxu0 %v2314
      %v2623 = vpop.f32.mrb[0].mxu0
      %v2624 = vadd.f32 %v2475, %v2623
      %v2625 = vpop.f32.mrb[0].mxu0
      %v2626 = vpop.f32.mrb[0].mxu0
      %v2627 = vadd.f32 %v2475, %v2626
      %v2628 = vpop.f32.mrb[0].mxu0
      %2629 = vmatprep.mubr.bf16.mxu0 %v2317
      %2630 = vmatmul.mubr.bf16.gmra.mrb[0].mxu0 %v2316
      %v2631 = vpop.f32.mrb[0].mxu0
      %v2632 = vadd.f32 %v2475, %v2631
      %v2633 = vpop.f32.mrb[0].mxu0
      %v2634 = vpop.f32.mrb[0].mxu0
      %v2635 = vadd.f32 %v2475, %v2634
      %v2636 = vpop.f32.mrb[0].mxu0
      %2637 = vmatprep.mubr.bf16.mxu0 %v2319
      %2638 = vmatmul.mubr.bf16.gmra.mrb[0].mxu0 %v2318
      %v2639 = vpop.f32.mrb[0].mxu0
      %v2640 = vadd.f32 %v2475, %v2639
      %v2641 = vpop.f32.mrb[0].mxu0
      %v2642 = vpop.f32.mrb[0].mxu0
      %v2643 = vadd.f32 %v2475, %v2642
      %v2644 = vpop.f32.mrb[0].mxu0
      %2645 = vmatprep.mubr.bf16.mxu0 %v2321
      %2646 = vmatmul.mubr.bf16.gmra.mrb[0].mxu0 %v2320
      %v2647 = vpop.f32.mrb[0].mxu0
      %v2648 = vadd.f32 %v2475, %v2647
      %v2649 = vpop.f32.mrb[0].mxu0
      %v2650 = vpop.f32.mrb[0].mxu0
      %v2651 = vadd.f32 %v2475, %v2650
      %v2652 = vpop.f32.mrb[0].mxu0
      %2653 = vmatprep.mubr.bf16.mxu0 %v2323
      %2654 = vmatmul.mubr.bf16.gmra.mrb[0].mxu0 %v2322
      %v2655 = vpop.f32.mrb[0].mxu0
      %v2656 = vadd.f32 %v2475, %v2655
      %v2657 = vpop.f32.mrb[0].mxu0
      %v2658 = vpop.f32.mrb[0].mxu0
      %v2659 = vadd.f32 %v2475, %v2658
      %v2660 = vpop.f32.mrb[0].mxu0
      %2661 = vmatprep.mubr.bf16.mxu0 %v2325
      %2662 = vmatmul.mubr.bf16.gmra.mrb[0].mxu0 %v2324
      %v2663 = vpop.f32.mrb[0].mxu0
      %v2664 = vadd.f32 %v2475, %v2663
      %v2665 = vpop.f32.mrb[0].mxu0
      %v2666 = vpop.f32.mrb[0].mxu0
      %v2667 = vadd.f32 %v2475, %v2666
      %v2668 = vpop.f32.mrb[0].mxu0
      %2669 = vmatprep.mubr.bf16.mxu0 %v2327
      %2670 = vmatmul.mubr.bf16.gmra.mrb[0].mxu0 %v2326
      %v2671 = vpop.f32.mrb[0].mxu0
      %v2672 = vadd.f32 %v2475, %v2671
      %v2673 = vpop.f32.mrb[0].mxu0
      %v2674 = vpop.f32.mrb[0].mxu0
      %v2675 = vadd.f32 %v2475, %v2674
      %v2676 = vpop.f32.mrb[0].mxu0
      %2677 = vmatprep.mubr.bf16.mxu0 %v2329
      %2678 = vmatmul.mubr.bf16.gmra.mrb[0].mxu0 %v2328
      %v2679 = vpop.f32.mrb[0].mxu0
      %v2680 = vadd.f32 %v2475, %v2679
      %v2681 = vpop.f32.mrb[0].mxu0
      %v2682 = vpop.f32.mrb[0].mxu0
      %v2683 = vadd.f32 %v2475, %v2682
      %v2684 = vpop.f32.mrb[0].mxu0
      %2685 = vmatprep.mubr.bf16.mxu0 %v2331
      %2686 = vmatmul.mubr.bf16.gmra.mrb[0].mxu0 %v2330
      %v2687 = vpop.f32.mrb[0].mxu0
      %v2688 = vadd.f32 %v2475, %v2687
      %v2689 = vpop.f32.mrb[0].mxu0
      %v2690 = vpop.f32.mrb[0].mxu0
      %v2691 = vadd.f32 %v2475, %v2690
      %v2692 = vpop.f32.mrb[0].mxu0
      %2693 = vmatprep.mubr.bf16.mxu0 %v2333
      %2694 = vmatmul.mubr.bf16.gmra.mrb[0].mxu0 %v2332
      %v2695 = vpop.f32.mrb[0].mxu0
      %v2696 = vadd.f32 %v2475, %v2695
      %v2697 = vpop.f32.mrb[0].mxu0
      %v2698 = vpop.f32.mrb[0].mxu0
      %v2699 = vadd.f32 %v2475, %v2698
      %v2700 = vpop.f32.mrb[0].mxu0
      %2701 = vmatprep.mubr.bf16.mxu0 %v2335
      %2702 = vmatmul.mubr.bf16.gmra.mrb[0].mxu0 %v2334
      %v2703 = vpop.f32.mrb[0].mxu0
      %v2704 = vadd.f32 %v2475, %v2703
      %v2705 = vpop.f32.mrb[0].mxu0
      %v2706 = vpop.f32.mrb[0].mxu0
      %v2707 = vadd.f32 %v2475, %v2706
      %v2708 = vpop.f32.mrb[0].mxu0
      %2709 = vmatprep.mubr.bf16.mxu0 %v2337
      %2710 = vmatmul.mubr.bf16.gmra.mrb[0].mxu0 %v2336
      %v2711 = vpop.f32.mrb[0].mxu0
      %v2712 = vadd.f32 %v2475, %v2711
      %v2713 = vpop.f32.mrb[0].mxu0
      %v2714 = vpop.f32.mrb[0].mxu0
      %v2715 = vadd.f32 %v2475, %v2714
      %v2716 = vpop.f32.mrb[0].mxu0
      %2717 = vmatprep.mubr.bf16.mxu0 %v2339
      %2718 = vmatmul.mubr.bf16.gmra.mrb[0].mxu0 %v2338
      %v2719 = vpop.f32.mrb[0].mxu0
      %v2720 = vadd.f32 %v2475, %v2719
      %v2721 = vpop.f32.mrb[0].mxu0
      %v2722 = vpop.f32.mrb[0].mxu0
      %v2723 = vadd.f32 %v2475, %v2722
      %v2724 = vpop.f32.mrb[0].mxu0
      %2725 = vmatprep.mubr.bf16.mxu0 %v2341
      %2726 = vmatmul.mubr.bf16.gmra.mrb[0].mxu0 %v2340
      %v2727 = vpop.f32.mrb[0].mxu0
      %v2728 = vadd.f32 %v2475, %v2727
      %v2729 = vpop.f32.mrb[0].mxu0
      %v2730 = vpop.f32.mrb[0].mxu0
      %v2731 = vadd.f32 %v2475, %v2730
      %v2732 = vpop.f32.mrb[0].mxu0
      %2733 = vmatprep.mubr.bf16.mxu0 %v2343
      %2734 = vmatmul.mubr.bf16.gmra.mrb[0].mxu0 %v2342
      %v2735 = vpop.f32.mrb[0].mxu0
      %v2736 = vadd.f32 %v2475, %v2735
      %v2737 = vpop.f32.mrb[0].mxu0
      %v2738 = vpop.f32.mrb[0].mxu0
      %v2739 = vadd.f32 %v2475, %v2738
      %v2740 = vpop.f32.mrb[0].mxu0
      %2741 = vmatprep.mubr.bf16.mxu0 %v2345
      %2742 = vmatmul.mubr.bf16.gmra.mrb[0].mxu0 %v2344
      %v2743 = vpop.f32.mrb[0].mxu0
      %v2744 = vadd.f32 %v2475, %v2743
      %v2745 = vpop.f32.mrb[0].mxu0
      %v2746 = vpop.f32.mrb[0].mxu0
      %v2747 = vadd.f32 %v2475, %v2746
      %v2748 = vpop.f32.mrb[0].mxu0
      %2749 = vmatprep.mubr.bf16.mxu0 %v2347
      %2750 = vmatmul.mubr.bf16.gmra.mrb[0].mxu0 %v2346
      %v2751 = vpop.f32.mrb[0].mxu0
      %v2752 = vadd.f32 %v2475, %v2751
      %v2753 = vpop.f32.mrb[0].mxu0
      %v2754 = vpop.f32.mrb[0].mxu0
      %v2755 = vadd.f32 %v2475, %v2754
      %v2756 = vpop.f32.mrb[0].mxu0
      %2757 = vmatprep.mubr.bf16.mxu0 %v2349
      %2758 = vmatmul.mubr.bf16.gmra.mrb[0].mxu0 %v2348
      %v2759 = vpop.f32.mrb[0].mxu0
      %v2760 = vadd.f32 %v2475, %v2759
      %v2761 = vpop.f32.mrb[0].mxu0
      %v2762 = vpop.f32.mrb[0].mxu0
      %v2763 = vadd.f32 %v2475, %v2762
      %v2764 = vpop.f32.mrb[0].mxu0
      %2765 = vmatprep.mubr.bf16.mxu0 %v2351
      %2766 = vmatmul.mubr.bf16.gmra.mrb[0].mxu0 %v2350
      %v2767 = vpop.f32.mrb[0].mxu0
      %v2768 = vadd.f32 %v2475, %v2767
      %v2769 = vpop.f32.mrb[0].mxu0
      %v2770 = vpop.f32.mrb[0].mxu0
      %v2771 = vadd.f32 %v2475, %v2770
      %v2772 = vpop.f32.mrb[0].mxu0
      %2773 = vmatprep.mubr.bf16.mxu0 %v2353
      %2774 = vmatmul.mubr.bf16.gmra.mrb[0].mxu0 %v2352
      %v2775 = vpop.f32.mrb[0].mxu0
      %v2776 = vadd.f32 %v2475, %v2775
      %v2777 = vpop.f32.mrb[0].mxu0
      %v2778 = vpop.f32.mrb[0].mxu0
      %v2779 = vadd.f32 %v2475, %v2778
      %v2780 = vpop.f32.mrb[0].mxu0
      %2781 = vmatprep.mubr.bf16.mxu0 %v2355
      %2782 = vmatmul.mubr.bf16.gmra.mrb[0].mxu0 %v2354
      %v2783 = vpop.f32.mrb[0].mxu0
      %v2784 = vadd.f32 %v2475, %v2783
      %v2785 = vpop.f32.mrb[0].mxu0
      %v2786 = vpop.f32.mrb[0].mxu0
      %v2787 = vadd.f32 %v2475, %v2786
      %v2788 = vpop.f32.mrb[0].mxu0
      %2789 = vmatprep.mubr.bf16.mxu0 %v2357
      %2790 = vmatmul.mubr.bf16.gmra.mrb[0].mxu0 %v2356
      %v2791 = vpop.f32.mrb[0].mxu0
      %v2792 = vadd.f32 %v2475, %v2791
      %v2793 = vpop.f32.mrb[0].mxu0
      %v2794 = vpop.f32.mrb[0].mxu0
      %v2795 = vadd.f32 %v2475, %v2794
      %v2796 = vpop.f32.mrb[0].mxu0
      %2797 = vmatprep.mubr.bf16.mxu0 %v2359
      %2798 = vmatmul.mubr.bf16.gmra.mrb[0].mxu0 %v2358
      %v2799 = vpop.f32.mrb[0].mxu0
      %v2800 = vadd.f32 %v2475, %v2799
      %v2801 = vpop.f32.mrb[0].mxu0
      %v2802 = vpop.f32.mrb[0].mxu0
      %v2803 = vadd.f32 %v2475, %v2802
      %v2804 = vpop.f32.mrb[0].mxu0
      %2805 = vmatprep.mubr.bf16.mxu0 %v2361
      %2806 = vmatmul.mubr.bf16.gmra.mrb[0].mxu0 %v2360
      %v2807 = vpop.f32.mrb[0].mxu0
      %v2808 = vadd.f32 %v2475, %v2807
      %v2809 = vpop.f32.mrb[0].mxu0
      %v2810 = vpop.f32.mrb[0].mxu0
      %v2811 = vadd.f32 %v2475, %v2810
      %v2812 = vpop.f32.mrb[0].mxu0
      %2813 = vmatprep.mubr.bf16.mxu0 %v2363
      %2814 = vmatmul.mubr.bf16.gmra.mrb[0].mxu0 %v2362
      %v2815 = vpop.f32.mrb[0].mxu0
      %v2816 = vadd.f32 %v2475, %v2815
      %v2817 = vpop.f32.mrb[0].mxu0
      %v2818 = vpop.f32.mrb[0].mxu0
      %v2819 = vadd.f32 %v2475, %v2818
      %v2820 = vpop.f32.mrb[0].mxu0
      %2821 = vmatprep.mubr.bf16.mxu0 %v2365
      %2822 = vmatmul.mubr.bf16.gmra.mrb[0].mxu0 %v2364
      %v2823 = vpop.f32.mrb[0].mxu0
      %v2824 = vadd.f32 %v2475, %v2823
      %v2825 = vpop.f32.mrb[0].mxu0
      %v2826 = vpop.f32.mrb[0].mxu0
      %v2827 = vadd.f32 %v2475, %v2826
      %v2828 = vpop.f32.mrb[0].mxu0
      %2829 = vmatprep.mubr.bf16.mxu0 %v2367
      %2830 = vmatmul.mubr.bf16.gmra.mrb[0].mxu0 %v2366
      %v2831 = vpop.f32.mrb[0].mxu0
      %v2832 = vadd.f32 %v2475, %v2831
      %v2833 = vpop.f32.mrb[0].mxu0
      %v2834 = vpop.f32.mrb[0].mxu0
      %v2835 = vadd.f32 %v2475, %v2834
      %v2836 = vpop.f32.mrb[0].mxu0
      %2837 = vmatprep.mubr.bf16.mxu0 %v2369
      %2838 = vmatmul.mubr.bf16.gmra.mrb[0].mxu0 %v2368
      %v2839 = vpop.f32.mrb[0].mxu0
      %v2840 = vadd.f32 %v2475, %v2839
      %v2841 = vpop.f32.mrb[0].mxu0
      %v2842 = vpop.f32.mrb[0].mxu0
      %v2843 = vadd.f32 %v2475, %v2842
      %v2844 = vpop.f32.mrb[0].mxu0
      %2845 = vmatprep.mubr.bf16.mxu0 %v2371
      %2846 = vmatmul.mubr.bf16.gmra.mrb[0].mxu0 %v2370
      %v2847 = vpop.f32.mrb[0].mxu0
      %v2848 = vadd.f32 %v2475, %v2847
      %v2849 = vpop.f32.mrb[0].mxu0
      %v2850 = vpop.f32.mrb[0].mxu0
      %v2851 = vadd.f32 %v2475, %v2850
      %v2852 = vpop.f32.mrb[0].mxu0
      %2853 = vmatprep.mubr.bf16.mxu0 %v2373
      %2854 = vmatmul.mubr.bf16.gmra.mrb[0].mxu0 %v2372
      %v2855 = vpop.f32.mrb[0].mxu0
      %v2856 = vadd.f32 %v2475, %v2855
      %v2857 = vpop.f32.mrb[0].mxu0
      %v2858 = vpop.f32.mrb[0].mxu0
      %v2859 = vadd.f32 %v2475, %v2858
      %v2860 = vpop.f32.mrb[0].mxu0
      %2861 = vmatprep.mubr.bf16.mxu0 %v2375
      %2862 = vmatmul.mubr.bf16.gmra.mrb[0].mxu0 %v2374
      %v2863 = vpop.f32.mrb[0].mxu0
      %v2864 = vadd.f32 %v2475, %v2863
      %v2865 = vpop.f32.mrb[0].mxu0
      %v2866 = vpop.f32.mrb[0].mxu0
      %v2867 = vadd.f32 %v2475, %v2866
      %v2868 = vpop.f32.mrb[0].mxu0
      %2869 = vmatprep.mubr.bf16.mxu0 %v2377
      %2870 = vmatmul.mubr.bf16.gmra.mrb[0].mxu0 %v2376
      %v2871 = vpop.f32.mrb[0].mxu0
      %v2872 = vadd.f32 %v2475, %v2871
      %v2873 = vpop.f32.mrb[0].mxu0
      %v2874 = vpop.f32.mrb[0].mxu0
      %v2875 = vadd.f32 %v2475, %v2874
      %v2876 = vpop.f32.mrb[0].mxu0
      %2877 = vmatprep.mubr.bf16.mxu0 %v2379
      %2878 = vmatmul.mubr.bf16.gmra.mrb[0].mxu0 %v2378
      %v2879 = vpop.f32.mrb[0].mxu0
      %v2880 = vadd.f32 %v2475, %v2879
      %v2881 = vpop.f32.mrb[0].mxu0
      %v2882 = vpop.f32.mrb[0].mxu0
      %v2883 = vadd.f32 %v2475, %v2882
      %v2884 = vpop.f32.mrb[0].mxu0
      %2885 = vmatprep.mubr.bf16.mxu0 %v2381
      %2886 = vmatmul.mubr.bf16.gmra.mrb[0].mxu0 %v2380
      %v2887 = vpop.f32.mrb[0].mxu0
      %v2888 = vadd.f32 %v2475, %v2887
      %v2889 = vpop.f32.mrb[0].mxu0
      %v2890 = vpop.f32.mrb[0].mxu0
      %v2891 = vadd.f32 %v2475, %v2890
      %v2892 = vpop.f32.mrb[0].mxu0
      %2893 = vmatprep.mubr.bf16.mxu0 %v2383
      %2894 = vmatmul.mubr.bf16.gmra.mrb[0].mxu0 %v2382
      %v2895 = vpop.f32.mrb[0].mxu0
      %v2896 = vadd.f32 %v2475, %v2895
      %v2897 = vpop.f32.mrb[0].mxu0
      %v2898 = vpop.f32.mrb[0].mxu0
      %v2899 = vadd.f32 %v2475, %v2898
      %v2900 = vpop.f32.mrb[0].mxu0
      %2901 = vmatprep.mubr.bf16.mxu0 %v2385
      %2902 = vmatmul.mubr.bf16.gmra.mrb[0].mxu0 %v2384
      %v2903 = vpop.f32.mrb[0].mxu0
      %v2904 = vadd.f32 %v2475, %v2903
      %v2905 = vpop.f32.mrb[0].mxu0
      %v2906 = vpop.f32.mrb[0].mxu0
      %v2907 = vadd.f32 %v2475, %v2906
      %v2908 = vpop.f32.mrb[0].mxu0
      %2909 = vmatprep.mubr.bf16.mxu0 %v2387
      %2910 = vmatmul.mubr.bf16.gmra.mrb[0].mxu0 %v2386
      %v2911 = vpop.f32.mrb[0].mxu0
      %v2912 = vadd.f32 %v2475, %v2911
      %v2913 = vpop.f32.mrb[0].mxu0
      %v2914 = vpop.f32.mrb[0].mxu0
      %v2915 = vadd.f32 %v2475, %v2914
      %v2916 = vpop.f32.mrb[0].mxu0
      %2917 = vmatprep.mubr.bf16.mxu0 %v2389
      %2918 = vmatmul.mubr.bf16.gmra.mrb[0].mxu0 %v2388
      %v2919 = vpop.f32.mrb[0].mxu0
      %v2920 = vadd.f32 %v2475, %v2919
      %v2921 = vpop.f32.mrb[0].mxu0
      %v2922 = vpop.f32.mrb[0].mxu0
      %v2923 = vadd.f32 %v2475, %v2922
      %v2924 = vpop.f32.mrb[0].mxu0
      %2925 = vmatprep.mubr.bf16.mxu0 %v2391
      %2926 = vmatmul.mubr.bf16.gmra.mrb[0].mxu0 %v2390
      %v2927 = vpop.f32.mrb[0].mxu0
      %v2928 = vadd.f32 %v2475, %v2927
      %v2929 = vpop.f32.mrb[0].mxu0
      %v2930 = vpop.f32.mrb[0].mxu0
      %v2931 = vadd.f32 %v2475, %v2930
      %v2932 = vpop.f32.mrb[0].mxu0
      %2933 = vmatprep.mubr.bf16.mxu0 %v2393
      %2934 = vmatmul.mubr.bf16.gmra.mrb[0].mxu0 %v2392
      %v2935 = vpop.f32.mrb[0].mxu0
      %v2936 = vadd.f32 %v2475, %v2935
      %v2937 = vpop.f32.mrb[0].mxu0
      %v2938 = vpop.f32.mrb[0].mxu0
      %v2939 = vadd.f32 %v2475, %v2938
      %v2940 = vpop.f32.mrb[0].mxu0
      %2941 = vmatprep.mubr.bf16.mxu0 %v2395
      %2942 = vmatmul.mubr.bf16.gmra.mrb[0].mxu0 %v2394
      %v2943 = vpop.f32.mrb[0].mxu0
      %v2944 = vadd.f32 %v2475, %v2943
      %v2945 = vpop.f32.mrb[0].mxu0
      %v2946 = vpop.f32.mrb[0].mxu0
      %v2947 = vadd.f32 %v2475, %v2946
      %v2948 = vpop.f32.mrb[0].mxu0
      %2949 = vmatprep.mubr.bf16.mxu0 %v2397
      %2950 = vmatmul.mubr.bf16.gmra.mrb[0].mxu0 %v2396
      %v2951 = vpop.f32.mrb[0].mxu0
      %v2952 = vadd.f32 %v2475, %v2951
      %v2953 = vpop.f32.mrb[0].mxu0
      %v2954 = vpop.f32.mrb[0].mxu0
      %v2955 = vadd.f32 %v2475, %v2954
      %v2956 = vpop.f32.mrb[0].mxu0
      %2957 = vmatprep.mubr.bf16.mxu0 %v2399
      %2958 = vmatmul.mubr.bf16.gmra.mrb[0].mxu0 %v2398
      %v2959 = vpop.f32.mrb[0].mxu0
      %v2960 = vadd.f32 %v2475, %v2959
      %v2961 = vpop.f32.mrb[0].mxu0
      %v2962 = vpop.f32.mrb[0].mxu0
      %v2963 = vadd.f32 %v2475, %v2962
      %v2964 = vpop.f32.mrb[0].mxu0
      %2965 = vmatprep.mubr.bf16.mxu0 %v2401
      %2966 = vmatmul.mubr.bf16.gmra.mrb[0].mxu0 %v2400
      %v2967 = vpop.f32.mrb[0].mxu0
      %v2968 = vadd.f32 %v2475, %v2967
      %v2969 = vpop.f32.mrb[0].mxu0
      %v2970 = vpop.f32.mrb[0].mxu0
      %v2971 = vadd.f32 %v2475, %v2970
      %v2972 = vpop.f32.mrb[0].mxu0
      %2973 = vmatprep.mubr.bf16.mxu0 %v2403
      %2974 = vmatmul.mubr.bf16.gmra.mrb[0].mxu0 %v2402
      %v2975 = vpop.f32.mrb[0].mxu0
      %v2976 = vadd.f32 %v2475, %v2975
      %v2977 = vpop.f32.mrb[0].mxu0
      %v2978 = vpop.f32.mrb[0].mxu0
      %v2979 = vadd.f32 %v2475, %v2978
      %v2980 = vpop.f32.mrb[0].mxu0
      %2981 = vmatprep.mubr.bf16.mxu0 %v2405
      %2982 = vmatmul.mubr.bf16.gmra.mrb[0].mxu0 %v2404
      %v2983 = vpop.f32.mrb[0].mxu0
      %v2984 = vadd.f32 %v2475, %v2983
      %v2985 = vpop.f32.mrb[0].mxu0
      %v2986 = vpop.f32.mrb[0].mxu0
      %v2987 = vadd.f32 %v2475, %v2986
      %v2988 = vpop.f32.mrb[0].mxu0
      %2989 = vmatprep.mubr.bf16.mxu0 %v2407
      %2990 = vmatmul.mubr.bf16.gmra.mrb[0].mxu0 %v2406
      %v2991 = vpop.f32.mrb[0].mxu0
      %v2992 = vadd.f32 %v2475, %v2991
      %v2993 = vpop.f32.mrb[0].mxu0
      %v2994 = vpop.f32.mrb[0].mxu0
      %v2995 = vadd.f32 %v2475, %v2994
      %v2996 = vpop.f32.mrb[0].mxu0
      %2997 = vmatprep.mubr.bf16.mxu0 %v2409
      %2998 = vmatmul.mubr.bf16.gmra.mrb[0].mxu0 %v2408
      %v2999 = vpop.f32.mrb[0].mxu0
      %v3000 = vadd.f32 %v2475, %v2999
      %v3001 = vpop.f32.mrb[0].mxu0
      %v3002 = vpop.f32.mrb[0].mxu0
      %v3003 = vadd.f32 %v2475, %v3002
      %v3004 = vpop.f32.mrb[0].mxu0
      %3005 = vmatprep.mubr.bf16.mxu0 %v2411
      %3006 = vmatmul.mubr.bf16.gmra.mrb[0].mxu0 %v2410
      %v3007 = vpop.f32.mrb[0].mxu0
      %v3008 = vadd.f32 %v2475, %v3007
      %v3009 = vpop.f32.mrb[0].mxu0
      %v3010 = vpop.f32.mrb[0].mxu0
      %v3011 = vadd.f32 %v2475, %v3010
      %v3012 = vpop.f32.mrb[0].mxu0
      %3013 = vmatprep.mubr.bf16.mxu0 %v2413
      %3014 = vmatmul.mubr.bf16.gmra.mrb[0].mxu0 %v2412
      %v3015 = vpop.f32.mrb[0].mxu0
      %v3016 = vadd.f32 %v2475, %v3015
      %v3017 = vpop.f32.mrb[0].mxu0
      %v3018 = vpop.f32.mrb[0].mxu0
      %v3019 = vadd.f32 %v2475, %v3018
      %v3020 = vpop.f32.mrb[0].mxu0
      %3021 = vmatprep.mubr.bf16.mxu0 %v2415
      %3022 = vmatmul.mubr.bf16.gmra.mrb[0].mxu0 %v2414
      %v3023 = vpop.f32.mrb[0].mxu0
      %v3024 = vadd.f32 %v2475, %v3023
      %v3025 = vpop.f32.mrb[0].mxu0
      %v3026 = vpop.f32.mrb[0].mxu0
      %v3027 = vadd.f32 %v2475, %v3026
      %v3028 = vpop.f32.mrb[0].mxu0
      %3029 = vmatprep.mubr.bf16.mxu0 %v2417
      %3030 = vmatmul.mubr.bf16.gmra.mrb[0].mxu0 %v2416
      %v3031 = vpop.f32.mrb[0].mxu0
      %v3032 = vadd.f32 %v2475, %v3031
      %v3033 = vpop.f32.mrb[0].mxu0
      %v3034 = vpop.f32.mrb[0].mxu0
      %v3035 = vadd.f32 %v2475, %v3034
      %v3036 = vpop.f32.mrb[0].mxu0
      %3037 = vmatprep.mubr.bf16.mxu0 %v2419
      %3038 = vmatmul.mubr.bf16.gmra.mrb[0].mxu0 %v2418
      %v3039 = vpop.f32.mrb[0].mxu0
      %v3040 = vadd.f32 %v2475, %v3039
      %v3041 = vpop.f32.mrb[0].mxu0
      %v3042 = vpop.f32.mrb[0].mxu0
      %v3043 = vadd.f32 %v2475, %v3042
      %v3044 = vpop.f32.mrb[0].mxu0
      %3045 = vmatprep.mubr.bf16.mxu0 %v2421
      %3046 = vmatmul.mubr.bf16.gmra.mrb[0].mxu0 %v2420
      %v3047 = vpop.f32.mrb[0].mxu0
      %v3048 = vadd.f32 %v2475, %v3047
      %v3049 = vpop.f32.mrb[0].mxu0
      %v3050 = vpop.f32.mrb[0].mxu0
      %v3051 = vadd.f32 %v2475, %v3050
      %v3052 = vpop.f32.mrb[0].mxu0
      %3053 = vmatprep.mubr.bf16.mxu0 %v2423
      %3054 = vmatmul.mubr.bf16.gmra.mrb[0].mxu0 %v2422
      %v3055 = vpop.f32.mrb[0].mxu0
      %v3056 = vadd.f32 %v2475, %v3055
      %v3057 = vpop.f32.mrb[0].mxu0
      %v3058 = vpop.f32.mrb[0].mxu0
      %v3059 = vadd.f32 %v2475, %v3058
      %v3060 = vpop.f32.mrb[0].mxu0
      %3061 = vmatprep.mubr.bf16.mxu0 %v2425
      %3062 = vmatmul.mubr.bf16.gmra.mrb[0].mxu0 %v2424
      %v3063 = vpop.f32.mrb[0].mxu0
      %v3064 = vadd.f32 %v2475, %v3063
      %v3065 = vpop.f32.mrb[0].mxu0
      %v3066 = vpop.f32.mrb[0].mxu0
      %v3067 = vadd.f32 %v2475, %v3066
      %v3068 = vpop.f32.mrb[0].mxu0
      %3069 = vmatprep.mubr.bf16.mxu0 %v2427
      %3070 = vmatmul.mubr.bf16.gmra.mrb[0].mxu0 %v2426
      %v3071 = vpop.f32.mrb[0].mxu0
      %v3072 = vadd.f32 %v2475, %v3071
      %v3073 = vpop.f32.mrb[0].mxu0
      %v3074 = vpop.f32.mrb[0].mxu0
      %v3075 = vadd.f32 %v2475, %v3074
      %v3076 = vpop.f32.mrb[0].mxu0
      %3077 = vmatprep.mubr.bf16.mxu0 %v2429
      %3078 = vmatmul.mubr.bf16.gmra.mrb[0].mxu0 %v2428
      %v3079 = vpop.f32.mrb[0].mxu0
      %v3080 = vadd.f32 %v2475, %v3079
      %v3081 = vpop.f32.mrb[0].mxu0
      %v3082 = vpop.f32.mrb[0].mxu0
      %v3083 = vadd.f32 %v2475, %v3082
      %v3084 = vpop.f32.mrb[0].mxu0
      %3085 = vmatprep.mubr.bf16.mxu0 %v2431
      %3086 = vmatmul.mubr.bf16.gmra.mrb[0].mxu0 %v2430
      %v3087 = vpop.f32.mrb[0].mxu0
      %v3088 = vadd.f32 %v2475, %v3087
      %v3089 = vpop.f32.mrb[0].mxu0
      %v3090 = vpop.f32.mrb[0].mxu0
      %v3091 = vadd.f32 %v2475, %v3090
      %v3092 = vpop.f32.mrb[0].mxu0
      %3093 = vmatprep.mubr.bf16.mxu0 %v2433
      %3094 = vmatmul.mubr.bf16.gmra.mrb[0].mxu0 %v2432
      %v3095 = vpop.f32.mrb[0].mxu0
      %v3096 = vadd.f32 %v2475, %v3095
      %v3097 = vpop.f32.mrb[0].mxu0
      %v3098 = vpop.f32.mrb[0].mxu0
      %v3099 = vadd.f32 %v2475, %v3098
      %v3100 = vpop.f32.mrb[0].mxu0
      %3101 = vmatprep.mubr.bf16.mxu0 %v2435
      %3102 = vmatmul.mubr.bf16.gmra.mrb[0].mxu0 %v2434
      %v3103 = vpop.f32.mrb[0].mxu0
      %v3104 = vadd.f32 %v2475, %v3103
      %v3105 = vpop.f32.mrb[0].mxu0
      %v3106 = vpop.f32.mrb[0].mxu0
      %v3107 = vadd.f32 %v2475, %v3106
      %v3108 = vpop.f32.mrb[0].mxu0
      %3109 = vmatprep.mubr.bf16.mxu0 %v2437
      %3110 = vmatmul.mubr.bf16.gmra.mrb[0].mxu0 %v2436
      %v3111 = vpop.f32.mrb[0].mxu0
      %v3112 = vadd.f32 %v2475, %v3111
      %v3113 = vpop.f32.mrb[0].mxu0
      %v3114 = vpop.f32.mrb[0].mxu0
      %v3115 = vadd.f32 %v2475, %v3114
      %v3116 = vpop.f32.mrb[0].mxu0
      %3117 = vdwg.mxu0
      %v3118 = vld [vmem:[%s272] sm:$0xff]
      %v3119 = vld [vmem:[%s272 + $0x8] sm:$0xff]
      %v3120 = vld [vmem:[%s272 + $0x10] sm:$0xff]
      %v3121 = vld [vmem:[%s272 + $0x18] sm:$0xff]
      %v3122 = vld [vmem:[%s272 + $0x20] sm:$0xff]
      %v3123 = vld [vmem:[%s272 + $0x28] sm:$0xff]
      %v3124 = vld [vmem:[%s272 + $0x30] sm:$0xff]
      %v3125 = vld [vmem:[%s272 + $0x38] sm:$0xff]
      %v3126 = vld [vmem:[%s272 + $0x40] sm:$0xff]
      %v3127 = vld [vmem:[%s272 + $0x48] sm:$0xff]
      %v3128 = vld [vmem:[%s272 + $0x50] sm:$0xff]
      %v3129 = vld [vmem:[%s272 + $0x58] sm:$0xff]
      %v3130 = vld [vmem:[%s272 + $0x60] sm:$0xff]
      %v3131 = vld [vmem:[%s272 + $0x68] sm:$0xff]
      %v3132 = vld [vmem:[%s272 + $0x70] sm:$0xff]
      %v3133 = vld [vmem:[%s272 + $0x78] sm:$0xff]
      %v3134 = vld [vmem:[%s272 + $0x80] sm:$0xff]
      %v3135 = vld [vmem:[%s272 + $0x88] sm:$0xff]
      %v3136 = vld [vmem:[%s272 + $0x90] sm:$0xff]
      %v3137 = vld [vmem:[%s272 + $0x98] sm:$0xff]
      %v3138 = vld [vmem:[%s272 + $0xa0] sm:$0xff]
      %v3139 = vld [vmem:[%s272 + $0xa8] sm:$0xff]
      %v3140 = vld [vmem:[%s272 + $0xb0] sm:$0xff]
      %v3141 = vld [vmem:[%s272 + $0xb8] sm:$0xff]
      %v3142 = vld [vmem:[%s272 + $0xc0] sm:$0xff]
      %v3143 = vld [vmem:[%s272 + $0xc8] sm:$0xff]
      %v3144 = vld [vmem:[%s272 + $0xd0] sm:$0xff]
      %v3145 = vld [vmem:[%s272 + $0xd8] sm:$0xff]
      %v3146 = vld [vmem:[%s272 + $0xe0] sm:$0xff]
      %v3147 = vld [vmem:[%s272 + $0xe8] sm:$0xff]
      %v3148 = vld [vmem:[%s272 + $0xf0] sm:$0xff]
      %v3149 = vld [vmem:[%s272 + $0xf8] sm:$0xff]
      %v3150 = vld [vmem:[%s272 + $0x100] sm:$0xff]
      %v3151 = vld [vmem:[%s272 + $0x108] sm:$0xff]
      %v3152 = vld [vmem:[%s272 + $0x110] sm:$0xff]
      %v3153 = vld [vmem:[%s272 + $0x118] sm:$0xff]
      %v3154 = vld [vmem:[%s272 + $0x120] sm:$0xff]
      %v3155 = vld [vmem:[%s272 + $0x128] sm:$0xff]
      %v3156 = vld [vmem:[%s272 + $0x130] sm:$0xff]
      %v3157 = vld [vmem:[%s272 + $0x138] sm:$0xff]
      %v3158 = vld [vmem:[%s272 + $0x140] sm:$0xff]
      %v3159 = vld [vmem:[%s272 + $0x148] sm:$0xff]
      %v3160 = vld [vmem:[%s272 + $0x150] sm:$0xff]
      %v3161 = vld [vmem:[%s272 + $0x158] sm:$0xff]
      %v3162 = vld [vmem:[%s272 + $0x160] sm:$0xff]
      %v3163 = vld [vmem:[%s272 + $0x168] sm:$0xff]
      %v3164 = vld [vmem:[%s272 + $0x170] sm:$0xff]
      %v3165 = vld [vmem:[%s272 + $0x178] sm:$0xff]
      %v3166 = vld [vmem:[%s272 + $0x180] sm:$0xff]
      %v3167 = vld [vmem:[%s272 + $0x188] sm:$0xff]
      %v3168 = vld [vmem:[%s272 + $0x190] sm:$0xff]
      %v3169 = vld [vmem:[%s272 + $0x198] sm:$0xff]
      %v3170 = vld [vmem:[%s272 + $0x1a0] sm:$0xff]
      %v3171 = vld [vmem:[%s272 + $0x1a8] sm:$0xff]
      %v3172 = vld [vmem:[%s272 + $0x1b0] sm:$0xff]
      %v3173 = vld [vmem:[%s272 + $0x1b8] sm:$0xff]
      %v3174 = vld [vmem:[%s272 + $0x1c0] sm:$0xff]
      %v3175 = vld [vmem:[%s272 + $0x1c8] sm:$0xff]
      %v3176 = vld [vmem:[%s272 + $0x1d0] sm:$0xff]
      %v3177 = vld [vmem:[%s272 + $0x1d8] sm:$0xff]
      %v3178 = vld [vmem:[%s272 + $0x1e0] sm:$0xff]
      %v3179 = vld [vmem:[%s272 + $0x1e8] sm:$0xff]
      %v3180 = vld [vmem:[%s272 + $0x1f0] sm:$0xff]
      %v3181 = vld [vmem:[%s272 + $0x1f8] sm:$0xff]
      %v3182 = vld [vmem:[%s272 + $0x200] sm:$0xff]
      %v3183 = vld [vmem:[%s272 + $0x208] sm:$0xff]
      %v3184 = vld [vmem:[%s272 + $0x210] sm:$0xff]
      %v3185 = vld [vmem:[%s272 + $0x218] sm:$0xff]
      %v3186 = vld [vmem:[%s272 + $0x220] sm:$0xff]
      %v3187 = vld [vmem:[%s272 + $0x228] sm:$0xff]
      %v3188 = vld [vmem:[%s272 + $0x230] sm:$0xff]
      %v3189 = vld [vmem:[%s272 + $0x238] sm:$0xff]
      %v3190 = vld [vmem:[%s272 + $0x240] sm:$0xff]
      %v3191 = vld [vmem:[%s272 + $0x248] sm:$0xff]
      %v3192 = vld [vmem:[%s272 + $0x250] sm:$0xff]
      %v3193 = vld [vmem:[%s272 + $0x258] sm:$0xff]
      %v3194 = vld [vmem:[%s272 + $0x260] sm:$0xff]
      %v3195 = vld [vmem:[%s272 + $0x268] sm:$0xff]
      %v3196 = vld [vmem:[%s272 + $0x270] sm:$0xff]
      %v3197 = vld [vmem:[%s272 + $0x278] sm:$0xff]
      %v3198 = vld [vmem:[%s272 + $0x280] sm:$0xff]
      %v3199 = vld [vmem:[%s272 + $0x288] sm:$0xff]
      %v3200 = vld [vmem:[%s272 + $0x290] sm:$0xff]
      %v3201 = vld [vmem:[%s272 + $0x298] sm:$0xff]
      %v3202 = vld [vmem:[%s272 + $0x2a0] sm:$0xff]
      %v3203 = vld [vmem:[%s272 + $0x2a8] sm:$0xff]
      %v3204 = vld [vmem:[%s272 + $0x2b0] sm:$0xff]
      %v3205 = vld [vmem:[%s272 + $0x2b8] sm:$0xff]
      %v3206 = vld [vmem:[%s272 + $0x2c0] sm:$0xff]
      %v3207 = vld [vmem:[%s272 + $0x2c8] sm:$0xff]
      %v3208 = vld [vmem:[%s272 + $0x2d0] sm:$0xff]
      %v3209 = vld [vmem:[%s272 + $0x2d8] sm:$0xff]
      %v3210 = vld [vmem:[%s272 + $0x2e0] sm:$0xff]
      %v3211 = vld [vmem:[%s272 + $0x2e8] sm:$0xff]
      %v3212 = vld [vmem:[%s272 + $0x2f0] sm:$0xff]
      %v3213 = vld [vmem:[%s272 + $0x2f8] sm:$0xff]
      %v3214 = vld [vmem:[%s272 + $0x300] sm:$0xff]
      %v3215 = vld [vmem:[%s272 + $0x308] sm:$0xff]
      %v3216 = vld [vmem:[%s272 + $0x310] sm:$0xff]
      %v3217 = vld [vmem:[%s272 + $0x318] sm:$0xff]
      %v3218 = vld [vmem:[%s272 + $0x320] sm:$0xff]
      %v3219 = vld [vmem:[%s272 + $0x328] sm:$0xff]
      %v3220 = vld [vmem:[%s272 + $0x330] sm:$0xff]
      %v3221 = vld [vmem:[%s272 + $0x338] sm:$0xff]
      %v3222 = vld [vmem:[%s272 + $0x340] sm:$0xff]
      %v3223 = vld [vmem:[%s272 + $0x348] sm:$0xff]
      %v3224 = vld [vmem:[%s272 + $0x350] sm:$0xff]
      %v3225 = vld [vmem:[%s272 + $0x358] sm:$0xff]
      %v3226 = vld [vmem:[%s272 + $0x360] sm:$0xff]
      %v3227 = vld [vmem:[%s272 + $0x368] sm:$0xff]
      %v3228 = vld [vmem:[%s272 + $0x370] sm:$0xff]
      %v3229 = vld [vmem:[%s272 + $0x378] sm:$0xff]
      %v3230 = vld [vmem:[%s272 + $0x380] sm:$0xff]
      %v3231 = vld [vmem:[%s272 + $0x388] sm:$0xff]
      %v3232 = vld [vmem:[%s272 + $0x390] sm:$0xff]
      %v3233 = vld [vmem:[%s272 + $0x398] sm:$0xff]
      %v3234 = vld [vmem:[%s272 + $0x3a0] sm:$0xff]
      %v3235 = vld [vmem:[%s272 + $0x3a8] sm:$0xff]
      %v3236 = vld [vmem:[%s272 + $0x3b0] sm:$0xff]
      %v3237 = vld [vmem:[%s272 + $0x3b8] sm:$0xff]
      %v3238 = vld [vmem:[%s272 + $0x3c0] sm:$0xff]
      %v3239 = vld [vmem:[%s272 + $0x3c8] sm:$0xff]
      %v3240 = vld [vmem:[%s272 + $0x3d0] sm:$0xff]
      %v3241 = vld [vmem:[%s272 + $0x3d8] sm:$0xff]
      %v3242 = vld [vmem:[%s272 + $0x3e0] sm:$0xff]
      %v3243 = vld [vmem:[%s272 + $0x3e8] sm:$0xff]
      %v3244 = vld [vmem:[%s272 + $0x3f0] sm:$0xff]
      %v3245 = vld [vmem:[%s272 + $0x3f8] sm:$0xff]
      %3247 = vset.pattern.permute.xlu0 0
      %3248 = vperm.xlu0 %3247, %v3118
      %v3249 = vpop.permute.xlu0 %3248
      %3252 = vset.pattern.permute.xlu0 0
      %3253 = vperm.xlu0 %3252, %v3119
      %v3254 = vpop.permute.xlu0 %3253
      %3257 = vset.pattern.permute.xlu0 0
      %3258 = vperm.xlu0 %3257, %v3120
      %v3259 = vpop.permute.xlu0 %3258
      %3262 = vset.pattern.permute.xlu0 0
      %3263 = vperm.xlu0 %3262, %v3121
      %v3264 = vpop.permute.xlu0 %3263
      %3267 = vset.pattern.permute.xlu0 0
      %3268 = vperm.xlu0 %3267, %v3122
      %v3269 = vpop.permute.xlu0 %3268
      %3272 = vset.pattern.permute.xlu0 0
      %3273 = vperm.xlu0 %3272, %v3123
      %v3274 = vpop.permute.xlu0 %3273
      %3277 = vset.pattern.permute.xlu0 0
      %3278 = vperm.xlu0 %3277, %v3124
      %v3279 = vpop.permute.xlu0 %3278
      %3282 = vset.pattern.permute.xlu0 0
      %3283 = vperm.xlu0 %3282, %v3125
      %v3284 = vpop.permute.xlu0 %3283
      %3287 = vset.pattern.permute.xlu0 0
      %3288 = vperm.xlu0 %3287, %v3126
      %v3289 = vpop.permute.xlu0 %3288
      %3292 = vset.pattern.permute.xlu0 0
      %3293 = vperm.xlu0 %3292, %v3127
      %v3294 = vpop.permute.xlu0 %3293
      %3297 = vset.pattern.permute.xlu0 0
      %3298 = vperm.xlu0 %3297, %v3128
      %v3299 = vpop.permute.xlu0 %3298
      %3302 = vset.pattern.permute.xlu0 0
      %3303 = vperm.xlu0 %3302, %v3129
      %v3304 = vpop.permute.xlu0 %3303
      %3307 = vset.pattern.permute.xlu0 0
      %3308 = vperm.xlu0 %3307, %v3130
      %v3309 = vpop.permute.xlu0 %3308
      %3312 = vset.pattern.permute.xlu0 0
      %3313 = vperm.xlu0 %3312, %v3131
      %v3314 = vpop.permute.xlu0 %3313
      %3317 = vset.pattern.permute.xlu0 0
      %3318 = vperm.xlu0 %3317, %v3132
      %v3319 = vpop.permute.xlu0 %3318
      %3322 = vset.pattern.permute.xlu0 0
      %3323 = vperm.xlu0 %3322, %v3133
      %v3324 = vpop.permute.xlu0 %3323
      %3327 = vset.pattern.permute.xlu0 0
      %3328 = vperm.xlu0 %3327, %v3134
      %v3329 = vpop.permute.xlu0 %3328
      %3332 = vset.pattern.permute.xlu0 0
      %3333 = vperm.xlu0 %3332, %v3135
      %v3334 = vpop.permute.xlu0 %3333
      %3337 = vset.pattern.permute.xlu0 0
      %3338 = vperm.xlu0 %3337, %v3136
      %v3339 = vpop.permute.xlu0 %3338
      %3342 = vset.pattern.permute.xlu0 0
      %3343 = vperm.xlu0 %3342, %v3137
      %v3344 = vpop.permute.xlu0 %3343
      %3347 = vset.pattern.permute.xlu0 0
      %3348 = vperm.xlu0 %3347, %v3138
      %v3349 = vpop.permute.xlu0 %3348
      %3352 = vset.pattern.permute.xlu0 0
      %3353 = vperm.xlu0 %3352, %v3139
      %v3354 = vpop.permute.xlu0 %3353
      %3357 = vset.pattern.permute.xlu0 0
      %3358 = vperm.xlu0 %3357, %v3140
      %v3359 = vpop.permute.xlu0 %3358
      %3362 = vset.pattern.permute.xlu0 0
      %3363 = vperm.xlu0 %3362, %v3141
      %v3364 = vpop.permute.xlu0 %3363
      %3367 = vset.pattern.permute.xlu0 0
      %3368 = vperm.xlu0 %3367, %v3142
      %v3369 = vpop.permute.xlu0 %3368
      %3372 = vset.pattern.permute.xlu0 0
      %3373 = vperm.xlu0 %3372, %v3143
      %v3374 = vpop.permute.xlu0 %3373
      %3377 = vset.pattern.permute.xlu0 0
      %3378 = vperm.xlu0 %3377, %v3144
      %v3379 = vpop.permute.xlu0 %3378
      %3382 = vset.pattern.permute.xlu0 0
      %3383 = vperm.xlu0 %3382, %v3145
      %v3384 = vpop.permute.xlu0 %3383
      %3387 = vset.pattern.permute.xlu0 0
      %3388 = vperm.xlu0 %3387, %v3146
      %v3389 = vpop.permute.xlu0 %3388
      %3392 = vset.pattern.permute.xlu0 0
      %3393 = vperm.xlu0 %3392, %v3147
      %v3394 = vpop.permute.xlu0 %3393
      %3397 = vset.pattern.permute.xlu0 0
      %3398 = vperm.xlu0 %3397, %v3148
      %v3399 = vpop.permute.xlu0 %3398
      %3402 = vset.pattern.permute.xlu0 0
      %3403 = vperm.xlu0 %3402, %v3149
      %v3404 = vpop.permute.xlu0 %3403
      %3407 = vset.pattern.permute.xlu0 0
      %3408 = vperm.xlu0 %3407, %v3150
      %v3409 = vpop.permute.xlu0 %3408
      %3412 = vset.pattern.permute.xlu0 0
      %3413 = vperm.xlu0 %3412, %v3151
      %v3414 = vpop.permute.xlu0 %3413
      %3417 = vset.pattern.permute.xlu0 0
      %3418 = vperm.xlu0 %3417, %v3152
      %v3419 = vpop.permute.xlu0 %3418
      %3422 = vset.pattern.permute.xlu0 0
      %3423 = vperm.xlu0 %3422, %v3153
      %v3424 = vpop.permute.xlu0 %3423
      %3427 = vset.pattern.permute.xlu0 0
      %3428 = vperm.xlu0 %3427, %v3154
      %v3429 = vpop.permute.xlu0 %3428
      %3432 = vset.pattern.permute.xlu0 0
      %3433 = vperm.xlu0 %3432, %v3155
      %v3434 = vpop.permute.xlu0 %3433
      %3437 = vset.pattern.permute.xlu0 0
      %3438 = vperm.xlu0 %3437, %v3156
      %v3439 = vpop.permute.xlu0 %3438
      %3442 = vset.pattern.permute.xlu0 0
      %3443 = vperm.xlu0 %3442, %v3157
      %v3444 = vpop.permute.xlu0 %3443
      %3447 = vset.pattern.permute.xlu0 0
      %3448 = vperm.xlu0 %3447, %v3158
      %v3449 = vpop.permute.xlu0 %3448
      %3452 = vset.pattern.permute.xlu0 0
      %3453 = vperm.xlu0 %3452, %v3159
      %v3454 = vpop.permute.xlu0 %3453
      %3457 = vset.pattern.permute.xlu0 0
      %3458 = vperm.xlu0 %3457, %v3160
      %v3459 = vpop.permute.xlu0 %3458
      %3462 = vset.pattern.permute.xlu0 0
      %3463 = vperm.xlu0 %3462, %v3161
      %v3464 = vpop.permute.xlu0 %3463
      %3467 = vset.pattern.permute.xlu0 0
      %3468 = vperm.xlu0 %3467, %v3162
      %v3469 = vpop.permute.xlu0 %3468
      %3472 = vset.pattern.permute.xlu0 0
      %3473 = vperm.xlu0 %3472, %v3163
      %v3474 = vpop.permute.xlu0 %3473
      %3477 = vset.pattern.permute.xlu0 0
      %3478 = vperm.xlu0 %3477, %v3164
      %v3479 = vpop.permute.xlu0 %3478
      %3482 = vset.pattern.permute.xlu0 0
      %3483 = vperm.xlu0 %3482, %v3165
      %v3484 = vpop.permute.xlu0 %3483
      %3487 = vset.pattern.permute.xlu0 0
      %3488 = vperm.xlu0 %3487, %v3166
      %v3489 = vpop.permute.xlu0 %3488
      %3492 = vset.pattern.permute.xlu0 0
      %3493 = vperm.xlu0 %3492, %v3167
      %v3494 = vpop.permute.xlu0 %3493
      %3497 = vset.pattern.permute.xlu0 0
      %3498 = vperm.xlu0 %3497, %v3168
      %v3499 = vpop.permute.xlu0 %3498
      %3502 = vset.pattern.permute.xlu0 0
      %3503 = vperm.xlu0 %3502, %v3169
      %v3504 = vpop.permute.xlu0 %3503
      %3507 = vset.pattern.permute.xlu0 0
      %3508 = vperm.xlu0 %3507, %v3170
      %v3509 = vpop.permute.xlu0 %3508
      %3512 = vset.pattern.permute.xlu0 0
      %3513 = vperm.xlu0 %3512, %v3171
      %v3514 = vpop.permute.xlu0 %3513
      %3517 = vset.pattern.permute.xlu0 0
      %3518 = vperm.xlu0 %3517, %v3172
      %v3519 = vpop.permute.xlu0 %3518
      %3522 = vset.pattern.permute.xlu0 0
      %3523 = vperm.xlu0 %3522, %v3173
      %v3524 = vpop.permute.xlu0 %3523
      %3527 = vset.pattern.permute.xlu0 0
      %3528 = vperm.xlu0 %3527, %v3174
      %v3529 = vpop.permute.xlu0 %3528
      %3532 = vset.pattern.permute.xlu0 0
      %3533 = vperm.xlu0 %3532, %v3175
      %v3534 = vpop.permute.xlu0 %3533
      %3537 = vset.pattern.permute.xlu0 0
      %3538 = vperm.xlu0 %3537, %v3176
      %v3539 = vpop.permute.xlu0 %3538
      %3542 = vset.pattern.permute.xlu0 0
      %3543 = vperm.xlu0 %3542, %v3177
      %v3544 = vpop.permute.xlu0 %3543
      %3547 = vset.pattern.permute.xlu0 0
      %3548 = vperm.xlu0 %3547, %v3178
      %v3549 = vpop.permute.xlu0 %3548
      %3552 = vset.pattern.permute.xlu0 0
      %3553 = vperm.xlu0 %3552, %v3179
      %v3554 = vpop.permute.xlu0 %3553
      %3557 = vset.pattern.permute.xlu0 0
      %3558 = vperm.xlu0 %3557, %v3180
      %v3559 = vpop.permute.xlu0 %3558
      %3562 = vset.pattern.permute.xlu0 0
      %3563 = vperm.xlu0 %3562, %v3181
      %v3564 = vpop.permute.xlu0 %3563
      %3567 = vset.pattern.permute.xlu0 0
      %3568 = vperm.xlu0 %3567, %v3182
      %v3569 = vpop.permute.xlu0 %3568
      %3572 = vset.pattern.permute.xlu0 0
      %3573 = vperm.xlu0 %3572, %v3183
      %v3574 = vpop.permute.xlu0 %3573
      %3577 = vset.pattern.permute.xlu0 0
      %3578 = vperm.xlu0 %3577, %v3184
      %v3579 = vpop.permute.xlu0 %3578
      %3582 = vset.pattern.permute.xlu0 0
      %3583 = vperm.xlu0 %3582, %v3185
      %v3584 = vpop.permute.xlu0 %3583
      %3587 = vset.pattern.permute.xlu0 0
      %3588 = vperm.xlu0 %3587, %v3186
      %v3589 = vpop.permute.xlu0 %3588
      %3592 = vset.pattern.permute.xlu0 0
      %3593 = vperm.xlu0 %3592, %v3187
      %v3594 = vpop.permute.xlu0 %3593
      %3597 = vset.pattern.permute.xlu0 0
      %3598 = vperm.xlu0 %3597, %v3188
      %v3599 = vpop.permute.xlu0 %3598
      %3602 = vset.pattern.permute.xlu0 0
      %3603 = vperm.xlu0 %3602, %v3189
      %v3604 = vpop.permute.xlu0 %3603
      %3607 = vset.pattern.permute.xlu0 0
      %3608 = vperm.xlu0 %3607, %v3190
      %v3609 = vpop.permute.xlu0 %3608
      %3612 = vset.pattern.permute.xlu0 0
      %3613 = vperm.xlu0 %3612, %v3191
      %v3614 = vpop.permute.xlu0 %3613
      %3617 = vset.pattern.permute.xlu0 0
      %3618 = vperm.xlu0 %3617, %v3192
      %v3619 = vpop.permute.xlu0 %3618
      %3622 = vset.pattern.permute.xlu0 0
      %3623 = vperm.xlu0 %3622, %v3193
      %v3624 = vpop.permute.xlu0 %3623
      %3627 = vset.pattern.permute.xlu0 0
      %3628 = vperm.xlu0 %3627, %v3194
      %v3629 = vpop.permute.xlu0 %3628
      %3632 = vset.pattern.permute.xlu0 0
      %3633 = vperm.xlu0 %3632, %v3195
      %v3634 = vpop.permute.xlu0 %3633
      %3637 = vset.pattern.permute.xlu0 0
      %3638 = vperm.xlu0 %3637, %v3196
      %v3639 = vpop.permute.xlu0 %3638
      %3642 = vset.pattern.permute.xlu0 0
      %3643 = vperm.xlu0 %3642, %v3197
      %v3644 = vpop.permute.xlu0 %3643
      %3647 = vset.pattern.permute.xlu0 0
      %3648 = vperm.xlu0 %3647, %v3198
      %v3649 = vpop.permute.xlu0 %3648
      %3652 = vset.pattern.permute.xlu0 0
      %3653 = vperm.xlu0 %3652, %v3199
      %v3654 = vpop.permute.xlu0 %3653
      %3657 = vset.pattern.permute.xlu0 0
      %3658 = vperm.xlu0 %3657, %v3200
      %v3659 = vpop.permute.xlu0 %3658
      %3662 = vset.pattern.permute.xlu0 0
      %3663 = vperm.xlu0 %3662, %v3201
      %v3664 = vpop.permute.xlu0 %3663
      %3667 = vset.pattern.permute.xlu0 0
      %3668 = vperm.xlu0 %3667, %v3202
      %v3669 = vpop.permute.xlu0 %3668
      %3672 = vset.pattern.permute.xlu0 0
      %3673 = vperm.xlu0 %3672, %v3203
      %v3674 = vpop.permute.xlu0 %3673
      %3677 = vset.pattern.permute.xlu0 0
      %3678 = vperm.xlu0 %3677, %v3204
      %v3679 = vpop.permute.xlu0 %3678
      %3682 = vset.pattern.permute.xlu0 0
      %3683 = vperm.xlu0 %3682, %v3205
      %v3684 = vpop.permute.xlu0 %3683
      %3687 = vset.pattern.permute.xlu0 0
      %3688 = vperm.xlu0 %3687, %v3206
      %v3689 = vpop.permute.xlu0 %3688
      %3692 = vset.pattern.permute.xlu0 0
      %3693 = vperm.xlu0 %3692, %v3207
      %v3694 = vpop.permute.xlu0 %3693
      %3697 = vset.pattern.permute.xlu0 0
      %3698 = vperm.xlu0 %3697, %v3208
      %v3699 = vpop.permute.xlu0 %3698
      %3702 = vset.pattern.permute.xlu0 0
      %3703 = vperm.xlu0 %3702, %v3209
      %v3704 = vpop.permute.xlu0 %3703
      %3707 = vset.pattern.permute.xlu0 0
      %3708 = vperm.xlu0 %3707, %v3210
      %v3709 = vpop.permute.xlu0 %3708
      %3712 = vset.pattern.permute.xlu0 0
      %3713 = vperm.xlu0 %3712, %v3211
      %v3714 = vpop.permute.xlu0 %3713
      %3717 = vset.pattern.permute.xlu0 0
      %3718 = vperm.xlu0 %3717, %v3212
      %v3719 = vpop.permute.xlu0 %3718
      %3722 = vset.pattern.permute.xlu0 0
      %3723 = vperm.xlu0 %3722, %v3213
      %v3724 = vpop.permute.xlu0 %3723
      %3727 = vset.pattern.permute.xlu0 0
      %3728 = vperm.xlu0 %3727, %v3214
      %v3729 = vpop.permute.xlu0 %3728
      %3732 = vset.pattern.permute.xlu0 0
      %3733 = vperm.xlu0 %3732, %v3215
      %v3734 = vpop.permute.xlu0 %3733
      %3737 = vset.pattern.permute.xlu0 0
      %3738 = vperm.xlu0 %3737, %v3216
      %v3739 = vpop.permute.xlu0 %3738
      %3742 = vset.pattern.permute.xlu0 0
      %3743 = vperm.xlu0 %3742, %v3217
      %v3744 = vpop.permute.xlu0 %3743
      %3747 = vset.pattern.permute.xlu0 0
      %3748 = vperm.xlu0 %3747, %v3218
      %v3749 = vpop.permute.xlu0 %3748
      %3752 = vset.pattern.permute.xlu0 0
      %3753 = vperm.xlu0 %3752, %v3219
      %v3754 = vpop.permute.xlu0 %3753
      %3757 = vset.pattern.permute.xlu0 0
      %3758 = vperm.xlu0 %3757, %v3220
      %v3759 = vpop.permute.xlu0 %3758
      %3762 = vset.pattern.permute.xlu0 0
      %3763 = vperm.xlu0 %3762, %v3221
      %v3764 = vpop.permute.xlu0 %3763
      %3767 = vset.pattern.permute.xlu0 0
      %3768 = vperm.xlu0 %3767, %v3222
      %v3769 = vpop.permute.xlu0 %3768
      %3772 = vset.pattern.permute.xlu0 0
      %3773 = vperm.xlu0 %3772, %v3223
      %v3774 = vpop.permute.xlu0 %3773
      %3777 = vset.pattern.permute.xlu0 0
      %3778 = vperm.xlu0 %3777, %v3224
      %v3779 = vpop.permute.xlu0 %3778
      %3782 = vset.pattern.permute.xlu0 0
      %3783 = vperm.xlu0 %3782, %v3225
      %v3784 = vpop.permute.xlu0 %3783
      %3787 = vset.pattern.permute.xlu0 0
      %3788 = vperm.xlu0 %3787, %v3226
      %v3789 = vpop.permute.xlu0 %3788
      %3792 = vset.pattern.permute.xlu0 0
      %3793 = vperm.xlu0 %3792, %v3227
      %v3794 = vpop.permute.xlu0 %3793
      %3797 = vset.pattern.permute.xlu0 0
      %3798 = vperm.xlu0 %3797, %v3228
      %v3799 = vpop.permute.xlu0 %3798
      %3802 = vset.pattern.permute.xlu0 0
      %3803 = vperm.xlu0 %3802, %v3229
      %v3804 = vpop.permute.xlu0 %3803
      %3807 = vset.pattern.permute.xlu0 0
      %3808 = vperm.xlu0 %3807, %v3230
      %v3809 = vpop.permute.xlu0 %3808
      %3812 = vset.pattern.permute.xlu0 0
      %3813 = vperm.xlu0 %3812, %v3231
      %v3814 = vpop.permute.xlu0 %3813
      %3817 = vset.pattern.permute.xlu0 0
      %3818 = vperm.xlu0 %3817, %v3232
      %v3819 = vpop.permute.xlu0 %3818
      %3822 = vset.pattern.permute.xlu0 0
      %3823 = vperm.xlu0 %3822, %v3233
      %v3824 = vpop.permute.xlu0 %3823
      %3827 = vset.pattern.permute.xlu0 0
      %3828 = vperm.xlu0 %3827, %v3234
      %v3829 = vpop.permute.xlu0 %3828
      %3832 = vset.pattern.permute.xlu0 0
      %3833 = vperm.xlu0 %3832, %v3235
      %v3834 = vpop.permute.xlu0 %3833
      %3837 = vset.pattern.permute.xlu0 0
      %3838 = vperm.xlu0 %3837, %v3236
      %v3839 = vpop.permute.xlu0 %3838
      %3842 = vset.pattern.permute.xlu0 0
      %3843 = vperm.xlu0 %3842, %v3237
      %v3844 = vpop.permute.xlu0 %3843
      %3847 = vset.pattern.permute.xlu0 0
      %3848 = vperm.xlu0 %3847, %v3238
      %v3849 = vpop.permute.xlu0 %3848
      %3852 = vset.pattern.permute.xlu0 0
      %3853 = vperm.xlu0 %3852, %v3239
      %v3854 = vpop.permute.xlu0 %3853
      %3857 = vset.pattern.permute.xlu0 0
      %3858 = vperm.xlu0 %3857, %v3240
      %v3859 = vpop.permute.xlu0 %3858
      %3862 = vset.pattern.permute.xlu0 0
      %3863 = vperm.xlu0 %3862, %v3241
      %v3864 = vpop.permute.xlu0 %3863
      %3867 = vset.pattern.permute.xlu0 0
      %3868 = vperm.xlu0 %3867, %v3242
      %v3869 = vpop.permute.xlu0 %3868
      %3872 = vset.pattern.permute.xlu0 0
      %3873 = vperm.xlu0 %3872, %v3243
      %v3874 = vpop.permute.xlu0 %3873
      %3877 = vset.pattern.permute.xlu0 0
      %3878 = vperm.xlu0 %3877, %v3244
      %v3879 = vpop.permute.xlu0 %3878
      %3882 = vset.pattern.permute.xlu0 0
      %3883 = vperm.xlu0 %3882, %v3245
      %v3884 = vpop.permute.xlu0 %3883
      %v3886 = vmul.f32 %v2608, %v3249
      %v3887 = vmul.f32 %v2611, %v3254
      %v3888 = vmul.f32 %v2616, %v3259
      %v3889 = vmul.f32 %v2619, %v3264
      %v3890 = vmul.f32 %v2624, %v3269
      %v3891 = vmul.f32 %v2627, %v3274
      %v3892 = vmul.f32 %v2632, %v3279
      %v3893 = vmul.f32 %v2635, %v3284
      %v3894 = vmul.f32 %v2640, %v3289
      %v3895 = vmul.f32 %v2643, %v3294
      %v3896 = vmul.f32 %v2648, %v3299
      %v3897 = vmul.f32 %v2651, %v3304
      %v3898 = vmul.f32 %v2656, %v3309
      %v3899 = vmul.f32 %v2659, %v3314
      %v3900 = vmul.f32 %v2664, %v3319
      %v3901 = vmul.f32 %v2667, %v3324
      %v3902 = vmul.f32 %v2672, %v3329
      %v3903 = vmul.f32 %v2675, %v3334
      %v3904 = vmul.f32 %v2680, %v3339
      %v3905 = vmul.f32 %v2683, %v3344
      %v3906 = vmul.f32 %v2688, %v3349
      %v3907 = vmul.f32 %v2691, %v3354
      %v3908 = vmul.f32 %v2696, %v3359
      %v3909 = vmul.f32 %v2699, %v3364
      %v3910 = vmul.f32 %v2704, %v3369
      %v3911 = vmul.f32 %v2707, %v3374
      %v3912 = vmul.f32 %v2712, %v3379
      %v3913 = vmul.f32 %v2715, %v3384
      %v3914 = vmul.f32 %v2720, %v3389
      %v3915 = vmul.f32 %v2723, %v3394
      %v3916 = vmul.f32 %v2728, %v3399
      %v3917 = vmul.f32 %v2731, %v3404
      %v3918 = vmul.f32 %v2736, %v3409
      %v3919 = vmul.f32 %v2739, %v3414
      %v3920 = vmul.f32 %v2744, %v3419
      %v3921 = vmul.f32 %v2747, %v3424
      %v3922 = vmul.f32 %v2752, %v3429
      %v3923 = vmul.f32 %v2755, %v3434
      %v3924 = vmul.f32 %v2760, %v3439
      %v3925 = vmul.f32 %v2763, %v3444
      %v3926 = vmul.f32 %v2768, %v3449
      %v3927 = vmul.f32 %v2771, %v3454
      %v3928 = vmul.f32 %v2776, %v3459
      %v3929 = vmul.f32 %v2779, %v3464
      %v3930 = vmul.f32 %v2784, %v3469
      %v3931 = vmul.f32 %v2787, %v3474
      %v3932 = vmul.f32 %v2792, %v3479
      %v3933 = vmul.f32 %v2795, %v3484
      %v3934 = vmul.f32 %v2800, %v3489
      %v3935 = vmul.f32 %v2803, %v3494
      %v3936 = vmul.f32 %v2808, %v3499
      %v3937 = vmul.f32 %v2811, %v3504
      %v3938 = vmul.f32 %v2816, %v3509
      %v3939 = vmul.f32 %v2819, %v3514
      %v3940 = vmul.f32 %v2824, %v3519
      %v3941 = vmul.f32 %v2827, %v3524
      %v3942 = vmul.f32 %v2832, %v3529
      %v3943 = vmul.f32 %v2835, %v3534
      %v3944 = vmul.f32 %v2840, %v3539
      %v3945 = vmul.f32 %v2843, %v3544
      %v3946 = vmul.f32 %v2848, %v3549
      %v3947 = vmul.f32 %v2851, %v3554
      %v3948 = vmul.f32 %v2856, %v3559
      %v3949 = vmul.f32 %v2859, %v3564
      %v3950 = vmul.f32 %v2864, %v3569
      %v3951 = vmul.f32 %v2867, %v3574
      %v3952 = vmul.f32 %v2872, %v3579
      %v3953 = vmul.f32 %v2875, %v3584
      %v3954 = vmul.f32 %v2880, %v3589
      %v3955 = vmul.f32 %v2883, %v3594
      %v3956 = vmul.f32 %v2888, %v3599
      %v3957 = vmul.f32 %v2891, %v3604
      %v3958 = vmul.f32 %v2896, %v3609
      %v3959 = vmul.f32 %v2899, %v3614
      %v3960 = vmul.f32 %v2904, %v3619
      %v3961 = vmul.f32 %v2907, %v3624
      %v3962 = vmul.f32 %v2912, %v3629
      %v3963 = vmul.f32 %v2915, %v3634
      %v3964 = vmul.f32 %v2920, %v3639
      %v3965 = vmul.f32 %v2923, %v3644
      %v3966 = vmul.f32 %v2928, %v3649
      %v3967 = vmul.f32 %v2931, %v3654
      %v3968 = vmul.f32 %v2936, %v3659
      %v3969 = vmul.f32 %v2939, %v3664
      %v3970 = vmul.f32 %v2944, %v3669
      %v3971 = vmul.f32 %v2947, %v3674
      %v3972 = vmul.f32 %v2952, %v3679
      %v3973 = vmul.f32 %v2955, %v3684
      %v3974 = vmul.f32 %v2960, %v3689
      %v3975 = vmul.f32 %v2963, %v3694
      %v3976 = vmul.f32 %v2968, %v3699
      %v3977 = vmul.f32 %v2971, %v3704
      %v3978 = vmul.f32 %v2976, %v3709
      %v3979 = vmul.f32 %v2979, %v3714
      %v3980 = vmul.f32 %v2984, %v3719
      %v3981 = vmul.f32 %v2987, %v3724
      %v3982 = vmul.f32 %v2992, %v3729
      %v3983 = vmul.f32 %v2995, %v3734
      %v3984 = vmul.f32 %v3000, %v3739
      %v3985 = vmul.f32 %v3003, %v3744
      %v3986 = vmul.f32 %v3008, %v3749
      %v3987 = vmul.f32 %v3011, %v3754
      %v3988 = vmul.f32 %v3016, %v3759
      %v3989 = vmul.f32 %v3019, %v3764
      %v3990 = vmul.f32 %v3024, %v3769
      %v3991 = vmul.f32 %v3027, %v3774
      %v3992 = vmul.f32 %v3032, %v3779
      %v3993 = vmul.f32 %v3035, %v3784
      %v3994 = vmul.f32 %v3040, %v3789
      %v3995 = vmul.f32 %v3043, %v3794
      %v3996 = vmul.f32 %v3048, %v3799
      %v3997 = vmul.f32 %v3051, %v3804
      %v3998 = vmul.f32 %v3056, %v3809
      %v3999 = vmul.f32 %v3059, %v3814
      %v4000 = vmul.f32 %v3064, %v3819
      %v4001 = vmul.f32 %v3067, %v3824
      %v4002 = vmul.f32 %v3072, %v3829
      %v4003 = vmul.f32 %v3075, %v3834
      %v4004 = vmul.f32 %v3080, %v3839
      %v4005 = vmul.f32 %v3083, %v3844
      %v4006 = vmul.f32 %v3088, %v3849
      %v4007 = vmul.f32 %v3091, %v3854
      %v4008 = vmul.f32 %v3096, %v3859
      %v4009 = vmul.f32 %v3099, %v3864
      %v4010 = vmul.f32 %v3104, %v3869
      %v4011 = vmul.f32 %v3107, %v3874
      %v4012 = vmul.f32 %v3112, %v3879
      %v4013 = vmul.f32 %v3115, %v3884
      %4014 = vset.pattern.permute.xlu0 1
      %4015 = vperm.xlu0 %4014, %v3118
      %v4016 = vpop.permute.xlu0 %4015
      %4018 = vset.pattern.permute.xlu0 1
      %4019 = vperm.xlu0 %4018, %v3119
      %v4020 = vpop.permute.xlu0 %4019
      %4022 = vset.pattern.permute.xlu0 1
      %4023 = vperm.xlu0 %4022, %v3120
      %v4024 = vpop.permute.xlu0 %4023
      %4026 = vset.pattern.permute.xlu0 1
      %4027 = vperm.xlu0 %4026, %v3121
      %v4028 = vpop.permute.xlu0 %4027
      %4030 = vset.pattern.permute.xlu0 1
      %4031 = vperm.xlu0 %4030, %v3122
      %v4032 = vpop.permute.xlu0 %4031
      %4034 = vset.pattern.permute.xlu0 1
      %4035 = vperm.xlu0 %4034, %v3123
      %v4036 = vpop.permute.xlu0 %4035
      %4038 = vset.pattern.permute.xlu0 1
      %4039 = vperm.xlu0 %4038, %v3124
      %v4040 = vpop.permute.xlu0 %4039
      %4042 = vset.pattern.permute.xlu0 1
      %4043 = vperm.xlu0 %4042, %v3125
      %v4044 = vpop.permute.xlu0 %4043
      %4046 = vset.pattern.permute.xlu0 1
      %4047 = vperm.xlu0 %4046, %v3126
      %v4048 = vpop.permute.xlu0 %4047
      %4050 = vset.pattern.permute.xlu0 1
      %4051 = vperm.xlu0 %4050, %v3127
      %v4052 = vpop.permute.xlu0 %4051
      %4054 = vset.pattern.permute.xlu0 1
      %4055 = vperm.xlu0 %4054, %v3128
      %v4056 = vpop.permute.xlu0 %4055
      %4058 = vset.pattern.permute.xlu0 1
      %4059 = vperm.xlu0 %4058, %v3129
      %v4060 = vpop.permute.xlu0 %4059
      %4062 = vset.pattern.permute.xlu0 1
      %4063 = vperm.xlu0 %4062, %v3130
      %v4064 = vpop.permute.xlu0 %4063
      %4066 = vset.pattern.permute.xlu0 1
      %4067 = vperm.xlu0 %4066, %v3131
      %v4068 = vpop.permute.xlu0 %4067
      %4070 = vset.pattern.permute.xlu0 1
      %4071 = vperm.xlu0 %4070, %v3132
      %v4072 = vpop.permute.xlu0 %4071
      %4074 = vset.pattern.permute.xlu0 1
      %4075 = vperm.xlu0 %4074, %v3133
      %v4076 = vpop.permute.xlu0 %4075
      %4078 = vset.pattern.permute.xlu0 1
      %4079 = vperm.xlu0 %4078, %v3134
      %v4080 = vpop.permute.xlu0 %4079
      %4082 = vset.pattern.permute.xlu0 1
      %4083 = vperm.xlu0 %4082, %v3135
      %v4084 = vpop.permute.xlu0 %4083
      %4086 = vset.pattern.permute.xlu0 1
      %4087 = vperm.xlu0 %4086, %v3136
      %v4088 = vpop.permute.xlu0 %4087
      %4090 = vset.pattern.permute.xlu0 1
      %4091 = vperm.xlu0 %4090, %v3137
      %v4092 = vpop.permute.xlu0 %4091
      %4094 = vset.pattern.permute.xlu0 1
      %4095 = vperm.xlu0 %4094, %v3138
      %v4096 = vpop.permute.xlu0 %4095
      %4098 = vset.pattern.permute.xlu0 1
      %4099 = vperm.xlu0 %4098, %v3139
      %v4100 = vpop.permute.xlu0 %4099
      %4102 = vset.pattern.permute.xlu0 1
      %4103 = vperm.xlu0 %4102, %v3140
      %v4104 = vpop.permute.xlu0 %4103
      %4106 = vset.pattern.permute.xlu0 1
      %4107 = vperm.xlu0 %4106, %v3141
      %v4108 = vpop.permute.xlu0 %4107
      %4110 = vset.pattern.permute.xlu0 1
      %4111 = vperm.xlu0 %4110, %v3142
      %v4112 = vpop.permute.xlu0 %4111
      %4114 = vset.pattern.permute.xlu0 1
      %4115 = vperm.xlu0 %4114, %v3143
      %v4116 = vpop.permute.xlu0 %4115
      %4118 = vset.pattern.permute.xlu0 1
      %4119 = vperm.xlu0 %4118, %v3144
      %v4120 = vpop.permute.xlu0 %4119
      %4122 = vset.pattern.permute.xlu0 1
      %4123 = vperm.xlu0 %4122, %v3145
      %v4124 = vpop.permute.xlu0 %4123
      %4126 = vset.pattern.permute.xlu0 1
      %4127 = vperm.xlu0 %4126, %v3146
      %v4128 = vpop.permute.xlu0 %4127
      %4130 = vset.pattern.permute.xlu0 1
      %4131 = vperm.xlu0 %4130, %v3147
      %v4132 = vpop.permute.xlu0 %4131
      %4134 = vset.pattern.permute.xlu0 1
      %4135 = vperm.xlu0 %4134, %v3148
      %v4136 = vpop.permute.xlu0 %4135
      %4138 = vset.pattern.permute.xlu0 1
      %4139 = vperm.xlu0 %4138, %v3149
      %v4140 = vpop.permute.xlu0 %4139
      %4142 = vset.pattern.permute.xlu0 1
      %4143 = vperm.xlu0 %4142, %v3150
      %v4144 = vpop.permute.xlu0 %4143
      %4146 = vset.pattern.permute.xlu0 1
      %4147 = vperm.xlu0 %4146, %v3151
      %v4148 = vpop.permute.xlu0 %4147
      %4150 = vset.pattern.permute.xlu0 1
      %4151 = vperm.xlu0 %4150, %v3152
      %v4152 = vpop.permute.xlu0 %4151
      %4154 = vset.pattern.permute.xlu0 1
      %4155 = vperm.xlu0 %4154, %v3153
      %v4156 = vpop.permute.xlu0 %4155
      %4158 = vset.pattern.permute.xlu0 1
      %4159 = vperm.xlu0 %4158, %v3154
      %v4160 = vpop.permute.xlu0 %4159
      %4162 = vset.pattern.permute.xlu0 1
      %4163 = vperm.xlu0 %4162, %v3155
      %v4164 = vpop.permute.xlu0 %4163
      %4166 = vset.pattern.permute.xlu0 1
      %4167 = vperm.xlu0 %4166, %v3156
      %v4168 = vpop.permute.xlu0 %4167
      %4170 = vset.pattern.permute.xlu0 1
      %4171 = vperm.xlu0 %4170, %v3157
      %v4172 = vpop.permute.xlu0 %4171
      %4174 = vset.pattern.permute.xlu0 1
      %4175 = vperm.xlu0 %4174, %v3158
      %v4176 = vpop.permute.xlu0 %4175
      %4178 = vset.pattern.permute.xlu0 1
      %4179 = vperm.xlu0 %4178, %v3159
      %v4180 = vpop.permute.xlu0 %4179
      %4182 = vset.pattern.permute.xlu0 1
      %4183 = vperm.xlu0 %4182, %v3160
      %v4184 = vpop.permute.xlu0 %4183
      %4186 = vset.pattern.permute.xlu0 1
      %4187 = vperm.xlu0 %4186, %v3161
      %v4188 = vpop.permute.xlu0 %4187
      %4190 = vset.pattern.permute.xlu0 1
      %4191 = vperm.xlu0 %4190, %v3162
      %v4192 = vpop.permute.xlu0 %4191
      %4194 = vset.pattern.permute.xlu0 1
      %4195 = vperm.xlu0 %4194, %v3163
      %v4196 = vpop.permute.xlu0 %4195
      %4198 = vset.pattern.permute.xlu0 1
      %4199 = vperm.xlu0 %4198, %v3164
      %v4200 = vpop.permute.xlu0 %4199
      %4202 = vset.pattern.permute.xlu0 1
      %4203 = vperm.xlu0 %4202, %v3165
      %v4204 = vpop.permute.xlu0 %4203
      %4206 = vset.pattern.permute.xlu0 1
      %4207 = vperm.xlu0 %4206, %v3166
      %v4208 = vpop.permute.xlu0 %4207
      %4210 = vset.pattern.permute.xlu0 1
      %4211 = vperm.xlu0 %4210, %v3167
      %v4212 = vpop.permute.xlu0 %4211
      %4214 = vset.pattern.permute.xlu0 1
      %4215 = vperm.xlu0 %4214, %v3168
      %v4216 = vpop.permute.xlu0 %4215
      %4218 = vset.pattern.permute.xlu0 1
      %4219 = vperm.xlu0 %4218, %v3169
      %v4220 = vpop.permute.xlu0 %4219
      %4222 = vset.pattern.permute.xlu0 1
      %4223 = vperm.xlu0 %4222, %v3170
      %v4224 = vpop.permute.xlu0 %4223
      %4226 = vset.pattern.permute.xlu0 1
      %4227 = vperm.xlu0 %4226, %v3171
      %v4228 = vpop.permute.xlu0 %4227
      %4230 = vset.pattern.permute.xlu0 1
      %4231 = vperm.xlu0 %4230, %v3172
      %v4232 = vpop.permute.xlu0 %4231
      %4234 = vset.pattern.permute.xlu0 1
      %4235 = vperm.xlu0 %4234, %v3173
      %v4236 = vpop.permute.xlu0 %4235
      %4238 = vset.pattern.permute.xlu0 1
      %4239 = vperm.xlu0 %4238, %v3174
      %v4240 = vpop.permute.xlu0 %4239
      %4242 = vset.pattern.permute.xlu0 1
      %4243 = vperm.xlu0 %4242, %v3175
      %v4244 = vpop.permute.xlu0 %4243
      %4246 = vset.pattern.permute.xlu0 1
      %4247 = vperm.xlu0 %4246, %v3176
      %v4248 = vpop.permute.xlu0 %4247
      %4250 = vset.pattern.permute.xlu0 1
      %4251 = vperm.xlu0 %4250, %v3177
      %v4252 = vpop.permute.xlu0 %4251
      %4254 = vset.pattern.permute.xlu0 1
      %4255 = vperm.xlu0 %4254, %v3178
      %v4256 = vpop.permute.xlu0 %4255
      %4258 = vset.pattern.permute.xlu0 1
      %4259 = vperm.xlu0 %4258, %v3179
      %v4260 = vpop.permute.xlu0 %4259
      %4262 = vset.pattern.permute.xlu0 1
      %4263 = vperm.xlu0 %4262, %v3180
      %v4264 = vpop.permute.xlu0 %4263
      %4266 = vset.pattern.permute.xlu0 1
      %4267 = vperm.xlu0 %4266, %v3181
      %v4268 = vpop.permute.xlu0 %4267
      %4270 = vset.pattern.permute.xlu0 1
      %4271 = vperm.xlu0 %4270, %v3182
      %v4272 = vpop.permute.xlu0 %4271
      %4274 = vset.pattern.permute.xlu0 1
      %4275 = vperm.xlu0 %4274, %v3183
      %v4276 = vpop.permute.xlu0 %4275
      %4278 = vset.pattern.permute.xlu0 1
      %4279 = vperm.xlu0 %4278, %v3184
      %v4280 = vpop.permute.xlu0 %4279
      %4282 = vset.pattern.permute.xlu0 1
      %4283 = vperm.xlu0 %4282, %v3185
      %v4284 = vpop.permute.xlu0 %4283
      %4286 = vset.pattern.permute.xlu0 1
      %4287 = vperm.xlu0 %4286, %v3186
      %v4288 = vpop.permute.xlu0 %4287
      %4290 = vset.pattern.permute.xlu0 1
      %4291 = vperm.xlu0 %4290, %v3187
      %v4292 = vpop.permute.xlu0 %4291
      %4294 = vset.pattern.permute.xlu0 1
      %4295 = vperm.xlu0 %4294, %v3188
      %v4296 = vpop.permute.xlu0 %4295
      %4298 = vset.pattern.permute.xlu0 1
      %4299 = vperm.xlu0 %4298, %v3189
      %v4300 = vpop.permute.xlu0 %4299
      %4302 = vset.pattern.permute.xlu0 1
      %4303 = vperm.xlu0 %4302, %v3190
      %v4304 = vpop.permute.xlu0 %4303
      %4306 = vset.pattern.permute.xlu0 1
      %4307 = vperm.xlu0 %4306, %v3191
      %v4308 = vpop.permute.xlu0 %4307
      %4310 = vset.pattern.permute.xlu0 1
      %4311 = vperm.xlu0 %4310, %v3192
      %v4312 = vpop.permute.xlu0 %4311
      %4314 = vset.pattern.permute.xlu0 1
      %4315 = vperm.xlu0 %4314, %v3193
      %v4316 = vpop.permute.xlu0 %4315
      %4318 = vset.pattern.permute.xlu0 1
      %4319 = vperm.xlu0 %4318, %v3194
      %v4320 = vpop.permute.xlu0 %4319
      %4322 = vset.pattern.permute.xlu0 1
      %4323 = vperm.xlu0 %4322, %v3195
      %v4324 = vpop.permute.xlu0 %4323
      %4326 = vset.pattern.permute.xlu0 1
      %4327 = vperm.xlu0 %4326, %v3196
      %v4328 = vpop.permute.xlu0 %4327
      %4330 = vset.pattern.permute.xlu0 1
      %4331 = vperm.xlu0 %4330, %v3197
      %v4332 = vpop.permute.xlu0 %4331
      %4334 = vset.pattern.permute.xlu0 1
      %4335 = vperm.xlu0 %4334, %v3198
      %v4336 = vpop.permute.xlu0 %4335
      %4338 = vset.pattern.permute.xlu0 1
      %4339 = vperm.xlu0 %4338, %v3199
      %v4340 = vpop.permute.xlu0 %4339
      %4342 = vset.pattern.permute.xlu0 1
      %4343 = vperm.xlu0 %4342, %v3200
      %v4344 = vpop.permute.xlu0 %4343
      %4346 = vset.pattern.permute.xlu0 1
      %4347 = vperm.xlu0 %4346, %v3201
      %v4348 = vpop.permute.xlu0 %4347
      %4350 = vset.pattern.permute.xlu0 1
      %4351 = vperm.xlu0 %4350, %v3202
      %v4352 = vpop.permute.xlu0 %4351
      %4354 = vset.pattern.permute.xlu0 1
      %4355 = vperm.xlu0 %4354, %v3203
      %v4356 = vpop.permute.xlu0 %4355
      %4358 = vset.pattern.permute.xlu0 1
      %4359 = vperm.xlu0 %4358, %v3204
      %v4360 = vpop.permute.xlu0 %4359
      %4362 = vset.pattern.permute.xlu0 1
      %4363 = vperm.xlu0 %4362, %v3205
      %v4364 = vpop.permute.xlu0 %4363
      %4366 = vset.pattern.permute.xlu0 1
      %4367 = vperm.xlu0 %4366, %v3206
      %v4368 = vpop.permute.xlu0 %4367
      %4370 = vset.pattern.permute.xlu0 1
      %4371 = vperm.xlu0 %4370, %v3207
      %v4372 = vpop.permute.xlu0 %4371
      %4374 = vset.pattern.permute.xlu0 1
      %4375 = vperm.xlu0 %4374, %v3208
      %v4376 = vpop.permute.xlu0 %4375
      %4378 = vset.pattern.permute.xlu0 1
      %4379 = vperm.xlu0 %4378, %v3209
      %v4380 = vpop.permute.xlu0 %4379
      %4382 = vset.pattern.permute.xlu0 1
      %4383 = vperm.xlu0 %4382, %v3210
      %v4384 = vpop.permute.xlu0 %4383
      %4386 = vset.pattern.permute.xlu0 1
      %4387 = vperm.xlu0 %4386, %v3211
      %v4388 = vpop.permute.xlu0 %4387
      %4390 = vset.pattern.permute.xlu0 1
      %4391 = vperm.xlu0 %4390, %v3212
      %v4392 = vpop.permute.xlu0 %4391
      %4394 = vset.pattern.permute.xlu0 1
      %4395 = vperm.xlu0 %4394, %v3213
      %v4396 = vpop.permute.xlu0 %4395
      %4398 = vset.pattern.permute.xlu0 1
      %4399 = vperm.xlu0 %4398, %v3214
      %v4400 = vpop.permute.xlu0 %4399
      %4402 = vset.pattern.permute.xlu0 1
      %4403 = vperm.xlu0 %4402, %v3215
      %v4404 = vpop.permute.xlu0 %4403
      %4406 = vset.pattern.permute.xlu0 1
      %4407 = vperm.xlu0 %4406, %v3216
      %v4408 = vpop.permute.xlu0 %4407
      %4410 = vset.pattern.permute.xlu0 1
      %4411 = vperm.xlu0 %4410, %v3217
      %v4412 = vpop.permute.xlu0 %4411
      %4414 = vset.pattern.permute.xlu0 1
      %4415 = vperm.xlu0 %4414, %v3218
      %v4416 = vpop.permute.xlu0 %4415
      %4418 = vset.pattern.permute.xlu0 1
      %4419 = vperm.xlu0 %4418, %v3219
      %v4420 = vpop.permute.xlu0 %4419
      %4422 = vset.pattern.permute.xlu0 1
      %4423 = vperm.xlu0 %4422, %v3220
      %v4424 = vpop.permute.xlu0 %4423
      %4426 = vset.pattern.permute.xlu0 1
      %4427 = vperm.xlu0 %4426, %v3221
      %v4428 = vpop.permute.xlu0 %4427
      %4430 = vset.pattern.permute.xlu0 1
      %4431 = vperm.xlu0 %4430, %v3222
      %v4432 = vpop.permute.xlu0 %4431
      %4434 = vset.pattern.permute.xlu0 1
      %4435 = vperm.xlu0 %4434, %v3223
      %v4436 = vpop.permute.xlu0 %4435
      %4438 = vset.pattern.permute.xlu0 1
      %4439 = vperm.xlu0 %4438, %v3224
      %v4440 = vpop.permute.xlu0 %4439
      %4442 = vset.pattern.permute.xlu0 1
      %4443 = vperm.xlu0 %4442, %v3225
      %v4444 = vpop.permute.xlu0 %4443
      %4446 = vset.pattern.permute.xlu0 1
      %4447 = vperm.xlu0 %4446, %v3226
      %v4448 = vpop.permute.xlu0 %4447
      %4450 = vset.pattern.permute.xlu0 1
      %4451 = vperm.xlu0 %4450, %v3227
      %v4452 = vpop.permute.xlu0 %4451
      %4454 = vset.pattern.permute.xlu0 1
      %4455 = vperm.xlu0 %4454, %v3228
      %v4456 = vpop.permute.xlu0 %4455
      %4458 = vset.pattern.permute.xlu0 1
      %4459 = vperm.xlu0 %4458, %v3229
      %v4460 = vpop.permute.xlu0 %4459
      %4462 = vset.pattern.permute.xlu0 1
      %4463 = vperm.xlu0 %4462, %v3230
      %v4464 = vpop.permute.xlu0 %4463
      %4466 = vset.pattern.permute.xlu0 1
      %4467 = vperm.xlu0 %4466, %v3231
      %v4468 = vpop.permute.xlu0 %4467
      %4470 = vset.pattern.permute.xlu0 1
      %4471 = vperm.xlu0 %4470, %v3232
      %v4472 = vpop.permute.xlu0 %4471
      %4474 = vset.pattern.permute.xlu0 1
      %4475 = vperm.xlu0 %4474, %v3233
      %v4476 = vpop.permute.xlu0 %4475
      %4478 = vset.pattern.permute.xlu0 1
      %4479 = vperm.xlu0 %4478, %v3234
      %v4480 = vpop.permute.xlu0 %4479
      %4482 = vset.pattern.permute.xlu0 1
      %4483 = vperm.xlu0 %4482, %v3235
      %v4484 = vpop.permute.xlu0 %4483
      %4486 = vset.pattern.permute.xlu0 1
      %4487 = vperm.xlu0 %4486, %v3236
      %v4488 = vpop.permute.xlu0 %4487
      %4490 = vset.pattern.permute.xlu0 1
      %4491 = vperm.xlu0 %4490, %v3237
      %v4492 = vpop.permute.xlu0 %4491
      %4494 = vset.pattern.permute.xlu0 1
      %4495 = vperm.xlu0 %4494, %v3238
      %v4496 = vpop.permute.xlu0 %4495
      %4498 = vset.pattern.permute.xlu0 1
      %4499 = vperm.xlu0 %4498, %v3239
      %v4500 = vpop.permute.xlu0 %4499
      %4502 = vset.pattern.permute.xlu0 1
      %4503 = vperm.xlu0 %4502, %v3240
      %v4504 = vpop.permute.xlu0 %4503
      %4506 = vset.pattern.permute.xlu0 1
      %4507 = vperm.xlu0 %4506, %v3241
      %v4508 = vpop.permute.xlu0 %4507
      %4510 = vset.pattern.permute.xlu0 1
      %4511 = vperm.xlu0 %4510, %v3242
      %v4512 = vpop.permute.xlu0 %4511
      %4514 = vset.pattern.permute.xlu0 1
      %4515 = vperm.xlu0 %4514, %v3243
      %v4516 = vpop.permute.xlu0 %4515
      %4518 = vset.pattern.permute.xlu0 1
      %4519 = vperm.xlu0 %4518, %v3244
      %v4520 = vpop.permute.xlu0 %4519
      %4522 = vset.pattern.permute.xlu0 1
      %4523 = vperm.xlu0 %4522, %v3245
      %v4524 = vpop.permute.xlu0 %4523
      %v4526 = vmul.f32 %v2608, %v4016
      %v4527 = vmul.f32 %v2611, %v4020
      %v4528 = vmul.f32 %v2616, %v4024
      %v4529 = vmul.f32 %v2619, %v4028
      %v4530 = vmul.f32 %v2624, %v4032
      %v4531 = vmul.f32 %v2627, %v4036
      %v4532 = vmul.f32 %v2632, %v4040
      %v4533 = vmul.f32 %v2635, %v4044
      %v4534 = vmul.f32 %v2640, %v4048
      %v4535 = vmul.f32 %v2643, %v4052
      %v4536 = vmul.f32 %v2648, %v4056
      %v4537 = vmul.f32 %v2651, %v4060
      %v4538 = vmul.f32 %v2656, %v4064
      %v4539 = vmul.f32 %v2659, %v4068
      %v4540 = vmul.f32 %v2664, %v4072
      %v4541 = vmul.f32 %v2667, %v4076
      %v4542 = vmul.f32 %v2672, %v4080
      %v4543 = vmul.f32 %v2675, %v4084
      %v4544 = vmul.f32 %v2680, %v4088
      %v4545 = vmul.f32 %v2683, %v4092
      %v4546 = vmul.f32 %v2688, %v4096
      %v4547 = vmul.f32 %v2691, %v4100
      %v4548 = vmul.f32 %v2696, %v4104
      %v4549 = vmul.f32 %v2699, %v4108
      %v4550 = vmul.f32 %v2704, %v4112
      %v4551 = vmul.f32 %v2707, %v4116
      %v4552 = vmul.f32 %v2712, %v4120
      %v4553 = vmul.f32 %v2715, %v4124
      %v4554 = vmul.f32 %v2720, %v4128
      %v4555 = vmul.f32 %v2723, %v4132
      %v4556 = vmul.f32 %v2728, %v4136
      %v4557 = vmul.f32 %v2731, %v4140
      %v4558 = vmul.f32 %v2736, %v4144
      %v4559 = vmul.f32 %v2739, %v4148
      %v4560 = vmul.f32 %v2744, %v4152
      %v4561 = vmul.f32 %v2747, %v4156
      %v4562 = vmul.f32 %v2752, %v4160
      %v4563 = vmul.f32 %v2755, %v4164
      %v4564 = vmul.f32 %v2760, %v4168
      %v4565 = vmul.f32 %v2763, %v4172
      %v4566 = vmul.f32 %v2768, %v4176
      %v4567 = vmul.f32 %v2771, %v4180
      %v4568 = vmul.f32 %v2776, %v4184
      %v4569 = vmul.f32 %v2779, %v4188
      %v4570 = vmul.f32 %v2784, %v4192
      %v4571 = vmul.f32 %v2787, %v4196
      %v4572 = vmul.f32 %v2792, %v4200
      %v4573 = vmul.f32 %v2795, %v4204
      %v4574 = vmul.f32 %v2800, %v4208
      %v4575 = vmul.f32 %v2803, %v4212
      %v4576 = vmul.f32 %v2808, %v4216
      %v4577 = vmul.f32 %v2811, %v4220
      %v4578 = vmul.f32 %v2816, %v4224
      %v4579 = vmul.f32 %v2819, %v4228
      %v4580 = vmul.f32 %v2824, %v4232
      %v4581 = vmul.f32 %v2827, %v4236
      %v4582 = vmul.f32 %v2832, %v4240
      %v4583 = vmul.f32 %v2835, %v4244
      %v4584 = vmul.f32 %v2840, %v4248
      %v4585 = vmul.f32 %v2843, %v4252
      %v4586 = vmul.f32 %v2848, %v4256
      %v4587 = vmul.f32 %v2851, %v4260
      %v4588 = vmul.f32 %v2856, %v4264
      %v4589 = vmul.f32 %v2859, %v4268
      %v4590 = vmul.f32 %v2864, %v4272
      %v4591 = vmul.f32 %v2867, %v4276
      %v4592 = vmul.f32 %v2872, %v4280
      %v4593 = vmul.f32 %v2875, %v4284
      %v4594 = vmul.f32 %v2880, %v4288
      %v4595 = vmul.f32 %v2883, %v4292
      %v4596 = vmul.f32 %v2888, %v4296
      %v4597 = vmul.f32 %v2891, %v4300
      %v4598 = vmul.f32 %v2896, %v4304
      %v4599 = vmul.f32 %v2899, %v4308
      %v4600 = vmul.f32 %v2904, %v4312
      %v4601 = vmul.f32 %v2907, %v4316
      %v4602 = vmul.f32 %v2912, %v4320
      %v4603 = vmul.f32 %v2915, %v4324
      %v4604 = vmul.f32 %v2920, %v4328
      %v4605 = vmul.f32 %v2923, %v4332
      %v4606 = vmul.f32 %v2928, %v4336
      %v4607 = vmul.f32 %v2931, %v4340
      %v4608 = vmul.f32 %v2936, %v4344
      %v4609 = vmul.f32 %v2939, %v4348
      %v4610 = vmul.f32 %v2944, %v4352
      %v4611 = vmul.f32 %v2947, %v4356
      %v4612 = vmul.f32 %v2952, %v4360
      %v4613 = vmul.f32 %v2955, %v4364
      %v4614 = vmul.f32 %v2960, %v4368
      %v4615 = vmul.f32 %v2963, %v4372
      %v4616 = vmul.f32 %v2968, %v4376
      %v4617 = vmul.f32 %v2971, %v4380
      %v4618 = vmul.f32 %v2976, %v4384
      %v4619 = vmul.f32 %v2979, %v4388
      %v4620 = vmul.f32 %v2984, %v4392
      %v4621 = vmul.f32 %v2987, %v4396
      %v4622 = vmul.f32 %v2992, %v4400
      %v4623 = vmul.f32 %v2995, %v4404
      %v4624 = vmul.f32 %v3000, %v4408
      %v4625 = vmul.f32 %v3003, %v4412
      %v4626 = vmul.f32 %v3008, %v4416
      %v4627 = vmul.f32 %v3011, %v4420
      %v4628 = vmul.f32 %v3016, %v4424
      %v4629 = vmul.f32 %v3019, %v4428
      %v4630 = vmul.f32 %v3024, %v4432
      %v4631 = vmul.f32 %v3027, %v4436
      %v4632 = vmul.f32 %v3032, %v4440
      %v4633 = vmul.f32 %v3035, %v4444
      %v4634 = vmul.f32 %v3040, %v4448
      %v4635 = vmul.f32 %v3043, %v4452
      %v4636 = vmul.f32 %v3048, %v4456
      %v4637 = vmul.f32 %v3051, %v4460
      %v4638 = vmul.f32 %v3056, %v4464
      %v4639 = vmul.f32 %v3059, %v4468
      %v4640 = vmul.f32 %v3064, %v4472
      %v4641 = vmul.f32 %v3067, %v4476
      %v4642 = vmul.f32 %v3072, %v4480
      %v4643 = vmul.f32 %v3075, %v4484
      %v4644 = vmul.f32 %v3080, %v4488
      %v4645 = vmul.f32 %v3083, %v4492
      %v4646 = vmul.f32 %v3088, %v4496
      %v4647 = vmul.f32 %v3091, %v4500
      %v4648 = vmul.f32 %v3096, %v4504
      %v4649 = vmul.f32 %v3099, %v4508
      %v4650 = vmul.f32 %v3104, %v4512
      %v4651 = vmul.f32 %v3107, %v4516
      %v4652 = vmul.f32 %v3112, %v4520
      %v4653 = vmul.f32 %v3115, %v4524
      %4782 = vrot.lane.b32.xlu0 %v4526, 120
      %v4783 = vpop.permute.xlu0 %4782
      %4784 = vrot.lane.b32.xlu0 %v4527, 120
      %v4785 = vpop.permute.xlu0 %4784
      %4786 = vrot.lane.b32.xlu0 %v4528, 120
      %v4787 = vpop.permute.xlu0 %4786
      %4788 = vrot.lane.b32.xlu0 %v4529, 120
      %v4789 = vpop.permute.xlu0 %4788
      %4790 = vrot.lane.b32.xlu0 %v4530, 120
      %v4791 = vpop.permute.xlu0 %4790
      %4792 = vrot.lane.b32.xlu0 %v4531, 120
      %v4793 = vpop.permute.xlu0 %4792
      %4794 = vrot.lane.b32.xlu0 %v4532, 120
      %v4795 = vpop.permute.xlu0 %4794
      %4796 = vrot.lane.b32.xlu0 %v4533, 120
      %v4797 = vpop.permute.xlu0 %4796
      %4798 = vrot.lane.b32.xlu0 %v4534, 120
      %v4799 = vpop.permute.xlu0 %4798
      %4800 = vrot.lane.b32.xlu0 %v4535, 120
      %v4801 = vpop.permute.xlu0 %4800
      %4802 = vrot.lane.b32.xlu0 %v4536, 120
      %v4803 = vpop.permute.xlu0 %4802
      %4804 = vrot.lane.b32.xlu0 %v4537, 120
      %v4805 = vpop.permute.xlu0 %4804
      %4806 = vrot.lane.b32.xlu0 %v4538, 120
      %v4807 = vpop.permute.xlu0 %4806
      %4808 = vrot.lane.b32.xlu0 %v4539, 120
      %v4809 = vpop.permute.xlu0 %4808
      %4810 = vrot.lane.b32.xlu0 %v4540, 120
      %v4811 = vpop.permute.xlu0 %4810
      %4812 = vrot.lane.b32.xlu0 %v4541, 120
      %v4813 = vpop.permute.xlu0 %4812
      %4814 = vrot.lane.b32.xlu0 %v4542, 120
      %v4815 = vpop.permute.xlu0 %4814
      %4816 = vrot.lane.b32.xlu0 %v4543, 120
      %v4817 = vpop.permute.xlu0 %4816
      %4818 = vrot.lane.b32.xlu0 %v4544, 120
      %v4819 = vpop.permute.xlu0 %4818
      %4820 = vrot.lane.b32.xlu0 %v4545, 120
      %v4821 = vpop.permute.xlu0 %4820
      %4822 = vrot.lane.b32.xlu0 %v4546, 120
      %v4823 = vpop.permute.xlu0 %4822
      %4824 = vrot.lane.b32.xlu0 %v4547, 120
      %v4825 = vpop.permute.xlu0 %4824
      %4826 = vrot.lane.b32.xlu0 %v4548, 120
      %v4827 = vpop.permute.xlu0 %4826
      %4828 = vrot.lane.b32.xlu0 %v4549, 120
      %v4829 = vpop.permute.xlu0 %4828
      %4830 = vrot.lane.b32.xlu0 %v4550, 120
      %v4831 = vpop.permute.xlu0 %4830
      %4832 = vrot.lane.b32.xlu0 %v4551, 120
      %v4833 = vpop.permute.xlu0 %4832
      %4834 = vrot.lane.b32.xlu0 %v4552, 120
      %v4835 = vpop.permute.xlu0 %4834
      %4836 = vrot.lane.b32.xlu0 %v4553, 120
      %v4837 = vpop.permute.xlu0 %4836
      %4838 = vrot.lane.b32.xlu0 %v4554, 120
      %v4839 = vpop.permute.xlu0 %4838
      %4840 = vrot.lane.b32.xlu0 %v4555, 120
      %v4841 = vpop.permute.xlu0 %4840
      %4842 = vrot.lane.b32.xlu0 %v4556, 120
      %v4843 = vpop.permute.xlu0 %4842
      %4844 = vrot.lane.b32.xlu0 %v4557, 120
      %v4845 = vpop.permute.xlu0 %4844
      %4846 = vrot.lane.b32.xlu0 %v4558, 120
      %v4847 = vpop.permute.xlu0 %4846
      %4848 = vrot.lane.b32.xlu0 %v4559, 120
      %v4849 = vpop.permute.xlu0 %4848
      %4850 = vrot.lane.b32.xlu0 %v4560, 120
      %v4851 = vpop.permute.xlu0 %4850
      %4852 = vrot.lane.b32.xlu0 %v4561, 120
      %v4853 = vpop.permute.xlu0 %4852
      %4854 = vrot.lane.b32.xlu0 %v4562, 120
      %v4855 = vpop.permute.xlu0 %4854
      %4856 = vrot.lane.b32.xlu0 %v4563, 120
      %v4857 = vpop.permute.xlu0 %4856
      %4858 = vrot.lane.b32.xlu0 %v4564, 120
      %v4859 = vpop.permute.xlu0 %4858
      %4860 = vrot.lane.b32.xlu0 %v4565, 120
      %v4861 = vpop.permute.xlu0 %4860
      %4862 = vrot.lane.b32.xlu0 %v4566, 120
      %v4863 = vpop.permute.xlu0 %4862
      %4864 = vrot.lane.b32.xlu0 %v4567, 120
      %v4865 = vpop.permute.xlu0 %4864
      %4866 = vrot.lane.b32.xlu0 %v4568, 120
      %v4867 = vpop.permute.xlu0 %4866
      %4868 = vrot.lane.b32.xlu0 %v4569, 120
      %v4869 = vpop.permute.xlu0 %4868
      %4870 = vrot.lane.b32.xlu0 %v4570, 120
      %v4871 = vpop.permute.xlu0 %4870
      %4872 = vrot.lane.b32.xlu0 %v4571, 120
      %v4873 = vpop.permute.xlu0 %4872
      %4874 = vrot.lane.b32.xlu0 %v4572, 120
      %v4875 = vpop.permute.xlu0 %4874
      %4876 = vrot.lane.b32.xlu0 %v4573, 120
      %v4877 = vpop.permute.xlu0 %4876
      %4878 = vrot.lane.b32.xlu0 %v4574, 120
      %v4879 = vpop.permute.xlu0 %4878
      %4880 = vrot.lane.b32.xlu0 %v4575, 120
      %v4881 = vpop.permute.xlu0 %4880
      %4882 = vrot.lane.b32.xlu0 %v4576, 120
      %v4883 = vpop.permute.xlu0 %4882
      %4884 = vrot.lane.b32.xlu0 %v4577, 120
      %v4885 = vpop.permute.xlu0 %4884
      %4886 = vrot.lane.b32.xlu0 %v4578, 120
      %v4887 = vpop.permute.xlu0 %4886
      %4888 = vrot.lane.b32.xlu0 %v4579, 120
      %v4889 = vpop.permute.xlu0 %4888
      %4890 = vrot.lane.b32.xlu0 %v4580, 120
      %v4891 = vpop.permute.xlu0 %4890
      %4892 = vrot.lane.b32.xlu0 %v4581, 120
      %v4893 = vpop.permute.xlu0 %4892
      %4894 = vrot.lane.b32.xlu0 %v4582, 120
      %v4895 = vpop.permute.xlu0 %4894
      %4896 = vrot.lane.b32.xlu0 %v4583, 120
      %v4897 = vpop.permute.xlu0 %4896
      %4898 = vrot.lane.b32.xlu0 %v4584, 120
      %v4899 = vpop.permute.xlu0 %4898
      %4900 = vrot.lane.b32.xlu0 %v4585, 120
      %v4901 = vpop.permute.xlu0 %4900
      %4902 = vrot.lane.b32.xlu0 %v4586, 120
      %v4903 = vpop.permute.xlu0 %4902
      %4904 = vrot.lane.b32.xlu0 %v4587, 120
      %v4905 = vpop.permute.xlu0 %4904
      %4906 = vrot.lane.b32.xlu0 %v4588, 120
      %v4907 = vpop.permute.xlu0 %4906
      %4908 = vrot.lane.b32.xlu0 %v4589, 120
      %v4909 = vpop.permute.xlu0 %4908
      %4910 = vrot.lane.b32.xlu0 %v4590, 120
      %v4911 = vpop.permute.xlu0 %4910
      %4912 = vrot.lane.b32.xlu0 %v4591, 120
      %v4913 = vpop.permute.xlu0 %4912
      %4914 = vrot.lane.b32.xlu0 %v4592, 120
      %v4915 = vpop.permute.xlu0 %4914
      %4916 = vrot.lane.b32.xlu0 %v4593, 120
      %v4917 = vpop.permute.xlu0 %4916
      %4918 = vrot.lane.b32.xlu0 %v4594, 120
      %v4919 = vpop.permute.xlu0 %4918
      %4920 = vrot.lane.b32.xlu0 %v4595, 120
      %v4921 = vpop.permute.xlu0 %4920
      %4922 = vrot.lane.b32.xlu0 %v4596, 120
      %v4923 = vpop.permute.xlu0 %4922
      %4924 = vrot.lane.b32.xlu0 %v4597, 120
      %v4925 = vpop.permute.xlu0 %4924
      %4926 = vrot.lane.b32.xlu0 %v4598, 120
      %v4927 = vpop.permute.xlu0 %4926
      %4928 = vrot.lane.b32.xlu0 %v4599, 120
      %v4929 = vpop.permute.xlu0 %4928
      %4930 = vrot.lane.b32.xlu0 %v4600, 120
      %v4931 = vpop.permute.xlu0 %4930
      %4932 = vrot.lane.b32.xlu0 %v4601, 120
      %v4933 = vpop.permute.xlu0 %4932
      %4934 = vrot.lane.b32.xlu0 %v4602, 120
      %v4935 = vpop.permute.xlu0 %4934
      %4936 = vrot.lane.b32.xlu0 %v4603, 120
      %v4937 = vpop.permute.xlu0 %4936
      %4938 = vrot.lane.b32.xlu0 %v4604, 120
      %v4939 = vpop.permute.xlu0 %4938
      %4940 = vrot.lane.b32.xlu0 %v4605, 120
      %v4941 = vpop.permute.xlu0 %4940
      %4942 = vrot.lane.b32.xlu0 %v4606, 120
      %v4943 = vpop.permute.xlu0 %4942
      %4944 = vrot.lane.b32.xlu0 %v4607, 120
      %v4945 = vpop.permute.xlu0 %4944
      %4946 = vrot.lane.b32.xlu0 %v4608, 120
      %v4947 = vpop.permute.xlu0 %4946
      %4948 = vrot.lane.b32.xlu0 %v4609, 120
      %v4949 = vpop.permute.xlu0 %4948
      %4950 = vrot.lane.b32.xlu0 %v4610, 120
      %v4951 = vpop.permute.xlu0 %4950
      %4952 = vrot.lane.b32.xlu0 %v4611, 120
      %v4953 = vpop.permute.xlu0 %4952
      %4954 = vrot.lane.b32.xlu0 %v4612, 120
      %v4955 = vpop.permute.xlu0 %4954
      %4956 = vrot.lane.b32.xlu0 %v4613, 120
      %v4957 = vpop.permute.xlu0 %4956
      %4958 = vrot.lane.b32.xlu0 %v4614, 120
      %v4959 = vpop.permute.xlu0 %4958
      %4960 = vrot.lane.b32.xlu0 %v4615, 120
      %v4961 = vpop.permute.xlu0 %4960
      %4962 = vrot.lane.b32.xlu0 %v4616, 120
      %v4963 = vpop.permute.xlu0 %4962
      %4964 = vrot.lane.b32.xlu0 %v4617, 120
      %v4965 = vpop.permute.xlu0 %4964
      %4966 = vrot.lane.b32.xlu0 %v4618, 120
      %v4967 = vpop.permute.xlu0 %4966
      %4968 = vrot.lane.b32.xlu0 %v4619, 120
      %v4969 = vpop.permute.xlu0 %4968
      %4970 = vrot.lane.b32.xlu0 %v4620, 120
      %v4971 = vpop.permute.xlu0 %4970
      %4972 = vrot.lane.b32.xlu0 %v4621, 120
      %v4973 = vpop.permute.xlu0 %4972
      %4974 = vrot.lane.b32.xlu0 %v4622, 120
      %v4975 = vpop.permute.xlu0 %4974
      %4976 = vrot.lane.b32.xlu0 %v4623, 120
      %v4977 = vpop.permute.xlu0 %4976
      %4978 = vrot.lane.b32.xlu0 %v4624, 120
      %v4979 = vpop.permute.xlu0 %4978
      %4980 = vrot.lane.b32.xlu0 %v4625, 120
      %v4981 = vpop.permute.xlu0 %4980
      %4982 = vrot.lane.b32.xlu0 %v4626, 120
      %v4983 = vpop.permute.xlu0 %4982
      %4984 = vrot.lane.b32.xlu0 %v4627, 120
      %v4985 = vpop.permute.xlu0 %4984
      %4986 = vrot.lane.b32.xlu0 %v4628, 120
      %v4987 = vpop.permute.xlu0 %4986
      %4988 = vrot.lane.b32.xlu0 %v4629, 120
      %v4989 = vpop.permute.xlu0 %4988
      %4990 = vrot.lane.b32.xlu0 %v4630, 120
      %v4991 = vpop.permute.xlu0 %4990
      %4992 = vrot.lane.b32.xlu0 %v4631, 120
      %v4993 = vpop.permute.xlu0 %4992
      %4994 = vrot.lane.b32.xlu0 %v4632, 120
      %v4995 = vpop.permute.xlu0 %4994
      %4996 = vrot.lane.b32.xlu0 %v4633, 120
      %v4997 = vpop.permute.xlu0 %4996
      %4998 = vrot.lane.b32.xlu0 %v4634, 120
      %v4999 = vpop.permute.xlu0 %4998
      %5000 = vrot.lane.b32.xlu0 %v4635, 120
      %v5001 = vpop.permute.xlu0 %5000
      %5002 = vrot.lane.b32.xlu0 %v4636, 120
      %v5003 = vpop.permute.xlu0 %5002
      %5004 = vrot.lane.b32.xlu0 %v4637, 120
      %v5005 = vpop.permute.xlu0 %5004
      %5006 = vrot.lane.b32.xlu0 %v4638, 120
      %v5007 = vpop.permute.xlu0 %5006
      %5008 = vrot.lane.b32.xlu0 %v4639, 120
      %v5009 = vpop.permute.xlu0 %5008
      %5010 = vrot.lane.b32.xlu0 %v4640, 120
      %v5011 = vpop.permute.xlu0 %5010
      %5012 = vrot.lane.b32.xlu0 %v4641, 120
      %v5013 = vpop.permute.xlu0 %5012
      %5014 = vrot.lane.b32.xlu0 %v4642, 120
      %v5015 = vpop.permute.xlu0 %5014
      %5016 = vrot.lane.b32.xlu0 %v4643, 120
      %v5017 = vpop.permute.xlu0 %5016
      %5018 = vrot.lane.b32.xlu0 %v4644, 120
      %v5019 = vpop.permute.xlu0 %5018
      %5020 = vrot.lane.b32.xlu0 %v4645, 120
      %v5021 = vpop.permute.xlu0 %5020
      %5022 = vrot.lane.b32.xlu0 %v4646, 120
      %v5023 = vpop.permute.xlu0 %5022
      %5024 = vrot.lane.b32.xlu0 %v4647, 120
      %v5025 = vpop.permute.xlu0 %5024
      %5026 = vrot.lane.b32.xlu0 %v4648, 120
      %v5027 = vpop.permute.xlu0 %5026
      %5028 = vrot.lane.b32.xlu0 %v4649, 120
      %v5029 = vpop.permute.xlu0 %5028
      %5030 = vrot.lane.b32.xlu0 %v4650, 120
      %v5031 = vpop.permute.xlu0 %5030
      %5032 = vrot.lane.b32.xlu0 %v4651, 120
      %v5033 = vpop.permute.xlu0 %5032
      %5034 = vrot.lane.b32.xlu0 %v4652, 120
      %v5035 = vpop.permute.xlu0 %5034
      %5036 = vrot.lane.b32.xlu0 %v4653, 120
      %v5037 = vpop.permute.xlu0 %5036
      %v5166 = vadd.f32 %v3886, %v4783
      %v5167 = vadd.f32 %v3887, %v4785
      %v5168 = vadd.f32 %v3888, %v4787
      %v5169 = vadd.f32 %v3889, %v4789
      %v5170 = vadd.f32 %v3890, %v4791
      %v5171 = vadd.f32 %v3891, %v4793
      %v5172 = vadd.f32 %v3892, %v4795
      %v5173 = vadd.f32 %v3893, %v4797
      %v5174 = vadd.f32 %v3894, %v4799
      %v5175 = vadd.f32 %v3895, %v4801
      %v5176 = vadd.f32 %v3896, %v4803
      %v5177 = vadd.f32 %v3897, %v4805
      %v5178 = vadd.f32 %v3898, %v4807
      %v5179 = vadd.f32 %v3899, %v4809
      %v5180 = vadd.f32 %v3900, %v4811
      %v5181 = vadd.f32 %v3901, %v4813
      %v5182 = vadd.f32 %v3902, %v4815
      %v5183 = vadd.f32 %v3903, %v4817
      %v5184 = vadd.f32 %v3904, %v4819
      %v5185 = vadd.f32 %v3905, %v4821
      %v5186 = vadd.f32 %v3906, %v4823
      %v5187 = vadd.f32 %v3907, %v4825
      %v5188 = vadd.f32 %v3908, %v4827
      %v5189 = vadd.f32 %v3909, %v4829
      %v5190 = vadd.f32 %v3910, %v4831
      %v5191 = vadd.f32 %v3911, %v4833
      %v5192 = vadd.f32 %v3912, %v4835
      %v5193 = vadd.f32 %v3913, %v4837
      %v5194 = vadd.f32 %v3914, %v4839
      %v5195 = vadd.f32 %v3915, %v4841
      %v5196 = vadd.f32 %v3916, %v4843
      %v5197 = vadd.f32 %v3917, %v4845
      %v5198 = vadd.f32 %v3918, %v4847
      %v5199 = vadd.f32 %v3919, %v4849
      %v5200 = vadd.f32 %v3920, %v4851
      %v5201 = vadd.f32 %v3921, %v4853
      %v5202 = vadd.f32 %v3922, %v4855
      %v5203 = vadd.f32 %v3923, %v4857
      %v5204 = vadd.f32 %v3924, %v4859
      %v5205 = vadd.f32 %v3925, %v4861
      %v5206 = vadd.f32 %v3926, %v4863
      %v5207 = vadd.f32 %v3927, %v4865
      %v5208 = vadd.f32 %v3928, %v4867
      %v5209 = vadd.f32 %v3929, %v4869
      %v5210 = vadd.f32 %v3930, %v4871
      %v5211 = vadd.f32 %v3931, %v4873
      %v5212 = vadd.f32 %v3932, %v4875
      %v5213 = vadd.f32 %v3933, %v4877
      %v5214 = vadd.f32 %v3934, %v4879
      %v5215 = vadd.f32 %v3935, %v4881
      %v5216 = vadd.f32 %v3936, %v4883
      %v5217 = vadd.f32 %v3937, %v4885
      %v5218 = vadd.f32 %v3938, %v4887
      %v5219 = vadd.f32 %v3939, %v4889
      %v5220 = vadd.f32 %v3940, %v4891
      %v5221 = vadd.f32 %v3941, %v4893
      %v5222 = vadd.f32 %v3942, %v4895
      %v5223 = vadd.f32 %v3943, %v4897
      %v5224 = vadd.f32 %v3944, %v4899
      %v5225 = vadd.f32 %v3945, %v4901
      %v5226 = vadd.f32 %v3946, %v4903
      %v5227 = vadd.f32 %v3947, %v4905
      %v5228 = vadd.f32 %v3948, %v4907
      %v5229 = vadd.f32 %v3949, %v4909
      %v5230 = vadd.f32 %v3950, %v4911
      %v5231 = vadd.f32 %v3951, %v4913
      %v5232 = vadd.f32 %v3952, %v4915
      %v5233 = vadd.f32 %v3953, %v4917
      %v5234 = vadd.f32 %v3954, %v4919
      %v5235 = vadd.f32 %v3955, %v4921
      %v5236 = vadd.f32 %v3956, %v4923
      %v5237 = vadd.f32 %v3957, %v4925
      %v5238 = vadd.f32 %v3958, %v4927
      %v5239 = vadd.f32 %v3959, %v4929
      %v5240 = vadd.f32 %v3960, %v4931
      %v5241 = vadd.f32 %v3961, %v4933
      %v5242 = vadd.f32 %v3962, %v4935
      %v5243 = vadd.f32 %v3963, %v4937
      %v5244 = vadd.f32 %v3964, %v4939
      %v5245 = vadd.f32 %v3965, %v4941
      %v5246 = vadd.f32 %v3966, %v4943
      %v5247 = vadd.f32 %v3967, %v4945
      %v5248 = vadd.f32 %v3968, %v4947
      %v5249 = vadd.f32 %v3969, %v4949
      %v5250 = vadd.f32 %v3970, %v4951
      %v5251 = vadd.f32 %v3971, %v4953
      %v5252 = vadd.f32 %v3972, %v4955
      %v5253 = vadd.f32 %v3973, %v4957
      %v5254 = vadd.f32 %v3974, %v4959
      %v5255 = vadd.f32 %v3975, %v4961
      %v5256 = vadd.f32 %v3976, %v4963
      %v5257 = vadd.f32 %v3977, %v4965
      %v5258 = vadd.f32 %v3978, %v4967
      %v5259 = vadd.f32 %v3979, %v4969
      %v5260 = vadd.f32 %v3980, %v4971
      %v5261 = vadd.f32 %v3981, %v4973
      %v5262 = vadd.f32 %v3982, %v4975
      %v5263 = vadd.f32 %v3983, %v4977
      %v5264 = vadd.f32 %v3984, %v4979
      %v5265 = vadd.f32 %v3985, %v4981
      %v5266 = vadd.f32 %v3986, %v4983
      %v5267 = vadd.f32 %v3987, %v4985
      %v5268 = vadd.f32 %v3988, %v4987
      %v5269 = vadd.f32 %v3989, %v4989
      %v5270 = vadd.f32 %v3990, %v4991
      %v5271 = vadd.f32 %v3991, %v4993
      %v5272 = vadd.f32 %v3992, %v4995
      %v5273 = vadd.f32 %v3993, %v4997
      %v5274 = vadd.f32 %v3994, %v4999
      %v5275 = vadd.f32 %v3995, %v5001
      %v5276 = vadd.f32 %v3996, %v5003
      %v5277 = vadd.f32 %v3997, %v5005
      %v5278 = vadd.f32 %v3998, %v5007
      %v5279 = vadd.f32 %v3999, %v5009
      %v5280 = vadd.f32 %v4000, %v5011
      %v5281 = vadd.f32 %v4001, %v5013
      %v5282 = vadd.f32 %v4002, %v5015
      %v5283 = vadd.f32 %v4003, %v5017
      %v5284 = vadd.f32 %v4004, %v5019
      %v5285 = vadd.f32 %v4005, %v5021
      %v5286 = vadd.f32 %v4006, %v5023
      %v5287 = vadd.f32 %v4007, %v5025
      %v5288 = vadd.f32 %v4008, %v5027
      %v5289 = vadd.f32 %v4009, %v5029
      %v5290 = vadd.f32 %v4010, %v5031
      %v5291 = vadd.f32 %v4011, %v5033
      %v5292 = vadd.f32 %v4012, %v5035
      %v5293 = vadd.f32 %v4013, %v5037
      %5294 = vset.pattern.permute.xlu0 2
      %5295 = vperm.xlu0 %5294, %v3118
      %v5296 = vpop.permute.xlu0 %5295
      %5298 = vset.pattern.permute.xlu0 2
      %5299 = vperm.xlu0 %5298, %v3119
      %v5300 = vpop.permute.xlu0 %5299
      %5302 = vset.pattern.permute.xlu0 2
      %5303 = vperm.xlu0 %5302, %v3120
      %v5304 = vpop.permute.xlu0 %5303
      %5306 = vset.pattern.permute.xlu0 2
      %5307 = vperm.xlu0 %5306, %v3121
      %v5308 = vpop.permute.xlu0 %5307
      %5310 = vset.pattern.permute.xlu0 2
      %5311 = vperm.xlu0 %5310, %v3122
      %v5312 = vpop.permute.xlu0 %5311
      %5314 = vset.pattern.permute.xlu0 2
      %5315 = vperm.xlu0 %5314, %v3123
      %v5316 = vpop.permute.xlu0 %5315
      %5318 = vset.pattern.permute.xlu0 2
      %5319 = vperm.xlu0 %5318, %v3124
      %v5320 = vpop.permute.xlu0 %5319
      %5322 = vset.pattern.permute.xlu0 2
      %5323 = vperm.xlu0 %5322, %v3125
      %v5324 = vpop.permute.xlu0 %5323
      %5326 = vset.pattern.permute.xlu0 2
      %5327 = vperm.xlu0 %5326, %v3126
      %v5328 = vpop.permute.xlu0 %5327
      %5330 = vset.pattern.permute.xlu0 2
      %5331 = vperm.xlu0 %5330, %v3127
      %v5332 = vpop.permute.xlu0 %5331
      %5334 = vset.pattern.permute.xlu0 2
      %5335 = vperm.xlu0 %5334, %v3128
      %v5336 = vpop.permute.xlu0 %5335
      %5338 = vset.pattern.permute.xlu0 2
      %5339 = vperm.xlu0 %5338, %v3129
      %v5340 = vpop.permute.xlu0 %5339
      %5342 = vset.pattern.permute.xlu0 2
      %5343 = vperm.xlu0 %5342, %v3130
      %v5344 = vpop.permute.xlu0 %5343
      %5346 = vset.pattern.permute.xlu0 2
      %5347 = vperm.xlu0 %5346, %v3131
      %v5348 = vpop.permute.xlu0 %5347
      %5350 = vset.pattern.permute.xlu0 2
      %5351 = vperm.xlu0 %5350, %v3132
      %v5352 = vpop.permute.xlu0 %5351
      %5354 = vset.pattern.permute.xlu0 2
      %5355 = vperm.xlu0 %5354, %v3133
      %v5356 = vpop.permute.xlu0 %5355
      %5358 = vset.pattern.permute.xlu0 2
      %5359 = vperm.xlu0 %5358, %v3134
      %v5360 = vpop.permute.xlu0 %5359
      %5362 = vset.pattern.permute.xlu0 2
      %5363 = vperm.xlu0 %5362, %v3135
      %v5364 = vpop.permute.xlu0 %5363
      %5366 = vset.pattern.permute.xlu0 2
      %5367 = vperm.xlu0 %5366, %v3136
      %v5368 = vpop.permute.xlu0 %5367
      %5370 = vset.pattern.permute.xlu0 2
      %5371 = vperm.xlu0 %5370, %v3137
      %v5372 = vpop.permute.xlu0 %5371
      %5374 = vset.pattern.permute.xlu0 2
      %5375 = vperm.xlu0 %5374, %v3138
      %v5376 = vpop.permute.xlu0 %5375
      %5378 = vset.pattern.permute.xlu0 2
      %5379 = vperm.xlu0 %5378, %v3139
      %v5380 = vpop.permute.xlu0 %5379
      %5382 = vset.pattern.permute.xlu0 2
      %5383 = vperm.xlu0 %5382, %v3140
      %v5384 = vpop.permute.xlu0 %5383
      %5386 = vset.pattern.permute.xlu0 2
      %5387 = vperm.xlu0 %5386, %v3141
      %v5388 = vpop.permute.xlu0 %5387
      %5390 = vset.pattern.permute.xlu0 2
      %5391 = vperm.xlu0 %5390, %v3142
      %v5392 = vpop.permute.xlu0 %5391
      %5394 = vset.pattern.permute.xlu0 2
      %5395 = vperm.xlu0 %5394, %v3143
      %v5396 = vpop.permute.xlu0 %5395
      %5398 = vset.pattern.permute.xlu0 2
      %5399 = vperm.xlu0 %5398, %v3144
      %v5400 = vpop.permute.xlu0 %5399
      %5402 = vset.pattern.permute.xlu0 2
      %5403 = vperm.xlu0 %5402, %v3145
      %v5404 = vpop.permute.xlu0 %5403
      %5406 = vset.pattern.permute.xlu0 2
      %5407 = vperm.xlu0 %5406, %v3146
      %v5408 = vpop.permute.xlu0 %5407
      %5410 = vset.pattern.permute.xlu0 2
      %5411 = vperm.xlu0 %5410, %v3147
      %v5412 = vpop.permute.xlu0 %5411
      %5414 = vset.pattern.permute.xlu0 2
      %5415 = vperm.xlu0 %5414, %v3148
      %v5416 = vpop.permute.xlu0 %5415
      %5418 = vset.pattern.permute.xlu0 2
      %5419 = vperm.xlu0 %5418, %v3149
      %v5420 = vpop.permute.xlu0 %5419
      %5422 = vset.pattern.permute.xlu0 2
      %5423 = vperm.xlu0 %5422, %v3150
      %v5424 = vpop.permute.xlu0 %5423
      %5426 = vset.pattern.permute.xlu0 2
      %5427 = vperm.xlu0 %5426, %v3151
      %v5428 = vpop.permute.xlu0 %5427
      %5430 = vset.pattern.permute.xlu0 2
      %5431 = vperm.xlu0 %5430, %v3152
      %v5432 = vpop.permute.xlu0 %5431
      %5434 = vset.pattern.permute.xlu0 2
      %5435 = vperm.xlu0 %5434, %v3153
      %v5436 = vpop.permute.xlu0 %5435
      %5438 = vset.pattern.permute.xlu0 2
      %5439 = vperm.xlu0 %5438, %v3154
      %v5440 = vpop.permute.xlu0 %5439
      %5442 = vset.pattern.permute.xlu0 2
      %5443 = vperm.xlu0 %5442, %v3155
      %v5444 = vpop.permute.xlu0 %5443
      %5446 = vset.pattern.permute.xlu0 2
      %5447 = vperm.xlu0 %5446, %v3156
      %v5448 = vpop.permute.xlu0 %5447
      %5450 = vset.pattern.permute.xlu0 2
      %5451 = vperm.xlu0 %5450, %v3157
      %v5452 = vpop.permute.xlu0 %5451
      %5454 = vset.pattern.permute.xlu0 2
      %5455 = vperm.xlu0 %5454, %v3158
      %v5456 = vpop.permute.xlu0 %5455
      %5458 = vset.pattern.permute.xlu0 2
      %5459 = vperm.xlu0 %5458, %v3159
      %v5460 = vpop.permute.xlu0 %5459
      %5462 = vset.pattern.permute.xlu0 2
      %5463 = vperm.xlu0 %5462, %v3160
      %v5464 = vpop.permute.xlu0 %5463
      %5466 = vset.pattern.permute.xlu0 2
      %5467 = vperm.xlu0 %5466, %v3161
      %v5468 = vpop.permute.xlu0 %5467
      %5470 = vset.pattern.permute.xlu0 2
      %5471 = vperm.xlu0 %5470, %v3162
      %v5472 = vpop.permute.xlu0 %5471
      %5474 = vset.pattern.permute.xlu0 2
      %5475 = vperm.xlu0 %5474, %v3163
      %v5476 = vpop.permute.xlu0 %5475
      %5478 = vset.pattern.permute.xlu0 2
      %5479 = vperm.xlu0 %5478, %v3164
      %v5480 = vpop.permute.xlu0 %5479
      %5482 = vset.pattern.permute.xlu0 2
      %5483 = vperm.xlu0 %5482, %v3165
      %v5484 = vpop.permute.xlu0 %5483
      %5486 = vset.pattern.permute.xlu0 2
      %5487 = vperm.xlu0 %5486, %v3166
      %v5488 = vpop.permute.xlu0 %5487
      %5490 = vset.pattern.permute.xlu0 2
      %5491 = vperm.xlu0 %5490, %v3167
      %v5492 = vpop.permute.xlu0 %5491
      %5494 = vset.pattern.permute.xlu0 2
      %5495 = vperm.xlu0 %5494, %v3168
      %v5496 = vpop.permute.xlu0 %5495
      %5498 = vset.pattern.permute.xlu0 2
      %5499 = vperm.xlu0 %5498, %v3169
      %v5500 = vpop.permute.xlu0 %5499
      %5502 = vset.pattern.permute.xlu0 2
      %5503 = vperm.xlu0 %5502, %v3170
      %v5504 = vpop.permute.xlu0 %5503
      %5506 = vset.pattern.permute.xlu0 2
      %5507 = vperm.xlu0 %5506, %v3171
      %v5508 = vpop.permute.xlu0 %5507
      %5510 = vset.pattern.permute.xlu0 2
      %5511 = vperm.xlu0 %5510, %v3172
      %v5512 = vpop.permute.xlu0 %5511
      %5514 = vset.pattern.permute.xlu0 2
      %5515 = vperm.xlu0 %5514, %v3173
      %v5516 = vpop.permute.xlu0 %5515
      %5518 = vset.pattern.permute.xlu0 2
      %5519 = vperm.xlu0 %5518, %v3174
      %v5520 = vpop.permute.xlu0 %5519
      %5522 = vset.pattern.permute.xlu0 2
      %5523 = vperm.xlu0 %5522, %v3175
      %v5524 = vpop.permute.xlu0 %5523
      %5526 = vset.pattern.permute.xlu0 2
      %5527 = vperm.xlu0 %5526, %v3176
      %v5528 = vpop.permute.xlu0 %5527
      %5530 = vset.pattern.permute.xlu0 2
      %5531 = vperm.xlu0 %5530, %v3177
      %v5532 = vpop.permute.xlu0 %5531
      %5534 = vset.pattern.permute.xlu0 2
      %5535 = vperm.xlu0 %5534, %v3178
      %v5536 = vpop.permute.xlu0 %5535
      %5538 = vset.pattern.permute.xlu0 2
      %5539 = vperm.xlu0 %5538, %v3179
      %v5540 = vpop.permute.xlu0 %5539
      %5542 = vset.pattern.permute.xlu0 2
      %5543 = vperm.xlu0 %5542, %v3180
      %v5544 = vpop.permute.xlu0 %5543
      %5546 = vset.pattern.permute.xlu0 2
      %5547 = vperm.xlu0 %5546, %v3181
      %v5548 = vpop.permute.xlu0 %5547
      %5550 = vset.pattern.permute.xlu0 2
      %5551 = vperm.xlu0 %5550, %v3182
      %v5552 = vpop.permute.xlu0 %5551
      %5554 = vset.pattern.permute.xlu0 2
      %5555 = vperm.xlu0 %5554, %v3183
      %v5556 = vpop.permute.xlu0 %5555
      %5558 = vset.pattern.permute.xlu0 2
      %5559 = vperm.xlu0 %5558, %v3184
      %v5560 = vpop.permute.xlu0 %5559
      %5562 = vset.pattern.permute.xlu0 2
      %5563 = vperm.xlu0 %5562, %v3185
      %v5564 = vpop.permute.xlu0 %5563
      %5566 = vset.pattern.permute.xlu0 2
      %5567 = vperm.xlu0 %5566, %v3186
      %v5568 = vpop.permute.xlu0 %5567
      %5570 = vset.pattern.permute.xlu0 2
      %5571 = vperm.xlu0 %5570, %v3187
      %v5572 = vpop.permute.xlu0 %5571
      %5574 = vset.pattern.permute.xlu0 2
      %5575 = vperm.xlu0 %5574, %v3188
      %v5576 = vpop.permute.xlu0 %5575
      %5578 = vset.pattern.permute.xlu0 2
      %5579 = vperm.xlu0 %5578, %v3189
      %v5580 = vpop.permute.xlu0 %5579
      %5582 = vset.pattern.permute.xlu0 2
      %5583 = vperm.xlu0 %5582, %v3190
      %v5584 = vpop.permute.xlu0 %5583
      %5586 = vset.pattern.permute.xlu0 2
      %5587 = vperm.xlu0 %5586, %v3191
      %v5588 = vpop.permute.xlu0 %5587
      %5590 = vset.pattern.permute.xlu0 2
      %5591 = vperm.xlu0 %5590, %v3192
      %v5592 = vpop.permute.xlu0 %5591
      %5594 = vset.pattern.permute.xlu0 2
      %5595 = vperm.xlu0 %5594, %v3193
      %v5596 = vpop.permute.xlu0 %5595
      %5598 = vset.pattern.permute.xlu0 2
      %5599 = vperm.xlu0 %5598, %v3194
      %v5600 = vpop.permute.xlu0 %5599
      %5602 = vset.pattern.permute.xlu0 2
      %5603 = vperm.xlu0 %5602, %v3195
      %v5604 = vpop.permute.xlu0 %5603
      %5606 = vset.pattern.permute.xlu0 2
      %5607 = vperm.xlu0 %5606, %v3196
      %v5608 = vpop.permute.xlu0 %5607
      %5610 = vset.pattern.permute.xlu0 2
      %5611 = vperm.xlu0 %5610, %v3197
      %v5612 = vpop.permute.xlu0 %5611
      %5614 = vset.pattern.permute.xlu0 2
      %5615 = vperm.xlu0 %5614, %v3198
      %v5616 = vpop.permute.xlu0 %5615
      %5618 = vset.pattern.permute.xlu0 2
      %5619 = vperm.xlu0 %5618, %v3199
      %v5620 = vpop.permute.xlu0 %5619
      %5622 = vset.pattern.permute.xlu0 2
      %5623 = vperm.xlu0 %5622, %v3200
      %v5624 = vpop.permute.xlu0 %5623
      %5626 = vset.pattern.permute.xlu0 2
      %5627 = vperm.xlu0 %5626, %v3201
      %v5628 = vpop.permute.xlu0 %5627
      %5630 = vset.pattern.permute.xlu0 2
      %5631 = vperm.xlu0 %5630, %v3202
      %v5632 = vpop.permute.xlu0 %5631
      %5634 = vset.pattern.permute.xlu0 2
      %5635 = vperm.xlu0 %5634, %v3203
      %v5636 = vpop.permute.xlu0 %5635
      %5638 = vset.pattern.permute.xlu0 2
      %5639 = vperm.xlu0 %5638, %v3204
      %v5640 = vpop.permute.xlu0 %5639
      %5642 = vset.pattern.permute.xlu0 2
      %5643 = vperm.xlu0 %5642, %v3205
      %v5644 = vpop.permute.xlu0 %5643
      %5646 = vset.pattern.permute.xlu0 2
      %5647 = vperm.xlu0 %5646, %v3206
      %v5648 = vpop.permute.xlu0 %5647
      %5650 = vset.pattern.permute.xlu0 2
      %5651 = vperm.xlu0 %5650, %v3207
      %v5652 = vpop.permute.xlu0 %5651
      %5654 = vset.pattern.permute.xlu0 2
      %5655 = vperm.xlu0 %5654, %v3208
      %v5656 = vpop.permute.xlu0 %5655
      %5658 = vset.pattern.permute.xlu0 2
      %5659 = vperm.xlu0 %5658, %v3209
      %v5660 = vpop.permute.xlu0 %5659
      %5662 = vset.pattern.permute.xlu0 2
      %5663 = vperm.xlu0 %5662, %v3210
      %v5664 = vpop.permute.xlu0 %5663
      %5666 = vset.pattern.permute.xlu0 2
      %5667 = vperm.xlu0 %5666, %v3211
      %v5668 = vpop.permute.xlu0 %5667
      %5670 = vset.pattern.permute.xlu0 2
      %5671 = vperm.xlu0 %5670, %v3212
      %v5672 = vpop.permute.xlu0 %5671
      %5674 = vset.pattern.permute.xlu0 2
      %5675 = vperm.xlu0 %5674, %v3213
      %v5676 = vpop.permute.xlu0 %5675
      %5678 = vset.pattern.permute.xlu0 2
      %5679 = vperm.xlu0 %5678, %v3214
      %v5680 = vpop.permute.xlu0 %5679
      %5682 = vset.pattern.permute.xlu0 2
      %5683 = vperm.xlu0 %5682, %v3215
      %v5684 = vpop.permute.xlu0 %5683
      %5686 = vset.pattern.permute.xlu0 2
      %5687 = vperm.xlu0 %5686, %v3216
      %v5688 = vpop.permute.xlu0 %5687
      %5690 = vset.pattern.permute.xlu0 2
      %5691 = vperm.xlu0 %5690, %v3217
      %v5692 = vpop.permute.xlu0 %5691
      %5694 = vset.pattern.permute.xlu0 2
      %5695 = vperm.xlu0 %5694, %v3218
      %v5696 = vpop.permute.xlu0 %5695
      %5698 = vset.pattern.permute.xlu0 2
      %5699 = vperm.xlu0 %5698, %v3219
      %v5700 = vpop.permute.xlu0 %5699
      %5702 = vset.pattern.permute.xlu0 2
      %5703 = vperm.xlu0 %5702, %v3220
      %v5704 = vpop.permute.xlu0 %5703
      %5706 = vset.pattern.permute.xlu0 2
      %5707 = vperm.xlu0 %5706, %v3221
      %v5708 = vpop.permute.xlu0 %5707
      %5710 = vset.pattern.permute.xlu0 2
      %5711 = vperm.xlu0 %5710, %v3222
      %v5712 = vpop.permute.xlu0 %5711
      %5714 = vset.pattern.permute.xlu0 2
      %5715 = vperm.xlu0 %5714, %v3223
      %v5716 = vpop.permute.xlu0 %5715
      %5718 = vset.pattern.permute.xlu0 2
      %5719 = vperm.xlu0 %5718, %v3224
      %v5720 = vpop.permute.xlu0 %5719
      %5722 = vset.pattern.permute.xlu0 2
      %5723 = vperm.xlu0 %5722, %v3225
      %v5724 = vpop.permute.xlu0 %5723
      %5726 = vset.pattern.permute.xlu0 2
      %5727 = vperm.xlu0 %5726, %v3226
      %v5728 = vpop.permute.xlu0 %5727
      %5730 = vset.pattern.permute.xlu0 2
      %5731 = vperm.xlu0 %5730, %v3227
      %v5732 = vpop.permute.xlu0 %5731
      %5734 = vset.pattern.permute.xlu0 2
      %5735 = vperm.xlu0 %5734, %v3228
      %v5736 = vpop.permute.xlu0 %5735
      %5738 = vset.pattern.permute.xlu0 2
      %5739 = vperm.xlu0 %5738, %v3229
      %v5740 = vpop.permute.xlu0 %5739
      %5742 = vset.pattern.permute.xlu0 2
      %5743 = vperm.xlu0 %5742, %v3230
      %v5744 = vpop.permute.xlu0 %5743
      %5746 = vset.pattern.permute.xlu0 2
      %5747 = vperm.xlu0 %5746, %v3231
      %v5748 = vpop.permute.xlu0 %5747
      %5750 = vset.pattern.permute.xlu0 2
      %5751 = vperm.xlu0 %5750, %v3232
      %v5752 = vpop.permute.xlu0 %5751
      %5754 = vset.pattern.permute.xlu0 2
      %5755 = vperm.xlu0 %5754, %v3233
      %v5756 = vpop.permute.xlu0 %5755
      %5758 = vset.pattern.permute.xlu0 2
      %5759 = vperm.xlu0 %5758, %v3234
      %v5760 = vpop.permute.xlu0 %5759
      %5762 = vset.pattern.permute.xlu0 2
      %5763 = vperm.xlu0 %5762, %v3235
      %v5764 = vpop.permute.xlu0 %5763
      %5766 = vset.pattern.permute.xlu0 2
      %5767 = vperm.xlu0 %5766, %v3236
      %v5768 = vpop.permute.xlu0 %5767
      %5770 = vset.pattern.permute.xlu0 2
      %5771 = vperm.xlu0 %5770, %v3237
      %v5772 = vpop.permute.xlu0 %5771
      %5774 = vset.pattern.permute.xlu0 2
      %5775 = vperm.xlu0 %5774, %v3238
      %v5776 = vpop.permute.xlu0 %5775
      %5778 = vset.pattern.permute.xlu0 2
      %5779 = vperm.xlu0 %5778, %v3239
      %v5780 = vpop.permute.xlu0 %5779
      %5782 = vset.pattern.permute.xlu0 2
      %5783 = vperm.xlu0 %5782, %v3240
      %v5784 = vpop.permute.xlu0 %5783
      %5786 = vset.pattern.permute.xlu0 2
      %5787 = vperm.xlu0 %5786, %v3241
      %v5788 = vpop.permute.xlu0 %5787
      %5790 = vset.pattern.permute.xlu0 2
      %5791 = vperm.xlu0 %5790, %v3242
      %v5792 = vpop.permute.xlu0 %5791
      %5794 = vset.pattern.permute.xlu0 2
      %5795 = vperm.xlu0 %5794, %v3243
      %v5796 = vpop.permute.xlu0 %5795
      %5798 = vset.pattern.permute.xlu0 2
      %5799 = vperm.xlu0 %5798, %v3244
      %v5800 = vpop.permute.xlu0 %5799
      %5802 = vset.pattern.permute.xlu0 2
      %5803 = vperm.xlu0 %5802, %v3245
      %v5804 = vpop.permute.xlu0 %5803
      %v5806 = vmul.f32 %v2608, %v5296
      %v5807 = vmul.f32 %v2611, %v5300
      %v5808 = vmul.f32 %v2616, %v5304
      %v5809 = vmul.f32 %v2619, %v5308
      %v5810 = vmul.f32 %v2624, %v5312
      %v5811 = vmul.f32 %v2627, %v5316
      %v5812 = vmul.f32 %v2632, %v5320
      %v5813 = vmul.f32 %v2635, %v5324
      %v5814 = vmul.f32 %v2640, %v5328
      %v5815 = vmul.f32 %v2643, %v5332
      %v5816 = vmul.f32 %v2648, %v5336
      %v5817 = vmul.f32 %v2651, %v5340
      %v5818 = vmul.f32 %v2656, %v5344
      %v5819 = vmul.f32 %v2659, %v5348
      %v5820 = vmul.f32 %v2664, %v5352
      %v5821 = vmul.f32 %v2667, %v5356
      %v5822 = vmul.f32 %v2672, %v5360
      %v5823 = vmul.f32 %v2675, %v5364
      %v5824 = vmul.f32 %v2680, %v5368
      %v5825 = vmul.f32 %v2683, %v5372
      %v5826 = vmul.f32 %v2688, %v5376
      %v5827 = vmul.f32 %v2691, %v5380
      %v5828 = vmul.f32 %v2696, %v5384
      %v5829 = vmul.f32 %v2699, %v5388
      %v5830 = vmul.f32 %v2704, %v5392
      %v5831 = vmul.f32 %v2707, %v5396
      %v5832 = vmul.f32 %v2712, %v5400
      %v5833 = vmul.f32 %v2715, %v5404
      %v5834 = vmul.f32 %v2720, %v5408
      %v5835 = vmul.f32 %v2723, %v5412
      %v5836 = vmul.f32 %v2728, %v5416
      %v5837 = vmul.f32 %v2731, %v5420
      %v5838 = vmul.f32 %v2736, %v5424
      %v5839 = vmul.f32 %v2739, %v5428
      %v5840 = vmul.f32 %v2744, %v5432
      %v5841 = vmul.f32 %v2747, %v5436
      %v5842 = vmul.f32 %v2752, %v5440
      %v5843 = vmul.f32 %v2755, %v5444
      %v5844 = vmul.f32 %v2760, %v5448
      %v5845 = vmul.f32 %v2763, %v5452
      %v5846 = vmul.f32 %v2768, %v5456
      %v5847 = vmul.f32 %v2771, %v5460
      %v5848 = vmul.f32 %v2776, %v5464
      %v5849 = vmul.f32 %v2779, %v5468
      %v5850 = vmul.f32 %v2784, %v5472
      %v5851 = vmul.f32 %v2787, %v5476
      %v5852 = vmul.f32 %v2792, %v5480
      %v5853 = vmul.f32 %v2795, %v5484
      %v5854 = vmul.f32 %v2800, %v5488
      %v5855 = vmul.f32 %v2803, %v5492
      %v5856 = vmul.f32 %v2808, %v5496
      %v5857 = vmul.f32 %v2811, %v5500
      %v5858 = vmul.f32 %v2816, %v5504
      %v5859 = vmul.f32 %v2819, %v5508
      %v5860 = vmul.f32 %v2824, %v5512
      %v5861 = vmul.f32 %v2827, %v5516
      %v5862 = vmul.f32 %v2832, %v5520
      %v5863 = vmul.f32 %v2835, %v5524
      %v5864 = vmul.f32 %v2840, %v5528
      %v5865 = vmul.f32 %v2843, %v5532
      %v5866 = vmul.f32 %v2848, %v5536
      %v5867 = vmul.f32 %v2851, %v5540
      %v5868 = vmul.f32 %v2856, %v5544
      %v5869 = vmul.f32 %v2859, %v5548
      %v5870 = vmul.f32 %v2864, %v5552
      %v5871 = vmul.f32 %v2867, %v5556
      %v5872 = vmul.f32 %v2872, %v5560
      %v5873 = vmul.f32 %v2875, %v5564
      %v5874 = vmul.f32 %v2880, %v5568
      %v5875 = vmul.f32 %v2883, %v5572
      %v5876 = vmul.f32 %v2888, %v5576
      %v5877 = vmul.f32 %v2891, %v5580
      %v5878 = vmul.f32 %v2896, %v5584
      %v5879 = vmul.f32 %v2899, %v5588
      %v5880 = vmul.f32 %v2904, %v5592
      %v5881 = vmul.f32 %v2907, %v5596
      %v5882 = vmul.f32 %v2912, %v5600
      %v5883 = vmul.f32 %v2915, %v5604
      %v5884 = vmul.f32 %v2920, %v5608
      %v5885 = vmul.f32 %v2923, %v5612
      %v5886 = vmul.f32 %v2928, %v5616
      %v5887 = vmul.f32 %v2931, %v5620
      %v5888 = vmul.f32 %v2936, %v5624
      %v5889 = vmul.f32 %v2939, %v5628
      %v5890 = vmul.f32 %v2944, %v5632
      %v5891 = vmul.f32 %v2947, %v5636
      %v5892 = vmul.f32 %v2952, %v5640
      %v5893 = vmul.f32 %v2955, %v5644
      %v5894 = vmul.f32 %v2960, %v5648
      %v5895 = vmul.f32 %v2963, %v5652
      %v5896 = vmul.f32 %v2968, %v5656
      %v5897 = vmul.f32 %v2971, %v5660
      %v5898 = vmul.f32 %v2976, %v5664
      %v5899 = vmul.f32 %v2979, %v5668
      %v5900 = vmul.f32 %v2984, %v5672
      %v5901 = vmul.f32 %v2987, %v5676
      %v5902 = vmul.f32 %v2992, %v5680
      %v5903 = vmul.f32 %v2995, %v5684
      %v5904 = vmul.f32 %v3000, %v5688
      %v5905 = vmul.f32 %v3003, %v5692
      %v5906 = vmul.f32 %v3008, %v5696
      %v5907 = vmul.f32 %v3011, %v5700
      %v5908 = vmul.f32 %v3016, %v5704
      %v5909 = vmul.f32 %v3019, %v5708
      %v5910 = vmul.f32 %v3024, %v5712
      %v5911 = vmul.f32 %v3027, %v5716
      %v5912 = vmul.f32 %v3032, %v5720
      %v5913 = vmul.f32 %v3035, %v5724
      %v5914 = vmul.f32 %v3040, %v5728
      %v5915 = vmul.f32 %v3043, %v5732
      %v5916 = vmul.f32 %v3048, %v5736
      %v5917 = vmul.f32 %v3051, %v5740
      %v5918 = vmul.f32 %v3056, %v5744
      %v5919 = vmul.f32 %v3059, %v5748
      %v5920 = vmul.f32 %v3064, %v5752
      %v5921 = vmul.f32 %v3067, %v5756
      %v5922 = vmul.f32 %v3072, %v5760
      %v5923 = vmul.f32 %v3075, %v5764
      %v5924 = vmul.f32 %v3080, %v5768
      %v5925 = vmul.f32 %v3083, %v5772
      %v5926 = vmul.f32 %v3088, %v5776
      %v5927 = vmul.f32 %v3091, %v5780
      %v5928 = vmul.f32 %v3096, %v5784
      %v5929 = vmul.f32 %v3099, %v5788
      %v5930 = vmul.f32 %v3104, %v5792
      %v5931 = vmul.f32 %v3107, %v5796
      %v5932 = vmul.f32 %v3112, %v5800
      %v5933 = vmul.f32 %v3115, %v5804
      %6062 = vrot.lane.b32.xlu0 %v5806, 112
      %v6063 = vpop.permute.xlu0 %6062
      %6064 = vrot.lane.b32.xlu0 %v5807, 112
      %v6065 = vpop.permute.xlu0 %6064
      %6066 = vrot.lane.b32.xlu0 %v5808, 112
      %v6067 = vpop.permute.xlu0 %6066
      %6068 = vrot.lane.b32.xlu0 %v5809, 112
      %v6069 = vpop.permute.xlu0 %6068
      %6070 = vrot.lane.b32.xlu0 %v5810, 112
      %v6071 = vpop.permute.xlu0 %6070
      %6072 = vrot.lane.b32.xlu0 %v5811, 112
      %v6073 = vpop.permute.xlu0 %6072
      %6074 = vrot.lane.b32.xlu0 %v5812, 112
      %v6075 = vpop.permute.xlu0 %6074
      %6076 = vrot.lane.b32.xlu0 %v5813, 112
      %v6077 = vpop.permute.xlu0 %6076
      %6078 = vrot.lane.b32.xlu0 %v5814, 112
      %v6079 = vpop.permute.xlu0 %6078
      %6080 = vrot.lane.b32.xlu0 %v5815, 112
      %v6081 = vpop.permute.xlu0 %6080
      %6082 = vrot.lane.b32.xlu0 %v5816, 112
      %v6083 = vpop.permute.xlu0 %6082
      %6084 = vrot.lane.b32.xlu0 %v5817, 112
      %v6085 = vpop.permute.xlu0 %6084
      %6086 = vrot.lane.b32.xlu0 %v5818, 112
      %v6087 = vpop.permute.xlu0 %6086
      %6088 = vrot.lane.b32.xlu0 %v5819, 112
      %v6089 = vpop.permute.xlu0 %6088
      %6090 = vrot.lane.b32.xlu0 %v5820, 112
      %v6091 = vpop.permute.xlu0 %6090
      %6092 = vrot.lane.b32.xlu0 %v5821, 112
      %v6093 = vpop.permute.xlu0 %6092
      %6094 = vrot.lane.b32.xlu0 %v5822, 112
      %v6095 = vpop.permute.xlu0 %6094
      %6096 = vrot.lane.b32.xlu0 %v5823, 112
      %v6097 = vpop.permute.xlu0 %6096
      %6098 = vrot.lane.b32.xlu0 %v5824, 112
      %v6099 = vpop.permute.xlu0 %6098
      %6100 = vrot.lane.b32.xlu0 %v5825, 112
      %v6101 = vpop.permute.xlu0 %6100
      %6102 = vrot.lane.b32.xlu0 %v5826, 112
      %v6103 = vpop.permute.xlu0 %6102
      %6104 = vrot.lane.b32.xlu0 %v5827, 112
      %v6105 = vpop.permute.xlu0 %6104
      %6106 = vrot.lane.b32.xlu0 %v5828, 112
      %v6107 = vpop.permute.xlu0 %6106
      %6108 = vrot.lane.b32.xlu0 %v5829, 112
      %v6109 = vpop.permute.xlu0 %6108
      %6110 = vrot.lane.b32.xlu0 %v5830, 112
      %v6111 = vpop.permute.xlu0 %6110
      %6112 = vrot.lane.b32.xlu0 %v5831, 112
      %v6113 = vpop.permute.xlu0 %6112
      %6114 = vrot.lane.b32.xlu0 %v5832, 112
      %v6115 = vpop.permute.xlu0 %6114
      %6116 = vrot.lane.b32.xlu0 %v5833, 112
      %v6117 = vpop.permute.xlu0 %6116
      %6118 = vrot.lane.b32.xlu0 %v5834, 112
      %v6119 = vpop.permute.xlu0 %6118
      %6120 = vrot.lane.b32.xlu0 %v5835, 112
      %v6121 = vpop.permute.xlu0 %6120
      %6122 = vrot.lane.b32.xlu0 %v5836, 112
      %v6123 = vpop.permute.xlu0 %6122
      %6124 = vrot.lane.b32.xlu0 %v5837, 112
      %v6125 = vpop.permute.xlu0 %6124
      %6126 = vrot.lane.b32.xlu0 %v5838, 112
      %v6127 = vpop.permute.xlu0 %6126
      %6128 = vrot.lane.b32.xlu0 %v5839, 112
      %v6129 = vpop.permute.xlu0 %6128
      %6130 = vrot.lane.b32.xlu0 %v5840, 112
      %v6131 = vpop.permute.xlu0 %6130
      %6132 = vrot.lane.b32.xlu0 %v5841, 112
      %v6133 = vpop.permute.xlu0 %6132
      %6134 = vrot.lane.b32.xlu0 %v5842, 112
      %v6135 = vpop.permute.xlu0 %6134
      %6136 = vrot.lane.b32.xlu0 %v5843, 112
      %v6137 = vpop.permute.xlu0 %6136
      %6138 = vrot.lane.b32.xlu0 %v5844, 112
      %v6139 = vpop.permute.xlu0 %6138
      %6140 = vrot.lane.b32.xlu0 %v5845, 112
      %v6141 = vpop.permute.xlu0 %6140
      %6142 = vrot.lane.b32.xlu0 %v5846, 112
      %v6143 = vpop.permute.xlu0 %6142
      %6144 = vrot.lane.b32.xlu0 %v5847, 112
      %v6145 = vpop.permute.xlu0 %6144
      %6146 = vrot.lane.b32.xlu0 %v5848, 112
      %v6147 = vpop.permute.xlu0 %6146
      %6148 = vrot.lane.b32.xlu0 %v5849, 112
      %v6149 = vpop.permute.xlu0 %6148
      %6150 = vrot.lane.b32.xlu0 %v5850, 112
      %v6151 = vpop.permute.xlu0 %6150
      %6152 = vrot.lane.b32.xlu0 %v5851, 112
      %v6153 = vpop.permute.xlu0 %6152
      %6154 = vrot.lane.b32.xlu0 %v5852, 112
      %v6155 = vpop.permute.xlu0 %6154
      %6156 = vrot.lane.b32.xlu0 %v5853, 112
      %v6157 = vpop.permute.xlu0 %6156
      %6158 = vrot.lane.b32.xlu0 %v5854, 112
      %v6159 = vpop.permute.xlu0 %6158
      %6160 = vrot.lane.b32.xlu0 %v5855, 112
      %v6161 = vpop.permute.xlu0 %6160
      %6162 = vrot.lane.b32.xlu0 %v5856, 112
      %v6163 = vpop.permute.xlu0 %6162
      %6164 = vrot.lane.b32.xlu0 %v5857, 112
      %v6165 = vpop.permute.xlu0 %6164
      %6166 = vrot.lane.b32.xlu0 %v5858, 112
      %v6167 = vpop.permute.xlu0 %6166
      %6168 = vrot.lane.b32.xlu0 %v5859, 112
      %v6169 = vpop.permute.xlu0 %6168
      %6170 = vrot.lane.b32.xlu0 %v5860, 112
      %v6171 = vpop.permute.xlu0 %6170
      %6172 = vrot.lane.b32.xlu0 %v5861, 112
      %v6173 = vpop.permute.xlu0 %6172
      %6174 = vrot.lane.b32.xlu0 %v5862, 112
      %v6175 = vpop.permute.xlu0 %6174
      %6176 = vrot.lane.b32.xlu0 %v5863, 112
      %v6177 = vpop.permute.xlu0 %6176
      %6178 = vrot.lane.b32.xlu0 %v5864, 112
      %v6179 = vpop.permute.xlu0 %6178
      %6180 = vrot.lane.b32.xlu0 %v5865, 112
      %v6181 = vpop.permute.xlu0 %6180
      %6182 = vrot.lane.b32.xlu0 %v5866, 112
      %v6183 = vpop.permute.xlu0 %6182
      %6184 = vrot.lane.b32.xlu0 %v5867, 112
      %v6185 = vpop.permute.xlu0 %6184
      %6186 = vrot.lane.b32.xlu0 %v5868, 112
      %v6187 = vpop.permute.xlu0 %6186
      %6188 = vrot.lane.b32.xlu0 %v5869, 112
      %v6189 = vpop.permute.xlu0 %6188
      %6190 = vrot.lane.b32.xlu0 %v5870, 112
      %v6191 = vpop.permute.xlu0 %6190
      %6192 = vrot.lane.b32.xlu0 %v5871, 112
      %v6193 = vpop.permute.xlu0 %6192
      %6194 = vrot.lane.b32.xlu0 %v5872, 112
      %v6195 = vpop.permute.xlu0 %6194
      %6196 = vrot.lane.b32.xlu0 %v5873, 112
      %v6197 = vpop.permute.xlu0 %6196
      %6198 = vrot.lane.b32.xlu0 %v5874, 112
      %v6199 = vpop.permute.xlu0 %6198
      %6200 = vrot.lane.b32.xlu0 %v5875, 112
      %v6201 = vpop.permute.xlu0 %6200
      %6202 = vrot.lane.b32.xlu0 %v5876, 112
      %v6203 = vpop.permute.xlu0 %6202
      %6204 = vrot.lane.b32.xlu0 %v5877, 112
      %v6205 = vpop.permute.xlu0 %6204
      %6206 = vrot.lane.b32.xlu0 %v5878, 112
      %v6207 = vpop.permute.xlu0 %6206
      %6208 = vrot.lane.b32.xlu0 %v5879, 112
      %v6209 = vpop.permute.xlu0 %6208
      %6210 = vrot.lane.b32.xlu0 %v5880, 112
      %v6211 = vpop.permute.xlu0 %6210
      %6212 = vrot.lane.b32.xlu0 %v5881, 112
      %v6213 = vpop.permute.xlu0 %6212
      %6214 = vrot.lane.b32.xlu0 %v5882, 112
      %v6215 = vpop.permute.xlu0 %6214
      %6216 = vrot.lane.b32.xlu0 %v5883, 112
      %v6217 = vpop.permute.xlu0 %6216
      %6218 = vrot.lane.b32.xlu0 %v5884, 112
      %v6219 = vpop.permute.xlu0 %6218
      %6220 = vrot.lane.b32.xlu0 %v5885, 112
      %v6221 = vpop.permute.xlu0 %6220
      %6222 = vrot.lane.b32.xlu0 %v5886, 112
      %v6223 = vpop.permute.xlu0 %6222
      %6224 = vrot.lane.b32.xlu0 %v5887, 112
      %v6225 = vpop.permute.xlu0 %6224
      %6226 = vrot.lane.b32.xlu0 %v5888, 112
      %v6227 = vpop.permute.xlu0 %6226
      %6228 = vrot.lane.b32.xlu0 %v5889, 112
      %v6229 = vpop.permute.xlu0 %6228
      %6230 = vrot.lane.b32.xlu0 %v5890, 112
      %v6231 = vpop.permute.xlu0 %6230
      %6232 = vrot.lane.b32.xlu0 %v5891, 112
      %v6233 = vpop.permute.xlu0 %6232
      %6234 = vrot.lane.b32.xlu0 %v5892, 112
      %v6235 = vpop.permute.xlu0 %6234
      %6236 = vrot.lane.b32.xlu0 %v5893, 112
      %v6237 = vpop.permute.xlu0 %6236
      %6238 = vrot.lane.b32.xlu0 %v5894, 112
      %v6239 = vpop.permute.xlu0 %6238
      %6240 = vrot.lane.b32.xlu0 %v5895, 112
      %v6241 = vpop.permute.xlu0 %6240
      %6242 = vrot.lane.b32.xlu0 %v5896, 112
      %v6243 = vpop.permute.xlu0 %6242
      %6244 = vrot.lane.b32.xlu0 %v5897, 112
      %v6245 = vpop.permute.xlu0 %6244
      %6246 = vrot.lane.b32.xlu0 %v5898, 112
      %v6247 = vpop.permute.xlu0 %6246
      %6248 = vrot.lane.b32.xlu0 %v5899, 112
      %v6249 = vpop.permute.xlu0 %6248
      %6250 = vrot.lane.b32.xlu0 %v5900, 112
      %v6251 = vpop.permute.xlu0 %6250
      %6252 = vrot.lane.b32.xlu0 %v5901, 112
      %v6253 = vpop.permute.xlu0 %6252
      %6254 = vrot.lane.b32.xlu0 %v5902, 112
      %v6255 = vpop.permute.xlu0 %6254
      %6256 = vrot.lane.b32.xlu0 %v5903, 112
      %v6257 = vpop.permute.xlu0 %6256
      %6258 = vrot.lane.b32.xlu0 %v5904, 112
      %v6259 = vpop.permute.xlu0 %6258
      %6260 = vrot.lane.b32.xlu0 %v5905, 112
      %v6261 = vpop.permute.xlu0 %6260
      %6262 = vrot.lane.b32.xlu0 %v5906, 112
      %v6263 = vpop.permute.xlu0 %6262
      %6264 = vrot.lane.b32.xlu0 %v5907, 112
      %v6265 = vpop.permute.xlu0 %6264
      %6266 = vrot.lane.b32.xlu0 %v5908, 112
      %v6267 = vpop.permute.xlu0 %6266
      %6268 = vrot.lane.b32.xlu0 %v5909, 112
      %v6269 = vpop.permute.xlu0 %6268
      %6270 = vrot.lane.b32.xlu0 %v5910, 112
      %v6271 = vpop.permute.xlu0 %6270
      %6272 = vrot.lane.b32.xlu0 %v5911, 112
      %v6273 = vpop.permute.xlu0 %6272
      %6274 = vrot.lane.b32.xlu0 %v5912, 112
      %v6275 = vpop.permute.xlu0 %6274
      %6276 = vrot.lane.b32.xlu0 %v5913, 112
      %v6277 = vpop.permute.xlu0 %6276
      %6278 = vrot.lane.b32.xlu0 %v5914, 112
      %v6279 = vpop.permute.xlu0 %6278
      %6280 = vrot.lane.b32.xlu0 %v5915, 112
      %v6281 = vpop.permute.xlu0 %6280
      %6282 = vrot.lane.b32.xlu0 %v5916, 112
      %v6283 = vpop.permute.xlu0 %6282
      %6284 = vrot.lane.b32.xlu0 %v5917, 112
      %v6285 = vpop.permute.xlu0 %6284
      %6286 = vrot.lane.b32.xlu0 %v5918, 112
      %v6287 = vpop.permute.xlu0 %6286
      %6288 = vrot.lane.b32.xlu0 %v5919, 112
      %v6289 = vpop.permute.xlu0 %6288
      %6290 = vrot.lane.b32.xlu0 %v5920, 112
      %v6291 = vpop.permute.xlu0 %6290
      %6292 = vrot.lane.b32.xlu0 %v5921, 112
      %v6293 = vpop.permute.xlu0 %6292
      %6294 = vrot.lane.b32.xlu0 %v5922, 112
      %v6295 = vpop.permute.xlu0 %6294
      %6296 = vrot.lane.b32.xlu0 %v5923, 112
      %v6297 = vpop.permute.xlu0 %6296
      %6298 = vrot.lane.b32.xlu0 %v5924, 112
      %v6299 = vpop.permute.xlu0 %6298
      %6300 = vrot.lane.b32.xlu0 %v5925, 112
      %v6301 = vpop.permute.xlu0 %6300
      %6302 = vrot.lane.b32.xlu0 %v5926, 112
      %v6303 = vpop.permute.xlu0 %6302
      %6304 = vrot.lane.b32.xlu0 %v5927, 112
      %v6305 = vpop.permute.xlu0 %6304
      %6306 = vrot.lane.b32.xlu0 %v5928, 112
      %v6307 = vpop.permute.xlu0 %6306
      %6308 = vrot.lane.b32.xlu0 %v5929, 112
      %v6309 = vpop.permute.xlu0 %6308
      %6310 = vrot.lane.b32.xlu0 %v5930, 112
      %v6311 = vpop.permute.xlu0 %6310
      %6312 = vrot.lane.b32.xlu0 %v5931, 112
      %v6313 = vpop.permute.xlu0 %6312
      %6314 = vrot.lane.b32.xlu0 %v5932, 112
      %v6315 = vpop.permute.xlu0 %6314
      %6316 = vrot.lane.b32.xlu0 %v5933, 112
      %v6317 = vpop.permute.xlu0 %6316
      %v6446 = vadd.f32 %v5166, %v6063
      %v6447 = vadd.f32 %v5167, %v6065
      %v6448 = vadd.f32 %v5168, %v6067
      %v6449 = vadd.f32 %v5169, %v6069
      %v6450 = vadd.f32 %v5170, %v6071
      %v6451 = vadd.f32 %v5171, %v6073
      %v6452 = vadd.f32 %v5172, %v6075
      %v6453 = vadd.f32 %v5173, %v6077
      %v6454 = vadd.f32 %v5174, %v6079
      %v6455 = vadd.f32 %v5175, %v6081
      %v6456 = vadd.f32 %v5176, %v6083
      %v6457 = vadd.f32 %v5177, %v6085
      %v6458 = vadd.f32 %v5178, %v6087
      %v6459 = vadd.f32 %v5179, %v6089
      %v6460 = vadd.f32 %v5180, %v6091
      %v6461 = vadd.f32 %v5181, %v6093
      %v6462 = vadd.f32 %v5182, %v6095
      %v6463 = vadd.f32 %v5183, %v6097
      %v6464 = vadd.f32 %v5184, %v6099
      %v6465 = vadd.f32 %v5185, %v6101
      %v6466 = vadd.f32 %v5186, %v6103
      %v6467 = vadd.f32 %v5187, %v6105
      %v6468 = vadd.f32 %v5188, %v6107
      %v6469 = vadd.f32 %v5189, %v6109
      %v6470 = vadd.f32 %v5190, %v6111
      %v6471 = vadd.f32 %v5191, %v6113
      %v6472 = vadd.f32 %v5192, %v6115
      %v6473 = vadd.f32 %v5193, %v6117
      %v6474 = vadd.f32 %v5194, %v6119
      %v6475 = vadd.f32 %v5195, %v6121
      %v6476 = vadd.f32 %v5196, %v6123
      %v6477 = vadd.f32 %v5197, %v6125
      %v6478 = vadd.f32 %v5198, %v6127
      %v6479 = vadd.f32 %v5199, %v6129
      %v6480 = vadd.f32 %v5200, %v6131
      %v6481 = vadd.f32 %v5201, %v6133
      %v6482 = vadd.f32 %v5202, %v6135
      %v6483 = vadd.f32 %v5203, %v6137
      %v6484 = vadd.f32 %v5204, %v6139
      %v6485 = vadd.f32 %v5205, %v6141
      %v6486 = vadd.f32 %v5206, %v6143
      %v6487 = vadd.f32 %v5207, %v6145
      %v6488 = vadd.f32 %v5208, %v6147
      %v6489 = vadd.f32 %v5209, %v6149
      %v6490 = vadd.f32 %v5210, %v6151
      %v6491 = vadd.f32 %v5211, %v6153
      %v6492 = vadd.f32 %v5212, %v6155
      %v6493 = vadd.f32 %v5213, %v6157
      %v6494 = vadd.f32 %v5214, %v6159
      %v6495 = vadd.f32 %v5215, %v6161
      %v6496 = vadd.f32 %v5216, %v6163
      %v6497 = vadd.f32 %v5217, %v6165
      %v6498 = vadd.f32 %v5218, %v6167
      %v6499 = vadd.f32 %v5219, %v6169
      %v6500 = vadd.f32 %v5220, %v6171
      %v6501 = vadd.f32 %v5221, %v6173
      %v6502 = vadd.f32 %v5222, %v6175
      %v6503 = vadd.f32 %v5223, %v6177
      %v6504 = vadd.f32 %v5224, %v6179
      %v6505 = vadd.f32 %v5225, %v6181
      %v6506 = vadd.f32 %v5226, %v6183
      %v6507 = vadd.f32 %v5227, %v6185
      %v6508 = vadd.f32 %v5228, %v6187
      %v6509 = vadd.f32 %v5229, %v6189
      %v6510 = vadd.f32 %v5230, %v6191
      %v6511 = vadd.f32 %v5231, %v6193
      %v6512 = vadd.f32 %v5232, %v6195
      %v6513 = vadd.f32 %v5233, %v6197
      %v6514 = vadd.f32 %v5234, %v6199
      %v6515 = vadd.f32 %v5235, %v6201
      %v6516 = vadd.f32 %v5236, %v6203
      %v6517 = vadd.f32 %v5237, %v6205
      %v6518 = vadd.f32 %v5238, %v6207
      %v6519 = vadd.f32 %v5239, %v6209
      %v6520 = vadd.f32 %v5240, %v6211
      %v6521 = vadd.f32 %v5241, %v6213
      %v6522 = vadd.f32 %v5242, %v6215
      %v6523 = vadd.f32 %v5243, %v6217
      %v6524 = vadd.f32 %v5244, %v6219
      %v6525 = vadd.f32 %v5245, %v6221
      %v6526 = vadd.f32 %v5246, %v6223
      %v6527 = vadd.f32 %v5247, %v6225
      %v6528 = vadd.f32 %v5248, %v6227
      %v6529 = vadd.f32 %v5249, %v6229
      %v6530 = vadd.f32 %v5250, %v6231
      %v6531 = vadd.f32 %v5251, %v6233
      %v6532 = vadd.f32 %v5252, %v6235
      %v6533 = vadd.f32 %v5253, %v6237
      %v6534 = vadd.f32 %v5254, %v6239
      %v6535 = vadd.f32 %v5255, %v6241
      %v6536 = vadd.f32 %v5256, %v6243
      %v6537 = vadd.f32 %v5257, %v6245
      %v6538 = vadd.f32 %v5258, %v6247
      %v6539 = vadd.f32 %v5259, %v6249
      %v6540 = vadd.f32 %v5260, %v6251
      %v6541 = vadd.f32 %v5261, %v6253
      %v6542 = vadd.f32 %v5262, %v6255
      %v6543 = vadd.f32 %v5263, %v6257
      %v6544 = vadd.f32 %v5264, %v6259
      %v6545 = vadd.f32 %v5265, %v6261
      %v6546 = vadd.f32 %v5266, %v6263
      %v6547 = vadd.f32 %v5267, %v6265
      %v6548 = vadd.f32 %v5268, %v6267
      %v6549 = vadd.f32 %v5269, %v6269
      %v6550 = vadd.f32 %v5270, %v6271
      %v6551 = vadd.f32 %v5271, %v6273
      %v6552 = vadd.f32 %v5272, %v6275
      %v6553 = vadd.f32 %v5273, %v6277
      %v6554 = vadd.f32 %v5274, %v6279
      %v6555 = vadd.f32 %v5275, %v6281
      %v6556 = vadd.f32 %v5276, %v6283
      %v6557 = vadd.f32 %v5277, %v6285
      %v6558 = vadd.f32 %v5278, %v6287
      %v6559 = vadd.f32 %v5279, %v6289
      %v6560 = vadd.f32 %v5280, %v6291
      %v6561 = vadd.f32 %v5281, %v6293
      %v6562 = vadd.f32 %v5282, %v6295
      %v6563 = vadd.f32 %v5283, %v6297
      %v6564 = vadd.f32 %v5284, %v6299
      %v6565 = vadd.f32 %v5285, %v6301
      %v6566 = vadd.f32 %v5286, %v6303
      %v6567 = vadd.f32 %v5287, %v6305
      %v6568 = vadd.f32 %v5288, %v6307
      %v6569 = vadd.f32 %v5289, %v6309
      %v6570 = vadd.f32 %v5290, %v6311
      %v6571 = vadd.f32 %v5291, %v6313
      %v6572 = vadd.f32 %v5292, %v6315
      %v6573 = vadd.f32 %v5293, %v6317
      %6574 = vset.pattern.permute.xlu0 3
      %6575 = vperm.xlu0 %6574, %v3118
      %v6576 = vpop.permute.xlu0 %6575
      %6578 = vset.pattern.permute.xlu0 3
      %6579 = vperm.xlu0 %6578, %v3119
      %v6580 = vpop.permute.xlu0 %6579
      %6582 = vset.pattern.permute.xlu0 3
      %6583 = vperm.xlu0 %6582, %v3120
      %v6584 = vpop.permute.xlu0 %6583
      %6586 = vset.pattern.permute.xlu0 3
      %6587 = vperm.xlu0 %6586, %v3121
      %v6588 = vpop.permute.xlu0 %6587
      %6590 = vset.pattern.permute.xlu0 3
      %6591 = vperm.xlu0 %6590, %v3122
      %v6592 = vpop.permute.xlu0 %6591
      %6594 = vset.pattern.permute.xlu0 3
      %6595 = vperm.xlu0 %6594, %v3123
      %v6596 = vpop.permute.xlu0 %6595
      %6598 = vset.pattern.permute.xlu0 3
      %6599 = vperm.xlu0 %6598, %v3124
      %v6600 = vpop.permute.xlu0 %6599
      %6602 = vset.pattern.permute.xlu0 3
      %6603 = vperm.xlu0 %6602, %v3125
      %v6604 = vpop.permute.xlu0 %6603
      %6606 = vset.pattern.permute.xlu0 3
      %6607 = vperm.xlu0 %6606, %v3126
      %v6608 = vpop.permute.xlu0 %6607
      %6610 = vset.pattern.permute.xlu0 3
      %6611 = vperm.xlu0 %6610, %v3127
      %v6612 = vpop.permute.xlu0 %6611
      %6614 = vset.pattern.permute.xlu0 3
      %6615 = vperm.xlu0 %6614, %v3128
      %v6616 = vpop.permute.xlu0 %6615
      %6618 = vset.pattern.permute.xlu0 3
      %6619 = vperm.xlu0 %6618, %v3129
      %v6620 = vpop.permute.xlu0 %6619
      %6622 = vset.pattern.permute.xlu0 3
      %6623 = vperm.xlu0 %6622, %v3130
      %v6624 = vpop.permute.xlu0 %6623
      %6626 = vset.pattern.permute.xlu0 3
      %6627 = vperm.xlu0 %6626, %v3131
      %v6628 = vpop.permute.xlu0 %6627
      %6630 = vset.pattern.permute.xlu0 3
      %6631 = vperm.xlu0 %6630, %v3132
      %v6632 = vpop.permute.xlu0 %6631
      %6634 = vset.pattern.permute.xlu0 3
      %6635 = vperm.xlu0 %6634, %v3133
      %v6636 = vpop.permute.xlu0 %6635
      %6638 = vset.pattern.permute.xlu0 3
      %6639 = vperm.xlu0 %6638, %v3134
      %v6640 = vpop.permute.xlu0 %6639
      %6642 = vset.pattern.permute.xlu0 3
      %6643 = vperm.xlu0 %6642, %v3135
      %v6644 = vpop.permute.xlu0 %6643
      %6646 = vset.pattern.permute.xlu0 3
      %6647 = vperm.xlu0 %6646, %v3136
      %v6648 = vpop.permute.xlu0 %6647
      %6650 = vset.pattern.permute.xlu0 3
      %6651 = vperm.xlu0 %6650, %v3137
      %v6652 = vpop.permute.xlu0 %6651
      %6654 = vset.pattern.permute.xlu0 3
      %6655 = vperm.xlu0 %6654, %v3138
      %v6656 = vpop.permute.xlu0 %6655
      %6658 = vset.pattern.permute.xlu0 3
      %6659 = vperm.xlu0 %6658, %v3139
      %v6660 = vpop.permute.xlu0 %6659
      %6662 = vset.pattern.permute.xlu0 3
      %6663 = vperm.xlu0 %6662, %v3140
      %v6664 = vpop.permute.xlu0 %6663
      %6666 = vset.pattern.permute.xlu0 3
      %6667 = vperm.xlu0 %6666, %v3141
      %v6668 = vpop.permute.xlu0 %6667
      %6670 = vset.pattern.permute.xlu0 3
      %6671 = vperm.xlu0 %6670, %v3142
      %v6672 = vpop.permute.xlu0 %6671
      %6674 = vset.pattern.permute.xlu0 3
      %6675 = vperm.xlu0 %6674, %v3143
      %v6676 = vpop.permute.xlu0 %6675
      %6678 = vset.pattern.permute.xlu0 3
      %6679 = vperm.xlu0 %6678, %v3144
      %v6680 = vpop.permute.xlu0 %6679
      %6682 = vset.pattern.permute.xlu0 3
      %6683 = vperm.xlu0 %6682, %v3145
      %v6684 = vpop.permute.xlu0 %6683
      %6686 = vset.pattern.permute.xlu0 3
      %6687 = vperm.xlu0 %6686, %v3146
      %v6688 = vpop.permute.xlu0 %6687
      %6690 = vset.pattern.permute.xlu0 3
      %6691 = vperm.xlu0 %6690, %v3147
      %v6692 = vpop.permute.xlu0 %6691
      %6694 = vset.pattern.permute.xlu0 3
      %6695 = vperm.xlu0 %6694, %v3148
      %v6696 = vpop.permute.xlu0 %6695
      %6698 = vset.pattern.permute.xlu0 3
      %6699 = vperm.xlu0 %6698, %v3149
      %v6700 = vpop.permute.xlu0 %6699
      %6702 = vset.pattern.permute.xlu0 3
      %6703 = vperm.xlu0 %6702, %v3150
      %v6704 = vpop.permute.xlu0 %6703
      %6706 = vset.pattern.permute.xlu0 3
      %6707 = vperm.xlu0 %6706, %v3151
      %v6708 = vpop.permute.xlu0 %6707
      %6710 = vset.pattern.permute.xlu0 3
      %6711 = vperm.xlu0 %6710, %v3152
      %v6712 = vpop.permute.xlu0 %6711
      %6714 = vset.pattern.permute.xlu0 3
      %6715 = vperm.xlu0 %6714, %v3153
      %v6716 = vpop.permute.xlu0 %6715
      %6718 = vset.pattern.permute.xlu0 3
      %6719 = vperm.xlu0 %6718, %v3154
      %v6720 = vpop.permute.xlu0 %6719
      %6722 = vset.pattern.permute.xlu0 3
      %6723 = vperm.xlu0 %6722, %v3155
      %v6724 = vpop.permute.xlu0 %6723
      %6726 = vset.pattern.permute.xlu0 3
      %6727 = vperm.xlu0 %6726, %v3156
      %v6728 = vpop.permute.xlu0 %6727
      %6730 = vset.pattern.permute.xlu0 3
      %6731 = vperm.xlu0 %6730, %v3157
      %v6732 = vpop.permute.xlu0 %6731
      %6734 = vset.pattern.permute.xlu0 3
      %6735 = vperm.xlu0 %6734, %v3158
      %v6736 = vpop.permute.xlu0 %6735
      %6738 = vset.pattern.permute.xlu0 3
      %6739 = vperm.xlu0 %6738, %v3159
      %v6740 = vpop.permute.xlu0 %6739
      %6742 = vset.pattern.permute.xlu0 3
      %6743 = vperm.xlu0 %6742, %v3160
      %v6744 = vpop.permute.xlu0 %6743
      %6746 = vset.pattern.permute.xlu0 3
      %6747 = vperm.xlu0 %6746, %v3161
      %v6748 = vpop.permute.xlu0 %6747
      %6750 = vset.pattern.permute.xlu0 3
      %6751 = vperm.xlu0 %6750, %v3162
      %v6752 = vpop.permute.xlu0 %6751
      %6754 = vset.pattern.permute.xlu0 3
      %6755 = vperm.xlu0 %6754, %v3163
      %v6756 = vpop.permute.xlu0 %6755
      %6758 = vset.pattern.permute.xlu0 3
      %6759 = vperm.xlu0 %6758, %v3164
      %v6760 = vpop.permute.xlu0 %6759
      %6762 = vset.pattern.permute.xlu0 3
      %6763 = vperm.xlu0 %6762, %v3165
      %v6764 = vpop.permute.xlu0 %6763
      %6766 = vset.pattern.permute.xlu0 3
      %6767 = vperm.xlu0 %6766, %v3166
      %v6768 = vpop.permute.xlu0 %6767
      %6770 = vset.pattern.permute.xlu0 3
      %6771 = vperm.xlu0 %6770, %v3167
      %v6772 = vpop.permute.xlu0 %6771
      %6774 = vset.pattern.permute.xlu0 3
      %6775 = vperm.xlu0 %6774, %v3168
      %v6776 = vpop.permute.xlu0 %6775
      %6778 = vset.pattern.permute.xlu0 3
      %6779 = vperm.xlu0 %6778, %v3169
      %v6780 = vpop.permute.xlu0 %6779
      %6782 = vset.pattern.permute.xlu0 3
      %6783 = vperm.xlu0 %6782, %v3170
      %v6784 = vpop.permute.xlu0 %6783
      %6786 = vset.pattern.permute.xlu0 3
      %6787 = vperm.xlu0 %6786, %v3171
      %v6788 = vpop.permute.xlu0 %6787
      %6790 = vset.pattern.permute.xlu0 3
      %6791 = vperm.xlu0 %6790, %v3172
      %v6792 = vpop.permute.xlu0 %6791
      %6794 = vset.pattern.permute.xlu0 3
      %6795 = vperm.xlu0 %6794, %v3173
      %v6796 = vpop.permute.xlu0 %6795
      %6798 = vset.pattern.permute.xlu0 3
      %6799 = vperm.xlu0 %6798, %v3174
      %v6800 = vpop.permute.xlu0 %6799
      %6802 = vset.pattern.permute.xlu0 3
      %6803 = vperm.xlu0 %6802, %v3175
      %v6804 = vpop.permute.xlu0 %6803
      %6806 = vset.pattern.permute.xlu0 3
      %6807 = vperm.xlu0 %6806, %v3176
      %v6808 = vpop.permute.xlu0 %6807
      %6810 = vset.pattern.permute.xlu0 3
      %6811 = vperm.xlu0 %6810, %v3177
      %v6812 = vpop.permute.xlu0 %6811
      %6814 = vset.pattern.permute.xlu0 3
      %6815 = vperm.xlu0 %6814, %v3178
      %v6816 = vpop.permute.xlu0 %6815
      %6818 = vset.pattern.permute.xlu0 3
      %6819 = vperm.xlu0 %6818, %v3179
      %v6820 = vpop.permute.xlu0 %6819
      %6822 = vset.pattern.permute.xlu0 3
      %6823 = vperm.xlu0 %6822, %v3180
      %v6824 = vpop.permute.xlu0 %6823
      %6826 = vset.pattern.permute.xlu0 3
      %6827 = vperm.xlu0 %6826, %v3181
      %v6828 = vpop.permute.xlu0 %6827
      %6830 = vset.pattern.permute.xlu0 3
      %6831 = vperm.xlu0 %6830, %v3182
      %v6832 = vpop.permute.xlu0 %6831
      %6834 = vset.pattern.permute.xlu0 3
      %6835 = vperm.xlu0 %6834, %v3183
      %v6836 = vpop.permute.xlu0 %6835
      %6838 = vset.pattern.permute.xlu0 3
      %6839 = vperm.xlu0 %6838, %v3184
      %v6840 = vpop.permute.xlu0 %6839
      %6842 = vset.pattern.permute.xlu0 3
      %6843 = vperm.xlu0 %6842, %v3185
      %v6844 = vpop.permute.xlu0 %6843
      %6846 = vset.pattern.permute.xlu0 3
      %6847 = vperm.xlu0 %6846, %v3186
      %v6848 = vpop.permute.xlu0 %6847
      %6850 = vset.pattern.permute.xlu0 3
      %6851 = vperm.xlu0 %6850, %v3187
      %v6852 = vpop.permute.xlu0 %6851
      %6854 = vset.pattern.permute.xlu0 3
      %6855 = vperm.xlu0 %6854, %v3188
      %v6856 = vpop.permute.xlu0 %6855
      %6858 = vset.pattern.permute.xlu0 3
      %6859 = vperm.xlu0 %6858, %v3189
      %v6860 = vpop.permute.xlu0 %6859
      %6862 = vset.pattern.permute.xlu0 3
      %6863 = vperm.xlu0 %6862, %v3190
      %v6864 = vpop.permute.xlu0 %6863
      %6866 = vset.pattern.permute.xlu0 3
      %6867 = vperm.xlu0 %6866, %v3191
      %v6868 = vpop.permute.xlu0 %6867
      %6870 = vset.pattern.permute.xlu0 3
      %6871 = vperm.xlu0 %6870, %v3192
      %v6872 = vpop.permute.xlu0 %6871
      %6874 = vset.pattern.permute.xlu0 3
      %6875 = vperm.xlu0 %6874, %v3193
      %v6876 = vpop.permute.xlu0 %6875
      %6878 = vset.pattern.permute.xlu0 3
      %6879 = vperm.xlu0 %6878, %v3194
      %v6880 = vpop.permute.xlu0 %6879
      %6882 = vset.pattern.permute.xlu0 3
      %6883 = vperm.xlu0 %6882, %v3195
      %v6884 = vpop.permute.xlu0 %6883
      %6886 = vset.pattern.permute.xlu0 3
      %6887 = vperm.xlu0 %6886, %v3196
      %v6888 = vpop.permute.xlu0 %6887
      %6890 = vset.pattern.permute.xlu0 3
      %6891 = vperm.xlu0 %6890, %v3197
      %v6892 = vpop.permute.xlu0 %6891
      %6894 = vset.pattern.permute.xlu0 3
      %6895 = vperm.xlu0 %6894, %v3198
      %v6896 = vpop.permute.xlu0 %6895
      %6898 = vset.pattern.permute.xlu0 3
      %6899 = vperm.xlu0 %6898, %v3199
      %v6900 = vpop.permute.xlu0 %6899
      %6902 = vset.pattern.permute.xlu0 3
      %6903 = vperm.xlu0 %6902, %v3200
      %v6904 = vpop.permute.xlu0 %6903
      %6906 = vset.pattern.permute.xlu0 3
      %6907 = vperm.xlu0 %6906, %v3201
      %v6908 = vpop.permute.xlu0 %6907
      %6910 = vset.pattern.permute.xlu0 3
      %6911 = vperm.xlu0 %6910, %v3202
      %v6912 = vpop.permute.xlu0 %6911
      %6914 = vset.pattern.permute.xlu0 3
      %6915 = vperm.xlu0 %6914, %v3203
      %v6916 = vpop.permute.xlu0 %6915
      %6918 = vset.pattern.permute.xlu0 3
      %6919 = vperm.xlu0 %6918, %v3204
      %v6920 = vpop.permute.xlu0 %6919
      %6922 = vset.pattern.permute.xlu0 3
      %6923 = vperm.xlu0 %6922, %v3205
      %v6924 = vpop.permute.xlu0 %6923
      %6926 = vset.pattern.permute.xlu0 3
      %6927 = vperm.xlu0 %6926, %v3206
      %v6928 = vpop.permute.xlu0 %6927
      %6930 = vset.pattern.permute.xlu0 3
      %6931 = vperm.xlu0 %6930, %v3207
      %v6932 = vpop.permute.xlu0 %6931
      %6934 = vset.pattern.permute.xlu0 3
      %6935 = vperm.xlu0 %6934, %v3208
      %v6936 = vpop.permute.xlu0 %6935
      %6938 = vset.pattern.permute.xlu0 3
      %6939 = vperm.xlu0 %6938, %v3209
      %v6940 = vpop.permute.xlu0 %6939
      %6942 = vset.pattern.permute.xlu0 3
      %6943 = vperm.xlu0 %6942, %v3210
      %v6944 = vpop.permute.xlu0 %6943
      %6946 = vset.pattern.permute.xlu0 3
      %6947 = vperm.xlu0 %6946, %v3211
      %v6948 = vpop.permute.xlu0 %6947
      %6950 = vset.pattern.permute.xlu0 3
      %6951 = vperm.xlu0 %6950, %v3212
      %v6952 = vpop.permute.xlu0 %6951
      %6954 = vset.pattern.permute.xlu0 3
      %6955 = vperm.xlu0 %6954, %v3213
      %v6956 = vpop.permute.xlu0 %6955
      %6958 = vset.pattern.permute.xlu0 3
      %6959 = vperm.xlu0 %6958, %v3214
      %v6960 = vpop.permute.xlu0 %6959
      %6962 = vset.pattern.permute.xlu0 3
      %6963 = vperm.xlu0 %6962, %v3215
      %v6964 = vpop.permute.xlu0 %6963
      %6966 = vset.pattern.permute.xlu0 3
      %6967 = vperm.xlu0 %6966, %v3216
      %v6968 = vpop.permute.xlu0 %6967
      %6970 = vset.pattern.permute.xlu0 3
      %6971 = vperm.xlu0 %6970, %v3217
      %v6972 = vpop.permute.xlu0 %6971
      %6974 = vset.pattern.permute.xlu0 3
      %6975 = vperm.xlu0 %6974, %v3218
      %v6976 = vpop.permute.xlu0 %6975
      %6978 = vset.pattern.permute.xlu0 3
      %6979 = vperm.xlu0 %6978, %v3219
      %v6980 = vpop.permute.xlu0 %6979
      %6982 = vset.pattern.permute.xlu0 3
      %6983 = vperm.xlu0 %6982, %v3220
      %v6984 = vpop.permute.xlu0 %6983
      %6986 = vset.pattern.permute.xlu0 3
      %6987 = vperm.xlu0 %6986, %v3221
      %v6988 = vpop.permute.xlu0 %6987
      %6990 = vset.pattern.permute.xlu0 3
      %6991 = vperm.xlu0 %6990, %v3222
      %v6992 = vpop.permute.xlu0 %6991
      %6994 = vset.pattern.permute.xlu0 3
      %6995 = vperm.xlu0 %6994, %v3223
      %v6996 = vpop.permute.xlu0 %6995
      %6998 = vset.pattern.permute.xlu0 3
      %6999 = vperm.xlu0 %6998, %v3224
      %v7000 = vpop.permute.xlu0 %6999
      %7002 = vset.pattern.permute.xlu0 3
      %7003 = vperm.xlu0 %7002, %v3225
      %v7004 = vpop.permute.xlu0 %7003
      %7006 = vset.pattern.permute.xlu0 3
      %7007 = vperm.xlu0 %7006, %v3226
      %v7008 = vpop.permute.xlu0 %7007
      %7010 = vset.pattern.permute.xlu0 3
      %7011 = vperm.xlu0 %7010, %v3227
      %v7012 = vpop.permute.xlu0 %7011
      %7014 = vset.pattern.permute.xlu0 3
      %7015 = vperm.xlu0 %7014, %v3228
      %v7016 = vpop.permute.xlu0 %7015
      %7018 = vset.pattern.permute.xlu0 3
      %7019 = vperm.xlu0 %7018, %v3229
      %v7020 = vpop.permute.xlu0 %7019
      %7022 = vset.pattern.permute.xlu0 3
      %7023 = vperm.xlu0 %7022, %v3230
      %v7024 = vpop.permute.xlu0 %7023
      %7026 = vset.pattern.permute.xlu0 3
      %7027 = vperm.xlu0 %7026, %v3231
      %v7028 = vpop.permute.xlu0 %7027
      %7030 = vset.pattern.permute.xlu0 3
      %7031 = vperm.xlu0 %7030, %v3232
      %v7032 = vpop.permute.xlu0 %7031
      %7034 = vset.pattern.permute.xlu0 3
      %7035 = vperm.xlu0 %7034, %v3233
      %v7036 = vpop.permute.xlu0 %7035
      %7038 = vset.pattern.permute.xlu0 3
      %7039 = vperm.xlu0 %7038, %v3234
      %v7040 = vpop.permute.xlu0 %7039
      %7042 = vset.pattern.permute.xlu0 3
      %7043 = vperm.xlu0 %7042, %v3235
      %v7044 = vpop.permute.xlu0 %7043
      %7046 = vset.pattern.permute.xlu0 3
      %7047 = vperm.xlu0 %7046, %v3236
      %v7048 = vpop.permute.xlu0 %7047
      %7050 = vset.pattern.permute.xlu0 3
      %7051 = vperm.xlu0 %7050, %v3237
      %v7052 = vpop.permute.xlu0 %7051
      %7054 = vset.pattern.permute.xlu0 3
      %7055 = vperm.xlu0 %7054, %v3238
      %v7056 = vpop.permute.xlu0 %7055
      %7058 = vset.pattern.permute.xlu0 3
      %7059 = vperm.xlu0 %7058, %v3239
      %v7060 = vpop.permute.xlu0 %7059
      %7062 = vset.pattern.permute.xlu0 3
      %7063 = vperm.xlu0 %7062, %v3240
      %v7064 = vpop.permute.xlu0 %7063
      %7066 = vset.pattern.permute.xlu0 3
      %7067 = vperm.xlu0 %7066, %v3241
      %v7068 = vpop.permute.xlu0 %7067
      %7070 = vset.pattern.permute.xlu0 3
      %7071 = vperm.xlu0 %7070, %v3242
      %v7072 = vpop.permute.xlu0 %7071
      %7074 = vset.pattern.permute.xlu0 3
      %7075 = vperm.xlu0 %7074, %v3243
      %v7076 = vpop.permute.xlu0 %7075
      %7078 = vset.pattern.permute.xlu0 3
      %7079 = vperm.xlu0 %7078, %v3244
      %v7080 = vpop.permute.xlu0 %7079
      %7082 = vset.pattern.permute.xlu0 3
      %7083 = vperm.xlu0 %7082, %v3245
      %v7084 = vpop.permute.xlu0 %7083
      %v7086 = vmul.f32 %v2608, %v6576
      %v7087 = vmul.f32 %v2611, %v6580
      %v7088 = vmul.f32 %v2616, %v6584
      %v7089 = vmul.f32 %v2619, %v6588
      %v7090 = vmul.f32 %v2624, %v6592
      %v7091 = vmul.f32 %v2627, %v6596
      %v7092 = vmul.f32 %v2632, %v6600
      %v7093 = vmul.f32 %v2635, %v6604
      %v7094 = vmul.f32 %v2640, %v6608
      %v7095 = vmul.f32 %v2643, %v6612
      %v7096 = vmul.f32 %v2648, %v6616
      %v7097 = vmul.f32 %v2651, %v6620
      %v7098 = vmul.f32 %v2656, %v6624
      %v7099 = vmul.f32 %v2659, %v6628
      %v7100 = vmul.f32 %v2664, %v6632
      %v7101 = vmul.f32 %v2667, %v6636
      %v7102 = vmul.f32 %v2672, %v6640
      %v7103 = vmul.f32 %v2675, %v6644
      %v7104 = vmul.f32 %v2680, %v6648
      %v7105 = vmul.f32 %v2683, %v6652
      %v7106 = vmul.f32 %v2688, %v6656
      %v7107 = vmul.f32 %v2691, %v6660
      %v7108 = vmul.f32 %v2696, %v6664
      %v7109 = vmul.f32 %v2699, %v6668
      %v7110 = vmul.f32 %v2704, %v6672
      %v7111 = vmul.f32 %v2707, %v6676
      %v7112 = vmul.f32 %v2712, %v6680
      %v7113 = vmul.f32 %v2715, %v6684
      %v7114 = vmul.f32 %v2720, %v6688
      %v7115 = vmul.f32 %v2723, %v6692
      %v7116 = vmul.f32 %v2728, %v6696
      %v7117 = vmul.f32 %v2731, %v6700
      %v7118 = vmul.f32 %v2736, %v6704
      %v7119 = vmul.f32 %v2739, %v6708
      %v7120 = vmul.f32 %v2744, %v6712
      %v7121 = vmul.f32 %v2747, %v6716
      %v7122 = vmul.f32 %v2752, %v6720
      %v7123 = vmul.f32 %v2755, %v6724
      %v7124 = vmul.f32 %v2760, %v6728
      %v7125 = vmul.f32 %v2763, %v6732
      %v7126 = vmul.f32 %v2768, %v6736
      %v7127 = vmul.f32 %v2771, %v6740
      %v7128 = vmul.f32 %v2776, %v6744
      %v7129 = vmul.f32 %v2779, %v6748
      %v7130 = vmul.f32 %v2784, %v6752
      %v7131 = vmul.f32 %v2787, %v6756
      %v7132 = vmul.f32 %v2792, %v6760
      %v7133 = vmul.f32 %v2795, %v6764
      %v7134 = vmul.f32 %v2800, %v6768
      %v7135 = vmul.f32 %v2803, %v6772
      %v7136 = vmul.f32 %v2808, %v6776
      %v7137 = vmul.f32 %v2811, %v6780
      %v7138 = vmul.f32 %v2816, %v6784
      %v7139 = vmul.f32 %v2819, %v6788
      %v7140 = vmul.f32 %v2824, %v6792
      %v7141 = vmul.f32 %v2827, %v6796
      %v7142 = vmul.f32 %v2832, %v6800
      %v7143 = vmul.f32 %v2835, %v6804
      %v7144 = vmul.f32 %v2840, %v6808
      %v7145 = vmul.f32 %v2843, %v6812
      %v7146 = vmul.f32 %v2848, %v6816
      %v7147 = vmul.f32 %v2851, %v6820
      %v7148 = vmul.f32 %v2856, %v6824
      %v7149 = vmul.f32 %v2859, %v6828
      %v7150 = vmul.f32 %v2864, %v6832
      %v7151 = vmul.f32 %v2867, %v6836
      %v7152 = vmul.f32 %v2872, %v6840
      %v7153 = vmul.f32 %v2875, %v6844
      %v7154 = vmul.f32 %v2880, %v6848
      %v7155 = vmul.f32 %v2883, %v6852
      %v7156 = vmul.f32 %v2888, %v6856
      %v7157 = vmul.f32 %v2891, %v6860
      %v7158 = vmul.f32 %v2896, %v6864
      %v7159 = vmul.f32 %v2899, %v6868
      %v7160 = vmul.f32 %v2904, %v6872
      %v7161 = vmul.f32 %v2907, %v6876
      %v7162 = vmul.f32 %v2912, %v6880
      %v7163 = vmul.f32 %v2915, %v6884
      %v7164 = vmul.f32 %v2920, %v6888
      %v7165 = vmul.f32 %v2923, %v6892
      %v7166 = vmul.f32 %v2928, %v6896
      %v7167 = vmul.f32 %v2931, %v6900
      %v7168 = vmul.f32 %v2936, %v6904
      %v7169 = vmul.f32 %v2939, %v6908
      %v7170 = vmul.f32 %v2944, %v6912
      %v7171 = vmul.f32 %v2947, %v6916
      %v7172 = vmul.f32 %v2952, %v6920
      %v7173 = vmul.f32 %v2955, %v6924
      %v7174 = vmul.f32 %v2960, %v6928
      %v7175 = vmul.f32 %v2963, %v6932
      %v7176 = vmul.f32 %v2968, %v6936
      %v7177 = vmul.f32 %v2971, %v6940
      %v7178 = vmul.f32 %v2976, %v6944
      %v7179 = vmul.f32 %v2979, %v6948
      %v7180 = vmul.f32 %v2984, %v6952
      %v7181 = vmul.f32 %v2987, %v6956
      %v7182 = vmul.f32 %v2992, %v6960
      %v7183 = vmul.f32 %v2995, %v6964
      %v7184 = vmul.f32 %v3000, %v6968
      %v7185 = vmul.f32 %v3003, %v6972
      %v7186 = vmul.f32 %v3008, %v6976
      %v7187 = vmul.f32 %v3011, %v6980
      %v7188 = vmul.f32 %v3016, %v6984
      %v7189 = vmul.f32 %v3019, %v6988
      %v7190 = vmul.f32 %v3024, %v6992
      %v7191 = vmul.f32 %v3027, %v6996
      %v7192 = vmul.f32 %v3032, %v7000
      %v7193 = vmul.f32 %v3035, %v7004
      %v7194 = vmul.f32 %v3040, %v7008
      %v7195 = vmul.f32 %v3043, %v7012
      %v7196 = vmul.f32 %v3048, %v7016
      %v7197 = vmul.f32 %v3051, %v7020
      %v7198 = vmul.f32 %v3056, %v7024
      %v7199 = vmul.f32 %v3059, %v7028
      %v7200 = vmul.f32 %v3064, %v7032
      %v7201 = vmul.f32 %v3067, %v7036
      %v7202 = vmul.f32 %v3072, %v7040
      %v7203 = vmul.f32 %v3075, %v7044
      %v7204 = vmul.f32 %v3080, %v7048
      %v7205 = vmul.f32 %v3083, %v7052
      %v7206 = vmul.f32 %v3088, %v7056
      %v7207 = vmul.f32 %v3091, %v7060
      %v7208 = vmul.f32 %v3096, %v7064
      %v7209 = vmul.f32 %v3099, %v7068
      %v7210 = vmul.f32 %v3104, %v7072
      %v7211 = vmul.f32 %v3107, %v7076
      %v7212 = vmul.f32 %v3112, %v7080
      %v7213 = vmul.f32 %v3115, %v7084
      %7342 = vrot.lane.b32.xlu0 %v7086, 104
      %v7343 = vpop.permute.xlu0 %7342
      %7344 = vrot.lane.b32.xlu0 %v7087, 104
      %v7345 = vpop.permute.xlu0 %7344
      %7346 = vrot.lane.b32.xlu0 %v7088, 104
      %v7347 = vpop.permute.xlu0 %7346
      %7348 = vrot.lane.b32.xlu0 %v7089, 104
      %v7349 = vpop.permute.xlu0 %7348
      %7350 = vrot.lane.b32.xlu0 %v7090, 104
      %v7351 = vpop.permute.xlu0 %7350
      %7352 = vrot.lane.b32.xlu0 %v7091, 104
      %v7353 = vpop.permute.xlu0 %7352
      %7354 = vrot.lane.b32.xlu0 %v7092, 104
      %v7355 = vpop.permute.xlu0 %7354
      %7356 = vrot.lane.b32.xlu0 %v7093, 104
      %v7357 = vpop.permute.xlu0 %7356
      %7358 = vrot.lane.b32.xlu0 %v7094, 104
      %v7359 = vpop.permute.xlu0 %7358
      %7360 = vrot.lane.b32.xlu0 %v7095, 104
      %v7361 = vpop.permute.xlu0 %7360
      %7362 = vrot.lane.b32.xlu0 %v7096, 104
      %v7363 = vpop.permute.xlu0 %7362
      %7364 = vrot.lane.b32.xlu0 %v7097, 104
      %v7365 = vpop.permute.xlu0 %7364
      %7366 = vrot.lane.b32.xlu0 %v7098, 104
      %v7367 = vpop.permute.xlu0 %7366
      %7368 = vrot.lane.b32.xlu0 %v7099, 104
      %v7369 = vpop.permute.xlu0 %7368
      %7370 = vrot.lane.b32.xlu0 %v7100, 104
      %v7371 = vpop.permute.xlu0 %7370
      %7372 = vrot.lane.b32.xlu0 %v7101, 104
      %v7373 = vpop.permute.xlu0 %7372
      %7374 = vrot.lane.b32.xlu0 %v7102, 104
      %v7375 = vpop.permute.xlu0 %7374
      %7376 = vrot.lane.b32.xlu0 %v7103, 104
      %v7377 = vpop.permute.xlu0 %7376
      %7378 = vrot.lane.b32.xlu0 %v7104, 104
      %v7379 = vpop.permute.xlu0 %7378
      %7380 = vrot.lane.b32.xlu0 %v7105, 104
      %v7381 = vpop.permute.xlu0 %7380
      %7382 = vrot.lane.b32.xlu0 %v7106, 104
      %v7383 = vpop.permute.xlu0 %7382
      %7384 = vrot.lane.b32.xlu0 %v7107, 104
      %v7385 = vpop.permute.xlu0 %7384
      %7386 = vrot.lane.b32.xlu0 %v7108, 104
      %v7387 = vpop.permute.xlu0 %7386
      %7388 = vrot.lane.b32.xlu0 %v7109, 104
      %v7389 = vpop.permute.xlu0 %7388
      %7390 = vrot.lane.b32.xlu0 %v7110, 104
      %v7391 = vpop.permute.xlu0 %7390
      %7392 = vrot.lane.b32.xlu0 %v7111, 104
      %v7393 = vpop.permute.xlu0 %7392
      %7394 = vrot.lane.b32.xlu0 %v7112, 104
      %v7395 = vpop.permute.xlu0 %7394
      %7396 = vrot.lane.b32.xlu0 %v7113, 104
      %v7397 = vpop.permute.xlu0 %7396
      %7398 = vrot.lane.b32.xlu0 %v7114, 104
      %v7399 = vpop.permute.xlu0 %7398
      %7400 = vrot.lane.b32.xlu0 %v7115, 104
      %v7401 = vpop.permute.xlu0 %7400
      %7402 = vrot.lane.b32.xlu0 %v7116, 104
      %v7403 = vpop.permute.xlu0 %7402
      %7404 = vrot.lane.b32.xlu0 %v7117, 104
      %v7405 = vpop.permute.xlu0 %7404
      %7406 = vrot.lane.b32.xlu0 %v7118, 104
      %v7407 = vpop.permute.xlu0 %7406
      %7408 = vrot.lane.b32.xlu0 %v7119, 104
      %v7409 = vpop.permute.xlu0 %7408
      %7410 = vrot.lane.b32.xlu0 %v7120, 104
      %v7411 = vpop.permute.xlu0 %7410
      %7412 = vrot.lane.b32.xlu0 %v7121, 104
      %v7413 = vpop.permute.xlu0 %7412
      %7414 = vrot.lane.b32.xlu0 %v7122, 104
      %v7415 = vpop.permute.xlu0 %7414
      %7416 = vrot.lane.b32.xlu0 %v7123, 104
      %v7417 = vpop.permute.xlu0 %7416
      %7418 = vrot.lane.b32.xlu0 %v7124, 104
      %v7419 = vpop.permute.xlu0 %7418
      %7420 = vrot.lane.b32.xlu0 %v7125, 104
      %v7421 = vpop.permute.xlu0 %7420
      %7422 = vrot.lane.b32.xlu0 %v7126, 104
      %v7423 = vpop.permute.xlu0 %7422
      %7424 = vrot.lane.b32.xlu0 %v7127, 104
      %v7425 = vpop.permute.xlu0 %7424
      %7426 = vrot.lane.b32.xlu0 %v7128, 104
      %v7427 = vpop.permute.xlu0 %7426
      %7428 = vrot.lane.b32.xlu0 %v7129, 104
      %v7429 = vpop.permute.xlu0 %7428
      %7430 = vrot.lane.b32.xlu0 %v7130, 104
      %v7431 = vpop.permute.xlu0 %7430
      %7432 = vrot.lane.b32.xlu0 %v7131, 104
      %v7433 = vpop.permute.xlu0 %7432
      %7434 = vrot.lane.b32.xlu0 %v7132, 104
      %v7435 = vpop.permute.xlu0 %7434
      %7436 = vrot.lane.b32.xlu0 %v7133, 104
      %v7437 = vpop.permute.xlu0 %7436
      %7438 = vrot.lane.b32.xlu0 %v7134, 104
      %v7439 = vpop.permute.xlu0 %7438
      %7440 = vrot.lane.b32.xlu0 %v7135, 104
      %v7441 = vpop.permute.xlu0 %7440
      %7442 = vrot.lane.b32.xlu0 %v7136, 104
      %v7443 = vpop.permute.xlu0 %7442
      %7444 = vrot.lane.b32.xlu0 %v7137, 104
      %v7445 = vpop.permute.xlu0 %7444
      %7446 = vrot.lane.b32.xlu0 %v7138, 104
      %v7447 = vpop.permute.xlu0 %7446
      %7448 = vrot.lane.b32.xlu0 %v7139, 104
      %v7449 = vpop.permute.xlu0 %7448
      %7450 = vrot.lane.b32.xlu0 %v7140, 104
      %v7451 = vpop.permute.xlu0 %7450
      %7452 = vrot.lane.b32.xlu0 %v7141, 104
      %v7453 = vpop.permute.xlu0 %7452
      %7454 = vrot.lane.b32.xlu0 %v7142, 104
      %v7455 = vpop.permute.xlu0 %7454
      %7456 = vrot.lane.b32.xlu0 %v7143, 104
      %v7457 = vpop.permute.xlu0 %7456
      %7458 = vrot.lane.b32.xlu0 %v7144, 104
      %v7459 = vpop.permute.xlu0 %7458
      %7460 = vrot.lane.b32.xlu0 %v7145, 104
      %v7461 = vpop.permute.xlu0 %7460
      %7462 = vrot.lane.b32.xlu0 %v7146, 104
      %v7463 = vpop.permute.xlu0 %7462
      %7464 = vrot.lane.b32.xlu0 %v7147, 104
      %v7465 = vpop.permute.xlu0 %7464
      %7466 = vrot.lane.b32.xlu0 %v7148, 104
      %v7467 = vpop.permute.xlu0 %7466
      %7468 = vrot.lane.b32.xlu0 %v7149, 104
      %v7469 = vpop.permute.xlu0 %7468
      %7470 = vrot.lane.b32.xlu0 %v7150, 104
      %v7471 = vpop.permute.xlu0 %7470
      %7472 = vrot.lane.b32.xlu0 %v7151, 104
      %v7473 = vpop.permute.xlu0 %7472
      %7474 = vrot.lane.b32.xlu0 %v7152, 104
      %v7475 = vpop.permute.xlu0 %7474
      %7476 = vrot.lane.b32.xlu0 %v7153, 104
      %v7477 = vpop.permute.xlu0 %7476
      %7478 = vrot.lane.b32.xlu0 %v7154, 104
      %v7479 = vpop.permute.xlu0 %7478
      %7480 = vrot.lane.b32.xlu0 %v7155, 104
      %v7481 = vpop.permute.xlu0 %7480
      %7482 = vrot.lane.b32.xlu0 %v7156, 104
      %v7483 = vpop.permute.xlu0 %7482
      %7484 = vrot.lane.b32.xlu0 %v7157, 104
      %v7485 = vpop.permute.xlu0 %7484
      %7486 = vrot.lane.b32.xlu0 %v7158, 104
      %v7487 = vpop.permute.xlu0 %7486
      %7488 = vrot.lane.b32.xlu0 %v7159, 104
      %v7489 = vpop.permute.xlu0 %7488
      %7490 = vrot.lane.b32.xlu0 %v7160, 104
      %v7491 = vpop.permute.xlu0 %7490
      %7492 = vrot.lane.b32.xlu0 %v7161, 104
      %v7493 = vpop.permute.xlu0 %7492
      %7494 = vrot.lane.b32.xlu0 %v7162, 104
      %v7495 = vpop.permute.xlu0 %7494
      %7496 = vrot.lane.b32.xlu0 %v7163, 104
      %v7497 = vpop.permute.xlu0 %7496
      %7498 = vrot.lane.b32.xlu0 %v7164, 104
      %v7499 = vpop.permute.xlu0 %7498
      %7500 = vrot.lane.b32.xlu0 %v7165, 104
      %v7501 = vpop.permute.xlu0 %7500
      %7502 = vrot.lane.b32.xlu0 %v7166, 104
      %v7503 = vpop.permute.xlu0 %7502
      %7504 = vrot.lane.b32.xlu0 %v7167, 104
      %v7505 = vpop.permute.xlu0 %7504
      %7506 = vrot.lane.b32.xlu0 %v7168, 104
      %v7507 = vpop.permute.xlu0 %7506
      %7508 = vrot.lane.b32.xlu0 %v7169, 104
      %v7509 = vpop.permute.xlu0 %7508
      %7510 = vrot.lane.b32.xlu0 %v7170, 104
      %v7511 = vpop.permute.xlu0 %7510
      %7512 = vrot.lane.b32.xlu0 %v7171, 104
      %v7513 = vpop.permute.xlu0 %7512
      %7514 = vrot.lane.b32.xlu0 %v7172, 104
      %v7515 = vpop.permute.xlu0 %7514
      %7516 = vrot.lane.b32.xlu0 %v7173, 104
      %v7517 = vpop.permute.xlu0 %7516
      %7518 = vrot.lane.b32.xlu0 %v7174, 104
      %v7519 = vpop.permute.xlu0 %7518
      %7520 = vrot.lane.b32.xlu0 %v7175, 104
      %v7521 = vpop.permute.xlu0 %7520
      %7522 = vrot.lane.b32.xlu0 %v7176, 104
      %v7523 = vpop.permute.xlu0 %7522
      %7524 = vrot.lane.b32.xlu0 %v7177, 104
      %v7525 = vpop.permute.xlu0 %7524
      %7526 = vrot.lane.b32.xlu0 %v7178, 104
      %v7527 = vpop.permute.xlu0 %7526
      %7528 = vrot.lane.b32.xlu0 %v7179, 104
      %v7529 = vpop.permute.xlu0 %7528
      %7530 = vrot.lane.b32.xlu0 %v7180, 104
      %v7531 = vpop.permute.xlu0 %7530
      %7532 = vrot.lane.b32.xlu0 %v7181, 104
      %v7533 = vpop.permute.xlu0 %7532
      %7534 = vrot.lane.b32.xlu0 %v7182, 104
      %v7535 = vpop.permute.xlu0 %7534
      %7536 = vrot.lane.b32.xlu0 %v7183, 104
      %v7537 = vpop.permute.xlu0 %7536
      %7538 = vrot.lane.b32.xlu0 %v7184, 104
      %v7539 = vpop.permute.xlu0 %7538
      %7540 = vrot.lane.b32.xlu0 %v7185, 104
      %v7541 = vpop.permute.xlu0 %7540
      %7542 = vrot.lane.b32.xlu0 %v7186, 104
      %v7543 = vpop.permute.xlu0 %7542
      %7544 = vrot.lane.b32.xlu0 %v7187, 104
      %v7545 = vpop.permute.xlu0 %7544
      %7546 = vrot.lane.b32.xlu0 %v7188, 104
      %v7547 = vpop.permute.xlu0 %7546
      %7548 = vrot.lane.b32.xlu0 %v7189, 104
      %v7549 = vpop.permute.xlu0 %7548
      %7550 = vrot.lane.b32.xlu0 %v7190, 104
      %v7551 = vpop.permute.xlu0 %7550
      %7552 = vrot.lane.b32.xlu0 %v7191, 104
      %v7553 = vpop.permute.xlu0 %7552
      %7554 = vrot.lane.b32.xlu0 %v7192, 104
      %v7555 = vpop.permute.xlu0 %7554
      %7556 = vrot.lane.b32.xlu0 %v7193, 104
      %v7557 = vpop.permute.xlu0 %7556
      %7558 = vrot.lane.b32.xlu0 %v7194, 104
      %v7559 = vpop.permute.xlu0 %7558
      %7560 = vrot.lane.b32.xlu0 %v7195, 104
      %v7561 = vpop.permute.xlu0 %7560
      %7562 = vrot.lane.b32.xlu0 %v7196, 104
      %v7563 = vpop.permute.xlu0 %7562
      %7564 = vrot.lane.b32.xlu0 %v7197, 104
      %v7565 = vpop.permute.xlu0 %7564
      %7566 = vrot.lane.b32.xlu0 %v7198, 104
      %v7567 = vpop.permute.xlu0 %7566
      %7568 = vrot.lane.b32.xlu0 %v7199, 104
      %v7569 = vpop.permute.xlu0 %7568
      %7570 = vrot.lane.b32.xlu0 %v7200, 104
      %v7571 = vpop.permute.xlu0 %7570
      %7572 = vrot.lane.b32.xlu0 %v7201, 104
      %v7573 = vpop.permute.xlu0 %7572
      %7574 = vrot.lane.b32.xlu0 %v7202, 104
      %v7575 = vpop.permute.xlu0 %7574
      %7576 = vrot.lane.b32.xlu0 %v7203, 104
      %v7577 = vpop.permute.xlu0 %7576
      %7578 = vrot.lane.b32.xlu0 %v7204, 104
      %v7579 = vpop.permute.xlu0 %7578
      %7580 = vrot.lane.b32.xlu0 %v7205, 104
      %v7581 = vpop.permute.xlu0 %7580
      %7582 = vrot.lane.b32.xlu0 %v7206, 104
      %v7583 = vpop.permute.xlu0 %7582
      %7584 = vrot.lane.b32.xlu0 %v7207, 104
      %v7585 = vpop.permute.xlu0 %7584
      %7586 = vrot.lane.b32.xlu0 %v7208, 104
      %v7587 = vpop.permute.xlu0 %7586
      %7588 = vrot.lane.b32.xlu0 %v7209, 104
      %v7589 = vpop.permute.xlu0 %7588
      %7590 = vrot.lane.b32.xlu0 %v7210, 104
      %v7591 = vpop.permute.xlu0 %7590
      %7592 = vrot.lane.b32.xlu0 %v7211, 104
      %v7593 = vpop.permute.xlu0 %7592
      %7594 = vrot.lane.b32.xlu0 %v7212, 104
      %v7595 = vpop.permute.xlu0 %7594
      %7596 = vrot.lane.b32.xlu0 %v7213, 104
      %v7597 = vpop.permute.xlu0 %7596
      %v7726 = vadd.f32 %v6446, %v7343
      %v7727 = vadd.f32 %v6447, %v7345
      %v7728 = vadd.f32 %v6448, %v7347
      %v7729 = vadd.f32 %v6449, %v7349
      %v7730 = vadd.f32 %v6450, %v7351
      %v7731 = vadd.f32 %v6451, %v7353
      %v7732 = vadd.f32 %v6452, %v7355
      %v7733 = vadd.f32 %v6453, %v7357
      %v7734 = vadd.f32 %v6454, %v7359
      %v7735 = vadd.f32 %v6455, %v7361
      %v7736 = vadd.f32 %v6456, %v7363
      %v7737 = vadd.f32 %v6457, %v7365
      %v7738 = vadd.f32 %v6458, %v7367
      %v7739 = vadd.f32 %v6459, %v7369
      %v7740 = vadd.f32 %v6460, %v7371
      %v7741 = vadd.f32 %v6461, %v7373
      %v7742 = vadd.f32 %v6462, %v7375
      %v7743 = vadd.f32 %v6463, %v7377
      %v7744 = vadd.f32 %v6464, %v7379
      %v7745 = vadd.f32 %v6465, %v7381
      %v7746 = vadd.f32 %v6466, %v7383
      %v7747 = vadd.f32 %v6467, %v7385
      %v7748 = vadd.f32 %v6468, %v7387
      %v7749 = vadd.f32 %v6469, %v7389
      %v7750 = vadd.f32 %v6470, %v7391
      %v7751 = vadd.f32 %v6471, %v7393
      %v7752 = vadd.f32 %v6472, %v7395
      %v7753 = vadd.f32 %v6473, %v7397
      %v7754 = vadd.f32 %v6474, %v7399
      %v7755 = vadd.f32 %v6475, %v7401
      %v7756 = vadd.f32 %v6476, %v7403
      %v7757 = vadd.f32 %v6477, %v7405
      %v7758 = vadd.f32 %v6478, %v7407
      %v7759 = vadd.f32 %v6479, %v7409
      %v7760 = vadd.f32 %v6480, %v7411
      %v7761 = vadd.f32 %v6481, %v7413
      %v7762 = vadd.f32 %v6482, %v7415
      %v7763 = vadd.f32 %v6483, %v7417
      %v7764 = vadd.f32 %v6484, %v7419
      %v7765 = vadd.f32 %v6485, %v7421
      %v7766 = vadd.f32 %v6486, %v7423
      %v7767 = vadd.f32 %v6487, %v7425
      %v7768 = vadd.f32 %v6488, %v7427
      %v7769 = vadd.f32 %v6489, %v7429
      %v7770 = vadd.f32 %v6490, %v7431
      %v7771 = vadd.f32 %v6491, %v7433
      %v7772 = vadd.f32 %v6492, %v7435
      %v7773 = vadd.f32 %v6493, %v7437
      %v7774 = vadd.f32 %v6494, %v7439
      %v7775 = vadd.f32 %v6495, %v7441
      %v7776 = vadd.f32 %v6496, %v7443
      %v7777 = vadd.f32 %v6497, %v7445
      %v7778 = vadd.f32 %v6498, %v7447
      %v7779 = vadd.f32 %v6499, %v7449
      %v7780 = vadd.f32 %v6500, %v7451
      %v7781 = vadd.f32 %v6501, %v7453
      %v7782 = vadd.f32 %v6502, %v7455
      %v7783 = vadd.f32 %v6503, %v7457
      %v7784 = vadd.f32 %v6504, %v7459
      %v7785 = vadd.f32 %v6505, %v7461
      %v7786 = vadd.f32 %v6506, %v7463
      %v7787 = vadd.f32 %v6507, %v7465
      %v7788 = vadd.f32 %v6508, %v7467
      %v7789 = vadd.f32 %v6509, %v7469
      %v7790 = vadd.f32 %v6510, %v7471
      %v7791 = vadd.f32 %v6511, %v7473
      %v7792 = vadd.f32 %v6512, %v7475
      %v7793 = vadd.f32 %v6513, %v7477
      %v7794 = vadd.f32 %v6514, %v7479
      %v7795 = vadd.f32 %v6515, %v7481
      %v7796 = vadd.f32 %v6516, %v7483
      %v7797 = vadd.f32 %v6517, %v7485
      %v7798 = vadd.f32 %v6518, %v7487
      %v7799 = vadd.f32 %v6519, %v7489
      %v7800 = vadd.f32 %v6520, %v7491
      %v7801 = vadd.f32 %v6521, %v7493
      %v7802 = vadd.f32 %v6522, %v7495
      %v7803 = vadd.f32 %v6523, %v7497
      %v7804 = vadd.f32 %v6524, %v7499
      %v7805 = vadd.f32 %v6525, %v7501
      %v7806 = vadd.f32 %v6526, %v7503
      %v7807 = vadd.f32 %v6527, %v7505
      %v7808 = vadd.f32 %v6528, %v7507
      %v7809 = vadd.f32 %v6529, %v7509
      %v7810 = vadd.f32 %v6530, %v7511
      %v7811 = vadd.f32 %v6531, %v7513
      %v7812 = vadd.f32 %v6532, %v7515
      %v7813 = vadd.f32 %v6533, %v7517
      %v7814 = vadd.f32 %v6534, %v7519
      %v7815 = vadd.f32 %v6535, %v7521
      %v7816 = vadd.f32 %v6536, %v7523
      %v7817 = vadd.f32 %v6537, %v7525
      %v7818 = vadd.f32 %v6538, %v7527
      %v7819 = vadd.f32 %v6539, %v7529
      %v7820 = vadd.f32 %v6540, %v7531
      %v7821 = vadd.f32 %v6541, %v7533
      %v7822 = vadd.f32 %v6542, %v7535
      %v7823 = vadd.f32 %v6543, %v7537
      %v7824 = vadd.f32 %v6544, %v7539
      %v7825 = vadd.f32 %v6545, %v7541
      %v7826 = vadd.f32 %v6546, %v7543
      %v7827 = vadd.f32 %v6547, %v7545
      %v7828 = vadd.f32 %v6548, %v7547
      %v7829 = vadd.f32 %v6549, %v7549
      %v7830 = vadd.f32 %v6550, %v7551
      %v7831 = vadd.f32 %v6551, %v7553
      %v7832 = vadd.f32 %v6552, %v7555
      %v7833 = vadd.f32 %v6553, %v7557
      %v7834 = vadd.f32 %v6554, %v7559
      %v7835 = vadd.f32 %v6555, %v7561
      %v7836 = vadd.f32 %v6556, %v7563
      %v7837 = vadd.f32 %v6557, %v7565
      %v7838 = vadd.f32 %v6558, %v7567
      %v7839 = vadd.f32 %v6559, %v7569
      %v7840 = vadd.f32 %v6560, %v7571
      %v7841 = vadd.f32 %v6561, %v7573
      %v7842 = vadd.f32 %v6562, %v7575
      %v7843 = vadd.f32 %v6563, %v7577
      %v7844 = vadd.f32 %v6564, %v7579
      %v7845 = vadd.f32 %v6565, %v7581
      %v7846 = vadd.f32 %v6566, %v7583
      %v7847 = vadd.f32 %v6567, %v7585
      %v7848 = vadd.f32 %v6568, %v7587
      %v7849 = vadd.f32 %v6569, %v7589
      %v7850 = vadd.f32 %v6570, %v7591
      %v7851 = vadd.f32 %v6571, %v7593
      %v7852 = vadd.f32 %v6572, %v7595
      %v7853 = vadd.f32 %v6573, %v7597
      %vm7854 = vcmask 64512
      %7855 = vst.msk [vmem:[%s278] sm:$0xff] %vm7854, %v7726
      %7856 = vst.msk [vmem:[%s278 + $0x8] sm:$0xff] %vm7854, %v7727
      %7857 = vst.msk [vmem:[%s278 + $0x10] sm:$0xff] %vm7854, %v7728
      %7858 = vst.msk [vmem:[%s278 + $0x18] sm:$0xff] %vm7854, %v7729
      %7859 = vst.msk [vmem:[%s278 + $0x20] sm:$0xff] %vm7854, %v7730
      %7860 = vst.msk [vmem:[%s278 + $0x28] sm:$0xff] %vm7854, %v7731
      %7861 = vst.msk [vmem:[%s278 + $0x30] sm:$0xff] %vm7854, %v7732
      %7862 = vst.msk [vmem:[%s278 + $0x38] sm:$0xff] %vm7854, %v7733
      %7863 = vst.msk [vmem:[%s278 + $0x40] sm:$0xff] %vm7854, %v7734
      %7864 = vst.msk [vmem:[%s278 + $0x48] sm:$0xff] %vm7854, %v7735
      %7865 = vst.msk [vmem:[%s278 + $0x50] sm:$0xff] %vm7854, %v7736
      %7866 = vst.msk [vmem:[%s278 + $0x58] sm:$0xff] %vm7854, %v7737
      %7867 = vst.msk [vmem:[%s278 + $0x60] sm:$0xff] %vm7854, %v7738
      %7868 = vst.msk [vmem:[%s278 + $0x68] sm:$0xff] %vm7854, %v7739
      %7869 = vst.msk [vmem:[%s278 + $0x70] sm:$0xff] %vm7854, %v7740
      %7870 = vst.msk [vmem:[%s278 + $0x78] sm:$0xff] %vm7854, %v7741
      %7871 = vst.msk [vmem:[%s278 + $0x80] sm:$0xff] %vm7854, %v7742
      %7872 = vst.msk [vmem:[%s278 + $0x88] sm:$0xff] %vm7854, %v7743
      %7873 = vst.msk [vmem:[%s278 + $0x90] sm:$0xff] %vm7854, %v7744
      %7874 = vst.msk [vmem:[%s278 + $0x98] sm:$0xff] %vm7854, %v7745
      %7875 = vst.msk [vmem:[%s278 + $0xa0] sm:$0xff] %vm7854, %v7746
      %7876 = vst.msk [vmem:[%s278 + $0xa8] sm:$0xff] %vm7854, %v7747
      %7877 = vst.msk [vmem:[%s278 + $0xb0] sm:$0xff] %vm7854, %v7748
      %7878 = vst.msk [vmem:[%s278 + $0xb8] sm:$0xff] %vm7854, %v7749
      %7879 = vst.msk [vmem:[%s278 + $0xc0] sm:$0xff] %vm7854, %v7750
      %7880 = vst.msk [vmem:[%s278 + $0xc8] sm:$0xff] %vm7854, %v7751
      %7881 = vst.msk [vmem:[%s278 + $0xd0] sm:$0xff] %vm7854, %v7752
      %7882 = vst.msk [vmem:[%s278 + $0xd8] sm:$0xff] %vm7854, %v7753
      %7883 = vst.msk [vmem:[%s278 + $0xe0] sm:$0xff] %vm7854, %v7754
      %7884 = vst.msk [vmem:[%s278 + $0xe8] sm:$0xff] %vm7854, %v7755
      %7885 = vst.msk [vmem:[%s278 + $0xf0] sm:$0xff] %vm7854, %v7756
      %7886 = vst.msk [vmem:[%s278 + $0xf8] sm:$0xff] %vm7854, %v7757
      %7887 = vst.msk [vmem:[%s278 + $0x100] sm:$0xff] %vm7854, %v7758
      %7888 = vst.msk [vmem:[%s278 + $0x108] sm:$0xff] %vm7854, %v7759
      %7889 = vst.msk [vmem:[%s278 + $0x110] sm:$0xff] %vm7854, %v7760
      %7890 = vst.msk [vmem:[%s278 + $0x118] sm:$0xff] %vm7854, %v7761
      %7891 = vst.msk [vmem:[%s278 + $0x120] sm:$0xff] %vm7854, %v7762
      %7892 = vst.msk [vmem:[%s278 + $0x128] sm:$0xff] %vm7854, %v7763
      %7893 = vst.msk [vmem:[%s278 + $0x130] sm:$0xff] %vm7854, %v7764
      %7894 = vst.msk [vmem:[%s278 + $0x138] sm:$0xff] %vm7854, %v7765
      %7895 = vst.msk [vmem:[%s278 + $0x140] sm:$0xff] %vm7854, %v7766
      %7896 = vst.msk [vmem:[%s278 + $0x148] sm:$0xff] %vm7854, %v7767
      %7897 = vst.msk [vmem:[%s278 + $0x150] sm:$0xff] %vm7854, %v7768
      %7898 = vst.msk [vmem:[%s278 + $0x158] sm:$0xff] %vm7854, %v7769
      %7899 = vst.msk [vmem:[%s278 + $0x160] sm:$0xff] %vm7854, %v7770
      %7900 = vst.msk [vmem:[%s278 + $0x168] sm:$0xff] %vm7854, %v7771
      %7901 = vst.msk [vmem:[%s278 + $0x170] sm:$0xff] %vm7854, %v7772
      %7902 = vst.msk [vmem:[%s278 + $0x178] sm:$0xff] %vm7854, %v7773
      %7903 = vst.msk [vmem:[%s278 + $0x180] sm:$0xff] %vm7854, %v7774
      %7904 = vst.msk [vmem:[%s278 + $0x188] sm:$0xff] %vm7854, %v7775
      %7905 = vst.msk [vmem:[%s278 + $0x190] sm:$0xff] %vm7854, %v7776
      %7906 = vst.msk [vmem:[%s278 + $0x198] sm:$0xff] %vm7854, %v7777
      %7907 = vst.msk [vmem:[%s278 + $0x1a0] sm:$0xff] %vm7854, %v7778
      %7908 = vst.msk [vmem:[%s278 + $0x1a8] sm:$0xff] %vm7854, %v7779
      %7909 = vst.msk [vmem:[%s278 + $0x1b0] sm:$0xff] %vm7854, %v7780
      %7910 = vst.msk [vmem:[%s278 + $0x1b8] sm:$0xff] %vm7854, %v7781
      %7911 = vst.msk [vmem:[%s278 + $0x1c0] sm:$0xff] %vm7854, %v7782
      %7912 = vst.msk [vmem:[%s278 + $0x1c8] sm:$0xff] %vm7854, %v7783
      %7913 = vst.msk [vmem:[%s278 + $0x1d0] sm:$0xff] %vm7854, %v7784
      %7914 = vst.msk [vmem:[%s278 + $0x1d8] sm:$0xff] %vm7854, %v7785
      %7915 = vst.msk [vmem:[%s278 + $0x1e0] sm:$0xff] %vm7854, %v7786
      %7916 = vst.msk [vmem:[%s278 + $0x1e8] sm:$0xff] %vm7854, %v7787
      %7917 = vst.msk [vmem:[%s278 + $0x1f0] sm:$0xff] %vm7854, %v7788
      %7918 = vst.msk [vmem:[%s278 + $0x1f8] sm:$0xff] %vm7854, %v7789
      %7919 = vst.msk [vmem:[%s278 + $0x200] sm:$0xff] %vm7854, %v7790
      %7920 = vst.msk [vmem:[%s278 + $0x208] sm:$0xff] %vm7854, %v7791
      %7921 = vst.msk [vmem:[%s278 + $0x210] sm:$0xff] %vm7854, %v7792
      %7922 = vst.msk [vmem:[%s278 + $0x218] sm:$0xff] %vm7854, %v7793
      %7923 = vst.msk [vmem:[%s278 + $0x220] sm:$0xff] %vm7854, %v7794
      %7924 = vst.msk [vmem:[%s278 + $0x228] sm:$0xff] %vm7854, %v7795
      %7925 = vst.msk [vmem:[%s278 + $0x230] sm:$0xff] %vm7854, %v7796
      %7926 = vst.msk [vmem:[%s278 + $0x238] sm:$0xff] %vm7854, %v7797
      %7927 = vst.msk [vmem:[%s278 + $0x240] sm:$0xff] %vm7854, %v7798
      %7928 = vst.msk [vmem:[%s278 + $0x248] sm:$0xff] %vm7854, %v7799
      %7929 = vst.msk [vmem:[%s278 + $0x250] sm:$0xff] %vm7854, %v7800
      %7930 = vst.msk [vmem:[%s278 + $0x258] sm:$0xff] %vm7854, %v7801
      %7931 = vst.msk [vmem:[%s278 + $0x260] sm:$0xff] %vm7854, %v7802
      %7932 = vst.msk [vmem:[%s278 + $0x268] sm:$0xff] %vm7854, %v7803
      %7933 = vst.msk [vmem:[%s278 + $0x270] sm:$0xff] %vm7854, %v7804
      %7934 = vst.msk [vmem:[%s278 + $0x278] sm:$0xff] %vm7854, %v7805
      %7935 = vst.msk [vmem:[%s278 + $0x280] sm:$0xff] %vm7854, %v7806
      %7936 = vst.msk [vmem:[%s278 + $0x288] sm:$0xff] %vm7854, %v7807
      %7937 = vst.msk [vmem:[%s278 + $0x290] sm:$0xff] %vm7854, %v7808
      %7938 = vst.msk [vmem:[%s278 + $0x298] sm:$0xff] %vm7854, %v7809
      %7939 = vst.msk [vmem:[%s278 + $0x2a0] sm:$0xff] %vm7854, %v7810
      %7940 = vst.msk [vmem:[%s278 + $0x2a8] sm:$0xff] %vm7854, %v7811
      %7941 = vst.msk [vmem:[%s278 + $0x2b0] sm:$0xff] %vm7854, %v7812
      %7942 = vst.msk [vmem:[%s278 + $0x2b8] sm:$0xff] %vm7854, %v7813
      %7943 = vst.msk [vmem:[%s278 + $0x2c0] sm:$0xff] %vm7854, %v7814
      %7944 = vst.msk [vmem:[%s278 + $0x2c8] sm:$0xff] %vm7854, %v7815
      %7945 = vst.msk [vmem:[%s278 + $0x2d0] sm:$0xff] %vm7854, %v7816
      %7946 = vst.msk [vmem:[%s278 + $0x2d8] sm:$0xff] %vm7854, %v7817
      %7947 = vst.msk [vmem:[%s278 + $0x2e0] sm:$0xff] %vm7854, %v7818
      %7948 = vst.msk [vmem:[%s278 + $0x2e8] sm:$0xff] %vm7854, %v7819
      %7949 = vst.msk [vmem:[%s278 + $0x2f0] sm:$0xff] %vm7854, %v7820
      %7950 = vst.msk [vmem:[%s278 + $0x2f8] sm:$0xff] %vm7854, %v7821
      %7951 = vst.msk [vmem:[%s278 + $0x300] sm:$0xff] %vm7854, %v7822
      %7952 = vst.msk [vmem:[%s278 + $0x308] sm:$0xff] %vm7854, %v7823
      %7953 = vst.msk [vmem:[%s278 + $0x310] sm:$0xff] %vm7854, %v7824
      %7954 = vst.msk [vmem:[%s278 + $0x318] sm:$0xff] %vm7854, %v7825
      %7955 = vst.msk [vmem:[%s278 + $0x320] sm:$0xff] %vm7854, %v7826
      %7956 = vst.msk [vmem:[%s278 + $0x328] sm:$0xff] %vm7854, %v7827
      %7957 = vst.msk [vmem:[%s278 + $0x330] sm:$0xff] %vm7854, %v7828
      %7958 = vst.msk [vmem:[%s278 + $0x338] sm:$0xff] %vm7854, %v7829
      %7959 = vst.msk [vmem:[%s278 + $0x340] sm:$0xff] %vm7854, %v7830
      %7960 = vst.msk [vmem:[%s278 + $0x348] sm:$0xff] %vm7854, %v7831
      %7961 = vst.msk [vmem:[%s278 + $0x350] sm:$0xff] %vm7854, %v7832
      %7962 = vst.msk [vmem:[%s278 + $0x358] sm:$0xff] %vm7854, %v7833
      %7963 = vst.msk [vmem:[%s278 + $0x360] sm:$0xff] %vm7854, %v7834
      %7964 = vst.msk [vmem:[%s278 + $0x368] sm:$0xff] %vm7854, %v7835
      %7965 = vst.msk [vmem:[%s278 + $0x370] sm:$0xff] %vm7854, %v7836
      %7966 = vst.msk [vmem:[%s278 + $0x378] sm:$0xff] %vm7854, %v7837
      %7967 = vst.msk [vmem:[%s278 + $0x380] sm:$0xff] %vm7854, %v7838
      %7968 = vst.msk [vmem:[%s278 + $0x388] sm:$0xff] %vm7854, %v7839
      %7969 = vst.msk [vmem:[%s278 + $0x390] sm:$0xff] %vm7854, %v7840
      %7970 = vst.msk [vmem:[%s278 + $0x398] sm:$0xff] %vm7854, %v7841
      %7971 = vst.msk [vmem:[%s278 + $0x3a0] sm:$0xff] %vm7854, %v7842
      %7972 = vst.msk [vmem:[%s278 + $0x3a8] sm:$0xff] %vm7854, %v7843
      %7973 = vst.msk [vmem:[%s278 + $0x3b0] sm:$0xff] %vm7854, %v7844
      %7974 = vst.msk [vmem:[%s278 + $0x3b8] sm:$0xff] %vm7854, %v7845
      %7975 = vst.msk [vmem:[%s278 + $0x3c0] sm:$0xff] %vm7854, %v7846
      %7976 = vst.msk [vmem:[%s278 + $0x3c8] sm:$0xff] %vm7854, %v7847
      %7977 = vst.msk [vmem:[%s278 + $0x3d0] sm:$0xff] %vm7854, %v7848
      %7978 = vst.msk [vmem:[%s278 + $0x3d8] sm:$0xff] %vm7854, %v7849
      %7979 = vst.msk [vmem:[%s278 + $0x3e0] sm:$0xff] %vm7854, %v7850
      %7980 = vst.msk [vmem:[%s278 + $0x3e8] sm:$0xff] %vm7854, %v7851
      %7981 = vst.msk [vmem:[%s278 + $0x3f0] sm:$0xff] %vm7854, %v7852
      %7982 = vst.msk [vmem:[%s278 + $0x3f8] sm:$0xff] %vm7854, %v7853
      %s7983 = smul.u32 128, %s17
      %p7984 = scmp.lt.s32.totalorder %s7983, 255
      %s7985 = scalar_select %p7984, %s7983, 255
      %s7986 = smul.addr %s7985, 8
      %s7987 = scalar_lea.vmem %s6, %s7986
      // Predicated region
      $region45: #{_lambda_.1} parent=43 // pred_check
        %p7988 = pneg %p171
      $region46: #{_lambda_.1} parent=43 // pred_check_branch
        %7990 = sbr.rel (%p7988) target = $region48
      $region47: #{_lambda_.1} parent=43 // pred_region
        %s7991 = smul.u32 128, %s17
      $region48: #{_lambda_.1} parent=43 // pred_fallthru
        _
    $region44: #{_lambda_.1} parent=5 // pred_fallthru
      _
    %p7992 = scmp.le.s32.totalorder 2, %s12
    // Predicated region
    $region49: #{_lambda_.1} parent=5 // pred_check
      %p7993 = pneg %p7992
    $region50: #{_lambda_.1} parent=5 // pred_check_branch
      %7995 = sbr.rel (%p7993) target = $region52
    $region51: #{_lambda_.1} parent=5 // pred_region
      %s7996 = ssub.s32 %s12, 2
      // Predicated region
      $region53: #{_lambda_.1} parent=51 // pred_check
        %p7997 = pneg %p177
      $region54: #{_lambda_.1} parent=51 // pred_check_branch
        %7999 = sbr.rel (%p7997) target = $region56
      $region55: #{_lambda_.1} parent=51 // pred_region
        %s8000 = smul.u32 128, %s18
        %p8001 = scmp.lt.s32.totalorder %s8000, 255
        %s8002 = scalar_select %p8001, %s8000, 255
        %s8003 = smul.addr %s8002, 8
        %s8004 = scalar_lea.vmem %s6, %s8003
      $region56: #{_lambda_.1} parent=51 // pred_fallthru
        _
    $region52: #{_lambda_.1} parent=5 // pred_fallthru
      _
  $region6: #{_lambda_.1} parent=0 // loop_footer
    %s16 = sadd.s32 1, %s12
  $region7: #{_lambda_.1} parent=0 // loop_footer_branch
    %11 = sbr.rel target = $region3
  $region8: #{_lambda_.1} parent=0 // loop_exit
    _

</llo_original>
